<compile_context>
chip_gen: v7x
topology: tpu7x:2x2x1
jax: 0.10.0
libtpu: 0.0.40
codegen_flags: <defaults>
</compile_context>

<pallas_src>
import functools

import jax
import jax.numpy as jnp
from jax import lax
from jax.experimental import pallas as pl
from jax.experimental.pallas import tpu as pltpu

_DIM_NUMS = ("NDHWC", "DHWIO", "NDHWC")
_VMEM_CAP = 48 * 1024 * 1024            # safe on v7x (64 MiB/core) and v5e/v6e (128 MiB)
_IN_BLOCK_BUDGET = 5 * 256 * 1024       # ~1.25 MiB per (TM, K) bf16 input block
_TM_CANDIDATES = (4096, 2048, 1024, 512, 256, 128, 64, 32, 16, 8)


def _round_up(x, m):
    return (x + m - 1) // m * m


# ---------------------------------------------------------------------------
# Pallas kernel: (patches @ W_folded) bf16 -> f32 acc, + bias, activation
# ---------------------------------------------------------------------------
def _conv_mm_kernel(x_ref, w_ref, bias_ref, o_ref, *, act):
    # x_ref: (TM, K) bf16, w_ref: (K, TC) bf16, bias_ref: (1, TC) f32, o_ref: (TM, TC)
    acc = jnp.dot(x_ref[...], w_ref[...], preferred_element_type=jnp.float32)
    y = acc + bias_ref[...]
    if act == "lrelu":
        y = jnp.where(y >= 0.0, y, 0.2 * y)
    elif act == "sigmoid":
        y = jax.nn.sigmoid(y)
    o_ref[...] = y.astype(o_ref.dtype)


def _padded_block_bytes(rows, cols, itemsize):
    """VMEM footprint of a (rows, cols) block after sublane/128-lane padding."""
    sublane = {4: 8, 2: 16, 1: 32}[itemsize]
    return _round_up(max(rows, 1), sublane) * _round_up(cols, 128) * itemsize


def _pick_tiles(M, K, C):
    """(TM, TC): deep-enough grid for pipelining, VMEM-budgeted input blocks."""
    tc = 128 if (C > 128 and C % 128 == 0) else C
    c_blocks = C // tc
    k_pad = _round_up(K, 128)
    target_steps = 8 if M >= 2048 else 4
    # Largest TM that still gives >= target grid steps within the block budget.
    for cand in _TM_CANDIDATES:
        if cand > M or M % cand:
            continue
        if cand * k_pad * 2 > _IN_BLOCK_BUDGET:
            continue
        if (M // cand) * c_blocks >= target_steps:
            return cand, tc
    # Relax the step target but keep the VMEM budget.
    for cand in _TM_CANDIDATES:
        if cand > M or M % cand:
            continue
        if cand * k_pad * 2 <= _IN_BLOCK_BUDGET:
            return cand, tc
    return M, tc   # caller verifies the padded footprint before using Pallas


def _vmem_need_bytes(tm, tc, K, out_itemsize):
    # Double-buffered input/weight/bias/output blocks + f32 epilogue temporary,
    # all accounted with lane/sublane padding.
    per_step = (
        _padded_block_bytes(tm, K, 2)
        + _padded_block_bytes(K, tc, 2)
        + _padded_block_bytes(1, tc, 4)
        + _padded_block_bytes(tm, tc, out_itemsize)
    )
    return 2 * per_step + _padded_block_bytes(tm, tc, 4)


def pallas_conv_matmul(patches, w, bias, act, out_dtype, tm, tc, vmem_limit):
    """patches: (M, K) bf16, w: (K, C) bf16, bias: (1, C) f32 -> (M, C) out_dtype."""
    M, K = patches.shape
    Kw, C = w.shape
    assert K == Kw
    grid = (C // tc, M // tm)   # Cout OUTER: weight block stays resident over the M sweep
    kernel = functools.partial(_conv_mm_kernel, act=act)
    return pl.pallas_call(
        kernel,
        out_shape=jax.ShapeDtypeStruct((M, C), out_dtype),
        grid=grid,
        in_specs=[
            pl.BlockSpec((tm, K), lambda j, i: (i, 0)),
            pl.BlockSpec((K, tc), lambda j, i: (0, j)),
            pl.BlockSpec((1, tc), lambda j, i: (0, j)),
        ],
        out_specs=pl.BlockSpec((tm, tc), lambda j, i: (i, j)),
        compiler_params=pltpu.CompilerParams(
            dimension_semantics=("parallel", "parallel"),
            vmem_limit_bytes=vmem_limit,
        ),
    )(patches, w, bias)


# ---------------------------------------------------------------------------
# Parameter construction (deterministic, PyTorch-shaped conv weights)
# ---------------------------------------------------------------------------
def _make_conv_weight(key, cout, cin, ksize):
    kd, kh, kw2 = ksize
    fan_in = cin * kd * kh * kw2
    std = (2.0 / fan_in) ** 0.5
    return jax.random.normal(key, (cout, cin, kd, kh, kw2), dtype=jnp.float32) * std


def _make_bn_affine(key, c, eps=1e-5):
    k1, k2, k3, k4 = jax.random.split(key, 4)
    gamma = 1.0 + 0.1 * jax.random.normal(k1, (c,), dtype=jnp.float32)
    beta = 0.1 * jax.random.normal(k2, (c,), dtype=jnp.float32)
    running_mean = 0.1 * jax.random.normal(k3, (c,), dtype=jnp.float32)
    running_var = 1.0 + 0.1 * jnp.abs(jax.random.normal(k4, (c,), dtype=jnp.float32))
    scale = gamma / jnp.sqrt(running_var + eps)
    bias = beta - running_mean * scale
    return scale.reshape(1, c), bias.reshape(1, c)


def make_discriminator_params(key, sample_duration_is_16=False):
    nc = 32
    stride4 = (2, 2, 2) if sample_duration_is_16 else (1, 2, 2)
    cfg = [
        # (cin,   cout,   ksize,     stride,    pad,       has_bn, act)
        (3,      nc,     (3, 3, 3), (2, 2, 2), (1, 1, 1), False, "lrelu"),
        (nc,     nc * 2, (3, 3, 3), (2, 2, 2), (1, 1, 1), True,  "lrelu"),
        (nc * 2, nc * 4, (3, 3, 3), (2, 2, 2), (1, 1, 1), True,  "lrelu"),
        (nc * 4, nc * 8, (3, 3, 3), stride4,   (1, 1, 1), True,  "lrelu"),
        (nc * 8, nc * 8, (3, 3, 3), (1, 2, 2), (1, 1, 1), True,  "lrelu"),
        (nc * 8, 1,      (1, 4, 4), (1, 2, 2), (0, 0, 0), False, "sigmoid"),
    ]
    params = []
    keys = jax.random.split(key, len(cfg))
    for (cin, cout, ksize, stride, pad, has_bn, act), k in zip(cfg, keys):
        w_key, bn_key = jax.random.split(k)
        kd, kh, kw2 = ksize
        w_pt = _make_conv_weight(w_key, cout, cin, ksize)   # (Cout, Cin, kd, kh, kw)
        if has_bn:
            scale, bias = _make_bn_affine(bn_key, cout)
        else:
            scale = jnp.ones((1, cout), dtype=jnp.float32)
            bias = jnp.zeros((1, cout), dtype=jnp.float32)
        # Fold BN scale into the conv weight (inference-mode BN); keep additive f32 bias.
        w_scaled = w_pt * scale.reshape(cout, 1, 1, 1, 1)
        # DHWIO layout for the XLA conv path (layer 1 + tiny tail layers).
        w_dhwio = jnp.transpose(w_scaled, (2, 3, 4, 1, 0)).astype(jnp.bfloat16)
        # (K, Cout) layout matching conv_general_dilated_patches' channel-major
        # (Cin, kd, kh, kw) feature ordering, for the Pallas matmul path.
        w_mat = jnp.transpose(w_scaled, (1, 2, 3, 4, 0)).reshape(
            cin * kd * kh * kw2, cout).astype(jnp.bfloat16)
        params.append(dict(w_dhwio=w_dhwio, w_mat=w_mat, bias=bias, cin=cin, cout=cout,
                           ksize=ksize, stride=stride, pad=pad, act=act))
    return params


# ---------------------------------------------------------------------------
# Full forward pass
# ---------------------------------------------------------------------------
def _apply_act(y, act):
    if act == "lrelu":
        return jnp.where(y >= 0.0, y, 0.2 * y)
    if act == "sigmoid":
        return jax.nn.sigmoid(y)
    return y


def _out_dim(d, k, s, p):
    return (d + 2 * p - k) // s + 1


def discriminator_forward(x_ncdhw, params):
    # PyTorch input is NCDHW; transpose once to NDHWC, carry activations in bf16.
    x = jnp.transpose(x_ncdhw, (0, 2, 3, 4, 1)).astype(jnp.bfloat16)
    n_layers = len(params)
    for li, layer in enumerate(params):
        N, D, H, W, cin = x.shape
        kd, kh, kw = layer["ksize"]
        sd, sh, sw = layer["stride"]
        pd, ph, pw = layer["pad"]
        cout = layer["cout"]
        od, oh, ow = _out_dim(D, kd, sd, pd), _out_dim(H, kh, sh, ph), _out_dim(W, kw, sw, pw)
        M, K = N * od * oh * ow, cin * kd * kh * kw
        is_last = li == n_layers - 1
        out_dtype = jnp.float32 if is_last else jnp.bfloat16

        # Route layer 1 (Cin=3: K=81 lane padding, Cout=32 narrow stores) and tiny tail
        # layers (M < 128 output rows) to XLA's native conv; the rest go to Pallas.
        use_pallas = (M >= 128) and (cin >= 8)
        if use_pallas:
            tm, tc = _pick_tiles(M, K, cout)
            need = _vmem_need_bytes(tm, tc, K, jnp.dtype(out_dtype).itemsize)
            vmem_limit = min(_VMEM_CAP, need + 16 * 1024 * 1024)
            if need + 16 * 1024 * 1024 > _VMEM_CAP:
                use_pallas = False   # can't tile this shape safely -> let XLA handle it

        if use_pallas:
            # Single fused XLA gather; feature dim ordered (Cin, kd, kh, kw) -> matches w_mat.
            patches = lax.conv_general_dilated_patches(
                x, (kd, kh, kw), (sd, sh, sw),
                ((pd, pd), (ph, ph), (pw, pw)),
                dimension_numbers=_DIM_NUMS)
            patches = patches.reshape(M, K)
            out = pallas_conv_matmul(patches, layer["w_mat"], layer["bias"],
                                     layer["act"], out_dtype, tm, tc, vmem_limit)
            x = out.reshape(N, od, oh, ow, cout)
        else:
            y = lax.conv_general_dilated(
                x, layer["w_dhwio"], (sd, sh, sw),
                ((pd, pd), (ph, ph), (pw, pw)),
                dimension_numbers=_DIM_NUMS,
                preferred_element_type=jnp.float32)
            y = y + layer["bias"].reshape((1, 1, 1, 1, cout))
            x = _apply_act(y, layer["act"]).astype(out_dtype)
    # Final feature map is (N, 1, 1, 1, 1)  ->  output.view(-1, 1)
    return x.reshape(-1, 1).astype(jnp.float32)


if __name__ == "__main__":
    key = jax.random.PRNGKey(0)
    k_param, k_input = jax.random.split(key)

    # Smallest spatial size compatible with the 6-layer downsampling stack:
    # H = W: 128 -> 64 -> 32 -> 16 -> 8 -> 4 -> 1 ; D: 8 -> 4 -> 2 -> 1 -> 1 -> 1 -> 1
    N, C, D, H, W = 2, 3, 8, 128, 128
    x = jax.random.normal(k_input, (N, C, D, H, W), dtype=jnp.float32)

    params = make_discriminator_params(k_param, sample_duration_is_16=False)

    fwd = jax.jit(lambda inp: discriminator_forward(inp, params))
    out = jax.block_until_ready(fwd(x))

    assert out.shape == (N, 1), out.shape
    assert bool(jnp.all(jnp.isfinite(out)))
    assert bool(jnp.all((out >= 0.0) & (out <= 1.0)))  # sigmoid output range
    print("KERNEL_OK")
</pallas_src>

<mosaic_0001>
module attributes {stable_mosaic.version = 11 : i64} {
  func.func @_conv_mm_kernel(%arg0: i32, %arg1: i32, %arg2: memref<512x864xbf16, #tpu.memory_space<vmem>>, %arg3: memref<864x64xbf16, #tpu.memory_space<vmem>>, %arg4: memref<1x64xf32, #tpu.memory_space<vmem>>, %arg5: memref<512x64xbf16, #tpu.memory_space<vmem>>) attributes {dimension_semantics = [#tpu.dimension_semantics<parallel>, #tpu.dimension_semantics<parallel>], iteration_bounds = array<i64: 1, 8>, scalar_prefetch = 0 : i64, scratch_operands = 0 : i64, tpu.core_type = #tpu.core_type<tc>, window_params = [{transform_indices = @transform_0, window_bounds = array<i64: 512, 864>}, {transform_indices = @transform_1, window_bounds = array<i64: 864, 64>}, {transform_indices = @transform_2, window_bounds = array<i64: 1, 64>}, {transform_indices = @transform_3, window_bounds = array<i64: 512, 64>}]} {
    %c0 = arith.constant 0 : index
    %c0_0 = arith.constant 0 : index
    %0 = vector.load %arg2[%c0, %c0_0] : memref<512x864xbf16, #tpu.memory_space<vmem>>, vector<512x864xbf16>
    %c0_1 = arith.constant 0 : index
    %c0_2 = arith.constant 0 : index
    %1 = vector.load %arg3[%c0_1, %c0_2] : memref<864x64xbf16, #tpu.memory_space<vmem>>, vector<864x64xbf16>
    %cst = arith.constant dense<0.000000e+00> : vector<512x64xf32>
    %2 = tpu.matmul %0, %1, %cst {dimension_numbers = #tpu.dot_dimension_numbers<[1], [0], [0], [1], [0, 0, 1, 1], [], []>} : vector<512x864xbf16>, vector<864x64xbf16>, vector<512x64xf32> -> vector<512x64xf32>
    %c0_3 = arith.constant 0 : index
    %c0_4 = arith.constant 0 : index
    %3 = vector.load %arg4[%c0_3, %c0_4] : memref<1x64xf32, #tpu.memory_space<vmem>>, vector<1x64xf32>
    %4 = vector.broadcast %3 : vector<1x64xf32> to vector<512x64xf32>
    %5 = arith.addf %2, %4 : vector<512x64xf32>
    %cst_5 = arith.constant 0.000000e+00 : f32
    %6 = vector.broadcast %cst_5 : f32 to vector<512x64xf32>
    %7 = arith.cmpf oge, %5, %6 : vector<512x64xf32>
    %cst_6 = arith.constant 2.000000e-01 : f32
    %8 = vector.broadcast %cst_6 : f32 to vector<512x64xf32>
    %9 = arith.mulf %8, %5 : vector<512x64xf32>
    %10 = arith.select %7, %5, %9 : vector<512x64xi1>, vector<512x64xf32>
    %11 = arith.truncf %10 : vector<512x64xf32> to vector<512x64xbf16>
    %c0_7 = arith.constant 0 : index
    %c0_8 = arith.constant 0 : index
    %12 = vector.load %arg5[%c0_7, %c0_8] : memref<512x64xbf16, #tpu.memory_space<vmem>>, vector<512x64xbf16>
    tpu.vector_store %arg5[%c0_7, %c0_8], %11 {strides = array<i32>} : memref<512x64xbf16, #tpu.memory_space<vmem>>, vector<512x64xbf16>,
    return
  }
  func.func @transform_0(%arg0: i32, %arg1: i32) -> (i32, i32) {
    %c0_i32 = arith.constant 0 : i32
    %c0_i32_0 = arith.constant 0 : i32
    return %arg1, %c0_i32 : i32, i32
  }
  func.func @transform_1(%arg0: i32, %arg1: i32) -> (i32, i32) {
    %c0_i32 = arith.constant 0 : i32
    %c0_i32_0 = arith.constant 0 : i32
    return %c0_i32, %arg0 : i32, i32
  }
  func.func @transform_2(%arg0: i32, %arg1: i32) -> (i32, i32) {
    %c0_i32 = arith.constant 0 : i32
    %c0_i32_0 = arith.constant 0 : i32
    return %c0_i32, %arg0 : i32, i32
  }
  func.func @transform_3(%arg0: i32, %arg1: i32) -> (i32, i32) {
    %c0_i32 = arith.constant 0 : i32
    return %arg1, %arg0 : i32, i32
  }
}

module attributes {stable_mosaic.version = 11 : i64} {
  func.func @_conv_mm_kernel(%arg0: i32, %arg1: i32, %arg2: memref<128x1728xbf16, #tpu.memory_space<vmem>>, %arg3: memref<1728x128xbf16, #tpu.memory_space<vmem>>, %arg4: memref<1x128xf32, #tpu.memory_space<vmem>>, %arg5: memref<128x128xbf16, #tpu.memory_space<vmem>>) attributes {dimension_semantics = [#tpu.dimension_semantics<parallel>, #tpu.dimension_semantics<parallel>], iteration_bounds = array<i64: 1, 4>, scalar_prefetch = 0 : i64, scratch_operands = 0 : i64, tpu.core_type = #tpu.core_type<tc>, window_params = [{transform_indices = @transform_0, window_bounds = array<i64: 128, 1728>}, {transform_indices = @transform_1, window_bounds = array<i64: 1728, 128>}, {transform_indices = @transform_2, window_bounds = array<i64: 1, 128>}, {transform_indices = @transform_3, window_bounds = array<i64: 128, 128>}]} {
    %c0 = arith.constant 0 : index
    %c0_0 = arith.constant 0 : index
    %0 = vector.load %arg2[%c0, %c0_0] : memref<128x1728xbf16, #tpu.memory_space<vmem>>, vector<128x1728xbf16>
    %c0_1 = arith.constant 0 : index
    %c0_2 = arith.constant 0 : index
    %1 = vector.load %arg3[%c0_1, %c0_2] : memref<1728x128xbf16, #tpu.memory_space<vmem>>, vector<1728x128xbf16>
    %cst = arith.constant dense<0.000000e+00> : vector<128x128xf32>
    %2 = tpu.matmul %0, %1, %cst {dimension_numbers = #tpu.dot_dimension_numbers<[1], [0], [0], [1], [0, 0, 1, 1], [], []>} : vector<128x1728xbf16>, vector<1728x128xbf16>, vector<128x128xf32> -> vector<128x128xf32>
    %c0_3 = arith.constant 0 : index
    %c0_4 = arith.constant 0 : index
    %3 = vector.load %arg4[%c0_3, %c0_4] : memref<1x128xf32, #tpu.memory_space<vmem>>, vector<1x128xf32>
    %4 = vector.broadcast %3 : vector<1x128xf32> to vector<128x128xf32>
    %5 = arith.addf %2, %4 : vector<128x128xf32>
    %cst_5 = arith.constant 0.000000e+00 : f32
    %6 = vector.broadcast %cst_5 : f32 to vector<128x128xf32>
    %7 = arith.cmpf oge, %5, %6 : vector<128x128xf32>
    %cst_6 = arith.constant 2.000000e-01 : f32
    %8 = vector.broadcast %cst_6 : f32 to vector<128x128xf32>
    %9 = arith.mulf %8, %5 : vector<128x128xf32>
    %10 = arith.select %7, %5, %9 : vector<128x128xi1>, vector<128x128xf32>
    %11 = arith.truncf %10 : vector<128x128xf32> to vector<128x128xbf16>
    %c0_7 = arith.constant 0 : index
    %c0_8 = arith.constant 0 : index
    %12 = vector.load %arg5[%c0_7, %c0_8] : memref<128x128xbf16, #tpu.memory_space<vmem>>, vector<128x128xbf16>
    tpu.vector_store %arg5[%c0_7, %c0_8], %11 {strides = array<i32>} : memref<128x128xbf16, #tpu.memory_space<vmem>>, vector<128x128xbf16>,
    return
  }
  func.func @transform_0(%arg0: i32, %arg1: i32) -> (i32, i32) {
    %c0_i32 = arith.constant 0 : i32
    %c0_i32_0 = arith.constant 0 : i32
    return %arg1, %c0_i32 : i32, i32
  }
  func.func @transform_1(%arg0: i32, %arg1: i32) -> (i32, i32) {
    %c0_i32 = arith.constant 0 : i32
    %c0_i32_0 = arith.constant 0 : i32
    return %c0_i32, %arg0 : i32, i32
  }
  func.func @transform_2(%arg0: i32, %arg1: i32) -> (i32, i32) {
    %c0_i32 = arith.constant 0 : i32
    %c0_i32_0 = arith.constant 0 : i32
    return %c0_i32, %arg0 : i32, i32
  }
  func.func @transform_3(%arg0: i32, %arg1: i32) -> (i32, i32) {
    %c0_i32 = arith.constant 0 : i32
    return %arg1, %arg0 : i32, i32
  }
}

module attributes {stable_mosaic.version = 11 : i64} {
  func.func @_conv_mm_kernel(%arg0: i32, %arg1: i32, %arg2: memref<64x3456xbf16, #tpu.memory_space<vmem>>, %arg3: memref<3456x128xbf16, #tpu.memory_space<vmem>>, %arg4: memref<1x128xf32, #tpu.memory_space<vmem>>, %arg5: memref<64x128xbf16, #tpu.memory_space<vmem>>) attributes {dimension_semantics = [#tpu.dimension_semantics<parallel>, #tpu.dimension_semantics<parallel>], iteration_bounds = array<i64: 2, 2>, scalar_prefetch = 0 : i64, scratch_operands = 0 : i64, tpu.core_type = #tpu.core_type<tc>, window_params = [{transform_indices = @transform_0, window_bounds = array<i64: 64, 3456>}, {transform_indices = @transform_1, window_bounds = array<i64: 3456, 128>}, {transform_indices = @transform_2, window_bounds = array<i64: 1, 128>}, {transform_indices = @transform_3, window_bounds = array<i64: 64, 128>}]} {
    %c0 = arith.constant 0 : index
    %c0_0 = arith.constant 0 : index
    %0 = vector.load %arg2[%c0, %c0_0] : memref<64x3456xbf16, #tpu.memory_space<vmem>>, vector<64x3456xbf16>
    %c0_1 = arith.constant 0 : index
    %c0_2 = arith.constant 0 : index
    %1 = vector.load %arg3[%c0_1, %c0_2] : memref<3456x128xbf16, #tpu.memory_space<vmem>>, vector<3456x128xbf16>
    %cst = arith.constant dense<0.000000e+00> : vector<64x128xf32>
    %2 = tpu.matmul %0, %1, %cst {dimension_numbers = #tpu.dot_dimension_numbers<[1], [0], [0], [1], [0, 0, 1, 1], [], []>} : vector<64x3456xbf16>, vector<3456x128xbf16>, vector<64x128xf32> -> vector<64x128xf32>
    %c0_3 = arith.constant 0 : index
    %c0_4 = arith.constant 0 : index
    %3 = vector.load %arg4[%c0_3, %c0_4] : memref<1x128xf32, #tpu.memory_space<vmem>>, vector<1x128xf32>
    %4 = vector.broadcast %3 : vector<1x128xf32> to vector<64x128xf32>
    %5 = arith.addf %2, %4 : vector<64x128xf32>
    %cst_5 = arith.constant 0.000000e+00 : f32
    %6 = vector.broadcast %cst_5 : f32 to vector<64x128xf32>
    %7 = arith.cmpf oge, %5, %6 : vector<64x128xf32>
    %cst_6 = arith.constant 2.000000e-01 : f32
    %8 = vector.broadcast %cst_6 : f32 to vector<64x128xf32>
    %9 = arith.mulf %8, %5 : vector<64x128xf32>
    %10 = arith.select %7, %5, %9 : vector<64x128xi1>, vector<64x128xf32>
    %11 = arith.truncf %10 : vector<64x128xf32> to vector<64x128xbf16>
    %c0_7 = arith.constant 0 : index
    %c0_8 = arith.constant 0 : index
    %12 = vector.load %arg5[%c0_7, %c0_8] : memref<64x128xbf16, #tpu.memory_space<vmem>>, vector<64x128xbf16>
    tpu.vector_store %arg5[%c0_7, %c0_8], %11 {strides = array<i32>} : memref<64x128xbf16, #tpu.memory_space<vmem>>, vector<64x128xbf16>,
    return
  }
  func.func @transform_0(%arg0: i32, %arg1: i32) -> (i32, i32) {
    %c0_i32 = arith.constant 0 : i32
    %c0_i32_0 = arith.constant 0 : i32
    return %arg1, %c0_i32 : i32, i32
  }
  func.func @transform_1(%arg0: i32, %arg1: i32) -> (i32, i32) {
    %c0_i32 = arith.constant 0 : i32
    %c0_i32_0 = arith.constant 0 : i32
    return %c0_i32, %arg0 : i32, i32
  }
  func.func @transform_2(%arg0: i32, %arg1: i32) -> (i32, i32) {
    %c0_i32 = arith.constant 0 : i32
    %c0_i32_0 = arith.constant 0 : i32
    return %c0_i32, %arg0 : i32, i32
  }
  func.func @transform_3(%arg0: i32, %arg1: i32) -> (i32, i32) {
    %c0_i32 = arith.constant 0 : i32
    return %arg1, %arg0 : i32, i32
  }
}

</mosaic_0001>

<llo_original>
// kernel: _lambda_.3
$region0: #{_lambda_.3}
  #allocation0 [shape = 'u32[]', space=smem, size = 0x4, offset = 0x4, fixed_abs, tag = 'smem constant byte address 0x4 - core index']
  #allocation1 [shape = 'u32[144,128]{1,0:T(1,128)}', space=vmem, size = 0x12000, scoped, tag = 'internal scratch']
  %s0 = inlined_call_operand.vmem [shape: bf16[4096,864], index: 0, kind: input, shape index: {}]
  %s1 = inlined_call_operand.vmem [shape: bf16[864,64], index: 1, kind: input, shape index: {}]
  %s2 = inlined_call_operand.vmem [shape: f32[1,64], index: 2, kind: input, shape index: {}]
  %s3 = inlined_call_operand.vmem [shape: bf16[4096,64], index: 3, kind: output, shape index: {}]
  %s4 = sld [smem:[#allocation0]]
  $region45: #{_lambda_.3} parent=0
    _
  %s6 = ssub.s32 1, %s4
  %s7 = scalar_select 0, %s6, %s4
  loop: start=0, step=1, limit=10
  $region2: #{_lambda_.3} parent=0 // loop_pre_header
    _
  $region3: #{_lambda_.3} parent=0 // loop_header
    %s9 = sphi 0, %s13
    %p10 = scmp.ge.s32.totalorder %s9, 10
    %s16 = sphi 0, %s28
    %s17 = sphi 0, %s24
    %s18 = sphi 0, %s16
    %s19 = sphi 0, %s17
    %s20 = sphi 0, %s18
    %s21 = sphi 0, %s19
    %s31 = sphi 0, %s33
    %s34 = sphi 0, %s31
    %s35 = sphi 0, %s34
    %s51 = sphi 0, %s35
    %s57 = sphi 0, %s59
    %s60 = sphi 0, %s57
    %s61 = sphi 0, %s60
    %s77 = sphi 0, %s61
    %s83 = sphi 0, %s85
    %s86 = sphi 0, %s83
    %s87 = sphi 0, %s86
    %s103 = sphi 0, %s87
    %s111 = sphi 0, %s113
    %s114 = sphi 0, %s111
    %s115 = sphi 0, %s114
    %s131 = sphi 0, %s115
  $region4: #{_lambda_.3} parent=0 // loop_header_branch
    %12 = sbr.rel (%p10) target = $region8
  $region5: #{_lambda_.3} parent=0 // loop_body
    %s14 = ssub.s32 %s9, 1
    %s15 = ssub.s32 %s9, 2
    %s22 = sadd.s32 1, %s17
    %p23 = scmp.ge.s32.totalorder %s22, 8
    %s24 = scalar_select %p23, 0, %s22
    %s25 = sadd.s32 1, %s16
    %s26 = scalar_select %p23, %s25, %s16
    %p27 = scmp.ge.s32.totalorder %s26, 1
    %s28 = scalar_select %p27, 0, %s26
    %s29 = ssub.s32 %s17, %s24
    %p30 = scmp.eq.s32.totalorder %s29, 0
    %s32 = sadd.s32 %s31, 1
    %s33 = scalar_select %p30, %s31, %s32
    %p36 = pneg %p30
    %p37 = scmp.eq.s32.totalorder %s9, 7
    %p38 = por %p36, %p37
    %p39 = scmp.ne.s32.totalorder %s31, %s34
    %p40 = scmp.eq.s32.totalorder %s9, 0
    %p41 = por %p39, %p40
    %p42 = scmp.ne.s32.totalorder %s31, %s34
    %p43 = scmp.eq.s32.totalorder %s14, 7
    %p44 = por %p42, %p43
    %p45 = scmp.ne.s32.totalorder %s34, %s35
    %p46 = scmp.eq.s32.totalorder %s14, 0
    %p47 = por %p45, %p46
    %p48 = scmp.ne.s32.totalorder %s34, %s35
    %p49 = scmp.eq.s32.totalorder %s15, 7
    %p50 = por %p48, %p49
    %p52 = scmp.ne.s32.totalorder %s35, %s51
    %p53 = scmp.eq.s32.totalorder %s15, 0
    %p54 = por %p52, %p53
    %s55 = ssub.s32 %s16, %s28
    %p56 = scmp.eq.s32.totalorder %s55, 0
    %s58 = sadd.s32 %s57, 1
    %s59 = scalar_select %p56, %s57, %s58
    %p62 = pneg %p56
    %p63 = scmp.eq.s32.totalorder %s9, 7
    %p64 = por %p62, %p63
    %p65 = scmp.ne.s32.totalorder %s57, %s60
    %p66 = scmp.eq.s32.totalorder %s9, 0
    %p67 = por %p65, %p66
    %p68 = scmp.ne.s32.totalorder %s57, %s60
    %p69 = scmp.eq.s32.totalorder %s14, 7
    %p70 = por %p68, %p69
    %p71 = scmp.ne.s32.totalorder %s60, %s61
    %p72 = scmp.eq.s32.totalorder %s14, 0
    %p73 = por %p71, %p72
    %p74 = scmp.ne.s32.totalorder %s60, %s61
    %p75 = scmp.eq.s32.totalorder %s15, 7
    %p76 = por %p74, %p75
    %p78 = scmp.ne.s32.totalorder %s61, %s77
    %p79 = scmp.eq.s32.totalorder %s15, 0
    %p80 = por %p78, %p79
    %s81 = ssub.s32 %s16, %s28
    %p82 = scmp.eq.s32.totalorder %s81, 0
    %s84 = sadd.s32 %s83, 1
    %s85 = scalar_select %p82, %s83, %s84
    %p88 = pneg %p82
    %p89 = scmp.eq.s32.totalorder %s9, 7
    %p90 = por %p88, %p89
    %p91 = scmp.ne.s32.totalorder %s83, %s86
    %p92 = scmp.eq.s32.totalorder %s9, 0
    %p93 = por %p91, %p92
    %p94 = scmp.ne.s32.totalorder %s83, %s86
    %p95 = scmp.eq.s32.totalorder %s14, 7
    %p96 = por %p94, %p95
    %p97 = scmp.ne.s32.totalorder %s86, %s87
    %p98 = scmp.eq.s32.totalorder %s14, 0
    %p99 = por %p97, %p98
    %p100 = scmp.ne.s32.totalorder %s86, %s87
    %p101 = scmp.eq.s32.totalorder %s15, 7
    %p102 = por %p100, %p101
    %p104 = scmp.ne.s32.totalorder %s87, %s103
    %p105 = scmp.eq.s32.totalorder %s15, 0
    %p106 = por %p104, %p105
    %s107 = ssub.s32 %s17, %s24
    %s108 = ssub.s32 %s16, %s28
    %s109 = sor.u32 %s107, %s108
    %p110 = scmp.eq.s32.totalorder %s109, 0
    %s112 = sadd.s32 %s111, 1
    %s113 = scalar_select %p110, %s111, %s112
    %p116 = pneg %p110
    %p117 = scmp.eq.s32.totalorder %s9, 7
    %p118 = por %p116, %p117
    %p119 = scmp.ne.s32.totalorder %s111, %s114
    %p120 = scmp.eq.s32.totalorder %s9, 0
    %p121 = por %p119, %p120
    %p122 = scmp.ne.s32.totalorder %s111, %s114
    %p123 = scmp.eq.s32.totalorder %s14, 7
    %p124 = por %p122, %p123
    %p125 = scmp.ne.s32.totalorder %s114, %s115
    %p126 = scmp.eq.s32.totalorder %s14, 0
    %p127 = por %p125, %p126
    %p128 = scmp.ne.s32.totalorder %s114, %s115
    %p129 = scmp.eq.s32.totalorder %s15, 7
    %p130 = por %p128, %p129
    %p132 = scmp.ne.s32.totalorder %s115, %s131
    %p133 = scmp.eq.s32.totalorder %s15, 0
    %p134 = por %p132, %p133
    %p135 = scmp.le.s32.totalorder 1, %s9
    %p136 = scmp.lt.s32.totalorder %s9, 9
    %p137 = pnand %p135, %p136
    %p138 = pneg %p137
    // Predicated region
    $region9: #{_lambda_.3} parent=5 // pred_check
      _
    $region10: #{_lambda_.3} parent=5 // pred_check_branch
      %140 = sbr.rel (%p137) target = $region12
    $region11: #{_lambda_.3} parent=5 // pred_region
      %s141 = ssub.s32 %s9, 1
      // Predicated region
      $region13: #{_lambda_.3} parent=11 // pred_check
        %p142 = pneg %p73
      $region14: #{_lambda_.3} parent=11 // pred_check_branch
        %144 = sbr.rel (%p142) target = $region16
      $region15: #{_lambda_.3} parent=11 // pred_region
        %p145 = scmp.lt.s32.totalorder %s18, 0
        %s146 = scalar_select %p145, %s18, 0
        %s147 = smul.addr %s146, 4
        %s148 = scalar_lea.vmem %s1, %s147
      $region16: #{_lambda_.3} parent=11 // pred_fallthru
        _
      // Predicated region
      $region17: #{_lambda_.3} parent=11 // pred_check
        %p149 = pneg %p99
      $region18: #{_lambda_.3} parent=11 // pred_check_branch
        %151 = sbr.rel (%p149) target = $region20
      $region19: #{_lambda_.3} parent=11 // pred_region
        %p152 = scmp.lt.s32.totalorder %s18, 0
        %s153 = scalar_select %p152, %s18, 0
        %s154 = scalar_lea.vmem %s2, %s153
      $region20: #{_lambda_.3} parent=11 // pred_fallthru
        _
    $region12: #{_lambda_.3} parent=5 // pred_fallthru
      _
    %p155 = scmp.lt.s32.totalorder %s9, 8
    // Predicated region
    $region21: #{_lambda_.3} parent=5 // pred_check
      %p156 = pneg %p155
    $region22: #{_lambda_.3} parent=5 // pred_check_branch
      %158 = sbr.rel (%p156) target = $region24
    $region23: #{_lambda_.3} parent=5 // pred_region
      // Predicated region
      $region25: #{_lambda_.3} parent=23 // pred_check
        %p159 = pneg %p41
      $region26: #{_lambda_.3} parent=23 // pred_check_branch
        %161 = sbr.rel (%p159) target = $region28
      $region27: #{_lambda_.3} parent=23 // pred_region
        %s162 = smul.u32 64, %s17
        %p163 = scmp.lt.s32.totalorder %s162, 511
        %s164 = scalar_select %p163, %s162, 511
        %s165 = smul.addr %s164, 7
        %s166 = smul.addr %s165, 4
        %s167 = scalar_lea.vmem %s0, %s166
        %s168 = smul.u32 64, %s17
      $region28: #{_lambda_.3} parent=23 // pred_fallthru
        _
    $region24: #{_lambda_.3} parent=5 // pred_fallthru
      _
    %p169 = scmp.le.s32.totalorder 1, %s9
    %p170 = scmp.lt.s32.totalorder %s9, 9
    %p171 = pnand %p169, %p170
    %p172 = pneg %p171
    // Predicated region
    $region29: #{_lambda_.3} parent=5 // pred_check
      _
    $region30: #{_lambda_.3} parent=5 // pred_check_branch
      %174 = sbr.rel (%p171) target = $region32
    $region31: #{_lambda_.3} parent=5 // pred_region
      %s175 = ssub.s32 %s9, 1
      %s176 = smul.u32 64, %s19
      %p177 = scmp.lt.s32.totalorder %s176, 511
      %s178 = scalar_select %p177, %s176, 511
      %s179 = smul.addr %s178, 7
      %s180 = smul.addr %s179, 4
      %s181 = scalar_lea.vmem %s0, %s180
      %p182 = pneg %p47
      %p183 = pneg %p44
      %p184 = scmp.lt.s32.totalorder %s18, 0
      %s185 = scalar_select %p184, %s18, 0
      %s186 = smul.addr %s185, 4
      %s187 = scalar_lea.vmem %s1, %s186
      %p188 = pneg %p73
      %p189 = pneg %p70
      %p190 = scmp.lt.s32.totalorder %s18, 0
      %s191 = scalar_select %p190, %s18, 0
      %s192 = scalar_lea.vmem %s2, %s191
      %p193 = pneg %p99
      %p194 = pneg %p96
      %p195 = pneg %p127
      %p196 = pneg %p124
      %s197 = smul.u32 64, %s19
      %p198 = scmp.lt.s32.totalorder %s197, 511
      %s199 = scalar_select %p198, %s197, 511
      %p200 = scmp.lt.s32.totalorder %s18, 0
      %s201 = scalar_select %p200, %s18, 0
      %s202 = sadd.s32 %s201, %s199
      %s203 = smul.addr %s202, 4
      %s204 = scalar_lea.vmem %s3, %s203
      %s205 = smul.u32 64, %s19
      %p206 = scmp.lt.s32.totalorder %s205, 511
      %s207 = scalar_select %p206, %s205, 511
      %s208 = smul.addr %s207, 7
      %s209 = smul.addr %s208, 4
      %s210 = scalar_lea.vmem %s0, %s209
      %s211 = smul.u32 64, %s19
      %p212 = scmp.lt.s32.totalorder %s18, 0
      %s213 = scalar_select %p212, %s18, 0
      %s214 = smul.addr %s213, 4
      %s215 = scalar_lea.vmem %s1, %s214
      %p216 = scmp.lt.s32.totalorder %s18, 0
      %s217 = scalar_select %p216, %s18, 0
      %s218 = scalar_lea.vmem %s2, %s217
      %s219 = smul.u32 64, %s19
      %p220 = scmp.lt.s32.totalorder %s219, 511
      %s221 = scalar_select %p220, %s219, 511
      %p222 = scmp.lt.s32.totalorder %s18, 0
      %s223 = scalar_select %p222, %s18, 0
      %s224 = sadd.s32 %s223, %s221
      %s225 = smul.addr %s224, 4
      %s226 = scalar_lea.vmem %s3, %s225
      %s227 = smul.u32 64, %s19
      %v229 = vld [vmem:[%s210] sm:$0xff]
      %v230 = vld [vmem:[%s210 + $0x8] sm:$0xff]
      %v231 = vld [vmem:[%s210 + $0x10] sm:$0xff]
      %v232 = vld [vmem:[%s210 + $0x18] sm:$0xf]
      %v233 = vld [vmem:[%s210 + $0x1c] sm:$0xff]
      %v234 = vld [vmem:[%s210 + $0x24] sm:$0xff]
      %v235 = vld [vmem:[%s210 + $0x2c] sm:$0xff]
      %v236 = vld [vmem:[%s210 + $0x34] sm:$0xf]
      %v237 = vld [vmem:[%s210 + $0x38] sm:$0xff]
      %v238 = vld [vmem:[%s210 + $0x40] sm:$0xff]
      %v239 = vld [vmem:[%s210 + $0x48] sm:$0xff]
      %v240 = vld [vmem:[%s210 + $0x50] sm:$0xf]
      %v241 = vld [vmem:[%s210 + $0x54] sm:$0xff]
      %v242 = vld [vmem:[%s210 + $0x5c] sm:$0xff]
      %v243 = vld [vmem:[%s210 + $0x64] sm:$0xff]
      %v244 = vld [vmem:[%s210 + $0x6c] sm:$0xf]
      %v245 = vld [vmem:[%s210 + $0x70] sm:$0xff]
      %v246 = vld [vmem:[%s210 + $0x78] sm:$0xff]
      %v247 = vld [vmem:[%s210 + $0x80] sm:$0xff]
      %v248 = vld [vmem:[%s210 + $0x88] sm:$0xf]
      %v249 = vld [vmem:[%s210 + $0x8c] sm:$0xff]
      %v250 = vld [vmem:[%s210 + $0x94] sm:$0xff]
      %v251 = vld [vmem:[%s210 + $0x9c] sm:$0xff]
      %v252 = vld [vmem:[%s210 + $0xa4] sm:$0xf]
      %v253 = vld [vmem:[%s210 + $0xa8] sm:$0xff]
      %v254 = vld [vmem:[%s210 + $0xb0] sm:$0xff]
      %v255 = vld [vmem:[%s210 + $0xb8] sm:$0xff]
      %v256 = vld [vmem:[%s210 + $0xc0] sm:$0xf]
      %v257 = vld [vmem:[%s210 + $0xc4] sm:$0xff]
      %v258 = vld [vmem:[%s210 + $0xcc] sm:$0xff]
      %v259 = vld [vmem:[%s210 + $0xd4] sm:$0xff]
      %v260 = vld [vmem:[%s210 + $0xdc] sm:$0xf]
      %v261 = vld [vmem:[%s210 + $0xe0] sm:$0xff]
      %v262 = vld [vmem:[%s210 + $0xe8] sm:$0xff]
      %v263 = vld [vmem:[%s210 + $0xf0] sm:$0xff]
      %v264 = vld [vmem:[%s210 + $0xf8] sm:$0xf]
      %v265 = vld [vmem:[%s210 + $0xfc] sm:$0xff]
      %v266 = vld [vmem:[%s210 + $0x104] sm:$0xff]
      %v267 = vld [vmem:[%s210 + $0x10c] sm:$0xff]
      %v268 = vld [vmem:[%s210 + $0x114] sm:$0xf]
      %v269 = vld [vmem:[%s210 + $0x118] sm:$0xff]
      %v270 = vld [vmem:[%s210 + $0x120] sm:$0xff]
      %v271 = vld [vmem:[%s210 + $0x128] sm:$0xff]
      %v272 = vld [vmem:[%s210 + $0x130] sm:$0xf]
      %v273 = vld [vmem:[%s210 + $0x134] sm:$0xff]
      %v274 = vld [vmem:[%s210 + $0x13c] sm:$0xff]
      %v275 = vld [vmem:[%s210 + $0x144] sm:$0xff]
      %v276 = vld [vmem:[%s210 + $0x14c] sm:$0xf]
      %v277 = vld [vmem:[%s210 + $0x150] sm:$0xff]
      %v278 = vld [vmem:[%s210 + $0x158] sm:$0xff]
      %v279 = vld [vmem:[%s210 + $0x160] sm:$0xff]
      %v280 = vld [vmem:[%s210 + $0x168] sm:$0xf]
      %v281 = vld [vmem:[%s210 + $0x16c] sm:$0xff]
      %v282 = vld [vmem:[%s210 + $0x174] sm:$0xff]
      %v283 = vld [vmem:[%s210 + $0x17c] sm:$0xff]
      %v284 = vld [vmem:[%s210 + $0x184] sm:$0xf]
      %v285 = vld [vmem:[%s210 + $0x188] sm:$0xff]
      %v286 = vld [vmem:[%s210 + $0x190] sm:$0xff]
      %v287 = vld [vmem:[%s210 + $0x198] sm:$0xff]
      %v288 = vld [vmem:[%s210 + $0x1a0] sm:$0xf]
      %v289 = vld [vmem:[%s210 + $0x1a4] sm:$0xff]
      %v290 = vld [vmem:[%s210 + $0x1ac] sm:$0xff]
      %v291 = vld [vmem:[%s210 + $0x1b4] sm:$0xff]
      %v292 = vld [vmem:[%s210 + $0x1bc] sm:$0xf]
      %v293 = vld [vmem:[%s210 + $0x1c0] sm:$0xff]
      %v294 = vld [vmem:[%s210 + $0x1c8] sm:$0xff]
      %v295 = vld [vmem:[%s210 + $0x1d0] sm:$0xff]
      %v296 = vld [vmem:[%s210 + $0x1d8] sm:$0xf]
      %v297 = vld [vmem:[%s210 + $0x1dc] sm:$0xff]
      %v298 = vld [vmem:[%s210 + $0x1e4] sm:$0xff]
      %v299 = vld [vmem:[%s210 + $0x1ec] sm:$0xff]
      %v300 = vld [vmem:[%s210 + $0x1f4] sm:$0xf]
      %v301 = vld [vmem:[%s210 + $0x1f8] sm:$0xff]
      %v302 = vld [vmem:[%s210 + $0x200] sm:$0xff]
      %v303 = vld [vmem:[%s210 + $0x208] sm:$0xff]
      %v304 = vld [vmem:[%s210 + $0x210] sm:$0xf]
      %v305 = vld [vmem:[%s210 + $0x214] sm:$0xff]
      %v306 = vld [vmem:[%s210 + $0x21c] sm:$0xff]
      %v307 = vld [vmem:[%s210 + $0x224] sm:$0xff]
      %v308 = vld [vmem:[%s210 + $0x22c] sm:$0xf]
      %v309 = vld [vmem:[%s210 + $0x230] sm:$0xff]
      %v310 = vld [vmem:[%s210 + $0x238] sm:$0xff]
      %v311 = vld [vmem:[%s210 + $0x240] sm:$0xff]
      %v312 = vld [vmem:[%s210 + $0x248] sm:$0xf]
      %v313 = vld [vmem:[%s210 + $0x24c] sm:$0xff]
      %v314 = vld [vmem:[%s210 + $0x254] sm:$0xff]
      %v315 = vld [vmem:[%s210 + $0x25c] sm:$0xff]
      %v316 = vld [vmem:[%s210 + $0x264] sm:$0xf]
      %v317 = vld [vmem:[%s210 + $0x268] sm:$0xff]
      %v318 = vld [vmem:[%s210 + $0x270] sm:$0xff]
      %v319 = vld [vmem:[%s210 + $0x278] sm:$0xff]
      %v320 = vld [vmem:[%s210 + $0x280] sm:$0xf]
      %v321 = vld [vmem:[%s210 + $0x284] sm:$0xff]
      %v322 = vld [vmem:[%s210 + $0x28c] sm:$0xff]
      %v323 = vld [vmem:[%s210 + $0x294] sm:$0xff]
      %v324 = vld [vmem:[%s210 + $0x29c] sm:$0xf]
      %v325 = vld [vmem:[%s210 + $0x2a0] sm:$0xff]
      %v326 = vld [vmem:[%s210 + $0x2a8] sm:$0xff]
      %v327 = vld [vmem:[%s210 + $0x2b0] sm:$0xff]
      %v328 = vld [vmem:[%s210 + $0x2b8] sm:$0xf]
      %v329 = vld [vmem:[%s210 + $0x2bc] sm:$0xff]
      %v330 = vld [vmem:[%s210 + $0x2c4] sm:$0xff]
      %v331 = vld [vmem:[%s210 + $0x2cc] sm:$0xff]
      %v332 = vld [vmem:[%s210 + $0x2d4] sm:$0xf]
      %v333 = vld [vmem:[%s210 + $0x2d8] sm:$0xff]
      %v334 = vld [vmem:[%s210 + $0x2e0] sm:$0xff]
      %v335 = vld [vmem:[%s210 + $0x2e8] sm:$0xff]
      %v336 = vld [vmem:[%s210 + $0x2f0] sm:$0xf]
      %v337 = vld [vmem:[%s210 + $0x2f4] sm:$0xff]
      %v338 = vld [vmem:[%s210 + $0x2fc] sm:$0xff]
      %v339 = vld [vmem:[%s210 + $0x304] sm:$0xff]
      %v340 = vld [vmem:[%s210 + $0x30c] sm:$0xf]
      %v341 = vld [vmem:[%s210 + $0x310] sm:$0xff]
      %v342 = vld [vmem:[%s210 + $0x318] sm:$0xff]
      %v343 = vld [vmem:[%s210 + $0x320] sm:$0xff]
      %v344 = vld [vmem:[%s210 + $0x328] sm:$0xf]
      %v345 = vld [vmem:[%s210 + $0x32c] sm:$0xff]
      %v346 = vld [vmem:[%s210 + $0x334] sm:$0xff]
      %v347 = vld [vmem:[%s210 + $0x33c] sm:$0xff]
      %v348 = vld [vmem:[%s210 + $0x344] sm:$0xf]
      %v349 = vld [vmem:[%s210 + $0x348] sm:$0xff]
      %v350 = vld [vmem:[%s210 + $0x350] sm:$0xff]
      %v351 = vld [vmem:[%s210 + $0x358] sm:$0xff]
      %v352 = vld [vmem:[%s210 + $0x360] sm:$0xf]
      %v353 = vld [vmem:[%s210 + $0x364] sm:$0xff]
      %v354 = vld [vmem:[%s210 + $0x36c] sm:$0xff]
      %v355 = vld [vmem:[%s210 + $0x374] sm:$0xff]
      %v356 = vld [vmem:[%s210 + $0x37c] sm:$0xf]
      %v357 = vld [vmem:[%s210 + $0x380] sm:$0xff]
      %v358 = vld [vmem:[%s210 + $0x388] sm:$0xff]
      %v359 = vld [vmem:[%s210 + $0x390] sm:$0xff]
      %v360 = vld [vmem:[%s210 + $0x398] sm:$0xf]
      %v361 = vld [vmem:[%s210 + $0x39c] sm:$0xff]
      %v362 = vld [vmem:[%s210 + $0x3a4] sm:$0xff]
      %v363 = vld [vmem:[%s210 + $0x3ac] sm:$0xff]
      %v364 = vld [vmem:[%s210 + $0x3b4] sm:$0xf]
      %v365 = vld [vmem:[%s210 + $0x3b8] sm:$0xff]
      %v366 = vld [vmem:[%s210 + $0x3c0] sm:$0xff]
      %v367 = vld [vmem:[%s210 + $0x3c8] sm:$0xff]
      %v368 = vld [vmem:[%s210 + $0x3d0] sm:$0xf]
      %v369 = vld [vmem:[%s210 + $0x3d4] sm:$0xff]
      %v370 = vld [vmem:[%s210 + $0x3dc] sm:$0xff]
      %v371 = vld [vmem:[%s210 + $0x3e4] sm:$0xff]
      %v372 = vld [vmem:[%s210 + $0x3ec] sm:$0xf]
      %v373 = vld [vmem:[%s210 + $0x3f0] sm:$0xff]
      %v374 = vld [vmem:[%s210 + $0x3f8] sm:$0xff]
      %v375 = vld [vmem:[%s210 + $0x400] sm:$0xff]
      %v376 = vld [vmem:[%s210 + $0x408] sm:$0xf]
      %v377 = vld [vmem:[%s210 + $0x40c] sm:$0xff]
      %v378 = vld [vmem:[%s210 + $0x414] sm:$0xff]
      %v379 = vld [vmem:[%s210 + $0x41c] sm:$0xff]
      %v380 = vld [vmem:[%s210 + $0x424] sm:$0xf]
      %v381 = vld [vmem:[%s210 + $0x428] sm:$0xff]
      %v382 = vld [vmem:[%s210 + $0x430] sm:$0xff]
      %v383 = vld [vmem:[%s210 + $0x438] sm:$0xff]
      %v384 = vld [vmem:[%s210 + $0x440] sm:$0xf]
      %v385 = vld [vmem:[%s210 + $0x444] sm:$0xff]
      %v386 = vld [vmem:[%s210 + $0x44c] sm:$0xff]
      %v387 = vld [vmem:[%s210 + $0x454] sm:$0xff]
      %v388 = vld [vmem:[%s210 + $0x45c] sm:$0xf]
      %v389 = vld [vmem:[%s210 + $0x460] sm:$0xff]
      %v390 = vld [vmem:[%s210 + $0x468] sm:$0xff]
      %v391 = vld [vmem:[%s210 + $0x470] sm:$0xff]
      %v392 = vld [vmem:[%s210 + $0x478] sm:$0xf]
      %v393 = vld [vmem:[%s210 + $0x47c] sm:$0xff]
      %v394 = vld [vmem:[%s210 + $0x484] sm:$0xff]
      %v395 = vld [vmem:[%s210 + $0x48c] sm:$0xff]
      %v396 = vld [vmem:[%s210 + $0x494] sm:$0xf]
      %v397 = vld [vmem:[%s210 + $0x498] sm:$0xff]
      %v398 = vld [vmem:[%s210 + $0x4a0] sm:$0xff]
      %v399 = vld [vmem:[%s210 + $0x4a8] sm:$0xff]
      %v400 = vld [vmem:[%s210 + $0x4b0] sm:$0xf]
      %v401 = vld [vmem:[%s210 + $0x4b4] sm:$0xff]
      %v402 = vld [vmem:[%s210 + $0x4bc] sm:$0xff]
      %v403 = vld [vmem:[%s210 + $0x4c4] sm:$0xff]
      %v404 = vld [vmem:[%s210 + $0x4cc] sm:$0xf]
      %v405 = vld [vmem:[%s210 + $0x4d0] sm:$0xff]
      %v406 = vld [vmem:[%s210 + $0x4d8] sm:$0xff]
      %v407 = vld [vmem:[%s210 + $0x4e0] sm:$0xff]
      %v408 = vld [vmem:[%s210 + $0x4e8] sm:$0xf]
      %v409 = vld [vmem:[%s210 + $0x4ec] sm:$0xff]
      %v410 = vld [vmem:[%s210 + $0x4f4] sm:$0xff]
      %v411 = vld [vmem:[%s210 + $0x4fc] sm:$0xff]
      %v412 = vld [vmem:[%s210 + $0x504] sm:$0xf]
      %v413 = vld [vmem:[%s210 + $0x508] sm:$0xff]
      %v414 = vld [vmem:[%s210 + $0x510] sm:$0xff]
      %v415 = vld [vmem:[%s210 + $0x518] sm:$0xff]
      %v416 = vld [vmem:[%s210 + $0x520] sm:$0xf]
      %v417 = vld [vmem:[%s210 + $0x524] sm:$0xff]
      %v418 = vld [vmem:[%s210 + $0x52c] sm:$0xff]
      %v419 = vld [vmem:[%s210 + $0x534] sm:$0xff]
      %v420 = vld [vmem:[%s210 + $0x53c] sm:$0xf]
      %v421 = vld [vmem:[%s210 + $0x540] sm:$0xff]
      %v422 = vld [vmem:[%s210 + $0x548] sm:$0xff]
      %v423 = vld [vmem:[%s210 + $0x550] sm:$0xff]
      %v424 = vld [vmem:[%s210 + $0x558] sm:$0xf]
      %v425 = vld [vmem:[%s210 + $0x55c] sm:$0xff]
      %v426 = vld [vmem:[%s210 + $0x564] sm:$0xff]
      %v427 = vld [vmem:[%s210 + $0x56c] sm:$0xff]
      %v428 = vld [vmem:[%s210 + $0x574] sm:$0xf]
      %v429 = vld [vmem:[%s210 + $0x578] sm:$0xff]
      %v430 = vld [vmem:[%s210 + $0x580] sm:$0xff]
      %v431 = vld [vmem:[%s210 + $0x588] sm:$0xff]
      %v432 = vld [vmem:[%s210 + $0x590] sm:$0xf]
      %v433 = vld [vmem:[%s210 + $0x594] sm:$0xff]
      %v434 = vld [vmem:[%s210 + $0x59c] sm:$0xff]
      %v435 = vld [vmem:[%s210 + $0x5a4] sm:$0xff]
      %v436 = vld [vmem:[%s210 + $0x5ac] sm:$0xf]
      %v437 = vld [vmem:[%s210 + $0x5b0] sm:$0xff]
      %v438 = vld [vmem:[%s210 + $0x5b8] sm:$0xff]
      %v439 = vld [vmem:[%s210 + $0x5c0] sm:$0xff]
      %v440 = vld [vmem:[%s210 + $0x5c8] sm:$0xf]
      %v441 = vld [vmem:[%s210 + $0x5cc] sm:$0xff]
      %v442 = vld [vmem:[%s210 + $0x5d4] sm:$0xff]
      %v443 = vld [vmem:[%s210 + $0x5dc] sm:$0xff]
      %v444 = vld [vmem:[%s210 + $0x5e4] sm:$0xf]
      %v445 = vld [vmem:[%s210 + $0x5e8] sm:$0xff]
      %v446 = vld [vmem:[%s210 + $0x5f0] sm:$0xff]
      %v447 = vld [vmem:[%s210 + $0x5f8] sm:$0xff]
      %v448 = vld [vmem:[%s210 + $0x600] sm:$0xf]
      %v449 = vld [vmem:[%s210 + $0x604] sm:$0xff]
      %v450 = vld [vmem:[%s210 + $0x60c] sm:$0xff]
      %v451 = vld [vmem:[%s210 + $0x614] sm:$0xff]
      %v452 = vld [vmem:[%s210 + $0x61c] sm:$0xf]
      %v453 = vld [vmem:[%s210 + $0x620] sm:$0xff]
      %v454 = vld [vmem:[%s210 + $0x628] sm:$0xff]
      %v455 = vld [vmem:[%s210 + $0x630] sm:$0xff]
      %v456 = vld [vmem:[%s210 + $0x638] sm:$0xf]
      %v457 = vld [vmem:[%s210 + $0x63c] sm:$0xff]
      %v458 = vld [vmem:[%s210 + $0x644] sm:$0xff]
      %v459 = vld [vmem:[%s210 + $0x64c] sm:$0xff]
      %v460 = vld [vmem:[%s210 + $0x654] sm:$0xf]
      %v461 = vld [vmem:[%s210 + $0x658] sm:$0xff]
      %v462 = vld [vmem:[%s210 + $0x660] sm:$0xff]
      %v463 = vld [vmem:[%s210 + $0x668] sm:$0xff]
      %v464 = vld [vmem:[%s210 + $0x670] sm:$0xf]
      %v465 = vld [vmem:[%s210 + $0x674] sm:$0xff]
      %v466 = vld [vmem:[%s210 + $0x67c] sm:$0xff]
      %v467 = vld [vmem:[%s210 + $0x684] sm:$0xff]
      %v468 = vld [vmem:[%s210 + $0x68c] sm:$0xf]
      %v469 = vld [vmem:[%s210 + $0x690] sm:$0xff]
      %v470 = vld [vmem:[%s210 + $0x698] sm:$0xff]
      %v471 = vld [vmem:[%s210 + $0x6a0] sm:$0xff]
      %v472 = vld [vmem:[%s210 + $0x6a8] sm:$0xf]
      %v473 = vld [vmem:[%s210 + $0x6ac] sm:$0xff]
      %v474 = vld [vmem:[%s210 + $0x6b4] sm:$0xff]
      %v475 = vld [vmem:[%s210 + $0x6bc] sm:$0xff]
      %v476 = vld [vmem:[%s210 + $0x6c4] sm:$0xf]
      %v477 = vld [vmem:[%s210 + $0x6c8] sm:$0xff]
      %v478 = vld [vmem:[%s210 + $0x6d0] sm:$0xff]
      %v479 = vld [vmem:[%s210 + $0x6d8] sm:$0xff]
      %v480 = vld [vmem:[%s210 + $0x6e0] sm:$0xf]
      %v481 = vld [vmem:[%s210 + $0x6e4] sm:$0xff]
      %v482 = vld [vmem:[%s210 + $0x6ec] sm:$0xff]
      %v483 = vld [vmem:[%s210 + $0x6f4] sm:$0xff]
      %v484 = vld [vmem:[%s210 + $0x6fc] sm:$0xf]
      %v485 = vld [vmem:[%s215] sm:$0xf]
      %v486 = vld [vmem:[%s215 + $0x4] sm:$0xf]
      %v487 = vld [vmem:[%s215 + $0x8] sm:$0xf]
      %v488 = vld [vmem:[%s215 + $0xc] sm:$0xf]
      %v489 = vld [vmem:[%s215 + $0x10] sm:$0xf]
      %v490 = vld [vmem:[%s215 + $0x14] sm:$0xf]
      %v491 = vld [vmem:[%s215 + $0x18] sm:$0xf]
      %v492 = vld [vmem:[%s215 + $0x1c] sm:$0xf]
      %v493 = vld [vmem:[%s215 + $0x20] sm:$0xf]
      %v494 = vld [vmem:[%s215 + $0x24] sm:$0xf]
      %v495 = vld [vmem:[%s215 + $0x28] sm:$0xf]
      %v496 = vld [vmem:[%s215 + $0x2c] sm:$0xf]
      %v497 = vld [vmem:[%s215 + $0x30] sm:$0xf]
      %v498 = vld [vmem:[%s215 + $0x34] sm:$0xf]
      %v499 = vld [vmem:[%s215 + $0x38] sm:$0xf]
      %v500 = vld [vmem:[%s215 + $0x3c] sm:$0xf]
      %v501 = vld [vmem:[%s215 + $0x40] sm:$0xf]
      %v502 = vld [vmem:[%s215 + $0x44] sm:$0xf]
      %v503 = vld [vmem:[%s215 + $0x48] sm:$0xf]
      %v504 = vld [vmem:[%s215 + $0x4c] sm:$0xf]
      %v505 = vld [vmem:[%s215 + $0x50] sm:$0xf]
      %v506 = vld [vmem:[%s215 + $0x54] sm:$0xf]
      %v507 = vld [vmem:[%s215 + $0x58] sm:$0xf]
      %v508 = vld [vmem:[%s215 + $0x5c] sm:$0xf]
      %v509 = vld [vmem:[%s215 + $0x60] sm:$0xf]
      %v510 = vld [vmem:[%s215 + $0x64] sm:$0xf]
      %v511 = vld [vmem:[%s215 + $0x68] sm:$0xf]
      %v512 = vld [vmem:[%s215 + $0x6c] sm:$0xf]
      %v513 = vld [vmem:[%s215 + $0x70] sm:$0xf]
      %v514 = vld [vmem:[%s215 + $0x74] sm:$0xf]
      %v515 = vld [vmem:[%s215 + $0x78] sm:$0xf]
      %v516 = vld [vmem:[%s215 + $0x7c] sm:$0xf]
      %v517 = vld [vmem:[%s215 + $0x80] sm:$0xf]
      %v518 = vld [vmem:[%s215 + $0x84] sm:$0xf]
      %v519 = vld [vmem:[%s215 + $0x88] sm:$0xf]
      %v520 = vld [vmem:[%s215 + $0x8c] sm:$0xf]
      %v521 = vld [vmem:[%s215 + $0x90] sm:$0xf]
      %v522 = vld [vmem:[%s215 + $0x94] sm:$0xf]
      %v523 = vld [vmem:[%s215 + $0x98] sm:$0xf]
      %v524 = vld [vmem:[%s215 + $0x9c] sm:$0xf]
      %v525 = vld [vmem:[%s215 + $0xa0] sm:$0xf]
      %v526 = vld [vmem:[%s215 + $0xa4] sm:$0xf]
      %v527 = vld [vmem:[%s215 + $0xa8] sm:$0xf]
      %v528 = vld [vmem:[%s215 + $0xac] sm:$0xf]
      %v529 = vld [vmem:[%s215 + $0xb0] sm:$0xf]
      %v530 = vld [vmem:[%s215 + $0xb4] sm:$0xf]
      %v531 = vld [vmem:[%s215 + $0xb8] sm:$0xf]
      %v532 = vld [vmem:[%s215 + $0xbc] sm:$0xf]
      %v533 = vld [vmem:[%s215 + $0xc0] sm:$0xf]
      %v534 = vld [vmem:[%s215 + $0xc4] sm:$0xf]
      %v535 = vld [vmem:[%s215 + $0xc8] sm:$0xf]
      %v536 = vld [vmem:[%s215 + $0xcc] sm:$0xf]
      %v537 = vld [vmem:[%s215 + $0xd0] sm:$0xf]
      %v538 = vld [vmem:[%s215 + $0xd4] sm:$0xf]
      %v539 = vld [vmem:[%s215 + $0xd8] sm:$0xf]
      %v540 = vld [vmem:[%s215 + $0xdc] sm:$0xf]
      %v541 = vld [vmem:[%s215 + $0xe0] sm:$0xf]
      %v542 = vld [vmem:[%s215 + $0xe4] sm:$0xf]
      %v543 = vld [vmem:[%s215 + $0xe8] sm:$0xf]
      %v544 = vld [vmem:[%s215 + $0xec] sm:$0xf]
      %v545 = vld [vmem:[%s215 + $0xf0] sm:$0xf]
      %v546 = vld [vmem:[%s215 + $0xf4] sm:$0xf]
      %v547 = vld [vmem:[%s215 + $0xf8] sm:$0xf]
      %v548 = vld [vmem:[%s215 + $0xfc] sm:$0xf]
      %v549 = vld [vmem:[%s215 + $0x100] sm:$0xf]
      %v550 = vld [vmem:[%s215 + $0x104] sm:$0xf]
      %v551 = vld [vmem:[%s215 + $0x108] sm:$0xf]
      %v552 = vld [vmem:[%s215 + $0x10c] sm:$0xf]
      %v553 = vld [vmem:[%s215 + $0x110] sm:$0xf]
      %v554 = vld [vmem:[%s215 + $0x114] sm:$0xf]
      %v555 = vld [vmem:[%s215 + $0x118] sm:$0xf]
      %v556 = vld [vmem:[%s215 + $0x11c] sm:$0xf]
      %v557 = vld [vmem:[%s215 + $0x120] sm:$0xf]
      %v558 = vld [vmem:[%s215 + $0x124] sm:$0xf]
      %v559 = vld [vmem:[%s215 + $0x128] sm:$0xf]
      %v560 = vld [vmem:[%s215 + $0x12c] sm:$0xf]
      %v561 = vld [vmem:[%s215 + $0x130] sm:$0xf]
      %v562 = vld [vmem:[%s215 + $0x134] sm:$0xf]
      %v563 = vld [vmem:[%s215 + $0x138] sm:$0xf]
      %v564 = vld [vmem:[%s215 + $0x13c] sm:$0xf]
      %v565 = vld [vmem:[%s215 + $0x140] sm:$0xf]
      %v566 = vld [vmem:[%s215 + $0x144] sm:$0xf]
      %v567 = vld [vmem:[%s215 + $0x148] sm:$0xf]
      %v568 = vld [vmem:[%s215 + $0x14c] sm:$0xf]
      %v569 = vld [vmem:[%s215 + $0x150] sm:$0xf]
      %v570 = vld [vmem:[%s215 + $0x154] sm:$0xf]
      %v571 = vld [vmem:[%s215 + $0x158] sm:$0xf]
      %v572 = vld [vmem:[%s215 + $0x15c] sm:$0xf]
      %v573 = vld [vmem:[%s215 + $0x160] sm:$0xf]
      %v574 = vld [vmem:[%s215 + $0x164] sm:$0xf]
      %v575 = vld [vmem:[%s215 + $0x168] sm:$0xf]
      %v576 = vld [vmem:[%s215 + $0x16c] sm:$0xf]
      %v577 = vld [vmem:[%s215 + $0x170] sm:$0xf]
      %v578 = vld [vmem:[%s215 + $0x174] sm:$0xf]
      %v579 = vld [vmem:[%s215 + $0x178] sm:$0xf]
      %v580 = vld [vmem:[%s215 + $0x17c] sm:$0xf]
      %v581 = vld [vmem:[%s215 + $0x180] sm:$0xf]
      %v582 = vld [vmem:[%s215 + $0x184] sm:$0xf]
      %v583 = vld [vmem:[%s215 + $0x188] sm:$0xf]
      %v584 = vld [vmem:[%s215 + $0x18c] sm:$0xf]
      %v585 = vld [vmem:[%s215 + $0x190] sm:$0xf]
      %v586 = vld [vmem:[%s215 + $0x194] sm:$0xf]
      %v587 = vld [vmem:[%s215 + $0x198] sm:$0xf]
      %v588 = vld [vmem:[%s215 + $0x19c] sm:$0xf]
      %v589 = vld [vmem:[%s215 + $0x1a0] sm:$0xf]
      %v590 = vld [vmem:[%s215 + $0x1a4] sm:$0xf]
      %v591 = vld [vmem:[%s215 + $0x1a8] sm:$0xf]
      %v592 = vld [vmem:[%s215 + $0x1ac] sm:$0xf]
      %v593 = vld [vmem:[%s218] sm:$0x1]
      %v595 = vlaneseq
      %v596 = vshrl.u32 %v595, 7
      %v597 = vsub.s32 0, %v596
      %v598 = vrot.slane %v593, %v597
      %v856 = vunpack.c.l.b16 %v229
      %v857 = vunpack.c.h.b16 %v229
      %v858 = vunpack.c.l.b16 %v230
      %v859 = vunpack.c.h.b16 %v230
      %v860 = vunpack.c.l.b16 %v231
      %v861 = vunpack.c.h.b16 %v231
      %v862 = vunpack.c.l.b16 %v232
      %v863 = vunpack.c.l.b16 %v233
      %v864 = vunpack.c.h.b16 %v233
      %v865 = vunpack.c.l.b16 %v234
      %v866 = vunpack.c.h.b16 %v234
      %v867 = vunpack.c.l.b16 %v235
      %v868 = vunpack.c.h.b16 %v235
      %v869 = vunpack.c.l.b16 %v236
      %v870 = vunpack.c.l.b16 %v237
      %v871 = vunpack.c.h.b16 %v237
      %v872 = vunpack.c.l.b16 %v238
      %v873 = vunpack.c.h.b16 %v238
      %v874 = vunpack.c.l.b16 %v239
      %v875 = vunpack.c.h.b16 %v239
      %v876 = vunpack.c.l.b16 %v240
      %v877 = vunpack.c.l.b16 %v241
      %v878 = vunpack.c.h.b16 %v241
      %v879 = vunpack.c.l.b16 %v242
      %v880 = vunpack.c.h.b16 %v242
      %v881 = vunpack.c.l.b16 %v243
      %v882 = vunpack.c.h.b16 %v243
      %v883 = vunpack.c.l.b16 %v244
      %v884 = vunpack.c.l.b16 %v245
      %v885 = vunpack.c.h.b16 %v245
      %v886 = vunpack.c.l.b16 %v246
      %v887 = vunpack.c.h.b16 %v246
      %v888 = vunpack.c.l.b16 %v247
      %v889 = vunpack.c.h.b16 %v247
      %v890 = vunpack.c.l.b16 %v248
      %v891 = vunpack.c.l.b16 %v249
      %v892 = vunpack.c.h.b16 %v249
      %v893 = vunpack.c.l.b16 %v250
      %v894 = vunpack.c.h.b16 %v250
      %v895 = vunpack.c.l.b16 %v251
      %v896 = vunpack.c.h.b16 %v251
      %v897 = vunpack.c.l.b16 %v252
      %v898 = vunpack.c.l.b16 %v253
      %v899 = vunpack.c.h.b16 %v253
      %v900 = vunpack.c.l.b16 %v254
      %v901 = vunpack.c.h.b16 %v254
      %v902 = vunpack.c.l.b16 %v255
      %v903 = vunpack.c.h.b16 %v255
      %v904 = vunpack.c.l.b16 %v256
      %v905 = vunpack.c.l.b16 %v257
      %v906 = vunpack.c.h.b16 %v257
      %v907 = vunpack.c.l.b16 %v258
      %v908 = vunpack.c.h.b16 %v258
      %v909 = vunpack.c.l.b16 %v259
      %v910 = vunpack.c.h.b16 %v259
      %v911 = vunpack.c.l.b16 %v260
      %v912 = vunpack.c.l.b16 %v261
      %v913 = vunpack.c.h.b16 %v261
      %v914 = vunpack.c.l.b16 %v262
      %v915 = vunpack.c.h.b16 %v262
      %v916 = vunpack.c.l.b16 %v263
      %v917 = vunpack.c.h.b16 %v263
      %v918 = vunpack.c.l.b16 %v264
      %v919 = vunpack.c.l.b16 %v265
      %v920 = vunpack.c.h.b16 %v265
      %v921 = vunpack.c.l.b16 %v266
      %v922 = vunpack.c.h.b16 %v266
      %v923 = vunpack.c.l.b16 %v267
      %v924 = vunpack.c.h.b16 %v267
      %v925 = vunpack.c.l.b16 %v268
      %v926 = vunpack.c.l.b16 %v269
      %v927 = vunpack.c.h.b16 %v269
      %v928 = vunpack.c.l.b16 %v270
      %v929 = vunpack.c.h.b16 %v270
      %v930 = vunpack.c.l.b16 %v271
      %v931 = vunpack.c.h.b16 %v271
      %v932 = vunpack.c.l.b16 %v272
      %v933 = vunpack.c.l.b16 %v273
      %v934 = vunpack.c.h.b16 %v273
      %v935 = vunpack.c.l.b16 %v274
      %v936 = vunpack.c.h.b16 %v274
      %v937 = vunpack.c.l.b16 %v275
      %v938 = vunpack.c.h.b16 %v275
      %v939 = vunpack.c.l.b16 %v276
      %v940 = vunpack.c.l.b16 %v277
      %v941 = vunpack.c.h.b16 %v277
      %v942 = vunpack.c.l.b16 %v278
      %v943 = vunpack.c.h.b16 %v278
      %v944 = vunpack.c.l.b16 %v279
      %v945 = vunpack.c.h.b16 %v279
      %v946 = vunpack.c.l.b16 %v280
      %v947 = vunpack.c.l.b16 %v281
      %v948 = vunpack.c.h.b16 %v281
      %v949 = vunpack.c.l.b16 %v282
      %v950 = vunpack.c.h.b16 %v282
      %v951 = vunpack.c.l.b16 %v283
      %v952 = vunpack.c.h.b16 %v283
      %v953 = vunpack.c.l.b16 %v284
      %v954 = vunpack.c.l.b16 %v285
      %v955 = vunpack.c.h.b16 %v285
      %v956 = vunpack.c.l.b16 %v286
      %v957 = vunpack.c.h.b16 %v286
      %v958 = vunpack.c.l.b16 %v287
      %v959 = vunpack.c.h.b16 %v287
      %v960 = vunpack.c.l.b16 %v288
      %v961 = vunpack.c.l.b16 %v289
      %v962 = vunpack.c.h.b16 %v289
      %v963 = vunpack.c.l.b16 %v290
      %v964 = vunpack.c.h.b16 %v290
      %v965 = vunpack.c.l.b16 %v291
      %v966 = vunpack.c.h.b16 %v291
      %v967 = vunpack.c.l.b16 %v292
      %v968 = vunpack.c.l.b16 %v293
      %v969 = vunpack.c.h.b16 %v293
      %v970 = vunpack.c.l.b16 %v294
      %v971 = vunpack.c.h.b16 %v294
      %v972 = vunpack.c.l.b16 %v295
      %v973 = vunpack.c.h.b16 %v295
      %v974 = vunpack.c.l.b16 %v296
      %v975 = vunpack.c.l.b16 %v297
      %v976 = vunpack.c.h.b16 %v297
      %v977 = vunpack.c.l.b16 %v298
      %v978 = vunpack.c.h.b16 %v298
      %v979 = vunpack.c.l.b16 %v299
      %v980 = vunpack.c.h.b16 %v299
      %v981 = vunpack.c.l.b16 %v300
      %v982 = vunpack.c.l.b16 %v301
      %v983 = vunpack.c.h.b16 %v301
      %v984 = vunpack.c.l.b16 %v302
      %v985 = vunpack.c.h.b16 %v302
      %v986 = vunpack.c.l.b16 %v303
      %v987 = vunpack.c.h.b16 %v303
      %v988 = vunpack.c.l.b16 %v304
      %v989 = vunpack.c.l.b16 %v305
      %v990 = vunpack.c.h.b16 %v305
      %v991 = vunpack.c.l.b16 %v306
      %v992 = vunpack.c.h.b16 %v306
      %v993 = vunpack.c.l.b16 %v307
      %v994 = vunpack.c.h.b16 %v307
      %v995 = vunpack.c.l.b16 %v308
      %v996 = vunpack.c.l.b16 %v309
      %v997 = vunpack.c.h.b16 %v309
      %v998 = vunpack.c.l.b16 %v310
      %v999 = vunpack.c.h.b16 %v310
      %v1000 = vunpack.c.l.b16 %v311
      %v1001 = vunpack.c.h.b16 %v311
      %v1002 = vunpack.c.l.b16 %v312
      %v1003 = vunpack.c.l.b16 %v313
      %v1004 = vunpack.c.h.b16 %v313
      %v1005 = vunpack.c.l.b16 %v314
      %v1006 = vunpack.c.h.b16 %v314
      %v1007 = vunpack.c.l.b16 %v315
      %v1008 = vunpack.c.h.b16 %v315
      %v1009 = vunpack.c.l.b16 %v316
      %v1010 = vunpack.c.l.b16 %v317
      %v1011 = vunpack.c.h.b16 %v317
      %v1012 = vunpack.c.l.b16 %v318
      %v1013 = vunpack.c.h.b16 %v318
      %v1014 = vunpack.c.l.b16 %v319
      %v1015 = vunpack.c.h.b16 %v319
      %v1016 = vunpack.c.l.b16 %v320
      %v1017 = vunpack.c.l.b16 %v321
      %v1018 = vunpack.c.h.b16 %v321
      %v1019 = vunpack.c.l.b16 %v322
      %v1020 = vunpack.c.h.b16 %v322
      %v1021 = vunpack.c.l.b16 %v323
      %v1022 = vunpack.c.h.b16 %v323
      %v1023 = vunpack.c.l.b16 %v324
      %v1024 = vunpack.c.l.b16 %v325
      %v1025 = vunpack.c.h.b16 %v325
      %v1026 = vunpack.c.l.b16 %v326
      %v1027 = vunpack.c.h.b16 %v326
      %v1028 = vunpack.c.l.b16 %v327
      %v1029 = vunpack.c.h.b16 %v327
      %v1030 = vunpack.c.l.b16 %v328
      %v1031 = vunpack.c.l.b16 %v329
      %v1032 = vunpack.c.h.b16 %v329
      %v1033 = vunpack.c.l.b16 %v330
      %v1034 = vunpack.c.h.b16 %v330
      %v1035 = vunpack.c.l.b16 %v331
      %v1036 = vunpack.c.h.b16 %v331
      %v1037 = vunpack.c.l.b16 %v332
      %v1038 = vunpack.c.l.b16 %v333
      %v1039 = vunpack.c.h.b16 %v333
      %v1040 = vunpack.c.l.b16 %v334
      %v1041 = vunpack.c.h.b16 %v334
      %v1042 = vunpack.c.l.b16 %v335
      %v1043 = vunpack.c.h.b16 %v335
      %v1044 = vunpack.c.l.b16 %v336
      %v1045 = vunpack.c.l.b16 %v337
      %v1046 = vunpack.c.h.b16 %v337
      %v1047 = vunpack.c.l.b16 %v338
      %v1048 = vunpack.c.h.b16 %v338
      %v1049 = vunpack.c.l.b16 %v339
      %v1050 = vunpack.c.h.b16 %v339
      %v1051 = vunpack.c.l.b16 %v340
      %v1052 = vunpack.c.l.b16 %v341
      %v1053 = vunpack.c.h.b16 %v341
      %v1054 = vunpack.c.l.b16 %v342
      %v1055 = vunpack.c.h.b16 %v342
      %v1056 = vunpack.c.l.b16 %v343
      %v1057 = vunpack.c.h.b16 %v343
      %v1058 = vunpack.c.l.b16 %v344
      %v1059 = vunpack.c.l.b16 %v345
      %v1060 = vunpack.c.h.b16 %v345
      %v1061 = vunpack.c.l.b16 %v346
      %v1062 = vunpack.c.h.b16 %v346
      %v1063 = vunpack.c.l.b16 %v347
      %v1064 = vunpack.c.h.b16 %v347
      %v1065 = vunpack.c.l.b16 %v348
      %v1066 = vunpack.c.l.b16 %v349
      %v1067 = vunpack.c.h.b16 %v349
      %v1068 = vunpack.c.l.b16 %v350
      %v1069 = vunpack.c.h.b16 %v350
      %v1070 = vunpack.c.l.b16 %v351
      %v1071 = vunpack.c.h.b16 %v351
      %v1072 = vunpack.c.l.b16 %v352
      %v1073 = vunpack.c.l.b16 %v353
      %v1074 = vunpack.c.h.b16 %v353
      %v1075 = vunpack.c.l.b16 %v354
      %v1076 = vunpack.c.h.b16 %v354
      %v1077 = vunpack.c.l.b16 %v355
      %v1078 = vunpack.c.h.b16 %v355
      %v1079 = vunpack.c.l.b16 %v356
      %v1080 = vunpack.c.l.b16 %v357
      %v1081 = vunpack.c.h.b16 %v357
      %v1082 = vunpack.c.l.b16 %v358
      %v1083 = vunpack.c.h.b16 %v358
      %v1084 = vunpack.c.l.b16 %v359
      %v1085 = vunpack.c.h.b16 %v359
      %v1086 = vunpack.c.l.b16 %v360
      %v1087 = vunpack.c.l.b16 %v361
      %v1088 = vunpack.c.h.b16 %v361
      %v1089 = vunpack.c.l.b16 %v362
      %v1090 = vunpack.c.h.b16 %v362
      %v1091 = vunpack.c.l.b16 %v363
      %v1092 = vunpack.c.h.b16 %v363
      %v1093 = vunpack.c.l.b16 %v364
      %v1094 = vunpack.c.l.b16 %v365
      %v1095 = vunpack.c.h.b16 %v365
      %v1096 = vunpack.c.l.b16 %v366
      %v1097 = vunpack.c.h.b16 %v366
      %v1098 = vunpack.c.l.b16 %v367
      %v1099 = vunpack.c.h.b16 %v367
      %v1100 = vunpack.c.l.b16 %v368
      %v1101 = vunpack.c.l.b16 %v369
      %v1102 = vunpack.c.h.b16 %v369
      %v1103 = vunpack.c.l.b16 %v370
      %v1104 = vunpack.c.h.b16 %v370
      %v1105 = vunpack.c.l.b16 %v371
      %v1106 = vunpack.c.h.b16 %v371
      %v1107 = vunpack.c.l.b16 %v372
      %v1108 = vunpack.c.l.b16 %v373
      %v1109 = vunpack.c.h.b16 %v373
      %v1110 = vunpack.c.l.b16 %v374
      %v1111 = vunpack.c.h.b16 %v374
      %v1112 = vunpack.c.l.b16 %v375
      %v1113 = vunpack.c.h.b16 %v375
      %v1114 = vunpack.c.l.b16 %v376
      %v1115 = vunpack.c.l.b16 %v377
      %v1116 = vunpack.c.h.b16 %v377
      %v1117 = vunpack.c.l.b16 %v378
      %v1118 = vunpack.c.h.b16 %v378
      %v1119 = vunpack.c.l.b16 %v379
      %v1120 = vunpack.c.h.b16 %v379
      %v1121 = vunpack.c.l.b16 %v380
      %v1122 = vunpack.c.l.b16 %v381
      %v1123 = vunpack.c.h.b16 %v381
      %v1124 = vunpack.c.l.b16 %v382
      %v1125 = vunpack.c.h.b16 %v382
      %v1126 = vunpack.c.l.b16 %v383
      %v1127 = vunpack.c.h.b16 %v383
      %v1128 = vunpack.c.l.b16 %v384
      %v1129 = vunpack.c.l.b16 %v385
      %v1130 = vunpack.c.h.b16 %v385
      %v1131 = vunpack.c.l.b16 %v386
      %v1132 = vunpack.c.h.b16 %v386
      %v1133 = vunpack.c.l.b16 %v387
      %v1134 = vunpack.c.h.b16 %v387
      %v1135 = vunpack.c.l.b16 %v388
      %v1136 = vunpack.c.l.b16 %v389
      %v1137 = vunpack.c.h.b16 %v389
      %v1138 = vunpack.c.l.b16 %v390
      %v1139 = vunpack.c.h.b16 %v390
      %v1140 = vunpack.c.l.b16 %v391
      %v1141 = vunpack.c.h.b16 %v391
      %v1142 = vunpack.c.l.b16 %v392
      %v1143 = vunpack.c.l.b16 %v393
      %v1144 = vunpack.c.h.b16 %v393
      %v1145 = vunpack.c.l.b16 %v394
      %v1146 = vunpack.c.h.b16 %v394
      %v1147 = vunpack.c.l.b16 %v395
      %v1148 = vunpack.c.h.b16 %v395
      %v1149 = vunpack.c.l.b16 %v396
      %v1150 = vunpack.c.l.b16 %v397
      %v1151 = vunpack.c.h.b16 %v397
      %v1152 = vunpack.c.l.b16 %v398
      %v1153 = vunpack.c.h.b16 %v398
      %v1154 = vunpack.c.l.b16 %v399
      %v1155 = vunpack.c.h.b16 %v399
      %v1156 = vunpack.c.l.b16 %v400
      %v1157 = vunpack.c.l.b16 %v401
      %v1158 = vunpack.c.h.b16 %v401
      %v1159 = vunpack.c.l.b16 %v402
      %v1160 = vunpack.c.h.b16 %v402
      %v1161 = vunpack.c.l.b16 %v403
      %v1162 = vunpack.c.h.b16 %v403
      %v1163 = vunpack.c.l.b16 %v404
      %v1164 = vunpack.c.l.b16 %v405
      %v1165 = vunpack.c.h.b16 %v405
      %v1166 = vunpack.c.l.b16 %v406
      %v1167 = vunpack.c.h.b16 %v406
      %v1168 = vunpack.c.l.b16 %v407
      %v1169 = vunpack.c.h.b16 %v407
      %v1170 = vunpack.c.l.b16 %v408
      %v1171 = vunpack.c.l.b16 %v409
      %v1172 = vunpack.c.h.b16 %v409
      %v1173 = vunpack.c.l.b16 %v410
      %v1174 = vunpack.c.h.b16 %v410
      %v1175 = vunpack.c.l.b16 %v411
      %v1176 = vunpack.c.h.b16 %v411
      %v1177 = vunpack.c.l.b16 %v412
      %v1178 = vunpack.c.l.b16 %v413
      %v1179 = vunpack.c.h.b16 %v413
      %v1180 = vunpack.c.l.b16 %v414
      %v1181 = vunpack.c.h.b16 %v414
      %v1182 = vunpack.c.l.b16 %v415
      %v1183 = vunpack.c.h.b16 %v415
      %v1184 = vunpack.c.l.b16 %v416
      %v1185 = vunpack.c.l.b16 %v417
      %v1186 = vunpack.c.h.b16 %v417
      %v1187 = vunpack.c.l.b16 %v418
      %v1188 = vunpack.c.h.b16 %v418
      %v1189 = vunpack.c.l.b16 %v419
      %v1190 = vunpack.c.h.b16 %v419
      %v1191 = vunpack.c.l.b16 %v420
      %v1192 = vunpack.c.l.b16 %v421
      %v1193 = vunpack.c.h.b16 %v421
      %v1194 = vunpack.c.l.b16 %v422
      %v1195 = vunpack.c.h.b16 %v422
      %v1196 = vunpack.c.l.b16 %v423
      %v1197 = vunpack.c.h.b16 %v423
      %v1198 = vunpack.c.l.b16 %v424
      %v1199 = vunpack.c.l.b16 %v425
      %v1200 = vunpack.c.h.b16 %v425
      %v1201 = vunpack.c.l.b16 %v426
      %v1202 = vunpack.c.h.b16 %v426
      %v1203 = vunpack.c.l.b16 %v427
      %v1204 = vunpack.c.h.b16 %v427
      %v1205 = vunpack.c.l.b16 %v428
      %v1206 = vunpack.c.l.b16 %v429
      %v1207 = vunpack.c.h.b16 %v429
      %v1208 = vunpack.c.l.b16 %v430
      %v1209 = vunpack.c.h.b16 %v430
      %v1210 = vunpack.c.l.b16 %v431
      %v1211 = vunpack.c.h.b16 %v431
      %v1212 = vunpack.c.l.b16 %v432
      %v1213 = vunpack.c.l.b16 %v433
      %v1214 = vunpack.c.h.b16 %v433
      %v1215 = vunpack.c.l.b16 %v434
      %v1216 = vunpack.c.h.b16 %v434
      %v1217 = vunpack.c.l.b16 %v435
      %v1218 = vunpack.c.h.b16 %v435
      %v1219 = vunpack.c.l.b16 %v436
      %v1220 = vunpack.c.l.b16 %v437
      %v1221 = vunpack.c.h.b16 %v437
      %v1222 = vunpack.c.l.b16 %v438
      %v1223 = vunpack.c.h.b16 %v438
      %v1224 = vunpack.c.l.b16 %v439
      %v1225 = vunpack.c.h.b16 %v439
      %v1226 = vunpack.c.l.b16 %v440
      %v1227 = vunpack.c.l.b16 %v441
      %v1228 = vunpack.c.h.b16 %v441
      %v1229 = vunpack.c.l.b16 %v442
      %v1230 = vunpack.c.h.b16 %v442
      %v1231 = vunpack.c.l.b16 %v443
      %v1232 = vunpack.c.h.b16 %v443
      %v1233 = vunpack.c.l.b16 %v444
      %v1234 = vunpack.c.l.b16 %v445
      %v1235 = vunpack.c.h.b16 %v445
      %v1236 = vunpack.c.l.b16 %v446
      %v1237 = vunpack.c.h.b16 %v446
      %v1238 = vunpack.c.l.b16 %v447
      %v1239 = vunpack.c.h.b16 %v447
      %v1240 = vunpack.c.l.b16 %v448
      %v1241 = vunpack.c.l.b16 %v449
      %v1242 = vunpack.c.h.b16 %v449
      %v1243 = vunpack.c.l.b16 %v450
      %v1244 = vunpack.c.h.b16 %v450
      %v1245 = vunpack.c.l.b16 %v451
      %v1246 = vunpack.c.h.b16 %v451
      %v1247 = vunpack.c.l.b16 %v452
      %v1248 = vunpack.c.l.b16 %v453
      %v1249 = vunpack.c.h.b16 %v453
      %v1250 = vunpack.c.l.b16 %v454
      %v1251 = vunpack.c.h.b16 %v454
      %v1252 = vunpack.c.l.b16 %v455
      %v1253 = vunpack.c.h.b16 %v455
      %v1254 = vunpack.c.l.b16 %v456
      %v1255 = vunpack.c.l.b16 %v457
      %v1256 = vunpack.c.h.b16 %v457
      %v1257 = vunpack.c.l.b16 %v458
      %v1258 = vunpack.c.h.b16 %v458
      %v1259 = vunpack.c.l.b16 %v459
      %v1260 = vunpack.c.h.b16 %v459
      %v1261 = vunpack.c.l.b16 %v460
      %v1262 = vunpack.c.l.b16 %v461
      %v1263 = vunpack.c.h.b16 %v461
      %v1264 = vunpack.c.l.b16 %v462
      %v1265 = vunpack.c.h.b16 %v462
      %v1266 = vunpack.c.l.b16 %v463
      %v1267 = vunpack.c.h.b16 %v463
      %v1268 = vunpack.c.l.b16 %v464
      %v1269 = vunpack.c.l.b16 %v465
      %v1270 = vunpack.c.h.b16 %v465
      %v1271 = vunpack.c.l.b16 %v466
      %v1272 = vunpack.c.h.b16 %v466
      %v1273 = vunpack.c.l.b16 %v467
      %v1274 = vunpack.c.h.b16 %v467
      %v1275 = vunpack.c.l.b16 %v468
      %v1276 = vunpack.c.l.b16 %v469
      %v1277 = vunpack.c.h.b16 %v469
      %v1278 = vunpack.c.l.b16 %v470
      %v1279 = vunpack.c.h.b16 %v470
      %v1280 = vunpack.c.l.b16 %v471
      %v1281 = vunpack.c.h.b16 %v471
      %v1282 = vunpack.c.l.b16 %v472
      %v1283 = vunpack.c.l.b16 %v473
      %v1284 = vunpack.c.h.b16 %v473
      %v1285 = vunpack.c.l.b16 %v474
      %v1286 = vunpack.c.h.b16 %v474
      %v1287 = vunpack.c.l.b16 %v475
      %v1288 = vunpack.c.h.b16 %v475
      %v1289 = vunpack.c.l.b16 %v476
      %v1290 = vunpack.c.l.b16 %v477
      %v1291 = vunpack.c.h.b16 %v477
      %v1292 = vunpack.c.l.b16 %v478
      %v1293 = vunpack.c.h.b16 %v478
      %v1294 = vunpack.c.l.b16 %v479
      %v1295 = vunpack.c.h.b16 %v479
      %v1296 = vunpack.c.l.b16 %v480
      %v1297 = vunpack.c.l.b16 %v481
      %v1298 = vunpack.c.h.b16 %v481
      %v1299 = vunpack.c.l.b16 %v482
      %v1300 = vunpack.c.h.b16 %v482
      %v1301 = vunpack.c.l.b16 %v483
      %v1302 = vunpack.c.h.b16 %v483
      %v1303 = vunpack.c.l.b16 %v484
      %v1304 = vpack.c.b16 %v863, %v856
      %v1305 = vpack.c.b16 %v864, %v857
      %v1306 = vpack.c.b16 %v865, %v858
      %v1307 = vpack.c.b16 %v866, %v859
      %v1308 = vpack.c.b16 %v867, %v860
      %v1309 = vpack.c.b16 %v868, %v861
      %v1310 = vpack.c.b16 %v869, %v862
      %v1311 = vpack.c.b16 %v877, %v870
      %v1312 = vpack.c.b16 %v878, %v871
      %v1313 = vpack.c.b16 %v879, %v872
      %v1314 = vpack.c.b16 %v880, %v873
      %v1315 = vpack.c.b16 %v881, %v874
      %v1316 = vpack.c.b16 %v882, %v875
      %v1317 = vpack.c.b16 %v883, %v876
      %v1318 = vpack.c.b16 %v891, %v884
      %v1319 = vpack.c.b16 %v892, %v885
      %v1320 = vpack.c.b16 %v893, %v886
      %v1321 = vpack.c.b16 %v894, %v887
      %v1322 = vpack.c.b16 %v895, %v888
      %v1323 = vpack.c.b16 %v896, %v889
      %v1324 = vpack.c.b16 %v897, %v890
      %v1325 = vpack.c.b16 %v905, %v898
      %v1326 = vpack.c.b16 %v906, %v899
      %v1327 = vpack.c.b16 %v907, %v900
      %v1328 = vpack.c.b16 %v908, %v901
      %v1329 = vpack.c.b16 %v909, %v902
      %v1330 = vpack.c.b16 %v910, %v903
      %v1331 = vpack.c.b16 %v911, %v904
      %v1332 = vpack.c.b16 %v919, %v912
      %v1333 = vpack.c.b16 %v920, %v913
      %v1334 = vpack.c.b16 %v921, %v914
      %v1335 = vpack.c.b16 %v922, %v915
      %v1336 = vpack.c.b16 %v923, %v916
      %v1337 = vpack.c.b16 %v924, %v917
      %v1338 = vpack.c.b16 %v925, %v918
      %v1339 = vpack.c.b16 %v933, %v926
      %v1340 = vpack.c.b16 %v934, %v927
      %v1341 = vpack.c.b16 %v935, %v928
      %v1342 = vpack.c.b16 %v936, %v929
      %v1343 = vpack.c.b16 %v937, %v930
      %v1344 = vpack.c.b16 %v938, %v931
      %v1345 = vpack.c.b16 %v939, %v932
      %v1346 = vpack.c.b16 %v947, %v940
      %v1347 = vpack.c.b16 %v948, %v941
      %v1348 = vpack.c.b16 %v949, %v942
      %v1349 = vpack.c.b16 %v950, %v943
      %v1350 = vpack.c.b16 %v951, %v944
      %v1351 = vpack.c.b16 %v952, %v945
      %v1352 = vpack.c.b16 %v953, %v946
      %v1353 = vpack.c.b16 %v961, %v954
      %v1354 = vpack.c.b16 %v962, %v955
      %v1355 = vpack.c.b16 %v963, %v956
      %v1356 = vpack.c.b16 %v964, %v957
      %v1357 = vpack.c.b16 %v965, %v958
      %v1358 = vpack.c.b16 %v966, %v959
      %v1359 = vpack.c.b16 %v967, %v960
      %v1360 = vpack.c.b16 %v975, %v968
      %v1361 = vpack.c.b16 %v976, %v969
      %v1362 = vpack.c.b16 %v977, %v970
      %v1363 = vpack.c.b16 %v978, %v971
      %v1364 = vpack.c.b16 %v979, %v972
      %v1365 = vpack.c.b16 %v980, %v973
      %v1366 = vpack.c.b16 %v981, %v974
      %v1367 = vpack.c.b16 %v989, %v982
      %v1368 = vpack.c.b16 %v990, %v983
      %v1369 = vpack.c.b16 %v991, %v984
      %v1370 = vpack.c.b16 %v992, %v985
      %v1371 = vpack.c.b16 %v993, %v986
      %v1372 = vpack.c.b16 %v994, %v987
      %v1373 = vpack.c.b16 %v995, %v988
      %v1374 = vpack.c.b16 %v1003, %v996
      %v1375 = vpack.c.b16 %v1004, %v997
      %v1376 = vpack.c.b16 %v1005, %v998
      %v1377 = vpack.c.b16 %v1006, %v999
      %v1378 = vpack.c.b16 %v1007, %v1000
      %v1379 = vpack.c.b16 %v1008, %v1001
      %v1380 = vpack.c.b16 %v1009, %v1002
      %v1381 = vpack.c.b16 %v1017, %v1010
      %v1382 = vpack.c.b16 %v1018, %v1011
      %v1383 = vpack.c.b16 %v1019, %v1012
      %v1384 = vpack.c.b16 %v1020, %v1013
      %v1385 = vpack.c.b16 %v1021, %v1014
      %v1386 = vpack.c.b16 %v1022, %v1015
      %v1387 = vpack.c.b16 %v1023, %v1016
      %v1388 = vpack.c.b16 %v1031, %v1024
      %v1389 = vpack.c.b16 %v1032, %v1025
      %v1390 = vpack.c.b16 %v1033, %v1026
      %v1391 = vpack.c.b16 %v1034, %v1027
      %v1392 = vpack.c.b16 %v1035, %v1028
      %v1393 = vpack.c.b16 %v1036, %v1029
      %v1394 = vpack.c.b16 %v1037, %v1030
      %v1395 = vpack.c.b16 %v1045, %v1038
      %v1396 = vpack.c.b16 %v1046, %v1039
      %v1397 = vpack.c.b16 %v1047, %v1040
      %v1398 = vpack.c.b16 %v1048, %v1041
      %v1399 = vpack.c.b16 %v1049, %v1042
      %v1400 = vpack.c.b16 %v1050, %v1043
      %v1401 = vpack.c.b16 %v1051, %v1044
      %v1402 = vpack.c.b16 %v1059, %v1052
      %v1403 = vpack.c.b16 %v1060, %v1053
      %v1404 = vpack.c.b16 %v1061, %v1054
      %v1405 = vpack.c.b16 %v1062, %v1055
      %v1406 = vpack.c.b16 %v1063, %v1056
      %v1407 = vpack.c.b16 %v1064, %v1057
      %v1408 = vpack.c.b16 %v1065, %v1058
      %v1409 = vpack.c.b16 %v1073, %v1066
      %v1410 = vpack.c.b16 %v1074, %v1067
      %v1411 = vpack.c.b16 %v1075, %v1068
      %v1412 = vpack.c.b16 %v1076, %v1069
      %v1413 = vpack.c.b16 %v1077, %v1070
      %v1414 = vpack.c.b16 %v1078, %v1071
      %v1415 = vpack.c.b16 %v1079, %v1072
      %v1416 = vpack.c.b16 %v1087, %v1080
      %v1417 = vpack.c.b16 %v1088, %v1081
      %v1418 = vpack.c.b16 %v1089, %v1082
      %v1419 = vpack.c.b16 %v1090, %v1083
      %v1420 = vpack.c.b16 %v1091, %v1084
      %v1421 = vpack.c.b16 %v1092, %v1085
      %v1422 = vpack.c.b16 %v1093, %v1086
      %v1423 = vpack.c.b16 %v1101, %v1094
      %v1424 = vpack.c.b16 %v1102, %v1095
      %v1425 = vpack.c.b16 %v1103, %v1096
      %v1426 = vpack.c.b16 %v1104, %v1097
      %v1427 = vpack.c.b16 %v1105, %v1098
      %v1428 = vpack.c.b16 %v1106, %v1099
      %v1429 = vpack.c.b16 %v1107, %v1100
      %v1430 = vpack.c.b16 %v1115, %v1108
      %v1431 = vpack.c.b16 %v1116, %v1109
      %v1432 = vpack.c.b16 %v1117, %v1110
      %v1433 = vpack.c.b16 %v1118, %v1111
      %v1434 = vpack.c.b16 %v1119, %v1112
      %v1435 = vpack.c.b16 %v1120, %v1113
      %v1436 = vpack.c.b16 %v1121, %v1114
      %v1437 = vpack.c.b16 %v1129, %v1122
      %v1438 = vpack.c.b16 %v1130, %v1123
      %v1439 = vpack.c.b16 %v1131, %v1124
      %v1440 = vpack.c.b16 %v1132, %v1125
      %v1441 = vpack.c.b16 %v1133, %v1126
      %v1442 = vpack.c.b16 %v1134, %v1127
      %v1443 = vpack.c.b16 %v1135, %v1128
      %v1444 = vpack.c.b16 %v1143, %v1136
      %v1445 = vpack.c.b16 %v1144, %v1137
      %v1446 = vpack.c.b16 %v1145, %v1138
      %v1447 = vpack.c.b16 %v1146, %v1139
      %v1448 = vpack.c.b16 %v1147, %v1140
      %v1449 = vpack.c.b16 %v1148, %v1141
      %v1450 = vpack.c.b16 %v1149, %v1142
      %v1451 = vpack.c.b16 %v1157, %v1150
      %v1452 = vpack.c.b16 %v1158, %v1151
      %v1453 = vpack.c.b16 %v1159, %v1152
      %v1454 = vpack.c.b16 %v1160, %v1153
      %v1455 = vpack.c.b16 %v1161, %v1154
      %v1456 = vpack.c.b16 %v1162, %v1155
      %v1457 = vpack.c.b16 %v1163, %v1156
      %v1458 = vpack.c.b16 %v1171, %v1164
      %v1459 = vpack.c.b16 %v1172, %v1165
      %v1460 = vpack.c.b16 %v1173, %v1166
      %v1461 = vpack.c.b16 %v1174, %v1167
      %v1462 = vpack.c.b16 %v1175, %v1168
      %v1463 = vpack.c.b16 %v1176, %v1169
      %v1464 = vpack.c.b16 %v1177, %v1170
      %v1465 = vpack.c.b16 %v1185, %v1178
      %v1466 = vpack.c.b16 %v1186, %v1179
      %v1467 = vpack.c.b16 %v1187, %v1180
      %v1468 = vpack.c.b16 %v1188, %v1181
      %v1469 = vpack.c.b16 %v1189, %v1182
      %v1470 = vpack.c.b16 %v1190, %v1183
      %v1471 = vpack.c.b16 %v1191, %v1184
      %v1472 = vpack.c.b16 %v1199, %v1192
      %v1473 = vpack.c.b16 %v1200, %v1193
      %v1474 = vpack.c.b16 %v1201, %v1194
      %v1475 = vpack.c.b16 %v1202, %v1195
      %v1476 = vpack.c.b16 %v1203, %v1196
      %v1477 = vpack.c.b16 %v1204, %v1197
      %v1478 = vpack.c.b16 %v1205, %v1198
      %v1479 = vpack.c.b16 %v1213, %v1206
      %v1480 = vpack.c.b16 %v1214, %v1207
      %v1481 = vpack.c.b16 %v1215, %v1208
      %v1482 = vpack.c.b16 %v1216, %v1209
      %v1483 = vpack.c.b16 %v1217, %v1210
      %v1484 = vpack.c.b16 %v1218, %v1211
      %v1485 = vpack.c.b16 %v1219, %v1212
      %v1486 = vpack.c.b16 %v1227, %v1220
      %v1487 = vpack.c.b16 %v1228, %v1221
      %v1488 = vpack.c.b16 %v1229, %v1222
      %v1489 = vpack.c.b16 %v1230, %v1223
      %v1490 = vpack.c.b16 %v1231, %v1224
      %v1491 = vpack.c.b16 %v1232, %v1225
      %v1492 = vpack.c.b16 %v1233, %v1226
      %v1493 = vpack.c.b16 %v1241, %v1234
      %v1494 = vpack.c.b16 %v1242, %v1235
      %v1495 = vpack.c.b16 %v1243, %v1236
      %v1496 = vpack.c.b16 %v1244, %v1237
      %v1497 = vpack.c.b16 %v1245, %v1238
      %v1498 = vpack.c.b16 %v1246, %v1239
      %v1499 = vpack.c.b16 %v1247, %v1240
      %v1500 = vpack.c.b16 %v1255, %v1248
      %v1501 = vpack.c.b16 %v1256, %v1249
      %v1502 = vpack.c.b16 %v1257, %v1250
      %v1503 = vpack.c.b16 %v1258, %v1251
      %v1504 = vpack.c.b16 %v1259, %v1252
      %v1505 = vpack.c.b16 %v1260, %v1253
      %v1506 = vpack.c.b16 %v1261, %v1254
      %v1507 = vpack.c.b16 %v1269, %v1262
      %v1508 = vpack.c.b16 %v1270, %v1263
      %v1509 = vpack.c.b16 %v1271, %v1264
      %v1510 = vpack.c.b16 %v1272, %v1265
      %v1511 = vpack.c.b16 %v1273, %v1266
      %v1512 = vpack.c.b16 %v1274, %v1267
      %v1513 = vpack.c.b16 %v1275, %v1268
      %v1514 = vpack.c.b16 %v1283, %v1276
      %v1515 = vpack.c.b16 %v1284, %v1277
      %v1516 = vpack.c.b16 %v1285, %v1278
      %v1517 = vpack.c.b16 %v1286, %v1279
      %v1518 = vpack.c.b16 %v1287, %v1280
      %v1519 = vpack.c.b16 %v1288, %v1281
      %v1520 = vpack.c.b16 %v1289, %v1282
      %v1521 = vpack.c.b16 %v1297, %v1290
      %v1522 = vpack.c.b16 %v1298, %v1291
      %v1523 = vpack.c.b16 %v1299, %v1292
      %v1524 = vpack.c.b16 %v1300, %v1293
      %v1525 = vpack.c.b16 %v1301, %v1294
      %v1526 = vpack.c.b16 %v1302, %v1295
      %v1527 = vpack.c.b16 %v1303, %v1296
      %v1828 = vunpack.c.l.b16 %v485
      %v1829 = vunpack.c.l.b16 %v486
      %v1830 = vunpack.c.l.b16 %v487
      %v1831 = vunpack.c.l.b16 %v488
      %v1832 = vunpack.c.l.b16 %v489
      %v1833 = vunpack.c.l.b16 %v490
      %v1834 = vunpack.c.l.b16 %v491
      %v1835 = vunpack.c.l.b16 %v492
      %v1836 = vunpack.c.l.b16 %v493
      %v1837 = vunpack.c.l.b16 %v494
      %v1838 = vunpack.c.l.b16 %v495
      %v1839 = vunpack.c.l.b16 %v496
      %v1840 = vunpack.c.l.b16 %v497
      %v1841 = vunpack.c.l.b16 %v498
      %v1842 = vunpack.c.l.b16 %v499
      %v1843 = vunpack.c.l.b16 %v500
      %v1844 = vunpack.c.l.b16 %v501
      %v1845 = vunpack.c.l.b16 %v502
      %v1846 = vunpack.c.l.b16 %v503
      %v1847 = vunpack.c.l.b16 %v504
      %v1848 = vunpack.c.l.b16 %v505
      %v1849 = vunpack.c.l.b16 %v506
      %v1850 = vunpack.c.l.b16 %v507
      %v1851 = vunpack.c.l.b16 %v508
      %v1852 = vunpack.c.l.b16 %v509
      %v1853 = vunpack.c.l.b16 %v510
      %v1854 = vunpack.c.l.b16 %v511
      %v1855 = vunpack.c.l.b16 %v512
      %v1856 = vunpack.c.l.b16 %v513
      %v1857 = vunpack.c.l.b16 %v514
      %v1858 = vunpack.c.l.b16 %v515
      %v1859 = vunpack.c.l.b16 %v516
      %v1860 = vunpack.c.l.b16 %v517
      %v1861 = vunpack.c.l.b16 %v518
      %v1862 = vunpack.c.l.b16 %v519
      %v1863 = vunpack.c.l.b16 %v520
      %v1864 = vunpack.c.l.b16 %v521
      %v1865 = vunpack.c.l.b16 %v522
      %v1866 = vunpack.c.l.b16 %v523
      %v1867 = vunpack.c.l.b16 %v524
      %v1868 = vunpack.c.l.b16 %v525
      %v1869 = vunpack.c.l.b16 %v526
      %v1870 = vunpack.c.l.b16 %v527
      %v1871 = vunpack.c.l.b16 %v528
      %v1872 = vunpack.c.l.b16 %v529
      %v1873 = vunpack.c.l.b16 %v530
      %v1874 = vunpack.c.l.b16 %v531
      %v1875 = vunpack.c.l.b16 %v532
      %v1876 = vunpack.c.l.b16 %v533
      %v1877 = vunpack.c.l.b16 %v534
      %v1878 = vunpack.c.l.b16 %v535
      %v1879 = vunpack.c.l.b16 %v536
      %v1880 = vunpack.c.l.b16 %v537
      %v1881 = vunpack.c.l.b16 %v538
      %v1882 = vunpack.c.l.b16 %v539
      %v1883 = vunpack.c.l.b16 %v540
      %v1884 = vunpack.c.l.b16 %v541
      %v1885 = vunpack.c.l.b16 %v542
      %v1886 = vunpack.c.l.b16 %v543
      %v1887 = vunpack.c.l.b16 %v544
      %v1888 = vunpack.c.l.b16 %v545
      %v1889 = vunpack.c.l.b16 %v546
      %v1890 = vunpack.c.l.b16 %v547
      %v1891 = vunpack.c.l.b16 %v548
      %v1892 = vunpack.c.l.b16 %v549
      %v1893 = vunpack.c.l.b16 %v550
      %v1894 = vunpack.c.l.b16 %v551
      %v1895 = vunpack.c.l.b16 %v552
      %v1896 = vunpack.c.l.b16 %v553
      %v1897 = vunpack.c.l.b16 %v554
      %v1898 = vunpack.c.l.b16 %v555
      %v1899 = vunpack.c.l.b16 %v556
      %v1900 = vunpack.c.l.b16 %v557
      %v1901 = vunpack.c.l.b16 %v558
      %v1902 = vunpack.c.l.b16 %v559
      %v1903 = vunpack.c.l.b16 %v560
      %v1904 = vunpack.c.l.b16 %v561
      %v1905 = vunpack.c.l.b16 %v562
      %v1906 = vunpack.c.l.b16 %v563
      %v1907 = vunpack.c.l.b16 %v564
      %v1908 = vunpack.c.l.b16 %v565
      %v1909 = vunpack.c.l.b16 %v566
      %v1910 = vunpack.c.l.b16 %v567
      %v1911 = vunpack.c.l.b16 %v568
      %v1912 = vunpack.c.l.b16 %v569
      %v1913 = vunpack.c.l.b16 %v570
      %v1914 = vunpack.c.l.b16 %v571
      %v1915 = vunpack.c.l.b16 %v572
      %v1916 = vunpack.c.l.b16 %v573
      %v1917 = vunpack.c.l.b16 %v574
      %v1918 = vunpack.c.l.b16 %v575
      %v1919 = vunpack.c.l.b16 %v576
      %v1920 = vunpack.c.l.b16 %v577
      %v1921 = vunpack.c.l.b16 %v578
      %v1922 = vunpack.c.l.b16 %v579
      %v1923 = vunpack.c.l.b16 %v580
      %v1924 = vunpack.c.l.b16 %v581
      %v1925 = vunpack.c.l.b16 %v582
      %v1926 = vunpack.c.l.b16 %v583
      %v1927 = vunpack.c.l.b16 %v584
      %v1928 = vunpack.c.l.b16 %v585
      %v1929 = vunpack.c.l.b16 %v586
      %v1930 = vunpack.c.l.b16 %v587
      %v1931 = vunpack.c.l.b16 %v588
      %v1932 = vunpack.c.l.b16 %v589
      %v1933 = vunpack.c.l.b16 %v590
      %v1934 = vunpack.c.l.b16 %v591
      %v1935 = vunpack.c.l.b16 %v592
      %v1936 = vpack.c.b16 %v1829, %v1828
      %v1937 = vpack.c.b16 %v1831, %v1830
      %v1938 = vpack.c.b16 %v1833, %v1832
      %v1939 = vpack.c.b16 %v1835, %v1834
      %v1940 = vpack.c.b16 %v1837, %v1836
      %v1941 = vpack.c.b16 %v1839, %v1838
      %v1942 = vpack.c.b16 %v1841, %v1840
      %v1943 = vpack.c.b16 %v1843, %v1842
      %v1944 = vpack.c.b16 %v1845, %v1844
      %v1945 = vpack.c.b16 %v1847, %v1846
      %v1946 = vpack.c.b16 %v1849, %v1848
      %v1947 = vpack.c.b16 %v1851, %v1850
      %v1948 = vpack.c.b16 %v1853, %v1852
      %v1949 = vpack.c.b16 %v1855, %v1854
      %v1950 = vpack.c.b16 %v1857, %v1856
      %v1951 = vpack.c.b16 %v1859, %v1858
      %v1952 = vpack.c.b16 %v1861, %v1860
      %v1953 = vpack.c.b16 %v1863, %v1862
      %v1954 = vpack.c.b16 %v1865, %v1864
      %v1955 = vpack.c.b16 %v1867, %v1866
      %v1956 = vpack.c.b16 %v1869, %v1868
      %v1957 = vpack.c.b16 %v1871, %v1870
      %v1958 = vpack.c.b16 %v1873, %v1872
      %v1959 = vpack.c.b16 %v1875, %v1874
      %v1960 = vpack.c.b16 %v1877, %v1876
      %v1961 = vpack.c.b16 %v1879, %v1878
      %v1962 = vpack.c.b16 %v1881, %v1880
      %v1963 = vpack.c.b16 %v1883, %v1882
      %v1964 = vpack.c.b16 %v1885, %v1884
      %v1965 = vpack.c.b16 %v1887, %v1886
      %v1966 = vpack.c.b16 %v1889, %v1888
      %v1967 = vpack.c.b16 %v1891, %v1890
      %v1968 = vpack.c.b16 %v1893, %v1892
      %v1969 = vpack.c.b16 %v1895, %v1894
      %v1970 = vpack.c.b16 %v1897, %v1896
      %v1971 = vpack.c.b16 %v1899, %v1898
      %v1972 = vpack.c.b16 %v1901, %v1900
      %v1973 = vpack.c.b16 %v1903, %v1902
      %v1974 = vpack.c.b16 %v1905, %v1904
      %v1975 = vpack.c.b16 %v1907, %v1906
      %v1976 = vpack.c.b16 %v1909, %v1908
      %v1977 = vpack.c.b16 %v1911, %v1910
      %v1978 = vpack.c.b16 %v1913, %v1912
      %v1979 = vpack.c.b16 %v1915, %v1914
      %v1980 = vpack.c.b16 %v1917, %v1916
      %v1981 = vpack.c.b16 %v1919, %v1918
      %v1982 = vpack.c.b16 %v1921, %v1920
      %v1983 = vpack.c.b16 %v1923, %v1922
      %v1984 = vpack.c.b16 %v1925, %v1924
      %v1985 = vpack.c.b16 %v1927, %v1926
      %v1986 = vpack.c.b16 %v1929, %v1928
      %v1987 = vpack.c.b16 %v1931, %v1930
      %v1988 = vpack.c.b16 %v1933, %v1932
      %v1989 = vpack.c.b16 %v1935, %v1934
      %vm2044 = vcmask 785408
      %v2046 = vsel %vm2044, %v1310, 0
      %v2049 = vsel %vm2044, %v1317, 0
      %v2052 = vsel %vm2044, %v1324, 0
      %v2055 = vsel %vm2044, %v1331, 0
      %v2058 = vsel %vm2044, %v1338, 0
      %v2061 = vsel %vm2044, %v1345, 0
      %v2064 = vsel %vm2044, %v1352, 0
      %v2067 = vsel %vm2044, %v1359, 0
      %v2070 = vsel %vm2044, %v1366, 0
      %v2073 = vsel %vm2044, %v1373, 0
      %v2076 = vsel %vm2044, %v1380, 0
      %v2079 = vsel %vm2044, %v1387, 0
      %v2082 = vsel %vm2044, %v1394, 0
      %v2085 = vsel %vm2044, %v1401, 0
      %v2088 = vsel %vm2044, %v1408, 0
      %v2091 = vsel %vm2044, %v1415, 0
      %v2094 = vsel %vm2044, %v1422, 0
      %v2097 = vsel %vm2044, %v1429, 0
      %v2100 = vsel %vm2044, %v1436, 0
      %v2103 = vsel %vm2044, %v1443, 0
      %v2106 = vsel %vm2044, %v1450, 0
      %v2109 = vsel %vm2044, %v1457, 0
      %v2112 = vsel %vm2044, %v1464, 0
      %v2115 = vsel %vm2044, %v1471, 0
      %v2118 = vsel %vm2044, %v1478, 0
      %v2121 = vsel %vm2044, %v1485, 0
      %v2124 = vsel %vm2044, %v1492, 0
      %v2127 = vsel %vm2044, %v1499, 0
      %v2130 = vsel %vm2044, %v1506, 0
      %v2133 = vsel %vm2044, %v1513, 0
      %v2136 = vsel %vm2044, %v1520, 0
      %v2139 = vsel %vm2044, %v1527, 0
      %2141 = vmatprep.subr.bf16.mxu0 0
      %2142 = vmatpush1.bf16.msra.mxu0 %v1936
      %2143 = vmatprep.subr.bf16.mxu0 0
      %2144 = vmatpush1.bf16.msra.mxu0 %v1937
      %2145 = vmatprep.subr.bf16.mxu0 0
      %2146 = vmatpush1.bf16.msra.mxu0 %v1938
      %2147 = vmatprep.subr.bf16.mxu0 0
      %2148 = vmatpush1.bf16.msra.mxu0 %v1939
      %2149 = vmatprep.subr.bf16.mxu0 0
      %2150 = vmatpush1.bf16.msra.mxu0 %v1940
      %2151 = vmatprep.subr.bf16.mxu0 0
      %2152 = vmatpush1.bf16.msra.mxu0 %v1941
      %2153 = vmatprep.subr.bf16.mxu0 0
      %2154 = vmatpush1.bf16.msra.mxu0 %v1942
      %2155 = vmatprep.subr.bf16.mxu0 0
      %2156 = vmatpush1.bf16.msra.mxu0 %v1943
      %2157 = vmatprep.subr.bf16.mxu0 0
      %2158 = vmatpush1.bf16.msra.mxu0 %v1944
      %2159 = vmatprep.subr.bf16.mxu0 0
      %2160 = vmatpush1.bf16.msra.mxu0 %v1945
      %2161 = vmatprep.subr.bf16.mxu0 0
      %2162 = vmatpush1.bf16.msra.mxu0 %v1946
      %2163 = vmatprep.subr.bf16.mxu0 0
      %2164 = vmatpush1.bf16.msra.mxu0 %v1947
      %2165 = vmatprep.subr.bf16.mxu0 0
      %2166 = vmatpush1.bf16.msra.mxu0 %v1948
      %2167 = vmatprep.subr.bf16.mxu0 0
      %2168 = vmatpush1.bf16.msra.mxu0 %v1949
      %2169 = vmatprep.subr.bf16.mxu0 0
      %2170 = vmatpush1.bf16.msra.mxu0 %v1950
      %2171 = vmatprep.subr.bf16.mxu0 0
      %2172 = vmatpush1.bf16.msra.mxu0 %v1951
      %2173 = vmatprep.mubr.bf16.mxu0 %v1305
      %2174 = vmatmul.mubr.bf16.gmra.mrb[0].mxu0 %v1304
      %v2175 = vpop.f32.mrb[0].mxu0
      %v2176 = vadd.f32 %v598, %v2175
      %v2177 = vpop.f32.mrb[0].mxu0
      %v2178 = vpop.f32.mrb[0].mxu0
      %v2179 = vadd.f32 %v598, %v2178
      %v2180 = vpop.f32.mrb[0].mxu0
      %2181 = vmatprep.mubr.bf16.mxu0 %v1312
      %2182 = vmatmul.mubr.bf16.gmra.mrb[0].mxu0 %v1311
      %v2183 = vpop.f32.mrb[0].mxu0
      %v2184 = vadd.f32 %v598, %v2183
      %v2185 = vpop.f32.mrb[0].mxu0
      %v2186 = vpop.f32.mrb[0].mxu0
      %v2187 = vadd.f32 %v598, %v2186
      %v2188 = vpop.f32.mrb[0].mxu0
      %2189 = vmatprep.mubr.bf16.mxu0 %v1319
      %2190 = vmatmul.mubr.bf16.gmra.mrb[0].mxu0 %v1318
      %v2191 = vpop.f32.mrb[0].mxu0
      %v2192 = vadd.f32 %v598, %v2191
      %v2193 = vpop.f32.mrb[0].mxu0
      %v2194 = vpop.f32.mrb[0].mxu0
      %v2195 = vadd.f32 %v598, %v2194
      %v2196 = vpop.f32.mrb[0].mxu0
      %2197 = vmatprep.mubr.bf16.mxu0 %v1326
      %2198 = vmatmul.mubr.bf16.gmra.mrb[0].mxu0 %v1325
      %v2199 = vpop.f32.mrb[0].mxu0
      %v2200 = vadd.f32 %v598, %v2199
      %v2201 = vpop.f32.mrb[0].mxu0
      %v2202 = vpop.f32.mrb[0].mxu0
      %v2203 = vadd.f32 %v598, %v2202
      %v2204 = vpop.f32.mrb[0].mxu0
      %2205 = vmatprep.mubr.bf16.mxu0 %v1333
      %2206 = vmatmul.mubr.bf16.gmra.mrb[0].mxu0 %v1332
      %v2207 = vpop.f32.mrb[0].mxu0
      %v2208 = vadd.f32 %v598, %v2207
      %v2209 = vpop.f32.mrb[0].mxu0
      %v2210 = vpop.f32.mrb[0].mxu0
      %v2211 = vadd.f32 %v598, %v2210
      %v2212 = vpop.f32.mrb[0].mxu0
      %2213 = vmatprep.mubr.bf16.mxu0 %v1340
      %2214 = vmatmul.mubr.bf16.gmra.mrb[0].mxu0 %v1339
      %v2215 = vpop.f32.mrb[0].mxu0
      %v2216 = vadd.f32 %v598, %v2215
      %v2217 = vpop.f32.mrb[0].mxu0
      %v2218 = vpop.f32.mrb[0].mxu0
      %v2219 = vadd.f32 %v598, %v2218
      %v2220 = vpop.f32.mrb[0].mxu0
      %2221 = vmatprep.mubr.bf16.mxu0 %v1347
      %2222 = vmatmul.mubr.bf16.gmra.mrb[0].mxu0 %v1346
      %v2223 = vpop.f32.mrb[0].mxu0
      %v2224 = vadd.f32 %v598, %v2223
      %v2225 = vpop.f32.mrb[0].mxu0
      %v2226 = vpop.f32.mrb[0].mxu0
      %v2227 = vadd.f32 %v598, %v2226
      %v2228 = vpop.f32.mrb[0].mxu0
      %2229 = vmatprep.mubr.bf16.mxu0 %v1354
      %2230 = vmatmul.mubr.bf16.gmra.mrb[0].mxu0 %v1353
      %v2231 = vpop.f32.mrb[0].mxu0
      %v2232 = vadd.f32 %v598, %v2231
      %v2233 = vpop.f32.mrb[0].mxu0
      %v2234 = vpop.f32.mrb[0].mxu0
      %v2235 = vadd.f32 %v598, %v2234
      %v2236 = vpop.f32.mrb[0].mxu0
      %2237 = vmatprep.mubr.bf16.mxu0 %v1361
      %2238 = vmatmul.mubr.bf16.gmra.mrb[0].mxu0 %v1360
      %v2239 = vpop.f32.mrb[0].mxu0
      %v2240 = vadd.f32 %v598, %v2239
      %v2241 = vpop.f32.mrb[0].mxu0
      %v2242 = vpop.f32.mrb[0].mxu0
      %v2243 = vadd.f32 %v598, %v2242
      %v2244 = vpop.f32.mrb[0].mxu0
      %2245 = vmatprep.mubr.bf16.mxu0 %v1368
      %2246 = vmatmul.mubr.bf16.gmra.mrb[0].mxu0 %v1367
      %v2247 = vpop.f32.mrb[0].mxu0
      %v2248 = vadd.f32 %v598, %v2247
      %v2249 = vpop.f32.mrb[0].mxu0
      %v2250 = vpop.f32.mrb[0].mxu0
      %v2251 = vadd.f32 %v598, %v2250
      %v2252 = vpop.f32.mrb[0].mxu0
      %2253 = vmatprep.mubr.bf16.mxu0 %v1375
      %2254 = vmatmul.mubr.bf16.gmra.mrb[0].mxu0 %v1374
      %v2255 = vpop.f32.mrb[0].mxu0
      %v2256 = vadd.f32 %v598, %v2255
      %v2257 = vpop.f32.mrb[0].mxu0
      %v2258 = vpop.f32.mrb[0].mxu0
      %v2259 = vadd.f32 %v598, %v2258
      %v2260 = vpop.f32.mrb[0].mxu0
      %2261 = vmatprep.mubr.bf16.mxu0 %v1382
      %2262 = vmatmul.mubr.bf16.gmra.mrb[0].mxu0 %v1381
      %v2263 = vpop.f32.mrb[0].mxu0
      %v2264 = vadd.f32 %v598, %v2263
      %v2265 = vpop.f32.mrb[0].mxu0
      %v2266 = vpop.f32.mrb[0].mxu0
      %v2267 = vadd.f32 %v598, %v2266
      %v2268 = vpop.f32.mrb[0].mxu0
      %2269 = vmatprep.mubr.bf16.mxu0 %v1389
      %2270 = vmatmul.mubr.bf16.gmra.mrb[0].mxu0 %v1388
      %v2271 = vpop.f32.mrb[0].mxu0
      %v2272 = vadd.f32 %v598, %v2271
      %v2273 = vpop.f32.mrb[0].mxu0
      %v2274 = vpop.f32.mrb[0].mxu0
      %v2275 = vadd.f32 %v598, %v2274
      %v2276 = vpop.f32.mrb[0].mxu0
      %2277 = vmatprep.mubr.bf16.mxu0 %v1396
      %2278 = vmatmul.mubr.bf16.gmra.mrb[0].mxu0 %v1395
      %v2279 = vpop.f32.mrb[0].mxu0
      %v2280 = vadd.f32 %v598, %v2279
      %v2281 = vpop.f32.mrb[0].mxu0
      %v2282 = vpop.f32.mrb[0].mxu0
      %v2283 = vadd.f32 %v598, %v2282
      %v2284 = vpop.f32.mrb[0].mxu0
      %2285 = vmatprep.mubr.bf16.mxu0 %v1403
      %2286 = vmatmul.mubr.bf16.gmra.mrb[0].mxu0 %v1402
      %v2287 = vpop.f32.mrb[0].mxu0
      %v2288 = vadd.f32 %v598, %v2287
      %v2289 = vpop.f32.mrb[0].mxu0
      %v2290 = vpop.f32.mrb[0].mxu0
      %v2291 = vadd.f32 %v598, %v2290
      %v2292 = vpop.f32.mrb[0].mxu0
      %2293 = vmatprep.mubr.bf16.mxu0 %v1410
      %2294 = vmatmul.mubr.bf16.gmra.mrb[0].mxu0 %v1409
      %v2295 = vpop.f32.mrb[0].mxu0
      %v2296 = vadd.f32 %v598, %v2295
      %v2297 = vpop.f32.mrb[0].mxu0
      %v2298 = vpop.f32.mrb[0].mxu0
      %v2299 = vadd.f32 %v598, %v2298
      %v2300 = vpop.f32.mrb[0].mxu0
      %2301 = vmatprep.mubr.bf16.mxu0 %v1417
      %2302 = vmatmul.mubr.bf16.gmra.mrb[0].mxu0 %v1416
      %v2303 = vpop.f32.mrb[0].mxu0
      %v2304 = vadd.f32 %v598, %v2303
      %v2305 = vpop.f32.mrb[0].mxu0
      %v2306 = vpop.f32.mrb[0].mxu0
      %v2307 = vadd.f32 %v598, %v2306
      %v2308 = vpop.f32.mrb[0].mxu0
      %2309 = vmatprep.mubr.bf16.mxu0 %v1424
      %2310 = vmatmul.mubr.bf16.gmra.mrb[0].mxu0 %v1423
      %v2311 = vpop.f32.mrb[0].mxu0
      %v2312 = vadd.f32 %v598, %v2311
      %v2313 = vpop.f32.mrb[0].mxu0
      %v2314 = vpop.f32.mrb[0].mxu0
      %v2315 = vadd.f32 %v598, %v2314
      %v2316 = vpop.f32.mrb[0].mxu0
      %2317 = vmatprep.mubr.bf16.mxu0 %v1431
      %2318 = vmatmul.mubr.bf16.gmra.mrb[0].mxu0 %v1430
      %v2319 = vpop.f32.mrb[0].mxu0
      %v2320 = vadd.f32 %v598, %v2319
      %v2321 = vpop.f32.mrb[0].mxu0
      %v2322 = vpop.f32.mrb[0].mxu0
      %v2323 = vadd.f32 %v598, %v2322
      %v2324 = vpop.f32.mrb[0].mxu0
      %2325 = vmatprep.mubr.bf16.mxu0 %v1438
      %2326 = vmatmul.mubr.bf16.gmra.mrb[0].mxu0 %v1437
      %v2327 = vpop.f32.mrb[0].mxu0
      %v2328 = vadd.f32 %v598, %v2327
      %v2329 = vpop.f32.mrb[0].mxu0
      %v2330 = vpop.f32.mrb[0].mxu0
      %v2331 = vadd.f32 %v598, %v2330
      %v2332 = vpop.f32.mrb[0].mxu0
      %2333 = vmatprep.mubr.bf16.mxu0 %v1445
      %2334 = vmatmul.mubr.bf16.gmra.mrb[0].mxu0 %v1444
      %v2335 = vpop.f32.mrb[0].mxu0
      %v2336 = vadd.f32 %v598, %v2335
      %v2337 = vpop.f32.mrb[0].mxu0
      %v2338 = vpop.f32.mrb[0].mxu0
      %v2339 = vadd.f32 %v598, %v2338
      %v2340 = vpop.f32.mrb[0].mxu0
      %2341 = vmatprep.mubr.bf16.mxu0 %v1452
      %2342 = vmatmul.mubr.bf16.gmra.mrb[0].mxu0 %v1451
      %v2343 = vpop.f32.mrb[0].mxu0
      %v2344 = vadd.f32 %v598, %v2343
      %v2345 = vpop.f32.mrb[0].mxu0
      %v2346 = vpop.f32.mrb[0].mxu0
      %v2347 = vadd.f32 %v598, %v2346
      %v2348 = vpop.f32.mrb[0].mxu0
      %2349 = vmatprep.mubr.bf16.mxu0 %v1459
      %2350 = vmatmul.mubr.bf16.gmra.mrb[0].mxu0 %v1458
      %v2351 = vpop.f32.mrb[0].mxu0
      %v2352 = vadd.f32 %v598, %v2351
      %v2353 = vpop.f32.mrb[0].mxu0
      %v2354 = vpop.f32.mrb[0].mxu0
      %v2355 = vadd.f32 %v598, %v2354
      %v2356 = vpop.f32.mrb[0].mxu0
      %2357 = vmatprep.mubr.bf16.mxu0 %v1466
      %2358 = vmatmul.mubr.bf16.gmra.mrb[0].mxu0 %v1465
      %v2359 = vpop.f32.mrb[0].mxu0
      %v2360 = vadd.f32 %v598, %v2359
      %v2361 = vpop.f32.mrb[0].mxu0
      %v2362 = vpop.f32.mrb[0].mxu0
      %v2363 = vadd.f32 %v598, %v2362
      %v2364 = vpop.f32.mrb[0].mxu0
      %2365 = vmatprep.mubr.bf16.mxu0 %v1473
      %2366 = vmatmul.mubr.bf16.gmra.mrb[0].mxu0 %v1472
      %v2367 = vpop.f32.mrb[0].mxu0
      %v2368 = vadd.f32 %v598, %v2367
      %v2369 = vpop.f32.mrb[0].mxu0
      %v2370 = vpop.f32.mrb[0].mxu0
      %v2371 = vadd.f32 %v598, %v2370
      %v2372 = vpop.f32.mrb[0].mxu0
      %2373 = vmatprep.mubr.bf16.mxu0 %v1480
      %2374 = vmatmul.mubr.bf16.gmra.mrb[0].mxu0 %v1479
      %v2375 = vpop.f32.mrb[0].mxu0
      %v2376 = vadd.f32 %v598, %v2375
      %v2377 = vpop.f32.mrb[0].mxu0
      %v2378 = vpop.f32.mrb[0].mxu0
      %v2379 = vadd.f32 %v598, %v2378
      %v2380 = vpop.f32.mrb[0].mxu0
      %2381 = vmatprep.mubr.bf16.mxu0 %v1487
      %2382 = vmatmul.mubr.bf16.gmra.mrb[0].mxu0 %v1486
      %v2383 = vpop.f32.mrb[0].mxu0
      %v2384 = vadd.f32 %v598, %v2383
      %v2385 = vpop.f32.mrb[0].mxu0
      %v2386 = vpop.f32.mrb[0].mxu0
      %v2387 = vadd.f32 %v598, %v2386
      %v2388 = vpop.f32.mrb[0].mxu0
      %2389 = vmatprep.mubr.bf16.mxu0 %v1494
      %2390 = vmatmul.mubr.bf16.gmra.mrb[0].mxu0 %v1493
      %v2391 = vpop.f32.mrb[0].mxu0
      %v2392 = vadd.f32 %v598, %v2391
      %v2393 = vpop.f32.mrb[0].mxu0
      %v2394 = vpop.f32.mrb[0].mxu0
      %v2395 = vadd.f32 %v598, %v2394
      %v2396 = vpop.f32.mrb[0].mxu0
      %2397 = vmatprep.mubr.bf16.mxu0 %v1501
      %2398 = vmatmul.mubr.bf16.gmra.mrb[0].mxu0 %v1500
      %v2399 = vpop.f32.mrb[0].mxu0
      %v2400 = vadd.f32 %v598, %v2399
      %v2401 = vpop.f32.mrb[0].mxu0
      %v2402 = vpop.f32.mrb[0].mxu0
      %v2403 = vadd.f32 %v598, %v2402
      %v2404 = vpop.f32.mrb[0].mxu0
      %2405 = vmatprep.mubr.bf16.mxu0 %v1508
      %2406 = vmatmul.mubr.bf16.gmra.mrb[0].mxu0 %v1507
      %v2407 = vpop.f32.mrb[0].mxu0
      %v2408 = vadd.f32 %v598, %v2407
      %v2409 = vpop.f32.mrb[0].mxu0
      %v2410 = vpop.f32.mrb[0].mxu0
      %v2411 = vadd.f32 %v598, %v2410
      %v2412 = vpop.f32.mrb[0].mxu0
      %2413 = vmatprep.mubr.bf16.mxu0 %v1515
      %2414 = vmatmul.mubr.bf16.gmra.mrb[0].mxu0 %v1514
      %v2415 = vpop.f32.mrb[0].mxu0
      %v2416 = vadd.f32 %v598, %v2415
      %v2417 = vpop.f32.mrb[0].mxu0
      %v2418 = vpop.f32.mrb[0].mxu0
      %v2419 = vadd.f32 %v598, %v2418
      %v2420 = vpop.f32.mrb[0].mxu0
      %2421 = vmatprep.mubr.bf16.mxu0 %v1522
      %2422 = vmatmul.mubr.bf16.gmra.mrb[0].mxu0 %v1521
      %v2423 = vpop.f32.mrb[0].mxu0
      %v2424 = vadd.f32 %v598, %v2423
      %v2425 = vpop.f32.mrb[0].mxu0
      %v2426 = vpop.f32.mrb[0].mxu0
      %v2427 = vadd.f32 %v598, %v2426
      %v2428 = vpop.f32.mrb[0].mxu0
      %2429 = vdwg.mxu0
      %2430 = vmatprep.subr.bf16.mxu0 0
      %2431 = vmatpush1.bf16.msra.mxu0 %v1952
      %2432 = vmatprep.subr.bf16.mxu0 0
      %2433 = vmatpush1.bf16.msra.mxu0 %v1953
      %2434 = vmatprep.subr.bf16.mxu0 0
      %2435 = vmatpush1.bf16.msra.mxu0 %v1954
      %2436 = vmatprep.subr.bf16.mxu0 0
      %2437 = vmatpush1.bf16.msra.mxu0 %v1955
      %2438 = vmatprep.subr.bf16.mxu0 0
      %2439 = vmatpush1.bf16.msra.mxu0 %v1956
      %2440 = vmatprep.subr.bf16.mxu0 0
      %2441 = vmatpush1.bf16.msra.mxu0 %v1957
      %2442 = vmatprep.subr.bf16.mxu0 0
      %2443 = vmatpush1.bf16.msra.mxu0 %v1958
      %2444 = vmatprep.subr.bf16.mxu0 0
      %2445 = vmatpush1.bf16.msra.mxu0 %v1959
      %2446 = vmatprep.subr.bf16.mxu0 0
      %2447 = vmatpush1.bf16.msra.mxu0 %v1960
      %2448 = vmatprep.subr.bf16.mxu0 0
      %2449 = vmatpush1.bf16.msra.mxu0 %v1961
      %2450 = vmatprep.subr.bf16.mxu0 0
      %2451 = vmatpush1.bf16.msra.mxu0 %v1962
      %2452 = vmatprep.subr.bf16.mxu0 0
      %2453 = vmatpush1.bf16.msra.mxu0 %v1963
      %2454 = vmatprep.subr.bf16.mxu0 0
      %2455 = vmatpush1.bf16.msra.mxu0 %v1964
      %2456 = vmatprep.subr.bf16.mxu0 0
      %2457 = vmatpush1.bf16.msra.mxu0 %v1965
      %2458 = vmatprep.subr.bf16.mxu0 0
      %2459 = vmatpush1.bf16.msra.mxu0 %v1966
      %2460 = vmatprep.subr.bf16.mxu0 0
      %2461 = vmatpush1.bf16.msra.mxu0 %v1967
      %2462 = vmatprep.mubr.bf16.mxu0 %v1307
      %2463 = vmatmul.mubr.bf16.gmra.mrb[0].mxu0 %v1306
      %v2464 = vpop.f32.mrb[0].mxu0
      %v2465 = vadd.f32 %v2176, %v2464
      %v2466 = vpop.f32.mrb[0].mxu0
      %v2467 = vpop.f32.mrb[0].mxu0
      %v2468 = vadd.f32 %v2179, %v2467
      %v2469 = vpop.f32.mrb[0].mxu0
      %2470 = vmatprep.mubr.bf16.mxu0 %v1314
      %2471 = vmatmul.mubr.bf16.gmra.mrb[0].mxu0 %v1313
      %v2472 = vpop.f32.mrb[0].mxu0
      %v2473 = vadd.f32 %v2184, %v2472
      %v2474 = vpop.f32.mrb[0].mxu0
      %v2475 = vpop.f32.mrb[0].mxu0
      %v2476 = vadd.f32 %v2187, %v2475
      %v2477 = vpop.f32.mrb[0].mxu0
      %2478 = vmatprep.mubr.bf16.mxu0 %v1321
      %2479 = vmatmul.mubr.bf16.gmra.mrb[0].mxu0 %v1320
      %v2480 = vpop.f32.mrb[0].mxu0
      %v2481 = vadd.f32 %v2192, %v2480
      %v2482 = vpop.f32.mrb[0].mxu0
      %v2483 = vpop.f32.mrb[0].mxu0
      %v2484 = vadd.f32 %v2195, %v2483
      %v2485 = vpop.f32.mrb[0].mxu0
      %2486 = vmatprep.mubr.bf16.mxu0 %v1328
      %2487 = vmatmul.mubr.bf16.gmra.mrb[0].mxu0 %v1327
      %v2488 = vpop.f32.mrb[0].mxu0
      %v2489 = vadd.f32 %v2200, %v2488
      %v2490 = vpop.f32.mrb[0].mxu0
      %v2491 = vpop.f32.mrb[0].mxu0
      %v2492 = vadd.f32 %v2203, %v2491
      %v2493 = vpop.f32.mrb[0].mxu0
      %2494 = vmatprep.mubr.bf16.mxu0 %v1335
      %2495 = vmatmul.mubr.bf16.gmra.mrb[0].mxu0 %v1334
      %v2496 = vpop.f32.mrb[0].mxu0
      %v2497 = vadd.f32 %v2208, %v2496
      %v2498 = vpop.f32.mrb[0].mxu0
      %v2499 = vpop.f32.mrb[0].mxu0
      %v2500 = vadd.f32 %v2211, %v2499
      %v2501 = vpop.f32.mrb[0].mxu0
      %2502 = vmatprep.mubr.bf16.mxu0 %v1342
      %2503 = vmatmul.mubr.bf16.gmra.mrb[0].mxu0 %v1341
      %v2504 = vpop.f32.mrb[0].mxu0
      %v2505 = vadd.f32 %v2216, %v2504
      %v2506 = vpop.f32.mrb[0].mxu0
      %v2507 = vpop.f32.mrb[0].mxu0
      %v2508 = vadd.f32 %v2219, %v2507
      %v2509 = vpop.f32.mrb[0].mxu0
      %2510 = vmatprep.mubr.bf16.mxu0 %v1349
      %2511 = vmatmul.mubr.bf16.gmra.mrb[0].mxu0 %v1348
      %v2512 = vpop.f32.mrb[0].mxu0
      %v2513 = vadd.f32 %v2224, %v2512
      %v2514 = vpop.f32.mrb[0].mxu0
      %v2515 = vpop.f32.mrb[0].mxu0
      %v2516 = vadd.f32 %v2227, %v2515
      %v2517 = vpop.f32.mrb[0].mxu0
      %2518 = vmatprep.mubr.bf16.mxu0 %v1356
      %2519 = vmatmul.mubr.bf16.gmra.mrb[0].mxu0 %v1355
      %v2520 = vpop.f32.mrb[0].mxu0
      %v2521 = vadd.f32 %v2232, %v2520
      %v2522 = vpop.f32.mrb[0].mxu0
      %v2523 = vpop.f32.mrb[0].mxu0
      %v2524 = vadd.f32 %v2235, %v2523
      %v2525 = vpop.f32.mrb[0].mxu0
      %2526 = vmatprep.mubr.bf16.mxu0 %v1363
      %2527 = vmatmul.mubr.bf16.gmra.mrb[0].mxu0 %v1362
      %v2528 = vpop.f32.mrb[0].mxu0
      %v2529 = vadd.f32 %v2240, %v2528
      %v2530 = vpop.f32.mrb[0].mxu0
      %v2531 = vpop.f32.mrb[0].mxu0
      %v2532 = vadd.f32 %v2243, %v2531
      %v2533 = vpop.f32.mrb[0].mxu0
      %2534 = vmatprep.mubr.bf16.mxu0 %v1370
      %2535 = vmatmul.mubr.bf16.gmra.mrb[0].mxu0 %v1369
      %v2536 = vpop.f32.mrb[0].mxu0
      %v2537 = vadd.f32 %v2248, %v2536
      %v2538 = vpop.f32.mrb[0].mxu0
      %v2539 = vpop.f32.mrb[0].mxu0
      %v2540 = vadd.f32 %v2251, %v2539
      %v2541 = vpop.f32.mrb[0].mxu0
      %2542 = vmatprep.mubr.bf16.mxu0 %v1377
      %2543 = vmatmul.mubr.bf16.gmra.mrb[0].mxu0 %v1376
      %v2544 = vpop.f32.mrb[0].mxu0
      %v2545 = vadd.f32 %v2256, %v2544
      %v2546 = vpop.f32.mrb[0].mxu0
      %v2547 = vpop.f32.mrb[0].mxu0
      %v2548 = vadd.f32 %v2259, %v2547
      %v2549 = vpop.f32.mrb[0].mxu0
      %2550 = vmatprep.mubr.bf16.mxu0 %v1384
      %2551 = vmatmul.mubr.bf16.gmra.mrb[0].mxu0 %v1383
      %v2552 = vpop.f32.mrb[0].mxu0
      %v2553 = vadd.f32 %v2264, %v2552
      %v2554 = vpop.f32.mrb[0].mxu0
      %v2555 = vpop.f32.mrb[0].mxu0
      %v2556 = vadd.f32 %v2267, %v2555
      %v2557 = vpop.f32.mrb[0].mxu0
      %2558 = vmatprep.mubr.bf16.mxu0 %v1391
      %2559 = vmatmul.mubr.bf16.gmra.mrb[0].mxu0 %v1390
      %v2560 = vpop.f32.mrb[0].mxu0
      %v2561 = vadd.f32 %v2272, %v2560
      %v2562 = vpop.f32.mrb[0].mxu0
      %v2563 = vpop.f32.mrb[0].mxu0
      %v2564 = vadd.f32 %v2275, %v2563
      %v2565 = vpop.f32.mrb[0].mxu0
      %2566 = vmatprep.mubr.bf16.mxu0 %v1398
      %2567 = vmatmul.mubr.bf16.gmra.mrb[0].mxu0 %v1397
      %v2568 = vpop.f32.mrb[0].mxu0
      %v2569 = vadd.f32 %v2280, %v2568
      %v2570 = vpop.f32.mrb[0].mxu0
      %v2571 = vpop.f32.mrb[0].mxu0
      %v2572 = vadd.f32 %v2283, %v2571
      %v2573 = vpop.f32.mrb[0].mxu0
      %2574 = vmatprep.mubr.bf16.mxu0 %v1405
      %2575 = vmatmul.mubr.bf16.gmra.mrb[0].mxu0 %v1404
      %v2576 = vpop.f32.mrb[0].mxu0
      %v2577 = vadd.f32 %v2288, %v2576
      %v2578 = vpop.f32.mrb[0].mxu0
      %v2579 = vpop.f32.mrb[0].mxu0
      %v2580 = vadd.f32 %v2291, %v2579
      %v2581 = vpop.f32.mrb[0].mxu0
      %2582 = vmatprep.mubr.bf16.mxu0 %v1412
      %2583 = vmatmul.mubr.bf16.gmra.mrb[0].mxu0 %v1411
      %v2584 = vpop.f32.mrb[0].mxu0
      %v2585 = vadd.f32 %v2296, %v2584
      %v2586 = vpop.f32.mrb[0].mxu0
      %v2587 = vpop.f32.mrb[0].mxu0
      %v2588 = vadd.f32 %v2299, %v2587
      %v2589 = vpop.f32.mrb[0].mxu0
      %2590 = vmatprep.mubr.bf16.mxu0 %v1419
      %2591 = vmatmul.mubr.bf16.gmra.mrb[0].mxu0 %v1418
      %v2592 = vpop.f32.mrb[0].mxu0
      %v2593 = vadd.f32 %v2304, %v2592
      %v2594 = vpop.f32.mrb[0].mxu0
      %v2595 = vpop.f32.mrb[0].mxu0
      %v2596 = vadd.f32 %v2307, %v2595
      %v2597 = vpop.f32.mrb[0].mxu0
      %2598 = vmatprep.mubr.bf16.mxu0 %v1426
      %2599 = vmatmul.mubr.bf16.gmra.mrb[0].mxu0 %v1425
      %v2600 = vpop.f32.mrb[0].mxu0
      %v2601 = vadd.f32 %v2312, %v2600
      %v2602 = vpop.f32.mrb[0].mxu0
      %v2603 = vpop.f32.mrb[0].mxu0
      %v2604 = vadd.f32 %v2315, %v2603
      %v2605 = vpop.f32.mrb[0].mxu0
      %2606 = vmatprep.mubr.bf16.mxu0 %v1433
      %2607 = vmatmul.mubr.bf16.gmra.mrb[0].mxu0 %v1432
      %v2608 = vpop.f32.mrb[0].mxu0
      %v2609 = vadd.f32 %v2320, %v2608
      %v2610 = vpop.f32.mrb[0].mxu0
      %v2611 = vpop.f32.mrb[0].mxu0
      %v2612 = vadd.f32 %v2323, %v2611
      %v2613 = vpop.f32.mrb[0].mxu0
      %2614 = vmatprep.mubr.bf16.mxu0 %v1440
      %2615 = vmatmul.mubr.bf16.gmra.mrb[0].mxu0 %v1439
      %v2616 = vpop.f32.mrb[0].mxu0
      %v2617 = vadd.f32 %v2328, %v2616
      %v2618 = vpop.f32.mrb[0].mxu0
      %v2619 = vpop.f32.mrb[0].mxu0
      %v2620 = vadd.f32 %v2331, %v2619
      %v2621 = vpop.f32.mrb[0].mxu0
      %2622 = vmatprep.mubr.bf16.mxu0 %v1447
      %2623 = vmatmul.mubr.bf16.gmra.mrb[0].mxu0 %v1446
      %v2624 = vpop.f32.mrb[0].mxu0
      %v2625 = vadd.f32 %v2336, %v2624
      %v2626 = vpop.f32.mrb[0].mxu0
      %v2627 = vpop.f32.mrb[0].mxu0
      %v2628 = vadd.f32 %v2339, %v2627
      %v2629 = vpop.f32.mrb[0].mxu0
      %2630 = vmatprep.mubr.bf16.mxu0 %v1454
      %2631 = vmatmul.mubr.bf16.gmra.mrb[0].mxu0 %v1453
      %v2632 = vpop.f32.mrb[0].mxu0
      %v2633 = vadd.f32 %v2344, %v2632
      %v2634 = vpop.f32.mrb[0].mxu0
      %v2635 = vpop.f32.mrb[0].mxu0
      %v2636 = vadd.f32 %v2347, %v2635
      %v2637 = vpop.f32.mrb[0].mxu0
      %2638 = vmatprep.mubr.bf16.mxu0 %v1461
      %2639 = vmatmul.mubr.bf16.gmra.mrb[0].mxu0 %v1460
      %v2640 = vpop.f32.mrb[0].mxu0
      %v2641 = vadd.f32 %v2352, %v2640
      %v2642 = vpop.f32.mrb[0].mxu0
      %v2643 = vpop.f32.mrb[0].mxu0
      %v2644 = vadd.f32 %v2355, %v2643
      %v2645 = vpop.f32.mrb[0].mxu0
      %2646 = vmatprep.mubr.bf16.mxu0 %v1468
      %2647 = vmatmul.mubr.bf16.gmra.mrb[0].mxu0 %v1467
      %v2648 = vpop.f32.mrb[0].mxu0
      %v2649 = vadd.f32 %v2360, %v2648
      %v2650 = vpop.f32.mrb[0].mxu0
      %v2651 = vpop.f32.mrb[0].mxu0
      %v2652 = vadd.f32 %v2363, %v2651
      %v2653 = vpop.f32.mrb[0].mxu0
      %2654 = vmatprep.mubr.bf16.mxu0 %v1475
      %2655 = vmatmul.mubr.bf16.gmra.mrb[0].mxu0 %v1474
      %v2656 = vpop.f32.mrb[0].mxu0
      %v2657 = vadd.f32 %v2368, %v2656
      %v2658 = vpop.f32.mrb[0].mxu0
      %v2659 = vpop.f32.mrb[0].mxu0
      %v2660 = vadd.f32 %v2371, %v2659
      %v2661 = vpop.f32.mrb[0].mxu0
      %2662 = vmatprep.mubr.bf16.mxu0 %v1482
      %2663 = vmatmul.mubr.bf16.gmra.mrb[0].mxu0 %v1481
      %v2664 = vpop.f32.mrb[0].mxu0
      %v2665 = vadd.f32 %v2376, %v2664
      %v2666 = vpop.f32.mrb[0].mxu0
      %v2667 = vpop.f32.mrb[0].mxu0
      %v2668 = vadd.f32 %v2379, %v2667
      %v2669 = vpop.f32.mrb[0].mxu0
      %2670 = vmatprep.mubr.bf16.mxu0 %v1489
      %2671 = vmatmul.mubr.bf16.gmra.mrb[0].mxu0 %v1488
      %v2672 = vpop.f32.mrb[0].mxu0
      %v2673 = vadd.f32 %v2384, %v2672
      %v2674 = vpop.f32.mrb[0].mxu0
      %v2675 = vpop.f32.mrb[0].mxu0
      %v2676 = vadd.f32 %v2387, %v2675
      %v2677 = vpop.f32.mrb[0].mxu0
      %2678 = vmatprep.mubr.bf16.mxu0 %v1496
      %2679 = vmatmul.mubr.bf16.gmra.mrb[0].mxu0 %v1495
      %v2680 = vpop.f32.mrb[0].mxu0
      %v2681 = vadd.f32 %v2392, %v2680
      %v2682 = vpop.f32.mrb[0].mxu0
      %v2683 = vpop.f32.mrb[0].mxu0
      %v2684 = vadd.f32 %v2395, %v2683
      %v2685 = vpop.f32.mrb[0].mxu0
      %2686 = vmatprep.mubr.bf16.mxu0 %v1503
      %2687 = vmatmul.mubr.bf16.gmra.mrb[0].mxu0 %v1502
      %v2688 = vpop.f32.mrb[0].mxu0
      %v2689 = vadd.f32 %v2400, %v2688
      %v2690 = vpop.f32.mrb[0].mxu0
      %v2691 = vpop.f32.mrb[0].mxu0
      %v2692 = vadd.f32 %v2403, %v2691
      %v2693 = vpop.f32.mrb[0].mxu0
      %2694 = vmatprep.mubr.bf16.mxu0 %v1510
      %2695 = vmatmul.mubr.bf16.gmra.mrb[0].mxu0 %v1509
      %v2696 = vpop.f32.mrb[0].mxu0
      %v2697 = vadd.f32 %v2408, %v2696
      %v2698 = vpop.f32.mrb[0].mxu0
      %v2699 = vpop.f32.mrb[0].mxu0
      %v2700 = vadd.f32 %v2411, %v2699
      %v2701 = vpop.f32.mrb[0].mxu0
      %2702 = vmatprep.mubr.bf16.mxu0 %v1517
      %2703 = vmatmul.mubr.bf16.gmra.mrb[0].mxu0 %v1516
      %v2704 = vpop.f32.mrb[0].mxu0
      %v2705 = vadd.f32 %v2416, %v2704
      %v2706 = vpop.f32.mrb[0].mxu0
      %v2707 = vpop.f32.mrb[0].mxu0
      %v2708 = vadd.f32 %v2419, %v2707
      %v2709 = vpop.f32.mrb[0].mxu0
      %2710 = vmatprep.mubr.bf16.mxu0 %v1524
      %2711 = vmatmul.mubr.bf16.gmra.mrb[0].mxu0 %v1523
      %v2712 = vpop.f32.mrb[0].mxu0
      %v2713 = vadd.f32 %v2424, %v2712
      %v2714 = vpop.f32.mrb[0].mxu0
      %v2715 = vpop.f32.mrb[0].mxu0
      %v2716 = vadd.f32 %v2427, %v2715
      %v2717 = vpop.f32.mrb[0].mxu0
      %2718 = vdwg.mxu0
      %2719 = vmatprep.subr.bf16.mxu0 0
      %2720 = vmatpush1.bf16.msra.mxu0 %v1968
      %2721 = vmatprep.subr.bf16.mxu0 0
      %2722 = vmatpush1.bf16.msra.mxu0 %v1969
      %2723 = vmatprep.subr.bf16.mxu0 0
      %2724 = vmatpush1.bf16.msra.mxu0 %v1970
      %2725 = vmatprep.subr.bf16.mxu0 0
      %2726 = vmatpush1.bf16.msra.mxu0 %v1971
      %2727 = vmatprep.subr.bf16.mxu0 0
      %2728 = vmatpush1.bf16.msra.mxu0 %v1972
      %2729 = vmatprep.subr.bf16.mxu0 0
      %2730 = vmatpush1.bf16.msra.mxu0 %v1973
      %2731 = vmatprep.subr.bf16.mxu0 0
      %2732 = vmatpush1.bf16.msra.mxu0 %v1974
      %2733 = vmatprep.subr.bf16.mxu0 0
      %2734 = vmatpush1.bf16.msra.mxu0 %v1975
      %2735 = vmatprep.subr.bf16.mxu0 0
      %2736 = vmatpush1.bf16.msra.mxu0 %v1976
      %2737 = vmatprep.subr.bf16.mxu0 0
      %2738 = vmatpush1.bf16.msra.mxu0 %v1977
      %2739 = vmatprep.subr.bf16.mxu0 0
      %2740 = vmatpush1.bf16.msra.mxu0 %v1978
      %2741 = vmatprep.subr.bf16.mxu0 0
      %2742 = vmatpush1.bf16.msra.mxu0 %v1979
      %2743 = vmatprep.subr.bf16.mxu0 0
      %2744 = vmatpush1.bf16.msra.mxu0 %v1980
      %2745 = vmatprep.subr.bf16.mxu0 0
      %2746 = vmatpush1.bf16.msra.mxu0 %v1981
      %2747 = vmatprep.subr.bf16.mxu0 0
      %2748 = vmatpush1.bf16.msra.mxu0 %v1982
      %2749 = vmatprep.subr.bf16.mxu0 0
      %2750 = vmatpush1.bf16.msra.mxu0 %v1983
      %2751 = vmatprep.mubr.bf16.mxu0 %v1309
      %2752 = vmatmul.mubr.bf16.gmra.mrb[0].mxu0 %v1308
      %v2753 = vpop.f32.mrb[0].mxu0
      %v2754 = vadd.f32 %v2465, %v2753
      %v2755 = vpop.f32.mrb[0].mxu0
      %v2756 = vpop.f32.mrb[0].mxu0
      %v2757 = vadd.f32 %v2468, %v2756
      %v2758 = vpop.f32.mrb[0].mxu0
      %2759 = vmatprep.mubr.bf16.mxu0 %v1316
      %2760 = vmatmul.mubr.bf16.gmra.mrb[0].mxu0 %v1315
      %v2761 = vpop.f32.mrb[0].mxu0
      %v2762 = vadd.f32 %v2473, %v2761
      %v2763 = vpop.f32.mrb[0].mxu0
      %v2764 = vpop.f32.mrb[0].mxu0
      %v2765 = vadd.f32 %v2476, %v2764
      %v2766 = vpop.f32.mrb[0].mxu0
      %2767 = vmatprep.mubr.bf16.mxu0 %v1323
      %2768 = vmatmul.mubr.bf16.gmra.mrb[0].mxu0 %v1322
      %v2769 = vpop.f32.mrb[0].mxu0
      %v2770 = vadd.f32 %v2481, %v2769
      %v2771 = vpop.f32.mrb[0].mxu0
      %v2772 = vpop.f32.mrb[0].mxu0
      %v2773 = vadd.f32 %v2484, %v2772
      %v2774 = vpop.f32.mrb[0].mxu0
      %2775 = vmatprep.mubr.bf16.mxu0 %v1330
      %2776 = vmatmul.mubr.bf16.gmra.mrb[0].mxu0 %v1329
      %v2777 = vpop.f32.mrb[0].mxu0
      %v2778 = vadd.f32 %v2489, %v2777
      %v2779 = vpop.f32.mrb[0].mxu0
      %v2780 = vpop.f32.mrb[0].mxu0
      %v2781 = vadd.f32 %v2492, %v2780
      %v2782 = vpop.f32.mrb[0].mxu0
      %2783 = vmatprep.mubr.bf16.mxu0 %v1337
      %2784 = vmatmul.mubr.bf16.gmra.mrb[0].mxu0 %v1336
      %v2785 = vpop.f32.mrb[0].mxu0
      %v2786 = vadd.f32 %v2497, %v2785
      %v2787 = vpop.f32.mrb[0].mxu0
      %v2788 = vpop.f32.mrb[0].mxu0
      %v2789 = vadd.f32 %v2500, %v2788
      %v2790 = vpop.f32.mrb[0].mxu0
      %2791 = vmatprep.mubr.bf16.mxu0 %v1344
      %2792 = vmatmul.mubr.bf16.gmra.mrb[0].mxu0 %v1343
      %v2793 = vpop.f32.mrb[0].mxu0
      %v2794 = vadd.f32 %v2505, %v2793
      %v2795 = vpop.f32.mrb[0].mxu0
      %v2796 = vpop.f32.mrb[0].mxu0
      %v2797 = vadd.f32 %v2508, %v2796
      %v2798 = vpop.f32.mrb[0].mxu0
      %2799 = vmatprep.mubr.bf16.mxu0 %v1351
      %2800 = vmatmul.mubr.bf16.gmra.mrb[0].mxu0 %v1350
      %v2801 = vpop.f32.mrb[0].mxu0
      %v2802 = vadd.f32 %v2513, %v2801
      %v2803 = vpop.f32.mrb[0].mxu0
      %v2804 = vpop.f32.mrb[0].mxu0
      %v2805 = vadd.f32 %v2516, %v2804
      %v2806 = vpop.f32.mrb[0].mxu0
      %2807 = vmatprep.mubr.bf16.mxu0 %v1358
      %2808 = vmatmul.mubr.bf16.gmra.mrb[0].mxu0 %v1357
      %v2809 = vpop.f32.mrb[0].mxu0
      %v2810 = vadd.f32 %v2521, %v2809
      %v2811 = vpop.f32.mrb[0].mxu0
      %v2812 = vpop.f32.mrb[0].mxu0
      %v2813 = vadd.f32 %v2524, %v2812
      %v2814 = vpop.f32.mrb[0].mxu0
      %2815 = vmatprep.mubr.bf16.mxu0 %v1365
      %2816 = vmatmul.mubr.bf16.gmra.mrb[0].mxu0 %v1364
      %v2817 = vpop.f32.mrb[0].mxu0
      %v2818 = vadd.f32 %v2529, %v2817
      %v2819 = vpop.f32.mrb[0].mxu0
      %v2820 = vpop.f32.mrb[0].mxu0
      %v2821 = vadd.f32 %v2532, %v2820
      %v2822 = vpop.f32.mrb[0].mxu0
      %2823 = vmatprep.mubr.bf16.mxu0 %v1372
      %2824 = vmatmul.mubr.bf16.gmra.mrb[0].mxu0 %v1371
      %v2825 = vpop.f32.mrb[0].mxu0
      %v2826 = vadd.f32 %v2537, %v2825
      %v2827 = vpop.f32.mrb[0].mxu0
      %v2828 = vpop.f32.mrb[0].mxu0
      %v2829 = vadd.f32 %v2540, %v2828
      %v2830 = vpop.f32.mrb[0].mxu0
      %2831 = vmatprep.mubr.bf16.mxu0 %v1379
      %2832 = vmatmul.mubr.bf16.gmra.mrb[0].mxu0 %v1378
      %v2833 = vpop.f32.mrb[0].mxu0
      %v2834 = vadd.f32 %v2545, %v2833
      %v2835 = vpop.f32.mrb[0].mxu0
      %v2836 = vpop.f32.mrb[0].mxu0
      %v2837 = vadd.f32 %v2548, %v2836
      %v2838 = vpop.f32.mrb[0].mxu0
      %2839 = vmatprep.mubr.bf16.mxu0 %v1386
      %2840 = vmatmul.mubr.bf16.gmra.mrb[0].mxu0 %v1385
      %v2841 = vpop.f32.mrb[0].mxu0
      %v2842 = vadd.f32 %v2553, %v2841
      %v2843 = vpop.f32.mrb[0].mxu0
      %v2844 = vpop.f32.mrb[0].mxu0
      %v2845 = vadd.f32 %v2556, %v2844
      %v2846 = vpop.f32.mrb[0].mxu0
      %2847 = vmatprep.mubr.bf16.mxu0 %v1393
      %2848 = vmatmul.mubr.bf16.gmra.mrb[0].mxu0 %v1392
      %v2849 = vpop.f32.mrb[0].mxu0
      %v2850 = vadd.f32 %v2561, %v2849
      %v2851 = vpop.f32.mrb[0].mxu0
      %v2852 = vpop.f32.mrb[0].mxu0
      %v2853 = vadd.f32 %v2564, %v2852
      %v2854 = vpop.f32.mrb[0].mxu0
      %2855 = vmatprep.mubr.bf16.mxu0 %v1400
      %2856 = vmatmul.mubr.bf16.gmra.mrb[0].mxu0 %v1399
      %v2857 = vpop.f32.mrb[0].mxu0
      %v2858 = vadd.f32 %v2569, %v2857
      %v2859 = vpop.f32.mrb[0].mxu0
      %v2860 = vpop.f32.mrb[0].mxu0
      %v2861 = vadd.f32 %v2572, %v2860
      %v2862 = vpop.f32.mrb[0].mxu0
      %2863 = vmatprep.mubr.bf16.mxu0 %v1407
      %2864 = vmatmul.mubr.bf16.gmra.mrb[0].mxu0 %v1406
      %v2865 = vpop.f32.mrb[0].mxu0
      %v2866 = vadd.f32 %v2577, %v2865
      %v2867 = vpop.f32.mrb[0].mxu0
      %v2868 = vpop.f32.mrb[0].mxu0
      %v2869 = vadd.f32 %v2580, %v2868
      %v2870 = vpop.f32.mrb[0].mxu0
      %2871 = vmatprep.mubr.bf16.mxu0 %v1414
      %2872 = vmatmul.mubr.bf16.gmra.mrb[0].mxu0 %v1413
      %v2873 = vpop.f32.mrb[0].mxu0
      %v2874 = vadd.f32 %v2585, %v2873
      %v2875 = vpop.f32.mrb[0].mxu0
      %v2876 = vpop.f32.mrb[0].mxu0
      %v2877 = vadd.f32 %v2588, %v2876
      %v2878 = vpop.f32.mrb[0].mxu0
      %2879 = vmatprep.mubr.bf16.mxu0 %v1421
      %2880 = vmatmul.mubr.bf16.gmra.mrb[0].mxu0 %v1420
      %v2881 = vpop.f32.mrb[0].mxu0
      %v2882 = vadd.f32 %v2593, %v2881
      %v2883 = vpop.f32.mrb[0].mxu0
      %v2884 = vpop.f32.mrb[0].mxu0
      %v2885 = vadd.f32 %v2596, %v2884
      %v2886 = vpop.f32.mrb[0].mxu0
      %2887 = vmatprep.mubr.bf16.mxu0 %v1428
      %2888 = vmatmul.mubr.bf16.gmra.mrb[0].mxu0 %v1427
      %v2889 = vpop.f32.mrb[0].mxu0
      %v2890 = vadd.f32 %v2601, %v2889
      %v2891 = vpop.f32.mrb[0].mxu0
      %v2892 = vpop.f32.mrb[0].mxu0
      %v2893 = vadd.f32 %v2604, %v2892
      %v2894 = vpop.f32.mrb[0].mxu0
      %2895 = vmatprep.mubr.bf16.mxu0 %v1435
      %2896 = vmatmul.mubr.bf16.gmra.mrb[0].mxu0 %v1434
      %v2897 = vpop.f32.mrb[0].mxu0
      %v2898 = vadd.f32 %v2609, %v2897
      %v2899 = vpop.f32.mrb[0].mxu0
      %v2900 = vpop.f32.mrb[0].mxu0
      %v2901 = vadd.f32 %v2612, %v2900
      %v2902 = vpop.f32.mrb[0].mxu0
      %2903 = vmatprep.mubr.bf16.mxu0 %v1442
      %2904 = vmatmul.mubr.bf16.gmra.mrb[0].mxu0 %v1441
      %v2905 = vpop.f32.mrb[0].mxu0
      %v2906 = vadd.f32 %v2617, %v2905
      %v2907 = vpop.f32.mrb[0].mxu0
      %v2908 = vpop.f32.mrb[0].mxu0
      %v2909 = vadd.f32 %v2620, %v2908
      %v2910 = vpop.f32.mrb[0].mxu0
      %2911 = vmatprep.mubr.bf16.mxu0 %v1449
      %2912 = vmatmul.mubr.bf16.gmra.mrb[0].mxu0 %v1448
      %v2913 = vpop.f32.mrb[0].mxu0
      %v2914 = vadd.f32 %v2625, %v2913
      %v2915 = vpop.f32.mrb[0].mxu0
      %v2916 = vpop.f32.mrb[0].mxu0
      %v2917 = vadd.f32 %v2628, %v2916
      %v2918 = vpop.f32.mrb[0].mxu0
      %2919 = vmatprep.mubr.bf16.mxu0 %v1456
      %2920 = vmatmul.mubr.bf16.gmra.mrb[0].mxu0 %v1455
      %v2921 = vpop.f32.mrb[0].mxu0
      %v2922 = vadd.f32 %v2633, %v2921
      %v2923 = vpop.f32.mrb[0].mxu0
      %v2924 = vpop.f32.mrb[0].mxu0
      %v2925 = vadd.f32 %v2636, %v2924
      %v2926 = vpop.f32.mrb[0].mxu0
      %2927 = vmatprep.mubr.bf16.mxu0 %v1463
      %2928 = vmatmul.mubr.bf16.gmra.mrb[0].mxu0 %v1462
      %v2929 = vpop.f32.mrb[0].mxu0
      %v2930 = vadd.f32 %v2641, %v2929
      %v2931 = vpop.f32.mrb[0].mxu0
      %v2932 = vpop.f32.mrb[0].mxu0
      %v2933 = vadd.f32 %v2644, %v2932
      %v2934 = vpop.f32.mrb[0].mxu0
      %2935 = vmatprep.mubr.bf16.mxu0 %v1470
      %2936 = vmatmul.mubr.bf16.gmra.mrb[0].mxu0 %v1469
      %v2937 = vpop.f32.mrb[0].mxu0
      %v2938 = vadd.f32 %v2649, %v2937
      %v2939 = vpop.f32.mrb[0].mxu0
      %v2940 = vpop.f32.mrb[0].mxu0
      %v2941 = vadd.f32 %v2652, %v2940
      %v2942 = vpop.f32.mrb[0].mxu0
      %2943 = vmatprep.mubr.bf16.mxu0 %v1477
      %2944 = vmatmul.mubr.bf16.gmra.mrb[0].mxu0 %v1476
      %v2945 = vpop.f32.mrb[0].mxu0
      %v2946 = vadd.f32 %v2657, %v2945
      %v2947 = vpop.f32.mrb[0].mxu0
      %v2948 = vpop.f32.mrb[0].mxu0
      %v2949 = vadd.f32 %v2660, %v2948
      %v2950 = vpop.f32.mrb[0].mxu0
      %2951 = vmatprep.mubr.bf16.mxu0 %v1484
      %2952 = vmatmul.mubr.bf16.gmra.mrb[0].mxu0 %v1483
      %v2953 = vpop.f32.mrb[0].mxu0
      %v2954 = vadd.f32 %v2665, %v2953
      %v2955 = vpop.f32.mrb[0].mxu0
      %v2956 = vpop.f32.mrb[0].mxu0
      %v2957 = vadd.f32 %v2668, %v2956
      %v2958 = vpop.f32.mrb[0].mxu0
      %2959 = vmatprep.mubr.bf16.mxu0 %v1491
      %2960 = vmatmul.mubr.bf16.gmra.mrb[0].mxu0 %v1490
      %v2961 = vpop.f32.mrb[0].mxu0
      %v2962 = vadd.f32 %v2673, %v2961
      %v2963 = vpop.f32.mrb[0].mxu0
      %v2964 = vpop.f32.mrb[0].mxu0
      %v2965 = vadd.f32 %v2676, %v2964
      %v2966 = vpop.f32.mrb[0].mxu0
      %2967 = vmatprep.mubr.bf16.mxu0 %v1498
      %2968 = vmatmul.mubr.bf16.gmra.mrb[0].mxu0 %v1497
      %v2969 = vpop.f32.mrb[0].mxu0
      %v2970 = vadd.f32 %v2681, %v2969
      %v2971 = vpop.f32.mrb[0].mxu0
      %v2972 = vpop.f32.mrb[0].mxu0
      %v2973 = vadd.f32 %v2684, %v2972
      %v2974 = vpop.f32.mrb[0].mxu0
      %2975 = vmatprep.mubr.bf16.mxu0 %v1505
      %2976 = vmatmul.mubr.bf16.gmra.mrb[0].mxu0 %v1504
      %v2977 = vpop.f32.mrb[0].mxu0
      %v2978 = vadd.f32 %v2689, %v2977
      %v2979 = vpop.f32.mrb[0].mxu0
      %v2980 = vpop.f32.mrb[0].mxu0
      %v2981 = vadd.f32 %v2692, %v2980
      %v2982 = vpop.f32.mrb[0].mxu0
      %2983 = vmatprep.mubr.bf16.mxu0 %v1512
      %2984 = vmatmul.mubr.bf16.gmra.mrb[0].mxu0 %v1511
      %v2985 = vpop.f32.mrb[0].mxu0
      %v2986 = vadd.f32 %v2697, %v2985
      %v2987 = vpop.f32.mrb[0].mxu0
      %v2988 = vpop.f32.mrb[0].mxu0
      %v2989 = vadd.f32 %v2700, %v2988
      %v2990 = vpop.f32.mrb[0].mxu0
      %2991 = vmatprep.mubr.bf16.mxu0 %v1519
      %2992 = vmatmul.mubr.bf16.gmra.mrb[0].mxu0 %v1518
      %v2993 = vpop.f32.mrb[0].mxu0
      %v2994 = vadd.f32 %v2705, %v2993
      %v2995 = vpop.f32.mrb[0].mxu0
      %v2996 = vpop.f32.mrb[0].mxu0
      %v2997 = vadd.f32 %v2708, %v2996
      %v2998 = vpop.f32.mrb[0].mxu0
      %2999 = vmatprep.mubr.bf16.mxu0 %v1526
      %3000 = vmatmul.mubr.bf16.gmra.mrb[0].mxu0 %v1525
      %v3001 = vpop.f32.mrb[0].mxu0
      %v3002 = vadd.f32 %v2713, %v3001
      %v3003 = vpop.f32.mrb[0].mxu0
      %v3004 = vpop.f32.mrb[0].mxu0
      %v3005 = vadd.f32 %v2716, %v3004
      %v3006 = vpop.f32.mrb[0].mxu0
      %3007 = vdwg.mxu0
      %3008 = vmatprep.subr.bf16.mxu0 0
      %3009 = vmatpush1.bf16.msra.mxu0 %v1984
      %3010 = vmatprep.subr.bf16.mxu0 0
      %3011 = vmatpush1.bf16.msra.mxu0 %v1985
      %3012 = vmatprep.subr.bf16.mxu0 0
      %3013 = vmatpush1.bf16.msra.mxu0 %v1986
      %3014 = vmatprep.subr.bf16.mxu0 0
      %3015 = vmatpush1.bf16.msra.mxu0 %v1987
      %3016 = vmatprep.subr.bf16.mxu0 0
      %3017 = vmatpush1.bf16.msra.mxu0 %v1988
      %3018 = vmatprep.subr.bf16.mxu0 0
      %3019 = vmatpush1.bf16.msra.mxu0 %v1989
      %3020 = vmatprep.subr.bf16.mxu0 0
      %3021 = vmatpush1.bf16.msra.mxu0 0
      %3022 = vmatprep.subr.bf16.mxu0 0
      %3023 = vmatpush1.bf16.msra.mxu0 0
      %3024 = vmatprep.subr.bf16.mxu0 0
      %3025 = vmatpush1.bf16.msra.mxu0 0
      %3026 = vmatprep.subr.bf16.mxu0 0
      %3027 = vmatpush1.bf16.msra.mxu0 0
      %3028 = vmatprep.subr.bf16.mxu0 0
      %3029 = vmatpush1.bf16.msra.mxu0 0
      %3030 = vmatprep.subr.bf16.mxu0 0
      %3031 = vmatpush1.bf16.msra.mxu0 0
      %3032 = vmatprep.subr.bf16.mxu0 0
      %3033 = vmatpush1.bf16.msra.mxu0 0
      %3034 = vmatprep.subr.bf16.mxu0 0
      %3035 = vmatpush1.bf16.msra.mxu0 0
      %3036 = vmatprep.subr.bf16.mxu0 0
      %3037 = vmatpush1.bf16.msra.mxu0 0
      %3038 = vmatprep.subr.bf16.mxu0 0
      %3039 = vmatpush1.bf16.msra.mxu0 0
      %3040 = vmatprep.mubr.bf16.mxu0 0
      %3041 = vmatmul.mubr.bf16.gmra.mrb[0].mxu0 %v2046
      %v3042 = vpop.f32.mrb[0].mxu0
      %v3043 = vadd.f32 %v2754, %v3042
      %v3044 = vpop.f32.mrb[0].mxu0
      %v3045 = vpop.f32.mrb[0].mxu0
      %v3046 = vadd.f32 %v2757, %v3045
      %v3047 = vpop.f32.mrb[0].mxu0
      %3048 = vmatprep.mubr.bf16.mxu0 0
      %3049 = vmatmul.mubr.bf16.gmra.mrb[0].mxu0 %v2049
      %v3050 = vpop.f32.mrb[0].mxu0
      %v3051 = vadd.f32 %v2762, %v3050
      %v3052 = vpop.f32.mrb[0].mxu0
      %v3053 = vpop.f32.mrb[0].mxu0
      %v3054 = vadd.f32 %v2765, %v3053
      %v3055 = vpop.f32.mrb[0].mxu0
      %3056 = vmatprep.mubr.bf16.mxu0 0
      %3057 = vmatmul.mubr.bf16.gmra.mrb[0].mxu0 %v2052
      %v3058 = vpop.f32.mrb[0].mxu0
      %v3059 = vadd.f32 %v2770, %v3058
      %v3060 = vpop.f32.mrb[0].mxu0
      %v3061 = vpop.f32.mrb[0].mxu0
      %v3062 = vadd.f32 %v2773, %v3061
      %v3063 = vpop.f32.mrb[0].mxu0
      %3064 = vmatprep.mubr.bf16.mxu0 0
      %3065 = vmatmul.mubr.bf16.gmra.mrb[0].mxu0 %v2055
      %v3066 = vpop.f32.mrb[0].mxu0
      %v3067 = vadd.f32 %v2778, %v3066
      %v3068 = vpop.f32.mrb[0].mxu0
      %v3069 = vpop.f32.mrb[0].mxu0
      %v3070 = vadd.f32 %v2781, %v3069
      %v3071 = vpop.f32.mrb[0].mxu0
      %3072 = vmatprep.mubr.bf16.mxu0 0
      %3073 = vmatmul.mubr.bf16.gmra.mrb[0].mxu0 %v2058
      %v3074 = vpop.f32.mrb[0].mxu0
      %v3075 = vadd.f32 %v2786, %v3074
      %v3076 = vpop.f32.mrb[0].mxu0
      %v3077 = vpop.f32.mrb[0].mxu0
      %v3078 = vadd.f32 %v2789, %v3077
      %v3079 = vpop.f32.mrb[0].mxu0
      %3080 = vmatprep.mubr.bf16.mxu0 0
      %3081 = vmatmul.mubr.bf16.gmra.mrb[0].mxu0 %v2061
      %v3082 = vpop.f32.mrb[0].mxu0
      %v3083 = vadd.f32 %v2794, %v3082
      %v3084 = vpop.f32.mrb[0].mxu0
      %v3085 = vpop.f32.mrb[0].mxu0
      %v3086 = vadd.f32 %v2797, %v3085
      %v3087 = vpop.f32.mrb[0].mxu0
      %3088 = vmatprep.mubr.bf16.mxu0 0
      %3089 = vmatmul.mubr.bf16.gmra.mrb[0].mxu0 %v2064
      %v3090 = vpop.f32.mrb[0].mxu0
      %v3091 = vadd.f32 %v2802, %v3090
      %v3092 = vpop.f32.mrb[0].mxu0
      %v3093 = vpop.f32.mrb[0].mxu0
      %v3094 = vadd.f32 %v2805, %v3093
      %v3095 = vpop.f32.mrb[0].mxu0
      %3096 = vmatprep.mubr.bf16.mxu0 0
      %3097 = vmatmul.mubr.bf16.gmra.mrb[0].mxu0 %v2067
      %v3098 = vpop.f32.mrb[0].mxu0
      %v3099 = vadd.f32 %v2810, %v3098
      %v3100 = vpop.f32.mrb[0].mxu0
      %v3101 = vpop.f32.mrb[0].mxu0
      %v3102 = vadd.f32 %v2813, %v3101
      %v3103 = vpop.f32.mrb[0].mxu0
      %3104 = vmatprep.mubr.bf16.mxu0 0
      %3105 = vmatmul.mubr.bf16.gmra.mrb[0].mxu0 %v2070
      %v3106 = vpop.f32.mrb[0].mxu0
      %v3107 = vadd.f32 %v2818, %v3106
      %v3108 = vpop.f32.mrb[0].mxu0
      %v3109 = vpop.f32.mrb[0].mxu0
      %v3110 = vadd.f32 %v2821, %v3109
      %v3111 = vpop.f32.mrb[0].mxu0
      %3112 = vmatprep.mubr.bf16.mxu0 0
      %3113 = vmatmul.mubr.bf16.gmra.mrb[0].mxu0 %v2073
      %v3114 = vpop.f32.mrb[0].mxu0
      %v3115 = vadd.f32 %v2826, %v3114
      %v3116 = vpop.f32.mrb[0].mxu0
      %v3117 = vpop.f32.mrb[0].mxu0
      %v3118 = vadd.f32 %v2829, %v3117
      %v3119 = vpop.f32.mrb[0].mxu0
      %3120 = vmatprep.mubr.bf16.mxu0 0
      %3121 = vmatmul.mubr.bf16.gmra.mrb[0].mxu0 %v2076
      %v3122 = vpop.f32.mrb[0].mxu0
      %v3123 = vadd.f32 %v2834, %v3122
      %v3124 = vpop.f32.mrb[0].mxu0
      %v3125 = vpop.f32.mrb[0].mxu0
      %v3126 = vadd.f32 %v2837, %v3125
      %v3127 = vpop.f32.mrb[0].mxu0
      %3128 = vmatprep.mubr.bf16.mxu0 0
      %3129 = vmatmul.mubr.bf16.gmra.mrb[0].mxu0 %v2079
      %v3130 = vpop.f32.mrb[0].mxu0
      %v3131 = vadd.f32 %v2842, %v3130
      %v3132 = vpop.f32.mrb[0].mxu0
      %v3133 = vpop.f32.mrb[0].mxu0
      %v3134 = vadd.f32 %v2845, %v3133
      %v3135 = vpop.f32.mrb[0].mxu0
      %3136 = vmatprep.mubr.bf16.mxu0 0
      %3137 = vmatmul.mubr.bf16.gmra.mrb[0].mxu0 %v2082
      %v3138 = vpop.f32.mrb[0].mxu0
      %v3139 = vadd.f32 %v2850, %v3138
      %v3140 = vpop.f32.mrb[0].mxu0
      %v3141 = vpop.f32.mrb[0].mxu0
      %v3142 = vadd.f32 %v2853, %v3141
      %v3143 = vpop.f32.mrb[0].mxu0
      %3144 = vmatprep.mubr.bf16.mxu0 0
      %3145 = vmatmul.mubr.bf16.gmra.mrb[0].mxu0 %v2085
      %v3146 = vpop.f32.mrb[0].mxu0
      %v3147 = vadd.f32 %v2858, %v3146
      %v3148 = vpop.f32.mrb[0].mxu0
      %v3149 = vpop.f32.mrb[0].mxu0
      %v3150 = vadd.f32 %v2861, %v3149
      %v3151 = vpop.f32.mrb[0].mxu0
      %3152 = vmatprep.mubr.bf16.mxu0 0
      %3153 = vmatmul.mubr.bf16.gmra.mrb[0].mxu0 %v2088
      %v3154 = vpop.f32.mrb[0].mxu0
      %v3155 = vadd.f32 %v2866, %v3154
      %v3156 = vpop.f32.mrb[0].mxu0
      %v3157 = vpop.f32.mrb[0].mxu0
      %v3158 = vadd.f32 %v2869, %v3157
      %v3159 = vpop.f32.mrb[0].mxu0
      %3160 = vmatprep.mubr.bf16.mxu0 0
      %3161 = vmatmul.mubr.bf16.gmra.mrb[0].mxu0 %v2091
      %v3162 = vpop.f32.mrb[0].mxu0
      %v3163 = vadd.f32 %v2874, %v3162
      %v3164 = vpop.f32.mrb[0].mxu0
      %v3165 = vpop.f32.mrb[0].mxu0
      %v3166 = vadd.f32 %v2877, %v3165
      %v3167 = vpop.f32.mrb[0].mxu0
      %3168 = vmatprep.mubr.bf16.mxu0 0
      %3169 = vmatmul.mubr.bf16.gmra.mrb[0].mxu0 %v2094
      %v3170 = vpop.f32.mrb[0].mxu0
      %v3171 = vadd.f32 %v2882, %v3170
      %v3172 = vpop.f32.mrb[0].mxu0
      %v3173 = vpop.f32.mrb[0].mxu0
      %v3174 = vadd.f32 %v2885, %v3173
      %v3175 = vpop.f32.mrb[0].mxu0
      %3176 = vmatprep.mubr.bf16.mxu0 0
      %3177 = vmatmul.mubr.bf16.gmra.mrb[0].mxu0 %v2097
      %v3178 = vpop.f32.mrb[0].mxu0
      %v3179 = vadd.f32 %v2890, %v3178
      %v3180 = vpop.f32.mrb[0].mxu0
      %v3181 = vpop.f32.mrb[0].mxu0
      %v3182 = vadd.f32 %v2893, %v3181
      %v3183 = vpop.f32.mrb[0].mxu0
      %3184 = vmatprep.mubr.bf16.mxu0 0
      %3185 = vmatmul.mubr.bf16.gmra.mrb[0].mxu0 %v2100
      %v3186 = vpop.f32.mrb[0].mxu0
      %v3187 = vadd.f32 %v2898, %v3186
      %v3188 = vpop.f32.mrb[0].mxu0
      %v3189 = vpop.f32.mrb[0].mxu0
      %v3190 = vadd.f32 %v2901, %v3189
      %v3191 = vpop.f32.mrb[0].mxu0
      %3192 = vmatprep.mubr.bf16.mxu0 0
      %3193 = vmatmul.mubr.bf16.gmra.mrb[0].mxu0 %v2103
      %v3194 = vpop.f32.mrb[0].mxu0
      %v3195 = vadd.f32 %v2906, %v3194
      %v3196 = vpop.f32.mrb[0].mxu0
      %v3197 = vpop.f32.mrb[0].mxu0
      %v3198 = vadd.f32 %v2909, %v3197
      %v3199 = vpop.f32.mrb[0].mxu0
      %3200 = vmatprep.mubr.bf16.mxu0 0
      %3201 = vmatmul.mubr.bf16.gmra.mrb[0].mxu0 %v2106
      %v3202 = vpop.f32.mrb[0].mxu0
      %v3203 = vadd.f32 %v2914, %v3202
      %v3204 = vpop.f32.mrb[0].mxu0
      %v3205 = vpop.f32.mrb[0].mxu0
      %v3206 = vadd.f32 %v2917, %v3205
      %v3207 = vpop.f32.mrb[0].mxu0
      %3208 = vmatprep.mubr.bf16.mxu0 0
      %3209 = vmatmul.mubr.bf16.gmra.mrb[0].mxu0 %v2109
      %v3210 = vpop.f32.mrb[0].mxu0
      %v3211 = vadd.f32 %v2922, %v3210
      %v3212 = vpop.f32.mrb[0].mxu0
      %v3213 = vpop.f32.mrb[0].mxu0
      %v3214 = vadd.f32 %v2925, %v3213
      %v3215 = vpop.f32.mrb[0].mxu0
      %3216 = vmatprep.mubr.bf16.mxu0 0
      %3217 = vmatmul.mubr.bf16.gmra.mrb[0].mxu0 %v2112
      %v3218 = vpop.f32.mrb[0].mxu0
      %v3219 = vadd.f32 %v2930, %v3218
      %v3220 = vpop.f32.mrb[0].mxu0
      %v3221 = vpop.f32.mrb[0].mxu0
      %v3222 = vadd.f32 %v2933, %v3221
      %v3223 = vpop.f32.mrb[0].mxu0
      %3224 = vmatprep.mubr.bf16.mxu0 0
      %3225 = vmatmul.mubr.bf16.gmra.mrb[0].mxu0 %v2115
      %v3226 = vpop.f32.mrb[0].mxu0
      %v3227 = vadd.f32 %v2938, %v3226
      %v3228 = vpop.f32.mrb[0].mxu0
      %v3229 = vpop.f32.mrb[0].mxu0
      %v3230 = vadd.f32 %v2941, %v3229
      %v3231 = vpop.f32.mrb[0].mxu0
      %3232 = vmatprep.mubr.bf16.mxu0 0
      %3233 = vmatmul.mubr.bf16.gmra.mrb[0].mxu0 %v2118
      %v3234 = vpop.f32.mrb[0].mxu0
      %v3235 = vadd.f32 %v2946, %v3234
      %v3236 = vpop.f32.mrb[0].mxu0
      %v3237 = vpop.f32.mrb[0].mxu0
      %v3238 = vadd.f32 %v2949, %v3237
      %v3239 = vpop.f32.mrb[0].mxu0
      %3240 = vmatprep.mubr.bf16.mxu0 0
      %3241 = vmatmul.mubr.bf16.gmra.mrb[0].mxu0 %v2121
      %v3242 = vpop.f32.mrb[0].mxu0
      %v3243 = vadd.f32 %v2954, %v3242
      %v3244 = vpop.f32.mrb[0].mxu0
      %v3245 = vpop.f32.mrb[0].mxu0
      %v3246 = vadd.f32 %v2957, %v3245
      %v3247 = vpop.f32.mrb[0].mxu0
      %3248 = vmatprep.mubr.bf16.mxu0 0
      %3249 = vmatmul.mubr.bf16.gmra.mrb[0].mxu0 %v2124
      %v3250 = vpop.f32.mrb[0].mxu0
      %v3251 = vadd.f32 %v2962, %v3250
      %v3252 = vpop.f32.mrb[0].mxu0
      %v3253 = vpop.f32.mrb[0].mxu0
      %v3254 = vadd.f32 %v2965, %v3253
      %v3255 = vpop.f32.mrb[0].mxu0
      %3256 = vmatprep.mubr.bf16.mxu0 0
      %3257 = vmatmul.mubr.bf16.gmra.mrb[0].mxu0 %v2127
      %v3258 = vpop.f32.mrb[0].mxu0
      %v3259 = vadd.f32 %v2970, %v3258
      %v3260 = vpop.f32.mrb[0].mxu0
      %v3261 = vpop.f32.mrb[0].mxu0
      %v3262 = vadd.f32 %v2973, %v3261
      %v3263 = vpop.f32.mrb[0].mxu0
      %3264 = vmatprep.mubr.bf16.mxu0 0
      %3265 = vmatmul.mubr.bf16.gmra.mrb[0].mxu0 %v2130
      %v3266 = vpop.f32.mrb[0].mxu0
      %v3267 = vadd.f32 %v2978, %v3266
      %v3268 = vpop.f32.mrb[0].mxu0
      %v3269 = vpop.f32.mrb[0].mxu0
      %v3270 = vadd.f32 %v2981, %v3269
      %v3271 = vpop.f32.mrb[0].mxu0
      %3272 = vmatprep.mubr.bf16.mxu0 0
      %3273 = vmatmul.mubr.bf16.gmra.mrb[0].mxu0 %v2133
      %v3274 = vpop.f32.mrb[0].mxu0
      %v3275 = vadd.f32 %v2986, %v3274
      %v3276 = vpop.f32.mrb[0].mxu0
      %v3277 = vpop.f32.mrb[0].mxu0
      %v3278 = vadd.f32 %v2989, %v3277
      %v3279 = vpop.f32.mrb[0].mxu0
      %3280 = vmatprep.mubr.bf16.mxu0 0
      %3281 = vmatmul.mubr.bf16.gmra.mrb[0].mxu0 %v2136
      %v3282 = vpop.f32.mrb[0].mxu0
      %v3283 = vadd.f32 %v2994, %v3282
      %v3284 = vpop.f32.mrb[0].mxu0
      %v3285 = vpop.f32.mrb[0].mxu0
      %v3286 = vadd.f32 %v2997, %v3285
      %v3287 = vpop.f32.mrb[0].mxu0
      %3288 = vmatprep.mubr.bf16.mxu0 0
      %3289 = vmatmul.mubr.bf16.gmra.mrb[0].mxu0 %v2139
      %v3290 = vpop.f32.mrb[0].mxu0
      %v3291 = vadd.f32 %v3002, %v3290
      %v3292 = vpop.f32.mrb[0].mxu0
      %v3293 = vpop.f32.mrb[0].mxu0
      %v3294 = vadd.f32 %v3005, %v3293
      %v3295 = vpop.f32.mrb[0].mxu0
      %3296 = vdwg.mxu0
      %vm3297 = vcmp.ge.f32.partialorder %v3043, 0.0
      %vm3298 = vcmp.ge.f32.partialorder %v3046, 0.0
      %vm3299 = vcmp.ge.f32.partialorder %v3051, 0.0
      %vm3300 = vcmp.ge.f32.partialorder %v3054, 0.0
      %vm3301 = vcmp.ge.f32.partialorder %v3059, 0.0
      %vm3302 = vcmp.ge.f32.partialorder %v3062, 0.0
      %vm3303 = vcmp.ge.f32.partialorder %v3067, 0.0
      %vm3304 = vcmp.ge.f32.partialorder %v3070, 0.0
      %vm3305 = vcmp.ge.f32.partialorder %v3075, 0.0
      %vm3306 = vcmp.ge.f32.partialorder %v3078, 0.0
      %vm3307 = vcmp.ge.f32.partialorder %v3083, 0.0
      %vm3308 = vcmp.ge.f32.partialorder %v3086, 0.0
      %vm3309 = vcmp.ge.f32.partialorder %v3091, 0.0
      %vm3310 = vcmp.ge.f32.partialorder %v3094, 0.0
      %vm3311 = vcmp.ge.f32.partialorder %v3099, 0.0
      %vm3312 = vcmp.ge.f32.partialorder %v3102, 0.0
      %vm3313 = vcmp.ge.f32.partialorder %v3107, 0.0
      %vm3314 = vcmp.ge.f32.partialorder %v3110, 0.0
      %vm3315 = vcmp.ge.f32.partialorder %v3115, 0.0
      %vm3316 = vcmp.ge.f32.partialorder %v3118, 0.0
      %vm3317 = vcmp.ge.f32.partialorder %v3123, 0.0
      %vm3318 = vcmp.ge.f32.partialorder %v3126, 0.0
      %vm3319 = vcmp.ge.f32.partialorder %v3131, 0.0
      %vm3320 = vcmp.ge.f32.partialorder %v3134, 0.0
      %vm3321 = vcmp.ge.f32.partialorder %v3139, 0.0
      %vm3322 = vcmp.ge.f32.partialorder %v3142, 0.0
      %vm3323 = vcmp.ge.f32.partialorder %v3147, 0.0
      %vm3324 = vcmp.ge.f32.partialorder %v3150, 0.0
      %vm3325 = vcmp.ge.f32.partialorder %v3155, 0.0
      %vm3326 = vcmp.ge.f32.partialorder %v3158, 0.0
      %vm3327 = vcmp.ge.f32.partialorder %v3163, 0.0
      %vm3328 = vcmp.ge.f32.partialorder %v3166, 0.0
      %vm3329 = vcmp.ge.f32.partialorder %v3171, 0.0
      %vm3330 = vcmp.ge.f32.partialorder %v3174, 0.0
      %vm3331 = vcmp.ge.f32.partialorder %v3179, 0.0
      %vm3332 = vcmp.ge.f32.partialorder %v3182, 0.0
      %vm3333 = vcmp.ge.f32.partialorder %v3187, 0.0
      %vm3334 = vcmp.ge.f32.partialorder %v3190, 0.0
      %vm3335 = vcmp.ge.f32.partialorder %v3195, 0.0
      %vm3336 = vcmp.ge.f32.partialorder %v3198, 0.0
      %vm3337 = vcmp.ge.f32.partialorder %v3203, 0.0
      %vm3338 = vcmp.ge.f32.partialorder %v3206, 0.0
      %vm3339 = vcmp.ge.f32.partialorder %v3211, 0.0
      %vm3340 = vcmp.ge.f32.partialorder %v3214, 0.0
      %vm3341 = vcmp.ge.f32.partialorder %v3219, 0.0
      %vm3342 = vcmp.ge.f32.partialorder %v3222, 0.0
      %vm3343 = vcmp.ge.f32.partialorder %v3227, 0.0
      %vm3344 = vcmp.ge.f32.partialorder %v3230, 0.0
      %vm3345 = vcmp.ge.f32.partialorder %v3235, 0.0
      %vm3346 = vcmp.ge.f32.partialorder %v3238, 0.0
      %vm3347 = vcmp.ge.f32.partialorder %v3243, 0.0
      %vm3348 = vcmp.ge.f32.partialorder %v3246, 0.0
      %vm3349 = vcmp.ge.f32.partialorder %v3251, 0.0
      %vm3350 = vcmp.ge.f32.partialorder %v3254, 0.0
      %vm3351 = vcmp.ge.f32.partialorder %v3259, 0.0
      %vm3352 = vcmp.ge.f32.partialorder %v3262, 0.0
      %vm3353 = vcmp.ge.f32.partialorder %v3267, 0.0
      %vm3354 = vcmp.ge.f32.partialorder %v3270, 0.0
      %vm3355 = vcmp.ge.f32.partialorder %v3275, 0.0
      %vm3356 = vcmp.ge.f32.partialorder %v3278, 0.0
      %vm3357 = vcmp.ge.f32.partialorder %v3283, 0.0
      %vm3358 = vcmp.ge.f32.partialorder %v3286, 0.0
      %vm3359 = vcmp.ge.f32.partialorder %v3291, 0.0
      %vm3360 = vcmp.ge.f32.partialorder %v3294, 0.0
      %v3361 = vmul.f32 %v3043, 0.2
      %v3362 = vmul.f32 %v3046, 0.2
      %v3363 = vmul.f32 %v3051, 0.2
      %v3364 = vmul.f32 %v3054, 0.2
      %v3365 = vmul.f32 %v3059, 0.2
      %v3366 = vmul.f32 %v3062, 0.2
      %v3367 = vmul.f32 %v3067, 0.2
      %v3368 = vmul.f32 %v3070, 0.2
      %v3369 = vmul.f32 %v3075, 0.2
      %v3370 = vmul.f32 %v3078, 0.2
      %v3371 = vmul.f32 %v3083, 0.2
      %v3372 = vmul.f32 %v3086, 0.2
      %v3373 = vmul.f32 %v3091, 0.2
      %v3374 = vmul.f32 %v3094, 0.2
      %v3375 = vmul.f32 %v3099, 0.2
      %v3376 = vmul.f32 %v3102, 0.2
      %v3377 = vmul.f32 %v3107, 0.2
      %v3378 = vmul.f32 %v3110, 0.2
      %v3379 = vmul.f32 %v3115, 0.2
      %v3380 = vmul.f32 %v3118, 0.2
      %v3381 = vmul.f32 %v3123, 0.2
      %v3382 = vmul.f32 %v3126, 0.2
      %v3383 = vmul.f32 %v3131, 0.2
      %v3384 = vmul.f32 %v3134, 0.2
      %v3385 = vmul.f32 %v3139, 0.2
      %v3386 = vmul.f32 %v3142, 0.2
      %v3387 = vmul.f32 %v3147, 0.2
      %v3388 = vmul.f32 %v3150, 0.2
      %v3389 = vmul.f32 %v3155, 0.2
      %v3390 = vmul.f32 %v3158, 0.2
      %v3391 = vmul.f32 %v3163, 0.2
      %v3392 = vmul.f32 %v3166, 0.2
      %v3393 = vmul.f32 %v3171, 0.2
      %v3394 = vmul.f32 %v3174, 0.2
      %v3395 = vmul.f32 %v3179, 0.2
      %v3396 = vmul.f32 %v3182, 0.2
      %v3397 = vmul.f32 %v3187, 0.2
      %v3398 = vmul.f32 %v3190, 0.2
      %v3399 = vmul.f32 %v3195, 0.2
      %v3400 = vmul.f32 %v3198, 0.2
      %v3401 = vmul.f32 %v3203, 0.2
      %v3402 = vmul.f32 %v3206, 0.2
      %v3403 = vmul.f32 %v3211, 0.2
      %v3404 = vmul.f32 %v3214, 0.2
      %v3405 = vmul.f32 %v3219, 0.2
      %v3406 = vmul.f32 %v3222, 0.2
      %v3407 = vmul.f32 %v3227, 0.2
      %v3408 = vmul.f32 %v3230, 0.2
      %v3409 = vmul.f32 %v3235, 0.2
      %v3410 = vmul.f32 %v3238, 0.2
      %v3411 = vmul.f32 %v3243, 0.2
      %v3412 = vmul.f32 %v3246, 0.2
      %v3413 = vmul.f32 %v3251, 0.2
      %v3414 = vmul.f32 %v3254, 0.2
      %v3415 = vmul.f32 %v3259, 0.2
      %v3416 = vmul.f32 %v3262, 0.2
      %v3417 = vmul.f32 %v3267, 0.2
      %v3418 = vmul.f32 %v3270, 0.2
      %v3419 = vmul.f32 %v3275, 0.2
      %v3420 = vmul.f32 %v3278, 0.2
      %v3421 = vmul.f32 %v3283, 0.2
      %v3422 = vmul.f32 %v3286, 0.2
      %v3423 = vmul.f32 %v3291, 0.2
      %v3424 = vmul.f32 %v3294, 0.2
      %v3425 = vsel %vm3297, %v3043, %v3361
      %v3426 = vsel %vm3298, %v3046, %v3362
      %v3427 = vsel %vm3299, %v3051, %v3363
      %v3428 = vsel %vm3300, %v3054, %v3364
      %v3429 = vsel %vm3301, %v3059, %v3365
      %v3430 = vsel %vm3302, %v3062, %v3366
      %v3431 = vsel %vm3303, %v3067, %v3367
      %v3432 = vsel %vm3304, %v3070, %v3368
      %v3433 = vsel %vm3305, %v3075, %v3369
      %v3434 = vsel %vm3306, %v3078, %v3370
      %v3435 = vsel %vm3307, %v3083, %v3371
      %v3436 = vsel %vm3308, %v3086, %v3372
      %v3437 = vsel %vm3309, %v3091, %v3373
      %v3438 = vsel %vm3310, %v3094, %v3374
      %v3439 = vsel %vm3311, %v3099, %v3375
      %v3440 = vsel %vm3312, %v3102, %v3376
      %v3441 = vsel %vm3313, %v3107, %v3377
      %v3442 = vsel %vm3314, %v3110, %v3378
      %v3443 = vsel %vm3315, %v3115, %v3379
      %v3444 = vsel %vm3316, %v3118, %v3380
      %v3445 = vsel %vm3317, %v3123, %v3381
      %v3446 = vsel %vm3318, %v3126, %v3382
      %v3447 = vsel %vm3319, %v3131, %v3383
      %v3448 = vsel %vm3320, %v3134, %v3384
      %v3449 = vsel %vm3321, %v3139, %v3385
      %v3450 = vsel %vm3322, %v3142, %v3386
      %v3451 = vsel %vm3323, %v3147, %v3387
      %v3452 = vsel %vm3324, %v3150, %v3388
      %v3453 = vsel %vm3325, %v3155, %v3389
      %v3454 = vsel %vm3326, %v3158, %v3390
      %v3455 = vsel %vm3327, %v3163, %v3391
      %v3456 = vsel %vm3328, %v3166, %v3392
      %v3457 = vsel %vm3329, %v3171, %v3393
      %v3458 = vsel %vm3330, %v3174, %v3394
      %v3459 = vsel %vm3331, %v3179, %v3395
      %v3460 = vsel %vm3332, %v3182, %v3396
      %v3461 = vsel %vm3333, %v3187, %v3397
      %v3462 = vsel %vm3334, %v3190, %v3398
      %v3463 = vsel %vm3335, %v3195, %v3399
      %v3464 = vsel %vm3336, %v3198, %v3400
      %v3465 = vsel %vm3337, %v3203, %v3401
      %v3466 = vsel %vm3338, %v3206, %v3402
      %v3467 = vsel %vm3339, %v3211, %v3403
      %v3468 = vsel %vm3340, %v3214, %v3404
      %v3469 = vsel %vm3341, %v3219, %v3405
      %v3470 = vsel %vm3342, %v3222, %v3406
      %v3471 = vsel %vm3343, %v3227, %v3407
      %v3472 = vsel %vm3344, %v3230, %v3408
      %v3473 = vsel %vm3345, %v3235, %v3409
      %v3474 = vsel %vm3346, %v3238, %v3410
      %v3475 = vsel %vm3347, %v3243, %v3411
      %v3476 = vsel %vm3348, %v3246, %v3412
      %v3477 = vsel %vm3349, %v3251, %v3413
      %v3478 = vsel %vm3350, %v3254, %v3414
      %v3479 = vsel %vm3351, %v3259, %v3415
      %v3480 = vsel %vm3352, %v3262, %v3416
      %v3481 = vsel %vm3353, %v3267, %v3417
      %v3482 = vsel %vm3354, %v3270, %v3418
      %v3483 = vsel %vm3355, %v3275, %v3419
      %v3484 = vsel %vm3356, %v3278, %v3420
      %v3485 = vsel %vm3357, %v3283, %v3421
      %v3486 = vsel %vm3358, %v3286, %v3422
      %v3487 = vsel %vm3359, %v3291, %v3423
      %v3488 = vsel %vm3360, %v3294, %v3424
      %v3489 = vpack.c.bf16 %v3426, %v3425
      %v3490 = vpack.c.bf16 %v3428, %v3427
      %v3491 = vpack.c.bf16 %v3430, %v3429
      %v3492 = vpack.c.bf16 %v3432, %v3431
      %v3493 = vpack.c.bf16 %v3434, %v3433
      %v3494 = vpack.c.bf16 %v3436, %v3435
      %v3495 = vpack.c.bf16 %v3438, %v3437
      %v3496 = vpack.c.bf16 %v3440, %v3439
      %v3497 = vpack.c.bf16 %v3442, %v3441
      %v3498 = vpack.c.bf16 %v3444, %v3443
      %v3499 = vpack.c.bf16 %v3446, %v3445
      %v3500 = vpack.c.bf16 %v3448, %v3447
      %v3501 = vpack.c.bf16 %v3450, %v3449
      %v3502 = vpack.c.bf16 %v3452, %v3451
      %v3503 = vpack.c.bf16 %v3454, %v3453
      %v3504 = vpack.c.bf16 %v3456, %v3455
      %v3505 = vpack.c.bf16 %v3458, %v3457
      %v3506 = vpack.c.bf16 %v3460, %v3459
      %v3507 = vpack.c.bf16 %v3462, %v3461
      %v3508 = vpack.c.bf16 %v3464, %v3463
      %v3509 = vpack.c.bf16 %v3466, %v3465
      %v3510 = vpack.c.bf16 %v3468, %v3467
      %v3511 = vpack.c.bf16 %v3470, %v3469
      %v3512 = vpack.c.bf16 %v3472, %v3471
      %v3513 = vpack.c.bf16 %v3474, %v3473
      %v3514 = vpack.c.bf16 %v3476, %v3475
      %v3515 = vpack.c.bf16 %v3478, %v3477
      %v3516 = vpack.c.bf16 %v3480, %v3479
      %v3517 = vpack.c.bf16 %v3482, %v3481
      %v3518 = vpack.c.bf16 %v3484, %v3483
      %v3519 = vpack.c.bf16 %v3486, %v3485
      %v3520 = vpack.c.bf16 %v3488, %v3487
      %v3553 = vunpack.c.l.b16 %v3489
      %v3554 = vunpack.c.h.b16 %v3489
      %v3555 = vunpack.c.l.b16 %v3490
      %v3556 = vunpack.c.h.b16 %v3490
      %v3557 = vunpack.c.l.b16 %v3491
      %v3558 = vunpack.c.h.b16 %v3491
      %v3559 = vunpack.c.l.b16 %v3492
      %v3560 = vunpack.c.h.b16 %v3492
      %v3561 = vunpack.c.l.b16 %v3493
      %v3562 = vunpack.c.h.b16 %v3493
      %v3563 = vunpack.c.l.b16 %v3494
      %v3564 = vunpack.c.h.b16 %v3494
      %v3565 = vunpack.c.l.b16 %v3495
      %v3566 = vunpack.c.h.b16 %v3495
      %v3567 = vunpack.c.l.b16 %v3496
      %v3568 = vunpack.c.h.b16 %v3496
      %v3569 = vunpack.c.l.b16 %v3497
      %v3570 = vunpack.c.h.b16 %v3497
      %v3571 = vunpack.c.l.b16 %v3498
      %v3572 = vunpack.c.h.b16 %v3498
      %v3573 = vunpack.c.l.b16 %v3499
      %v3574 = vunpack.c.h.b16 %v3499
      %v3575 = vunpack.c.l.b16 %v3500
      %v3576 = vunpack.c.h.b16 %v3500
      %v3577 = vunpack.c.l.b16 %v3501
      %v3578 = vunpack.c.h.b16 %v3501
      %v3579 = vunpack.c.l.b16 %v3502
      %v3580 = vunpack.c.h.b16 %v3502
      %v3581 = vunpack.c.l.b16 %v3503
      %v3582 = vunpack.c.h.b16 %v3503
      %v3583 = vunpack.c.l.b16 %v3504
      %v3584 = vunpack.c.h.b16 %v3504
      %v3585 = vunpack.c.l.b16 %v3505
      %v3586 = vunpack.c.h.b16 %v3505
      %v3587 = vunpack.c.l.b16 %v3506
      %v3588 = vunpack.c.h.b16 %v3506
      %v3589 = vunpack.c.l.b16 %v3507
      %v3590 = vunpack.c.h.b16 %v3507
      %v3591 = vunpack.c.l.b16 %v3508
      %v3592 = vunpack.c.h.b16 %v3508
      %v3593 = vunpack.c.l.b16 %v3509
      %v3594 = vunpack.c.h.b16 %v3509
      %v3595 = vunpack.c.l.b16 %v3510
      %v3596 = vunpack.c.h.b16 %v3510
      %v3597 = vunpack.c.l.b16 %v3511
      %v3598 = vunpack.c.h.b16 %v3511
      %v3599 = vunpack.c.l.b16 %v3512
      %v3600 = vunpack.c.h.b16 %v3512
      %v3601 = vunpack.c.l.b16 %v3513
      %v3602 = vunpack.c.h.b16 %v3513
      %v3603 = vunpack.c.l.b16 %v3514
      %v3604 = vunpack.c.h.b16 %v3514
      %v3605 = vunpack.c.l.b16 %v3515
      %v3606 = vunpack.c.h.b16 %v3515
      %v3607 = vunpack.c.l.b16 %v3516
      %v3608 = vunpack.c.h.b16 %v3516
      %v3609 = vunpack.c.l.b16 %v3517
      %v3610 = vunpack.c.h.b16 %v3517
      %v3611 = vunpack.c.l.b16 %v3518
      %v3612 = vunpack.c.h.b16 %v3518
      %v3613 = vunpack.c.l.b16 %v3519
      %v3614 = vunpack.c.h.b16 %v3519
      %v3615 = vunpack.c.l.b16 %v3520
      %v3616 = vunpack.c.h.b16 %v3520
      %v3617 = vpack.c.b16 %v3553, %v3553
      %v3618 = vpack.c.b16 %v3554, %v3554
      %v3619 = vpack.c.b16 %v3555, %v3555
      %v3620 = vpack.c.b16 %v3556, %v3556
      %v3621 = vpack.c.b16 %v3557, %v3557
      %v3622 = vpack.c.b16 %v3558, %v3558
      %v3623 = vpack.c.b16 %v3559, %v3559
      %v3624 = vpack.c.b16 %v3560, %v3560
      %v3625 = vpack.c.b16 %v3561, %v3561
      %v3626 = vpack.c.b16 %v3562, %v3562
      %v3627 = vpack.c.b16 %v3563, %v3563
      %v3628 = vpack.c.b16 %v3564, %v3564
      %v3629 = vpack.c.b16 %v3565, %v3565
      %v3630 = vpack.c.b16 %v3566, %v3566
      %v3631 = vpack.c.b16 %v3567, %v3567
      %v3632 = vpack.c.b16 %v3568, %v3568
      %v3633 = vpack.c.b16 %v3569, %v3569
      %v3634 = vpack.c.b16 %v3570, %v3570
      %v3635 = vpack.c.b16 %v3571, %v3571
      %v3636 = vpack.c.b16 %v3572, %v3572
      %v3637 = vpack.c.b16 %v3573, %v3573
      %v3638 = vpack.c.b16 %v3574, %v3574
      %v3639 = vpack.c.b16 %v3575, %v3575
      %v3640 = vpack.c.b16 %v3576, %v3576
      %v3641 = vpack.c.b16 %v3577, %v3577
      %v3642 = vpack.c.b16 %v3578, %v3578
      %v3643 = vpack.c.b16 %v3579, %v3579
      %v3644 = vpack.c.b16 %v3580, %v3580
      %v3645 = vpack.c.b16 %v3581, %v3581
      %v3646 = vpack.c.b16 %v3582, %v3582
      %v3647 = vpack.c.b16 %v3583, %v3583
      %v3648 = vpack.c.b16 %v3584, %v3584
      %v3649 = vpack.c.b16 %v3585, %v3585
      %v3650 = vpack.c.b16 %v3586, %v3586
      %v3651 = vpack.c.b16 %v3587, %v3587
      %v3652 = vpack.c.b16 %v3588, %v3588
      %v3653 = vpack.c.b16 %v3589, %v3589
      %v3654 = vpack.c.b16 %v3590, %v3590
      %v3655 = vpack.c.b16 %v3591, %v3591
      %v3656 = vpack.c.b16 %v3592, %v3592
      %v3657 = vpack.c.b16 %v3593, %v3593
      %v3658 = vpack.c.b16 %v3594, %v3594
      %v3659 = vpack.c.b16 %v3595, %v3595
      %v3660 = vpack.c.b16 %v3596, %v3596
      %v3661 = vpack.c.b16 %v3597, %v3597
      %v3662 = vpack.c.b16 %v3598, %v3598
      %v3663 = vpack.c.b16 %v3599, %v3599
      %v3664 = vpack.c.b16 %v3600, %v3600
      %v3665 = vpack.c.b16 %v3601, %v3601
      %v3666 = vpack.c.b16 %v3602, %v3602
      %v3667 = vpack.c.b16 %v3603, %v3603
      %v3668 = vpack.c.b16 %v3604, %v3604
      %v3669 = vpack.c.b16 %v3605, %v3605
      %v3670 = vpack.c.b16 %v3606, %v3606
      %v3671 = vpack.c.b16 %v3607, %v3607
      %v3672 = vpack.c.b16 %v3608, %v3608
      %v3673 = vpack.c.b16 %v3609, %v3609
      %v3674 = vpack.c.b16 %v3610, %v3610
      %v3675 = vpack.c.b16 %v3611, %v3611
      %v3676 = vpack.c.b16 %v3612, %v3612
      %v3677 = vpack.c.b16 %v3613, %v3613
      %v3678 = vpack.c.b16 %v3614, %v3614
      %v3679 = vpack.c.b16 %v3615, %v3615
      %v3680 = vpack.c.b16 %v3616, %v3616
      %vm3745 = vcmask 519168
      %3746 = vst.msk [vmem:[%s226] sm:$0xf] %vm3745, %v3617
      %3747 = vst.msk [vmem:[%s226 + $0x4] sm:$0xf] %vm3745, %v3618
      %3748 = vst.msk [vmem:[%s226 + $0x8] sm:$0xf] %vm3745, %v3619
      %3749 = vst.msk [vmem:[%s226 + $0xc] sm:$0xf] %vm3745, %v3620
      %3750 = vst.msk [vmem:[%s226 + $0x10] sm:$0xf] %vm3745, %v3621
      %3751 = vst.msk [vmem:[%s226 + $0x14] sm:$0xf] %vm3745, %v3622
      %3752 = vst.msk [vmem:[%s226 + $0x18] sm:$0xf] %vm3745, %v3623
      %3753 = vst.msk [vmem:[%s226 + $0x1c] sm:$0xf] %vm3745, %v3624
      %3754 = vst.msk [vmem:[%s226 + $0x20] sm:$0xf] %vm3745, %v3625
      %3755 = vst.msk [vmem:[%s226 + $0x24] sm:$0xf] %vm3745, %v3626
      %3756 = vst.msk [vmem:[%s226 + $0x28] sm:$0xf] %vm3745, %v3627
      %3757 = vst.msk [vmem:[%s226 + $0x2c] sm:$0xf] %vm3745, %v3628
      %3758 = vst.msk [vmem:[%s226 + $0x30] sm:$0xf] %vm3745, %v3629
      %3759 = vst.msk [vmem:[%s226 + $0x34] sm:$0xf] %vm3745, %v3630
      %3760 = vst.msk [vmem:[%s226 + $0x38] sm:$0xf] %vm3745, %v3631
      %3761 = vst.msk [vmem:[%s226 + $0x3c] sm:$0xf] %vm3745, %v3632
      %3762 = vst.msk [vmem:[%s226 + $0x40] sm:$0xf] %vm3745, %v3633
      %3763 = vst.msk [vmem:[%s226 + $0x44] sm:$0xf] %vm3745, %v3634
      %3764 = vst.msk [vmem:[%s226 + $0x48] sm:$0xf] %vm3745, %v3635
      %3765 = vst.msk [vmem:[%s226 + $0x4c] sm:$0xf] %vm3745, %v3636
      %3766 = vst.msk [vmem:[%s226 + $0x50] sm:$0xf] %vm3745, %v3637
      %3767 = vst.msk [vmem:[%s226 + $0x54] sm:$0xf] %vm3745, %v3638
      %3768 = vst.msk [vmem:[%s226 + $0x58] sm:$0xf] %vm3745, %v3639
      %3769 = vst.msk [vmem:[%s226 + $0x5c] sm:$0xf] %vm3745, %v3640
      %3770 = vst.msk [vmem:[%s226 + $0x60] sm:$0xf] %vm3745, %v3641
      %3771 = vst.msk [vmem:[%s226 + $0x64] sm:$0xf] %vm3745, %v3642
      %3772 = vst.msk [vmem:[%s226 + $0x68] sm:$0xf] %vm3745, %v3643
      %3773 = vst.msk [vmem:[%s226 + $0x6c] sm:$0xf] %vm3745, %v3644
      %3774 = vst.msk [vmem:[%s226 + $0x70] sm:$0xf] %vm3745, %v3645
      %3775 = vst.msk [vmem:[%s226 + $0x74] sm:$0xf] %vm3745, %v3646
      %3776 = vst.msk [vmem:[%s226 + $0x78] sm:$0xf] %vm3745, %v3647
      %3777 = vst.msk [vmem:[%s226 + $0x7c] sm:$0xf] %vm3745, %v3648
      %3778 = vst.msk [vmem:[%s226 + $0x80] sm:$0xf] %vm3745, %v3649
      %3779 = vst.msk [vmem:[%s226 + $0x84] sm:$0xf] %vm3745, %v3650
      %3780 = vst.msk [vmem:[%s226 + $0x88] sm:$0xf] %vm3745, %v3651
      %3781 = vst.msk [vmem:[%s226 + $0x8c] sm:$0xf] %vm3745, %v3652
      %3782 = vst.msk [vmem:[%s226 + $0x90] sm:$0xf] %vm3745, %v3653
      %3783 = vst.msk [vmem:[%s226 + $0x94] sm:$0xf] %vm3745, %v3654
      %3784 = vst.msk [vmem:[%s226 + $0x98] sm:$0xf] %vm3745, %v3655
      %3785 = vst.msk [vmem:[%s226 + $0x9c] sm:$0xf] %vm3745, %v3656
      %3786 = vst.msk [vmem:[%s226 + $0xa0] sm:$0xf] %vm3745, %v3657
      %3787 = vst.msk [vmem:[%s226 + $0xa4] sm:$0xf] %vm3745, %v3658
      %3788 = vst.msk [vmem:[%s226 + $0xa8] sm:$0xf] %vm3745, %v3659
      %3789 = vst.msk [vmem:[%s226 + $0xac] sm:$0xf] %vm3745, %v3660
      %3790 = vst.msk [vmem:[%s226 + $0xb0] sm:$0xf] %vm3745, %v3661
      %3791 = vst.msk [vmem:[%s226 + $0xb4] sm:$0xf] %vm3745, %v3662
      %3792 = vst.msk [vmem:[%s226 + $0xb8] sm:$0xf] %vm3745, %v3663
      %3793 = vst.msk [vmem:[%s226 + $0xbc] sm:$0xf] %vm3745, %v3664
      %3794 = vst.msk [vmem:[%s226 + $0xc0] sm:$0xf] %vm3745, %v3665
      %3795 = vst.msk [vmem:[%s226 + $0xc4] sm:$0xf] %vm3745, %v3666
      %3796 = vst.msk [vmem:[%s226 + $0xc8] sm:$0xf] %vm3745, %v3667
      %3797 = vst.msk [vmem:[%s226 + $0xcc] sm:$0xf] %vm3745, %v3668
      %3798 = vst.msk [vmem:[%s226 + $0xd0] sm:$0xf] %vm3745, %v3669
      %3799 = vst.msk [vmem:[%s226 + $0xd4] sm:$0xf] %vm3745, %v3670
      %3800 = vst.msk [vmem:[%s226 + $0xd8] sm:$0xf] %vm3745, %v3671
      %3801 = vst.msk [vmem:[%s226 + $0xdc] sm:$0xf] %vm3745, %v3672
      %3802 = vst.msk [vmem:[%s226 + $0xe0] sm:$0xf] %vm3745, %v3673
      %3803 = vst.msk [vmem:[%s226 + $0xe4] sm:$0xf] %vm3745, %v3674
      %3804 = vst.msk [vmem:[%s226 + $0xe8] sm:$0xf] %vm3745, %v3675
      %3805 = vst.msk [vmem:[%s226 + $0xec] sm:$0xf] %vm3745, %v3676
      %3806 = vst.msk [vmem:[%s226 + $0xf0] sm:$0xf] %vm3745, %v3677
      %3807 = vst.msk [vmem:[%s226 + $0xf4] sm:$0xf] %vm3745, %v3678
      %3808 = vst.msk [vmem:[%s226 + $0xf8] sm:$0xf] %vm3745, %v3679
      %3809 = vst.msk [vmem:[%s226 + $0xfc] sm:$0xf] %vm3745, %v3680
      %s3810 = smul.u32 64, %s19
      %p3811 = scmp.lt.s32.totalorder %s3810, 511
      %s3812 = scalar_select %p3811, %s3810, 511
      %p3813 = scmp.lt.s32.totalorder %s18, 0
      %s3814 = scalar_select %p3813, %s18, 0
      %s3815 = sadd.s32 %s3814, %s3812
      %s3816 = smul.addr %s3815, 4
      %s3817 = scalar_lea.vmem %s3, %s3816
      // Predicated region
      $region33: #{_lambda_.3} parent=31 // pred_check
        %p3818 = pneg %p124
      $region34: #{_lambda_.3} parent=31 // pred_check_branch
        %3820 = sbr.rel (%p3818) target = $region36
      $region35: #{_lambda_.3} parent=31 // pred_region
        %s3821 = smul.u32 64, %s19
      $region36: #{_lambda_.3} parent=31 // pred_fallthru
        _
    $region32: #{_lambda_.3} parent=5 // pred_fallthru
      _
    %p3822 = scmp.le.s32.totalorder 2, %s9
    // Predicated region
    $region37: #{_lambda_.3} parent=5 // pred_check
      %p3823 = pneg %p3822
    $region38: #{_lambda_.3} parent=5 // pred_check_branch
      %3825 = sbr.rel (%p3823) target = $region40
    $region39: #{_lambda_.3} parent=5 // pred_region
      %s3826 = ssub.s32 %s9, 2
      // Predicated region
      $region41: #{_lambda_.3} parent=39 // pred_check
        %p3827 = pneg %p130
      $region42: #{_lambda_.3} parent=39 // pred_check_branch
        %3829 = sbr.rel (%p3827) target = $region44
      $region43: #{_lambda_.3} parent=39 // pred_region
        %s3830 = smul.u32 64, %s21
        %p3831 = scmp.lt.s32.totalorder %s3830, 511
        %s3832 = scalar_select %p3831, %s3830, 511
        %p3833 = scmp.lt.s32.totalorder %s20, 0
        %s3834 = scalar_select %p3833, %s20, 0
        %s3835 = sadd.s32 %s3834, %s3832
        %s3836 = smul.addr %s3835, 4
        %s3837 = scalar_lea.vmem %s3, %s3836
      $region44: #{_lambda_.3} parent=39 // pred_fallthru
        _
    $region40: #{_lambda_.3} parent=5 // pred_fallthru
      _
  $region6: #{_lambda_.3} parent=0 // loop_footer
    %s13 = sadd.s32 1, %s9
  $region7: #{_lambda_.3} parent=0 // loop_footer_branch
    %8 = sbr.rel target = $region3
  $region8: #{_lambda_.3} parent=0 // loop_exit
    _

// kernel: _lambda_.4
$region0: #{_lambda_.4}
  #allocation0 [shape = 'u32[]', space=smem, size = 0x4, offset = 0x4, fixed_abs, tag = 'smem constant byte address 0x4 - core index']
  #allocation1 [shape = 'u32[144,128]{1,0:T(1,128)}', space=vmem, size = 0x12000, scoped, tag = 'internal scratch']
  %s0 = inlined_call_operand.vmem [shape: bf16[512,1728], index: 0, kind: input, shape index: {}]
  %s1 = inlined_call_operand.vmem [shape: bf16[1728,128], index: 1, kind: input, shape index: {}]
  %s2 = inlined_call_operand.vmem [shape: f32[1,128], index: 2, kind: input, shape index: {}]
  %s3 = inlined_call_operand.vmem [shape: bf16[512,128], index: 3, kind: output, shape index: {}]
  %s4 = sld [smem:[#allocation0]]
  $region45: #{_lambda_.4} parent=0
    _
  %s6 = ssub.s32 1, %s4
  %s7 = scalar_select 0, %s6, %s4
  loop: start=0, step=1, limit=6
  $region2: #{_lambda_.4} parent=0 // loop_pre_header
    _
  $region3: #{_lambda_.4} parent=0 // loop_header
    %s9 = sphi 0, %s13
    %p10 = scmp.ge.s32.totalorder %s9, 6
    %s16 = sphi 0, %s28
    %s17 = sphi 0, %s24
    %s18 = sphi 0, %s16
    %s19 = sphi 0, %s17
    %s20 = sphi 0, %s18
    %s21 = sphi 0, %s19
    %s31 = sphi 0, %s33
    %s34 = sphi 0, %s31
    %s35 = sphi 0, %s34
    %s51 = sphi 0, %s35
    %s57 = sphi 0, %s59
    %s60 = sphi 0, %s57
    %s61 = sphi 0, %s60
    %s77 = sphi 0, %s61
    %s83 = sphi 0, %s85
    %s86 = sphi 0, %s83
    %s87 = sphi 0, %s86
    %s103 = sphi 0, %s87
    %s111 = sphi 0, %s113
    %s114 = sphi 0, %s111
    %s115 = sphi 0, %s114
    %s131 = sphi 0, %s115
  $region4: #{_lambda_.4} parent=0 // loop_header_branch
    %12 = sbr.rel (%p10) target = $region8
  $region5: #{_lambda_.4} parent=0 // loop_body
    %s14 = ssub.s32 %s9, 1
    %s15 = ssub.s32 %s9, 2
    %s22 = sadd.s32 1, %s17
    %p23 = scmp.ge.s32.totalorder %s22, 4
    %s24 = scalar_select %p23, 0, %s22
    %s25 = sadd.s32 1, %s16
    %s26 = scalar_select %p23, %s25, %s16
    %p27 = scmp.ge.s32.totalorder %s26, 1
    %s28 = scalar_select %p27, 0, %s26
    %s29 = ssub.s32 %s17, %s24
    %p30 = scmp.eq.s32.totalorder %s29, 0
    %s32 = sadd.s32 %s31, 1
    %s33 = scalar_select %p30, %s31, %s32
    %p36 = pneg %p30
    %p37 = scmp.eq.s32.totalorder %s9, 3
    %p38 = por %p36, %p37
    %p39 = scmp.ne.s32.totalorder %s31, %s34
    %p40 = scmp.eq.s32.totalorder %s9, 0
    %p41 = por %p39, %p40
    %p42 = scmp.ne.s32.totalorder %s31, %s34
    %p43 = scmp.eq.s32.totalorder %s14, 3
    %p44 = por %p42, %p43
    %p45 = scmp.ne.s32.totalorder %s34, %s35
    %p46 = scmp.eq.s32.totalorder %s14, 0
    %p47 = por %p45, %p46
    %p48 = scmp.ne.s32.totalorder %s34, %s35
    %p49 = scmp.eq.s32.totalorder %s15, 3
    %p50 = por %p48, %p49
    %p52 = scmp.ne.s32.totalorder %s35, %s51
    %p53 = scmp.eq.s32.totalorder %s15, 0
    %p54 = por %p52, %p53
    %s55 = ssub.s32 %s16, %s28
    %p56 = scmp.eq.s32.totalorder %s55, 0
    %s58 = sadd.s32 %s57, 1
    %s59 = scalar_select %p56, %s57, %s58
    %p62 = pneg %p56
    %p63 = scmp.eq.s32.totalorder %s9, 3
    %p64 = por %p62, %p63
    %p65 = scmp.ne.s32.totalorder %s57, %s60
    %p66 = scmp.eq.s32.totalorder %s9, 0
    %p67 = por %p65, %p66
    %p68 = scmp.ne.s32.totalorder %s57, %s60
    %p69 = scmp.eq.s32.totalorder %s14, 3
    %p70 = por %p68, %p69
    %p71 = scmp.ne.s32.totalorder %s60, %s61
    %p72 = scmp.eq.s32.totalorder %s14, 0
    %p73 = por %p71, %p72
    %p74 = scmp.ne.s32.totalorder %s60, %s61
    %p75 = scmp.eq.s32.totalorder %s15, 3
    %p76 = por %p74, %p75
    %p78 = scmp.ne.s32.totalorder %s61, %s77
    %p79 = scmp.eq.s32.totalorder %s15, 0
    %p80 = por %p78, %p79
    %s81 = ssub.s32 %s16, %s28
    %p82 = scmp.eq.s32.totalorder %s81, 0
    %s84 = sadd.s32 %s83, 1
    %s85 = scalar_select %p82, %s83, %s84
    %p88 = pneg %p82
    %p89 = scmp.eq.s32.totalorder %s9, 3
    %p90 = por %p88, %p89
    %p91 = scmp.ne.s32.totalorder %s83, %s86
    %p92 = scmp.eq.s32.totalorder %s9, 0
    %p93 = por %p91, %p92
    %p94 = scmp.ne.s32.totalorder %s83, %s86
    %p95 = scmp.eq.s32.totalorder %s14, 3
    %p96 = por %p94, %p95
    %p97 = scmp.ne.s32.totalorder %s86, %s87
    %p98 = scmp.eq.s32.totalorder %s14, 0
    %p99 = por %p97, %p98
    %p100 = scmp.ne.s32.totalorder %s86, %s87
    %p101 = scmp.eq.s32.totalorder %s15, 3
    %p102 = por %p100, %p101
    %p104 = scmp.ne.s32.totalorder %s87, %s103
    %p105 = scmp.eq.s32.totalorder %s15, 0
    %p106 = por %p104, %p105
    %s107 = ssub.s32 %s17, %s24
    %s108 = ssub.s32 %s16, %s28
    %s109 = sor.u32 %s107, %s108
    %p110 = scmp.eq.s32.totalorder %s109, 0
    %s112 = sadd.s32 %s111, 1
    %s113 = scalar_select %p110, %s111, %s112
    %p116 = pneg %p110
    %p117 = scmp.eq.s32.totalorder %s9, 3
    %p118 = por %p116, %p117
    %p119 = scmp.ne.s32.totalorder %s111, %s114
    %p120 = scmp.eq.s32.totalorder %s9, 0
    %p121 = por %p119, %p120
    %p122 = scmp.ne.s32.totalorder %s111, %s114
    %p123 = scmp.eq.s32.totalorder %s14, 3
    %p124 = por %p122, %p123
    %p125 = scmp.ne.s32.totalorder %s114, %s115
    %p126 = scmp.eq.s32.totalorder %s14, 0
    %p127 = por %p125, %p126
    %p128 = scmp.ne.s32.totalorder %s114, %s115
    %p129 = scmp.eq.s32.totalorder %s15, 3
    %p130 = por %p128, %p129
    %p132 = scmp.ne.s32.totalorder %s115, %s131
    %p133 = scmp.eq.s32.totalorder %s15, 0
    %p134 = por %p132, %p133
    %p135 = scmp.le.s32.totalorder 1, %s9
    %p136 = scmp.lt.s32.totalorder %s9, 5
    %p137 = pnand %p135, %p136
    %p138 = pneg %p137
    // Predicated region
    $region9: #{_lambda_.4} parent=5 // pred_check
      _
    $region10: #{_lambda_.4} parent=5 // pred_check_branch
      %140 = sbr.rel (%p137) target = $region12
    $region11: #{_lambda_.4} parent=5 // pred_region
      %s141 = ssub.s32 %s9, 1
      // Predicated region
      $region13: #{_lambda_.4} parent=11 // pred_check
        %p142 = pneg %p73
      $region14: #{_lambda_.4} parent=11 // pred_check_branch
        %144 = sbr.rel (%p142) target = $region16
      $region15: #{_lambda_.4} parent=11 // pred_region
        %p145 = scmp.lt.s32.totalorder %s18, 0
        %s146 = scalar_select %p145, %s18, 0
        %s147 = smul.addr %s146, 4
        %s148 = scalar_lea.vmem %s1, %s147
      $region16: #{_lambda_.4} parent=11 // pred_fallthru
        _
      // Predicated region
      $region17: #{_lambda_.4} parent=11 // pred_check
        %p149 = pneg %p99
      $region18: #{_lambda_.4} parent=11 // pred_check_branch
        %151 = sbr.rel (%p149) target = $region20
      $region19: #{_lambda_.4} parent=11 // pred_region
        %p152 = scmp.lt.s32.totalorder %s18, 0
        %s153 = scalar_select %p152, %s18, 0
        %s154 = scalar_lea.vmem %s2, %s153
      $region20: #{_lambda_.4} parent=11 // pred_fallthru
        _
    $region12: #{_lambda_.4} parent=5 // pred_fallthru
      _
    %p155 = scmp.lt.s32.totalorder %s9, 4
    // Predicated region
    $region21: #{_lambda_.4} parent=5 // pred_check
      %p156 = pneg %p155
    $region22: #{_lambda_.4} parent=5 // pred_check_branch
      %158 = sbr.rel (%p156) target = $region24
    $region23: #{_lambda_.4} parent=5 // pred_region
      // Predicated region
      $region25: #{_lambda_.4} parent=23 // pred_check
        %p159 = pneg %p41
      $region26: #{_lambda_.4} parent=23 // pred_check_branch
        %161 = sbr.rel (%p159) target = $region28
      $region27: #{_lambda_.4} parent=23 // pred_region
        %s162 = smul.u32 16, %s17
        %p163 = scmp.lt.s32.totalorder %s162, 63
        %s164 = scalar_select %p163, %s162, 63
        %s165 = smul.addr %s164, 14
        %s166 = smul.addr %s165, 4
        %s167 = scalar_lea.vmem %s0, %s166
        %s168 = smul.u32 16, %s17
      $region28: #{_lambda_.4} parent=23 // pred_fallthru
        _
    $region24: #{_lambda_.4} parent=5 // pred_fallthru
      _
    %p169 = scmp.le.s32.totalorder 1, %s9
    %p170 = scmp.lt.s32.totalorder %s9, 5
    %p171 = pnand %p169, %p170
    %p172 = pneg %p171
    // Predicated region
    $region29: #{_lambda_.4} parent=5 // pred_check
      _
    $region30: #{_lambda_.4} parent=5 // pred_check_branch
      %174 = sbr.rel (%p171) target = $region32
    $region31: #{_lambda_.4} parent=5 // pred_region
      %s175 = ssub.s32 %s9, 1
      %s176 = smul.u32 16, %s19
      %p177 = scmp.lt.s32.totalorder %s176, 63
      %s178 = scalar_select %p177, %s176, 63
      %s179 = smul.addr %s178, 14
      %s180 = smul.addr %s179, 4
      %s181 = scalar_lea.vmem %s0, %s180
      %p182 = pneg %p47
      %p183 = pneg %p44
      %p184 = scmp.lt.s32.totalorder %s18, 0
      %s185 = scalar_select %p184, %s18, 0
      %s186 = smul.addr %s185, 4
      %s187 = scalar_lea.vmem %s1, %s186
      %p188 = pneg %p73
      %p189 = pneg %p70
      %p190 = scmp.lt.s32.totalorder %s18, 0
      %s191 = scalar_select %p190, %s18, 0
      %s192 = scalar_lea.vmem %s2, %s191
      %p193 = pneg %p99
      %p194 = pneg %p96
      %p195 = pneg %p127
      %p196 = pneg %p124
      %s197 = smul.u32 16, %s19
      %p198 = scmp.lt.s32.totalorder %s197, 63
      %s199 = scalar_select %p198, %s197, 63
      %p200 = scmp.lt.s32.totalorder %s18, 0
      %s201 = scalar_select %p200, %s18, 0
      %s202 = sadd.s32 %s201, %s199
      %s203 = smul.addr %s202, 4
      %s204 = scalar_lea.vmem %s3, %s203
      %s205 = smul.u32 16, %s19
      %p206 = scmp.lt.s32.totalorder %s205, 63
      %s207 = scalar_select %p206, %s205, 63
      %s208 = smul.addr %s207, 14
      %s209 = smul.addr %s208, 4
      %s210 = scalar_lea.vmem %s0, %s209
      %s211 = smul.u32 16, %s19
      %p212 = scmp.lt.s32.totalorder %s18, 0
      %s213 = scalar_select %p212, %s18, 0
      %s214 = smul.addr %s213, 4
      %s215 = scalar_lea.vmem %s1, %s214
      %p216 = scmp.lt.s32.totalorder %s18, 0
      %s217 = scalar_select %p216, %s18, 0
      %s218 = scalar_lea.vmem %s2, %s217
      %s219 = smul.u32 16, %s19
      %p220 = scmp.lt.s32.totalorder %s219, 63
      %s221 = scalar_select %p220, %s219, 63
      %p222 = scmp.lt.s32.totalorder %s18, 0
      %s223 = scalar_select %p222, %s18, 0
      %s224 = sadd.s32 %s223, %s221
      %s225 = smul.addr %s224, 4
      %s226 = scalar_lea.vmem %s3, %s225
      %s227 = smul.u32 16, %s19
      %v229 = vld [vmem:[%s210] sm:$0xff]
      %v230 = vld [vmem:[%s210 + $0x8] sm:$0xff]
      %v231 = vld [vmem:[%s210 + $0x10] sm:$0xff]
      %v232 = vld [vmem:[%s210 + $0x18] sm:$0xff]
      %v233 = vld [vmem:[%s210 + $0x20] sm:$0xff]
      %v234 = vld [vmem:[%s210 + $0x28] sm:$0xff]
      %v235 = vld [vmem:[%s210 + $0x30] sm:$0xff]
      %v236 = vld [vmem:[%s210 + $0x38] sm:$0xff]
      %v237 = vld [vmem:[%s210 + $0x40] sm:$0xff]
      %v238 = vld [vmem:[%s210 + $0x48] sm:$0xff]
      %v239 = vld [vmem:[%s210 + $0x50] sm:$0xff]
      %v240 = vld [vmem:[%s210 + $0x58] sm:$0xff]
      %v241 = vld [vmem:[%s210 + $0x60] sm:$0xff]
      %v242 = vld [vmem:[%s210 + $0x68] sm:$0xff]
      %v243 = vld [vmem:[%s210 + $0x70] sm:$0xff]
      %v244 = vld [vmem:[%s210 + $0x78] sm:$0xff]
      %v245 = vld [vmem:[%s210 + $0x80] sm:$0xff]
      %v246 = vld [vmem:[%s210 + $0x88] sm:$0xff]
      %v247 = vld [vmem:[%s210 + $0x90] sm:$0xff]
      %v248 = vld [vmem:[%s210 + $0x98] sm:$0xff]
      %v249 = vld [vmem:[%s210 + $0xa0] sm:$0xff]
      %v250 = vld [vmem:[%s210 + $0xa8] sm:$0xff]
      %v251 = vld [vmem:[%s210 + $0xb0] sm:$0xff]
      %v252 = vld [vmem:[%s210 + $0xb8] sm:$0xff]
      %v253 = vld [vmem:[%s210 + $0xc0] sm:$0xff]
      %v254 = vld [vmem:[%s210 + $0xc8] sm:$0xff]
      %v255 = vld [vmem:[%s210 + $0xd0] sm:$0xff]
      %v256 = vld [vmem:[%s210 + $0xd8] sm:$0xff]
      %v257 = vld [vmem:[%s210 + $0xe0] sm:$0xff]
      %v258 = vld [vmem:[%s210 + $0xe8] sm:$0xff]
      %v259 = vld [vmem:[%s210 + $0xf0] sm:$0xff]
      %v260 = vld [vmem:[%s210 + $0xf8] sm:$0xff]
      %v261 = vld [vmem:[%s210 + $0x100] sm:$0xff]
      %v262 = vld [vmem:[%s210 + $0x108] sm:$0xff]
      %v263 = vld [vmem:[%s210 + $0x110] sm:$0xff]
      %v264 = vld [vmem:[%s210 + $0x118] sm:$0xff]
      %v265 = vld [vmem:[%s210 + $0x120] sm:$0xff]
      %v266 = vld [vmem:[%s210 + $0x128] sm:$0xff]
      %v267 = vld [vmem:[%s210 + $0x130] sm:$0xff]
      %v268 = vld [vmem:[%s210 + $0x138] sm:$0xff]
      %v269 = vld [vmem:[%s210 + $0x140] sm:$0xff]
      %v270 = vld [vmem:[%s210 + $0x148] sm:$0xff]
      %v271 = vld [vmem:[%s210 + $0x150] sm:$0xff]
      %v272 = vld [vmem:[%s210 + $0x158] sm:$0xff]
      %v273 = vld [vmem:[%s210 + $0x160] sm:$0xff]
      %v274 = vld [vmem:[%s210 + $0x168] sm:$0xff]
      %v275 = vld [vmem:[%s210 + $0x170] sm:$0xff]
      %v276 = vld [vmem:[%s210 + $0x178] sm:$0xff]
      %v277 = vld [vmem:[%s210 + $0x180] sm:$0xff]
      %v278 = vld [vmem:[%s210 + $0x188] sm:$0xff]
      %v279 = vld [vmem:[%s210 + $0x190] sm:$0xff]
      %v280 = vld [vmem:[%s210 + $0x198] sm:$0xff]
      %v281 = vld [vmem:[%s210 + $0x1a0] sm:$0xff]
      %v282 = vld [vmem:[%s210 + $0x1a8] sm:$0xff]
      %v283 = vld [vmem:[%s210 + $0x1b0] sm:$0xff]
      %v284 = vld [vmem:[%s210 + $0x1b8] sm:$0xff]
      %v285 = vld [vmem:[%s210 + $0x1c0] sm:$0xff]
      %v286 = vld [vmem:[%s210 + $0x1c8] sm:$0xff]
      %v287 = vld [vmem:[%s210 + $0x1d0] sm:$0xff]
      %v288 = vld [vmem:[%s210 + $0x1d8] sm:$0xff]
      %v289 = vld [vmem:[%s210 + $0x1e0] sm:$0xff]
      %v290 = vld [vmem:[%s210 + $0x1e8] sm:$0xff]
      %v291 = vld [vmem:[%s210 + $0x1f0] sm:$0xff]
      %v292 = vld [vmem:[%s210 + $0x1f8] sm:$0xff]
      %v293 = vld [vmem:[%s210 + $0x200] sm:$0xff]
      %v294 = vld [vmem:[%s210 + $0x208] sm:$0xff]
      %v295 = vld [vmem:[%s210 + $0x210] sm:$0xff]
      %v296 = vld [vmem:[%s210 + $0x218] sm:$0xff]
      %v297 = vld [vmem:[%s210 + $0x220] sm:$0xff]
      %v298 = vld [vmem:[%s210 + $0x228] sm:$0xff]
      %v299 = vld [vmem:[%s210 + $0x230] sm:$0xff]
      %v300 = vld [vmem:[%s210 + $0x238] sm:$0xff]
      %v301 = vld [vmem:[%s210 + $0x240] sm:$0xff]
      %v302 = vld [vmem:[%s210 + $0x248] sm:$0xff]
      %v303 = vld [vmem:[%s210 + $0x250] sm:$0xff]
      %v304 = vld [vmem:[%s210 + $0x258] sm:$0xff]
      %v305 = vld [vmem:[%s210 + $0x260] sm:$0xff]
      %v306 = vld [vmem:[%s210 + $0x268] sm:$0xff]
      %v307 = vld [vmem:[%s210 + $0x270] sm:$0xff]
      %v308 = vld [vmem:[%s210 + $0x278] sm:$0xff]
      %v309 = vld [vmem:[%s210 + $0x280] sm:$0xff]
      %v310 = vld [vmem:[%s210 + $0x288] sm:$0xff]
      %v311 = vld [vmem:[%s210 + $0x290] sm:$0xff]
      %v312 = vld [vmem:[%s210 + $0x298] sm:$0xff]
      %v313 = vld [vmem:[%s210 + $0x2a0] sm:$0xff]
      %v314 = vld [vmem:[%s210 + $0x2a8] sm:$0xff]
      %v315 = vld [vmem:[%s210 + $0x2b0] sm:$0xff]
      %v316 = vld [vmem:[%s210 + $0x2b8] sm:$0xff]
      %v317 = vld [vmem:[%s210 + $0x2c0] sm:$0xff]
      %v318 = vld [vmem:[%s210 + $0x2c8] sm:$0xff]
      %v319 = vld [vmem:[%s210 + $0x2d0] sm:$0xff]
      %v320 = vld [vmem:[%s210 + $0x2d8] sm:$0xff]
      %v321 = vld [vmem:[%s210 + $0x2e0] sm:$0xff]
      %v322 = vld [vmem:[%s210 + $0x2e8] sm:$0xff]
      %v323 = vld [vmem:[%s210 + $0x2f0] sm:$0xff]
      %v324 = vld [vmem:[%s210 + $0x2f8] sm:$0xff]
      %v325 = vld [vmem:[%s210 + $0x300] sm:$0xff]
      %v326 = vld [vmem:[%s210 + $0x308] sm:$0xff]
      %v327 = vld [vmem:[%s210 + $0x310] sm:$0xff]
      %v328 = vld [vmem:[%s210 + $0x318] sm:$0xff]
      %v329 = vld [vmem:[%s210 + $0x320] sm:$0xff]
      %v330 = vld [vmem:[%s210 + $0x328] sm:$0xff]
      %v331 = vld [vmem:[%s210 + $0x330] sm:$0xff]
      %v332 = vld [vmem:[%s210 + $0x338] sm:$0xff]
      %v333 = vld [vmem:[%s210 + $0x340] sm:$0xff]
      %v334 = vld [vmem:[%s210 + $0x348] sm:$0xff]
      %v335 = vld [vmem:[%s210 + $0x350] sm:$0xff]
      %v336 = vld [vmem:[%s210 + $0x358] sm:$0xff]
      %v337 = vld [vmem:[%s210 + $0x360] sm:$0xff]
      %v338 = vld [vmem:[%s210 + $0x368] sm:$0xff]
      %v339 = vld [vmem:[%s210 + $0x370] sm:$0xff]
      %v340 = vld [vmem:[%s210 + $0x378] sm:$0xff]
      %v341 = vld [vmem:[%s215] sm:$0xf]
      %v342 = vld [vmem:[%s215 + $0x4] sm:$0xf]
      %v343 = vld [vmem:[%s215 + $0x8] sm:$0xf]
      %v344 = vld [vmem:[%s215 + $0xc] sm:$0xf]
      %v345 = vld [vmem:[%s215 + $0x10] sm:$0xf]
      %v346 = vld [vmem:[%s215 + $0x14] sm:$0xf]
      %v347 = vld [vmem:[%s215 + $0x18] sm:$0xf]
      %v348 = vld [vmem:[%s215 + $0x1c] sm:$0xf]
      %v349 = vld [vmem:[%s215 + $0x20] sm:$0xf]
      %v350 = vld [vmem:[%s215 + $0x24] sm:$0xf]
      %v351 = vld [vmem:[%s215 + $0x28] sm:$0xf]
      %v352 = vld [vmem:[%s215 + $0x2c] sm:$0xf]
      %v353 = vld [vmem:[%s215 + $0x30] sm:$0xf]
      %v354 = vld [vmem:[%s215 + $0x34] sm:$0xf]
      %v355 = vld [vmem:[%s215 + $0x38] sm:$0xf]
      %v356 = vld [vmem:[%s215 + $0x3c] sm:$0xf]
      %v357 = vld [vmem:[%s215 + $0x40] sm:$0xf]
      %v358 = vld [vmem:[%s215 + $0x44] sm:$0xf]
      %v359 = vld [vmem:[%s215 + $0x48] sm:$0xf]
      %v360 = vld [vmem:[%s215 + $0x4c] sm:$0xf]
      %v361 = vld [vmem:[%s215 + $0x50] sm:$0xf]
      %v362 = vld [vmem:[%s215 + $0x54] sm:$0xf]
      %v363 = vld [vmem:[%s215 + $0x58] sm:$0xf]
      %v364 = vld [vmem:[%s215 + $0x5c] sm:$0xf]
      %v365 = vld [vmem:[%s215 + $0x60] sm:$0xf]
      %v366 = vld [vmem:[%s215 + $0x64] sm:$0xf]
      %v367 = vld [vmem:[%s215 + $0x68] sm:$0xf]
      %v368 = vld [vmem:[%s215 + $0x6c] sm:$0xf]
      %v369 = vld [vmem:[%s215 + $0x70] sm:$0xf]
      %v370 = vld [vmem:[%s215 + $0x74] sm:$0xf]
      %v371 = vld [vmem:[%s215 + $0x78] sm:$0xf]
      %v372 = vld [vmem:[%s215 + $0x7c] sm:$0xf]
      %v373 = vld [vmem:[%s215 + $0x80] sm:$0xf]
      %v374 = vld [vmem:[%s215 + $0x84] sm:$0xf]
      %v375 = vld [vmem:[%s215 + $0x88] sm:$0xf]
      %v376 = vld [vmem:[%s215 + $0x8c] sm:$0xf]
      %v377 = vld [vmem:[%s215 + $0x90] sm:$0xf]
      %v378 = vld [vmem:[%s215 + $0x94] sm:$0xf]
      %v379 = vld [vmem:[%s215 + $0x98] sm:$0xf]
      %v380 = vld [vmem:[%s215 + $0x9c] sm:$0xf]
      %v381 = vld [vmem:[%s215 + $0xa0] sm:$0xf]
      %v382 = vld [vmem:[%s215 + $0xa4] sm:$0xf]
      %v383 = vld [vmem:[%s215 + $0xa8] sm:$0xf]
      %v384 = vld [vmem:[%s215 + $0xac] sm:$0xf]
      %v385 = vld [vmem:[%s215 + $0xb0] sm:$0xf]
      %v386 = vld [vmem:[%s215 + $0xb4] sm:$0xf]
      %v387 = vld [vmem:[%s215 + $0xb8] sm:$0xf]
      %v388 = vld [vmem:[%s215 + $0xbc] sm:$0xf]
      %v389 = vld [vmem:[%s215 + $0xc0] sm:$0xf]
      %v390 = vld [vmem:[%s215 + $0xc4] sm:$0xf]
      %v391 = vld [vmem:[%s215 + $0xc8] sm:$0xf]
      %v392 = vld [vmem:[%s215 + $0xcc] sm:$0xf]
      %v393 = vld [vmem:[%s215 + $0xd0] sm:$0xf]
      %v394 = vld [vmem:[%s215 + $0xd4] sm:$0xf]
      %v395 = vld [vmem:[%s215 + $0xd8] sm:$0xf]
      %v396 = vld [vmem:[%s215 + $0xdc] sm:$0xf]
      %v397 = vld [vmem:[%s215 + $0xe0] sm:$0xf]
      %v398 = vld [vmem:[%s215 + $0xe4] sm:$0xf]
      %v399 = vld [vmem:[%s215 + $0xe8] sm:$0xf]
      %v400 = vld [vmem:[%s215 + $0xec] sm:$0xf]
      %v401 = vld [vmem:[%s215 + $0xf0] sm:$0xf]
      %v402 = vld [vmem:[%s215 + $0xf4] sm:$0xf]
      %v403 = vld [vmem:[%s215 + $0xf8] sm:$0xf]
      %v404 = vld [vmem:[%s215 + $0xfc] sm:$0xf]
      %v405 = vld [vmem:[%s215 + $0x100] sm:$0xf]
      %v406 = vld [vmem:[%s215 + $0x104] sm:$0xf]
      %v407 = vld [vmem:[%s215 + $0x108] sm:$0xf]
      %v408 = vld [vmem:[%s215 + $0x10c] sm:$0xf]
      %v409 = vld [vmem:[%s215 + $0x110] sm:$0xf]
      %v410 = vld [vmem:[%s215 + $0x114] sm:$0xf]
      %v411 = vld [vmem:[%s215 + $0x118] sm:$0xf]
      %v412 = vld [vmem:[%s215 + $0x11c] sm:$0xf]
      %v413 = vld [vmem:[%s215 + $0x120] sm:$0xf]
      %v414 = vld [vmem:[%s215 + $0x124] sm:$0xf]
      %v415 = vld [vmem:[%s215 + $0x128] sm:$0xf]
      %v416 = vld [vmem:[%s215 + $0x12c] sm:$0xf]
      %v417 = vld [vmem:[%s215 + $0x130] sm:$0xf]
      %v418 = vld [vmem:[%s215 + $0x134] sm:$0xf]
      %v419 = vld [vmem:[%s215 + $0x138] sm:$0xf]
      %v420 = vld [vmem:[%s215 + $0x13c] sm:$0xf]
      %v421 = vld [vmem:[%s215 + $0x140] sm:$0xf]
      %v422 = vld [vmem:[%s215 + $0x144] sm:$0xf]
      %v423 = vld [vmem:[%s215 + $0x148] sm:$0xf]
      %v424 = vld [vmem:[%s215 + $0x14c] sm:$0xf]
      %v425 = vld [vmem:[%s215 + $0x150] sm:$0xf]
      %v426 = vld [vmem:[%s215 + $0x154] sm:$0xf]
      %v427 = vld [vmem:[%s215 + $0x158] sm:$0xf]
      %v428 = vld [vmem:[%s215 + $0x15c] sm:$0xf]
      %v429 = vld [vmem:[%s215 + $0x160] sm:$0xf]
      %v430 = vld [vmem:[%s215 + $0x164] sm:$0xf]
      %v431 = vld [vmem:[%s215 + $0x168] sm:$0xf]
      %v432 = vld [vmem:[%s215 + $0x16c] sm:$0xf]
      %v433 = vld [vmem:[%s215 + $0x170] sm:$0xf]
      %v434 = vld [vmem:[%s215 + $0x174] sm:$0xf]
      %v435 = vld [vmem:[%s215 + $0x178] sm:$0xf]
      %v436 = vld [vmem:[%s215 + $0x17c] sm:$0xf]
      %v437 = vld [vmem:[%s215 + $0x180] sm:$0xf]
      %v438 = vld [vmem:[%s215 + $0x184] sm:$0xf]
      %v439 = vld [vmem:[%s215 + $0x188] sm:$0xf]
      %v440 = vld [vmem:[%s215 + $0x18c] sm:$0xf]
      %v441 = vld [vmem:[%s215 + $0x190] sm:$0xf]
      %v442 = vld [vmem:[%s215 + $0x194] sm:$0xf]
      %v443 = vld [vmem:[%s215 + $0x198] sm:$0xf]
      %v444 = vld [vmem:[%s215 + $0x19c] sm:$0xf]
      %v445 = vld [vmem:[%s215 + $0x1a0] sm:$0xf]
      %v446 = vld [vmem:[%s215 + $0x1a4] sm:$0xf]
      %v447 = vld [vmem:[%s215 + $0x1a8] sm:$0xf]
      %v448 = vld [vmem:[%s215 + $0x1ac] sm:$0xf]
      %v449 = vld [vmem:[%s215 + $0x1b0] sm:$0xf]
      %v450 = vld [vmem:[%s215 + $0x1b4] sm:$0xf]
      %v451 = vld [vmem:[%s215 + $0x1b8] sm:$0xf]
      %v452 = vld [vmem:[%s215 + $0x1bc] sm:$0xf]
      %v453 = vld [vmem:[%s215 + $0x1c0] sm:$0xf]
      %v454 = vld [vmem:[%s215 + $0x1c4] sm:$0xf]
      %v455 = vld [vmem:[%s215 + $0x1c8] sm:$0xf]
      %v456 = vld [vmem:[%s215 + $0x1cc] sm:$0xf]
      %v457 = vld [vmem:[%s215 + $0x1d0] sm:$0xf]
      %v458 = vld [vmem:[%s215 + $0x1d4] sm:$0xf]
      %v459 = vld [vmem:[%s215 + $0x1d8] sm:$0xf]
      %v460 = vld [vmem:[%s215 + $0x1dc] sm:$0xf]
      %v461 = vld [vmem:[%s215 + $0x1e0] sm:$0xf]
      %v462 = vld [vmem:[%s215 + $0x1e4] sm:$0xf]
      %v463 = vld [vmem:[%s215 + $0x1e8] sm:$0xf]
      %v464 = vld [vmem:[%s215 + $0x1ec] sm:$0xf]
      %v465 = vld [vmem:[%s215 + $0x1f0] sm:$0xf]
      %v466 = vld [vmem:[%s215 + $0x1f4] sm:$0xf]
      %v467 = vld [vmem:[%s215 + $0x1f8] sm:$0xf]
      %v468 = vld [vmem:[%s215 + $0x1fc] sm:$0xf]
      %v469 = vld [vmem:[%s215 + $0x200] sm:$0xf]
      %v470 = vld [vmem:[%s215 + $0x204] sm:$0xf]
      %v471 = vld [vmem:[%s215 + $0x208] sm:$0xf]
      %v472 = vld [vmem:[%s215 + $0x20c] sm:$0xf]
      %v473 = vld [vmem:[%s215 + $0x210] sm:$0xf]
      %v474 = vld [vmem:[%s215 + $0x214] sm:$0xf]
      %v475 = vld [vmem:[%s215 + $0x218] sm:$0xf]
      %v476 = vld [vmem:[%s215 + $0x21c] sm:$0xf]
      %v477 = vld [vmem:[%s215 + $0x220] sm:$0xf]
      %v478 = vld [vmem:[%s215 + $0x224] sm:$0xf]
      %v479 = vld [vmem:[%s215 + $0x228] sm:$0xf]
      %v480 = vld [vmem:[%s215 + $0x22c] sm:$0xf]
      %v481 = vld [vmem:[%s215 + $0x230] sm:$0xf]
      %v482 = vld [vmem:[%s215 + $0x234] sm:$0xf]
      %v483 = vld [vmem:[%s215 + $0x238] sm:$0xf]
      %v484 = vld [vmem:[%s215 + $0x23c] sm:$0xf]
      %v485 = vld [vmem:[%s215 + $0x240] sm:$0xf]
      %v486 = vld [vmem:[%s215 + $0x244] sm:$0xf]
      %v487 = vld [vmem:[%s215 + $0x248] sm:$0xf]
      %v488 = vld [vmem:[%s215 + $0x24c] sm:$0xf]
      %v489 = vld [vmem:[%s215 + $0x250] sm:$0xf]
      %v490 = vld [vmem:[%s215 + $0x254] sm:$0xf]
      %v491 = vld [vmem:[%s215 + $0x258] sm:$0xf]
      %v492 = vld [vmem:[%s215 + $0x25c] sm:$0xf]
      %v493 = vld [vmem:[%s215 + $0x260] sm:$0xf]
      %v494 = vld [vmem:[%s215 + $0x264] sm:$0xf]
      %v495 = vld [vmem:[%s215 + $0x268] sm:$0xf]
      %v496 = vld [vmem:[%s215 + $0x26c] sm:$0xf]
      %v497 = vld [vmem:[%s215 + $0x270] sm:$0xf]
      %v498 = vld [vmem:[%s215 + $0x274] sm:$0xf]
      %v499 = vld [vmem:[%s215 + $0x278] sm:$0xf]
      %v500 = vld [vmem:[%s215 + $0x27c] sm:$0xf]
      %v501 = vld [vmem:[%s215 + $0x280] sm:$0xf]
      %v502 = vld [vmem:[%s215 + $0x284] sm:$0xf]
      %v503 = vld [vmem:[%s215 + $0x288] sm:$0xf]
      %v504 = vld [vmem:[%s215 + $0x28c] sm:$0xf]
      %v505 = vld [vmem:[%s215 + $0x290] sm:$0xf]
      %v506 = vld [vmem:[%s215 + $0x294] sm:$0xf]
      %v507 = vld [vmem:[%s215 + $0x298] sm:$0xf]
      %v508 = vld [vmem:[%s215 + $0x29c] sm:$0xf]
      %v509 = vld [vmem:[%s215 + $0x2a0] sm:$0xf]
      %v510 = vld [vmem:[%s215 + $0x2a4] sm:$0xf]
      %v511 = vld [vmem:[%s215 + $0x2a8] sm:$0xf]
      %v512 = vld [vmem:[%s215 + $0x2ac] sm:$0xf]
      %v513 = vld [vmem:[%s215 + $0x2b0] sm:$0xf]
      %v514 = vld [vmem:[%s215 + $0x2b4] sm:$0xf]
      %v515 = vld [vmem:[%s215 + $0x2b8] sm:$0xf]
      %v516 = vld [vmem:[%s215 + $0x2bc] sm:$0xf]
      %v517 = vld [vmem:[%s215 + $0x2c0] sm:$0xf]
      %v518 = vld [vmem:[%s215 + $0x2c4] sm:$0xf]
      %v519 = vld [vmem:[%s215 + $0x2c8] sm:$0xf]
      %v520 = vld [vmem:[%s215 + $0x2cc] sm:$0xf]
      %v521 = vld [vmem:[%s215 + $0x2d0] sm:$0xf]
      %v522 = vld [vmem:[%s215 + $0x2d4] sm:$0xf]
      %v523 = vld [vmem:[%s215 + $0x2d8] sm:$0xf]
      %v524 = vld [vmem:[%s215 + $0x2dc] sm:$0xf]
      %v525 = vld [vmem:[%s215 + $0x2e0] sm:$0xf]
      %v526 = vld [vmem:[%s215 + $0x2e4] sm:$0xf]
      %v527 = vld [vmem:[%s215 + $0x2e8] sm:$0xf]
      %v528 = vld [vmem:[%s215 + $0x2ec] sm:$0xf]
      %v529 = vld [vmem:[%s215 + $0x2f0] sm:$0xf]
      %v530 = vld [vmem:[%s215 + $0x2f4] sm:$0xf]
      %v531 = vld [vmem:[%s215 + $0x2f8] sm:$0xf]
      %v532 = vld [vmem:[%s215 + $0x2fc] sm:$0xf]
      %v533 = vld [vmem:[%s215 + $0x300] sm:$0xf]
      %v534 = vld [vmem:[%s215 + $0x304] sm:$0xf]
      %v535 = vld [vmem:[%s215 + $0x308] sm:$0xf]
      %v536 = vld [vmem:[%s215 + $0x30c] sm:$0xf]
      %v537 = vld [vmem:[%s215 + $0x310] sm:$0xf]
      %v538 = vld [vmem:[%s215 + $0x314] sm:$0xf]
      %v539 = vld [vmem:[%s215 + $0x318] sm:$0xf]
      %v540 = vld [vmem:[%s215 + $0x31c] sm:$0xf]
      %v541 = vld [vmem:[%s215 + $0x320] sm:$0xf]
      %v542 = vld [vmem:[%s215 + $0x324] sm:$0xf]
      %v543 = vld [vmem:[%s215 + $0x328] sm:$0xf]
      %v544 = vld [vmem:[%s215 + $0x32c] sm:$0xf]
      %v545 = vld [vmem:[%s215 + $0x330] sm:$0xf]
      %v546 = vld [vmem:[%s215 + $0x334] sm:$0xf]
      %v547 = vld [vmem:[%s215 + $0x338] sm:$0xf]
      %v548 = vld [vmem:[%s215 + $0x33c] sm:$0xf]
      %v549 = vld [vmem:[%s215 + $0x340] sm:$0xf]
      %v550 = vld [vmem:[%s215 + $0x344] sm:$0xf]
      %v551 = vld [vmem:[%s215 + $0x348] sm:$0xf]
      %v552 = vld [vmem:[%s215 + $0x34c] sm:$0xf]
      %v553 = vld [vmem:[%s215 + $0x350] sm:$0xf]
      %v554 = vld [vmem:[%s215 + $0x354] sm:$0xf]
      %v555 = vld [vmem:[%s215 + $0x358] sm:$0xf]
      %v556 = vld [vmem:[%s215 + $0x35c] sm:$0xf]
      %v557 = vld [vmem:[%s218] sm:$0x1]
      %v559 = vlaneseq
      %v560 = vshrl.u32 %v559, 7
      %v561 = vsub.s32 0, %v560
      %v562 = vrot.slane %v557, %v561
      %v676 = vunpack.c.l.b16 %v229
      %v677 = vunpack.c.h.b16 %v229
      %v678 = vunpack.c.l.b16 %v230
      %v679 = vunpack.c.h.b16 %v230
      %v680 = vunpack.c.l.b16 %v231
      %v681 = vunpack.c.h.b16 %v231
      %v682 = vunpack.c.l.b16 %v232
      %v683 = vunpack.c.h.b16 %v232
      %v684 = vunpack.c.l.b16 %v233
      %v685 = vunpack.c.h.b16 %v233
      %v686 = vunpack.c.l.b16 %v234
      %v687 = vunpack.c.h.b16 %v234
      %v688 = vunpack.c.l.b16 %v235
      %v689 = vunpack.c.h.b16 %v235
      %v690 = vunpack.c.l.b16 %v236
      %v691 = vunpack.c.h.b16 %v236
      %v692 = vunpack.c.l.b16 %v237
      %v693 = vunpack.c.h.b16 %v237
      %v694 = vunpack.c.l.b16 %v238
      %v695 = vunpack.c.h.b16 %v238
      %v696 = vunpack.c.l.b16 %v239
      %v697 = vunpack.c.h.b16 %v239
      %v698 = vunpack.c.l.b16 %v240
      %v699 = vunpack.c.h.b16 %v240
      %v700 = vunpack.c.l.b16 %v241
      %v701 = vunpack.c.h.b16 %v241
      %v702 = vunpack.c.l.b16 %v242
      %v703 = vunpack.c.h.b16 %v242
      %v704 = vunpack.c.l.b16 %v243
      %v705 = vunpack.c.h.b16 %v243
      %v706 = vunpack.c.l.b16 %v244
      %v707 = vunpack.c.h.b16 %v244
      %v708 = vunpack.c.l.b16 %v245
      %v709 = vunpack.c.h.b16 %v245
      %v710 = vunpack.c.l.b16 %v246
      %v711 = vunpack.c.h.b16 %v246
      %v712 = vunpack.c.l.b16 %v247
      %v713 = vunpack.c.h.b16 %v247
      %v714 = vunpack.c.l.b16 %v248
      %v715 = vunpack.c.h.b16 %v248
      %v716 = vunpack.c.l.b16 %v249
      %v717 = vunpack.c.h.b16 %v249
      %v718 = vunpack.c.l.b16 %v250
      %v719 = vunpack.c.h.b16 %v250
      %v720 = vunpack.c.l.b16 %v251
      %v721 = vunpack.c.h.b16 %v251
      %v722 = vunpack.c.l.b16 %v252
      %v723 = vunpack.c.h.b16 %v252
      %v724 = vunpack.c.l.b16 %v253
      %v725 = vunpack.c.h.b16 %v253
      %v726 = vunpack.c.l.b16 %v254
      %v727 = vunpack.c.h.b16 %v254
      %v728 = vunpack.c.l.b16 %v255
      %v729 = vunpack.c.h.b16 %v255
      %v730 = vunpack.c.l.b16 %v256
      %v731 = vunpack.c.h.b16 %v256
      %v732 = vunpack.c.l.b16 %v257
      %v733 = vunpack.c.h.b16 %v257
      %v734 = vunpack.c.l.b16 %v258
      %v735 = vunpack.c.h.b16 %v258
      %v736 = vunpack.c.l.b16 %v259
      %v737 = vunpack.c.h.b16 %v259
      %v738 = vunpack.c.l.b16 %v260
      %v739 = vunpack.c.h.b16 %v260
      %v740 = vunpack.c.l.b16 %v261
      %v741 = vunpack.c.h.b16 %v261
      %v742 = vunpack.c.l.b16 %v262
      %v743 = vunpack.c.h.b16 %v262
      %v744 = vunpack.c.l.b16 %v263
      %v745 = vunpack.c.h.b16 %v263
      %v746 = vunpack.c.l.b16 %v264
      %v747 = vunpack.c.h.b16 %v264
      %v748 = vunpack.c.l.b16 %v265
      %v749 = vunpack.c.h.b16 %v265
      %v750 = vunpack.c.l.b16 %v266
      %v751 = vunpack.c.h.b16 %v266
      %v752 = vunpack.c.l.b16 %v267
      %v753 = vunpack.c.h.b16 %v267
      %v754 = vunpack.c.l.b16 %v268
      %v755 = vunpack.c.h.b16 %v268
      %v756 = vunpack.c.l.b16 %v269
      %v757 = vunpack.c.h.b16 %v269
      %v758 = vunpack.c.l.b16 %v270
      %v759 = vunpack.c.h.b16 %v270
      %v760 = vunpack.c.l.b16 %v271
      %v761 = vunpack.c.h.b16 %v271
      %v762 = vunpack.c.l.b16 %v272
      %v763 = vunpack.c.h.b16 %v272
      %v764 = vunpack.c.l.b16 %v273
      %v765 = vunpack.c.h.b16 %v273
      %v766 = vunpack.c.l.b16 %v274
      %v767 = vunpack.c.h.b16 %v274
      %v768 = vunpack.c.l.b16 %v275
      %v769 = vunpack.c.h.b16 %v275
      %v770 = vunpack.c.l.b16 %v276
      %v771 = vunpack.c.h.b16 %v276
      %v772 = vunpack.c.l.b16 %v277
      %v773 = vunpack.c.h.b16 %v277
      %v774 = vunpack.c.l.b16 %v278
      %v775 = vunpack.c.h.b16 %v278
      %v776 = vunpack.c.l.b16 %v279
      %v777 = vunpack.c.h.b16 %v279
      %v778 = vunpack.c.l.b16 %v280
      %v779 = vunpack.c.h.b16 %v280
      %v780 = vunpack.c.l.b16 %v281
      %v781 = vunpack.c.h.b16 %v281
      %v782 = vunpack.c.l.b16 %v282
      %v783 = vunpack.c.h.b16 %v282
      %v784 = vunpack.c.l.b16 %v283
      %v785 = vunpack.c.h.b16 %v283
      %v786 = vunpack.c.l.b16 %v284
      %v787 = vunpack.c.h.b16 %v284
      %v788 = vunpack.c.l.b16 %v285
      %v789 = vunpack.c.h.b16 %v285
      %v790 = vunpack.c.l.b16 %v286
      %v791 = vunpack.c.h.b16 %v286
      %v792 = vunpack.c.l.b16 %v287
      %v793 = vunpack.c.h.b16 %v287
      %v794 = vunpack.c.l.b16 %v288
      %v795 = vunpack.c.h.b16 %v288
      %v796 = vunpack.c.l.b16 %v289
      %v797 = vunpack.c.h.b16 %v289
      %v798 = vunpack.c.l.b16 %v290
      %v799 = vunpack.c.h.b16 %v290
      %v800 = vunpack.c.l.b16 %v291
      %v801 = vunpack.c.h.b16 %v291
      %v802 = vunpack.c.l.b16 %v292
      %v803 = vunpack.c.h.b16 %v292
      %v804 = vunpack.c.l.b16 %v293
      %v805 = vunpack.c.h.b16 %v293
      %v806 = vunpack.c.l.b16 %v294
      %v807 = vunpack.c.h.b16 %v294
      %v808 = vunpack.c.l.b16 %v295
      %v809 = vunpack.c.h.b16 %v295
      %v810 = vunpack.c.l.b16 %v296
      %v811 = vunpack.c.h.b16 %v296
      %v812 = vunpack.c.l.b16 %v297
      %v813 = vunpack.c.h.b16 %v297
      %v814 = vunpack.c.l.b16 %v298
      %v815 = vunpack.c.h.b16 %v298
      %v816 = vunpack.c.l.b16 %v299
      %v817 = vunpack.c.h.b16 %v299
      %v818 = vunpack.c.l.b16 %v300
      %v819 = vunpack.c.h.b16 %v300
      %v820 = vunpack.c.l.b16 %v301
      %v821 = vunpack.c.h.b16 %v301
      %v822 = vunpack.c.l.b16 %v302
      %v823 = vunpack.c.h.b16 %v302
      %v824 = vunpack.c.l.b16 %v303
      %v825 = vunpack.c.h.b16 %v303
      %v826 = vunpack.c.l.b16 %v304
      %v827 = vunpack.c.h.b16 %v304
      %v828 = vunpack.c.l.b16 %v305
      %v829 = vunpack.c.h.b16 %v305
      %v830 = vunpack.c.l.b16 %v306
      %v831 = vunpack.c.h.b16 %v306
      %v832 = vunpack.c.l.b16 %v307
      %v833 = vunpack.c.h.b16 %v307
      %v834 = vunpack.c.l.b16 %v308
      %v835 = vunpack.c.h.b16 %v308
      %v836 = vunpack.c.l.b16 %v309
      %v837 = vunpack.c.h.b16 %v309
      %v838 = vunpack.c.l.b16 %v310
      %v839 = vunpack.c.h.b16 %v310
      %v840 = vunpack.c.l.b16 %v311
      %v841 = vunpack.c.h.b16 %v311
      %v842 = vunpack.c.l.b16 %v312
      %v843 = vunpack.c.h.b16 %v312
      %v844 = vunpack.c.l.b16 %v313
      %v845 = vunpack.c.h.b16 %v313
      %v846 = vunpack.c.l.b16 %v314
      %v847 = vunpack.c.h.b16 %v314
      %v848 = vunpack.c.l.b16 %v315
      %v849 = vunpack.c.h.b16 %v315
      %v850 = vunpack.c.l.b16 %v316
      %v851 = vunpack.c.h.b16 %v316
      %v852 = vunpack.c.l.b16 %v317
      %v853 = vunpack.c.h.b16 %v317
      %v854 = vunpack.c.l.b16 %v318
      %v855 = vunpack.c.h.b16 %v318
      %v856 = vunpack.c.l.b16 %v319
      %v857 = vunpack.c.h.b16 %v319
      %v858 = vunpack.c.l.b16 %v320
      %v859 = vunpack.c.h.b16 %v320
      %v860 = vunpack.c.l.b16 %v321
      %v861 = vunpack.c.h.b16 %v321
      %v862 = vunpack.c.l.b16 %v322
      %v863 = vunpack.c.h.b16 %v322
      %v864 = vunpack.c.l.b16 %v323
      %v865 = vunpack.c.h.b16 %v323
      %v866 = vunpack.c.l.b16 %v324
      %v867 = vunpack.c.h.b16 %v324
      %v868 = vunpack.c.l.b16 %v325
      %v869 = vunpack.c.h.b16 %v325
      %v870 = vunpack.c.l.b16 %v326
      %v871 = vunpack.c.h.b16 %v326
      %v872 = vunpack.c.l.b16 %v327
      %v873 = vunpack.c.h.b16 %v327
      %v874 = vunpack.c.l.b16 %v328
      %v875 = vunpack.c.h.b16 %v328
      %v876 = vunpack.c.l.b16 %v329
      %v877 = vunpack.c.h.b16 %v329
      %v878 = vunpack.c.l.b16 %v330
      %v879 = vunpack.c.h.b16 %v330
      %v880 = vunpack.c.l.b16 %v331
      %v881 = vunpack.c.h.b16 %v331
      %v882 = vunpack.c.l.b16 %v332
      %v883 = vunpack.c.h.b16 %v332
      %v884 = vunpack.c.l.b16 %v333
      %v885 = vunpack.c.h.b16 %v333
      %v886 = vunpack.c.l.b16 %v334
      %v887 = vunpack.c.h.b16 %v334
      %v888 = vunpack.c.l.b16 %v335
      %v889 = vunpack.c.h.b16 %v335
      %v890 = vunpack.c.l.b16 %v336
      %v891 = vunpack.c.h.b16 %v336
      %v892 = vunpack.c.l.b16 %v337
      %v893 = vunpack.c.h.b16 %v337
      %v894 = vunpack.c.l.b16 %v338
      %v895 = vunpack.c.h.b16 %v338
      %v896 = vunpack.c.l.b16 %v339
      %v897 = vunpack.c.h.b16 %v339
      %v898 = vunpack.c.l.b16 %v340
      %v899 = vunpack.c.h.b16 %v340
      %v900 = vpack.c.b16 %v690, %v676
      %v901 = vpack.c.b16 %v691, %v677
      %v902 = vpack.c.b16 %v692, %v678
      %v903 = vpack.c.b16 %v693, %v679
      %v904 = vpack.c.b16 %v694, %v680
      %v905 = vpack.c.b16 %v695, %v681
      %v906 = vpack.c.b16 %v696, %v682
      %v907 = vpack.c.b16 %v697, %v683
      %v908 = vpack.c.b16 %v698, %v684
      %v909 = vpack.c.b16 %v699, %v685
      %v910 = vpack.c.b16 %v700, %v686
      %v911 = vpack.c.b16 %v701, %v687
      %v912 = vpack.c.b16 %v702, %v688
      %v913 = vpack.c.b16 %v703, %v689
      %v914 = vpack.c.b16 %v718, %v704
      %v915 = vpack.c.b16 %v719, %v705
      %v916 = vpack.c.b16 %v720, %v706
      %v917 = vpack.c.b16 %v721, %v707
      %v918 = vpack.c.b16 %v722, %v708
      %v919 = vpack.c.b16 %v723, %v709
      %v920 = vpack.c.b16 %v724, %v710
      %v921 = vpack.c.b16 %v725, %v711
      %v922 = vpack.c.b16 %v726, %v712
      %v923 = vpack.c.b16 %v727, %v713
      %v924 = vpack.c.b16 %v728, %v714
      %v925 = vpack.c.b16 %v729, %v715
      %v926 = vpack.c.b16 %v730, %v716
      %v927 = vpack.c.b16 %v731, %v717
      %v928 = vpack.c.b16 %v746, %v732
      %v929 = vpack.c.b16 %v747, %v733
      %v930 = vpack.c.b16 %v748, %v734
      %v931 = vpack.c.b16 %v749, %v735
      %v932 = vpack.c.b16 %v750, %v736
      %v933 = vpack.c.b16 %v751, %v737
      %v934 = vpack.c.b16 %v752, %v738
      %v935 = vpack.c.b16 %v753, %v739
      %v936 = vpack.c.b16 %v754, %v740
      %v937 = vpack.c.b16 %v755, %v741
      %v938 = vpack.c.b16 %v756, %v742
      %v939 = vpack.c.b16 %v757, %v743
      %v940 = vpack.c.b16 %v758, %v744
      %v941 = vpack.c.b16 %v759, %v745
      %v942 = vpack.c.b16 %v774, %v760
      %v943 = vpack.c.b16 %v775, %v761
      %v944 = vpack.c.b16 %v776, %v762
      %v945 = vpack.c.b16 %v777, %v763
      %v946 = vpack.c.b16 %v778, %v764
      %v947 = vpack.c.b16 %v779, %v765
      %v948 = vpack.c.b16 %v780, %v766
      %v949 = vpack.c.b16 %v781, %v767
      %v950 = vpack.c.b16 %v782, %v768
      %v951 = vpack.c.b16 %v783, %v769
      %v952 = vpack.c.b16 %v784, %v770
      %v953 = vpack.c.b16 %v785, %v771
      %v954 = vpack.c.b16 %v786, %v772
      %v955 = vpack.c.b16 %v787, %v773
      %v956 = vpack.c.b16 %v802, %v788
      %v957 = vpack.c.b16 %v803, %v789
      %v958 = vpack.c.b16 %v804, %v790
      %v959 = vpack.c.b16 %v805, %v791
      %v960 = vpack.c.b16 %v806, %v792
      %v961 = vpack.c.b16 %v807, %v793
      %v962 = vpack.c.b16 %v808, %v794
      %v963 = vpack.c.b16 %v809, %v795
      %v964 = vpack.c.b16 %v810, %v796
      %v965 = vpack.c.b16 %v811, %v797
      %v966 = vpack.c.b16 %v812, %v798
      %v967 = vpack.c.b16 %v813, %v799
      %v968 = vpack.c.b16 %v814, %v800
      %v969 = vpack.c.b16 %v815, %v801
      %v970 = vpack.c.b16 %v830, %v816
      %v971 = vpack.c.b16 %v831, %v817
      %v972 = vpack.c.b16 %v832, %v818
      %v973 = vpack.c.b16 %v833, %v819
      %v974 = vpack.c.b16 %v834, %v820
      %v975 = vpack.c.b16 %v835, %v821
      %v976 = vpack.c.b16 %v836, %v822
      %v977 = vpack.c.b16 %v837, %v823
      %v978 = vpack.c.b16 %v838, %v824
      %v979 = vpack.c.b16 %v839, %v825
      %v980 = vpack.c.b16 %v840, %v826
      %v981 = vpack.c.b16 %v841, %v827
      %v982 = vpack.c.b16 %v842, %v828
      %v983 = vpack.c.b16 %v843, %v829
      %v984 = vpack.c.b16 %v858, %v844
      %v985 = vpack.c.b16 %v859, %v845
      %v986 = vpack.c.b16 %v860, %v846
      %v987 = vpack.c.b16 %v861, %v847
      %v988 = vpack.c.b16 %v862, %v848
      %v989 = vpack.c.b16 %v863, %v849
      %v990 = vpack.c.b16 %v864, %v850
      %v991 = vpack.c.b16 %v865, %v851
      %v992 = vpack.c.b16 %v866, %v852
      %v993 = vpack.c.b16 %v867, %v853
      %v994 = vpack.c.b16 %v868, %v854
      %v995 = vpack.c.b16 %v869, %v855
      %v996 = vpack.c.b16 %v870, %v856
      %v997 = vpack.c.b16 %v871, %v857
      %v998 = vpack.c.b16 %v886, %v872
      %v999 = vpack.c.b16 %v887, %v873
      %v1000 = vpack.c.b16 %v888, %v874
      %v1001 = vpack.c.b16 %v889, %v875
      %v1002 = vpack.c.b16 %v890, %v876
      %v1003 = vpack.c.b16 %v891, %v877
      %v1004 = vpack.c.b16 %v892, %v878
      %v1005 = vpack.c.b16 %v893, %v879
      %v1006 = vpack.c.b16 %v894, %v880
      %v1007 = vpack.c.b16 %v895, %v881
      %v1008 = vpack.c.b16 %v896, %v882
      %v1009 = vpack.c.b16 %v897, %v883
      %v1010 = vpack.c.b16 %v898, %v884
      %v1011 = vpack.c.b16 %v899, %v885
      %v1332 = vunpack.c.l.b16 %v341
      %v1333 = vunpack.c.l.b16 %v342
      %v1334 = vunpack.c.l.b16 %v343
      %v1335 = vunpack.c.l.b16 %v344
      %v1336 = vunpack.c.l.b16 %v345
      %v1337 = vunpack.c.l.b16 %v346
      %v1338 = vunpack.c.l.b16 %v347
      %v1339 = vunpack.c.l.b16 %v348
      %v1340 = vunpack.c.l.b16 %v349
      %v1341 = vunpack.c.l.b16 %v350
      %v1342 = vunpack.c.l.b16 %v351
      %v1343 = vunpack.c.l.b16 %v352
      %v1344 = vunpack.c.l.b16 %v353
      %v1345 = vunpack.c.l.b16 %v354
      %v1346 = vunpack.c.l.b16 %v355
      %v1347 = vunpack.c.l.b16 %v356
      %v1348 = vunpack.c.l.b16 %v357
      %v1349 = vunpack.c.l.b16 %v358
      %v1350 = vunpack.c.l.b16 %v359
      %v1351 = vunpack.c.l.b16 %v360
      %v1352 = vunpack.c.l.b16 %v361
      %v1353 = vunpack.c.l.b16 %v362
      %v1354 = vunpack.c.l.b16 %v363
      %v1355 = vunpack.c.l.b16 %v364
      %v1356 = vunpack.c.l.b16 %v365
      %v1357 = vunpack.c.l.b16 %v366
      %v1358 = vunpack.c.l.b16 %v367
      %v1359 = vunpack.c.l.b16 %v368
      %v1360 = vunpack.c.l.b16 %v369
      %v1361 = vunpack.c.l.b16 %v370
      %v1362 = vunpack.c.l.b16 %v371
      %v1363 = vunpack.c.l.b16 %v372
      %v1364 = vunpack.c.l.b16 %v373
      %v1365 = vunpack.c.l.b16 %v374
      %v1366 = vunpack.c.l.b16 %v375
      %v1367 = vunpack.c.l.b16 %v376
      %v1368 = vunpack.c.l.b16 %v377
      %v1369 = vunpack.c.l.b16 %v378
      %v1370 = vunpack.c.l.b16 %v379
      %v1371 = vunpack.c.l.b16 %v380
      %v1372 = vunpack.c.l.b16 %v381
      %v1373 = vunpack.c.l.b16 %v382
      %v1374 = vunpack.c.l.b16 %v383
      %v1375 = vunpack.c.l.b16 %v384
      %v1376 = vunpack.c.l.b16 %v385
      %v1377 = vunpack.c.l.b16 %v386
      %v1378 = vunpack.c.l.b16 %v387
      %v1379 = vunpack.c.l.b16 %v388
      %v1380 = vunpack.c.l.b16 %v389
      %v1381 = vunpack.c.l.b16 %v390
      %v1382 = vunpack.c.l.b16 %v391
      %v1383 = vunpack.c.l.b16 %v392
      %v1384 = vunpack.c.l.b16 %v393
      %v1385 = vunpack.c.l.b16 %v394
      %v1386 = vunpack.c.l.b16 %v395
      %v1387 = vunpack.c.l.b16 %v396
      %v1388 = vunpack.c.l.b16 %v397
      %v1389 = vunpack.c.l.b16 %v398
      %v1390 = vunpack.c.l.b16 %v399
      %v1391 = vunpack.c.l.b16 %v400
      %v1392 = vunpack.c.l.b16 %v401
      %v1393 = vunpack.c.l.b16 %v402
      %v1394 = vunpack.c.l.b16 %v403
      %v1395 = vunpack.c.l.b16 %v404
      %v1396 = vunpack.c.l.b16 %v405
      %v1397 = vunpack.c.l.b16 %v406
      %v1398 = vunpack.c.l.b16 %v407
      %v1399 = vunpack.c.l.b16 %v408
      %v1400 = vunpack.c.l.b16 %v409
      %v1401 = vunpack.c.l.b16 %v410
      %v1402 = vunpack.c.l.b16 %v411
      %v1403 = vunpack.c.l.b16 %v412
      %v1404 = vunpack.c.l.b16 %v413
      %v1405 = vunpack.c.l.b16 %v414
      %v1406 = vunpack.c.l.b16 %v415
      %v1407 = vunpack.c.l.b16 %v416
      %v1408 = vunpack.c.l.b16 %v417
      %v1409 = vunpack.c.l.b16 %v418
      %v1410 = vunpack.c.l.b16 %v419
      %v1411 = vunpack.c.l.b16 %v420
      %v1412 = vunpack.c.l.b16 %v421
      %v1413 = vunpack.c.l.b16 %v422
      %v1414 = vunpack.c.l.b16 %v423
      %v1415 = vunpack.c.l.b16 %v424
      %v1416 = vunpack.c.l.b16 %v425
      %v1417 = vunpack.c.l.b16 %v426
      %v1418 = vunpack.c.l.b16 %v427
      %v1419 = vunpack.c.l.b16 %v428
      %v1420 = vunpack.c.l.b16 %v429
      %v1421 = vunpack.c.l.b16 %v430
      %v1422 = vunpack.c.l.b16 %v431
      %v1423 = vunpack.c.l.b16 %v432
      %v1424 = vunpack.c.l.b16 %v433
      %v1425 = vunpack.c.l.b16 %v434
      %v1426 = vunpack.c.l.b16 %v435
      %v1427 = vunpack.c.l.b16 %v436
      %v1428 = vunpack.c.l.b16 %v437
      %v1429 = vunpack.c.l.b16 %v438
      %v1430 = vunpack.c.l.b16 %v439
      %v1431 = vunpack.c.l.b16 %v440
      %v1432 = vunpack.c.l.b16 %v441
      %v1433 = vunpack.c.l.b16 %v442
      %v1434 = vunpack.c.l.b16 %v443
      %v1435 = vunpack.c.l.b16 %v444
      %v1436 = vunpack.c.l.b16 %v445
      %v1437 = vunpack.c.l.b16 %v446
      %v1438 = vunpack.c.l.b16 %v447
      %v1439 = vunpack.c.l.b16 %v448
      %v1440 = vunpack.c.l.b16 %v449
      %v1441 = vunpack.c.l.b16 %v450
      %v1442 = vunpack.c.l.b16 %v451
      %v1443 = vunpack.c.l.b16 %v452
      %v1444 = vunpack.c.l.b16 %v453
      %v1445 = vunpack.c.l.b16 %v454
      %v1446 = vunpack.c.l.b16 %v455
      %v1447 = vunpack.c.l.b16 %v456
      %v1448 = vunpack.c.l.b16 %v457
      %v1449 = vunpack.c.l.b16 %v458
      %v1450 = vunpack.c.l.b16 %v459
      %v1451 = vunpack.c.l.b16 %v460
      %v1452 = vunpack.c.l.b16 %v461
      %v1453 = vunpack.c.l.b16 %v462
      %v1454 = vunpack.c.l.b16 %v463
      %v1455 = vunpack.c.l.b16 %v464
      %v1456 = vunpack.c.l.b16 %v465
      %v1457 = vunpack.c.l.b16 %v466
      %v1458 = vunpack.c.l.b16 %v467
      %v1459 = vunpack.c.l.b16 %v468
      %v1460 = vunpack.c.l.b16 %v469
      %v1461 = vunpack.c.l.b16 %v470
      %v1462 = vunpack.c.l.b16 %v471
      %v1463 = vunpack.c.l.b16 %v472
      %v1464 = vunpack.c.l.b16 %v473
      %v1465 = vunpack.c.l.b16 %v474
      %v1466 = vunpack.c.l.b16 %v475
      %v1467 = vunpack.c.l.b16 %v476
      %v1468 = vunpack.c.l.b16 %v477
      %v1469 = vunpack.c.l.b16 %v478
      %v1470 = vunpack.c.l.b16 %v479
      %v1471 = vunpack.c.l.b16 %v480
      %v1472 = vunpack.c.l.b16 %v481
      %v1473 = vunpack.c.l.b16 %v482
      %v1474 = vunpack.c.l.b16 %v483
      %v1475 = vunpack.c.l.b16 %v484
      %v1476 = vunpack.c.l.b16 %v485
      %v1477 = vunpack.c.l.b16 %v486
      %v1478 = vunpack.c.l.b16 %v487
      %v1479 = vunpack.c.l.b16 %v488
      %v1480 = vunpack.c.l.b16 %v489
      %v1481 = vunpack.c.l.b16 %v490
      %v1482 = vunpack.c.l.b16 %v491
      %v1483 = vunpack.c.l.b16 %v492
      %v1484 = vunpack.c.l.b16 %v493
      %v1485 = vunpack.c.l.b16 %v494
      %v1486 = vunpack.c.l.b16 %v495
      %v1487 = vunpack.c.l.b16 %v496
      %v1488 = vunpack.c.l.b16 %v497
      %v1489 = vunpack.c.l.b16 %v498
      %v1490 = vunpack.c.l.b16 %v499
      %v1491 = vunpack.c.l.b16 %v500
      %v1492 = vunpack.c.l.b16 %v501
      %v1493 = vunpack.c.l.b16 %v502
      %v1494 = vunpack.c.l.b16 %v503
      %v1495 = vunpack.c.l.b16 %v504
      %v1496 = vunpack.c.l.b16 %v505
      %v1497 = vunpack.c.l.b16 %v506
      %v1498 = vunpack.c.l.b16 %v507
      %v1499 = vunpack.c.l.b16 %v508
      %v1500 = vunpack.c.l.b16 %v509
      %v1501 = vunpack.c.l.b16 %v510
      %v1502 = vunpack.c.l.b16 %v511
      %v1503 = vunpack.c.l.b16 %v512
      %v1504 = vunpack.c.l.b16 %v513
      %v1505 = vunpack.c.l.b16 %v514
      %v1506 = vunpack.c.l.b16 %v515
      %v1507 = vunpack.c.l.b16 %v516
      %v1508 = vunpack.c.l.b16 %v517
      %v1509 = vunpack.c.l.b16 %v518
      %v1510 = vunpack.c.l.b16 %v519
      %v1511 = vunpack.c.l.b16 %v520
      %v1512 = vunpack.c.l.b16 %v521
      %v1513 = vunpack.c.l.b16 %v522
      %v1514 = vunpack.c.l.b16 %v523
      %v1515 = vunpack.c.l.b16 %v524
      %v1516 = vunpack.c.l.b16 %v525
      %v1517 = vunpack.c.l.b16 %v526
      %v1518 = vunpack.c.l.b16 %v527
      %v1519 = vunpack.c.l.b16 %v528
      %v1520 = vunpack.c.l.b16 %v529
      %v1521 = vunpack.c.l.b16 %v530
      %v1522 = vunpack.c.l.b16 %v531
      %v1523 = vunpack.c.l.b16 %v532
      %v1524 = vunpack.c.l.b16 %v533
      %v1525 = vunpack.c.l.b16 %v534
      %v1526 = vunpack.c.l.b16 %v535
      %v1527 = vunpack.c.l.b16 %v536
      %v1528 = vunpack.c.l.b16 %v537
      %v1529 = vunpack.c.l.b16 %v538
      %v1530 = vunpack.c.l.b16 %v539
      %v1531 = vunpack.c.l.b16 %v540
      %v1532 = vunpack.c.l.b16 %v541
      %v1533 = vunpack.c.l.b16 %v542
      %v1534 = vunpack.c.l.b16 %v543
      %v1535 = vunpack.c.l.b16 %v544
      %v1536 = vunpack.c.l.b16 %v545
      %v1537 = vunpack.c.l.b16 %v546
      %v1538 = vunpack.c.l.b16 %v547
      %v1539 = vunpack.c.l.b16 %v548
      %v1540 = vunpack.c.l.b16 %v549
      %v1541 = vunpack.c.l.b16 %v550
      %v1542 = vunpack.c.l.b16 %v551
      %v1543 = vunpack.c.l.b16 %v552
      %v1544 = vunpack.c.l.b16 %v553
      %v1545 = vunpack.c.l.b16 %v554
      %v1546 = vunpack.c.l.b16 %v555
      %v1547 = vunpack.c.l.b16 %v556
      %v1548 = vpack.c.b16 %v1333, %v1332
      %v1549 = vpack.c.b16 %v1335, %v1334
      %v1550 = vpack.c.b16 %v1337, %v1336
      %v1551 = vpack.c.b16 %v1339, %v1338
      %v1552 = vpack.c.b16 %v1341, %v1340
      %v1553 = vpack.c.b16 %v1343, %v1342
      %v1554 = vpack.c.b16 %v1345, %v1344
      %v1555 = vpack.c.b16 %v1347, %v1346
      %v1556 = vpack.c.b16 %v1349, %v1348
      %v1557 = vpack.c.b16 %v1351, %v1350
      %v1558 = vpack.c.b16 %v1353, %v1352
      %v1559 = vpack.c.b16 %v1355, %v1354
      %v1560 = vpack.c.b16 %v1357, %v1356
      %v1561 = vpack.c.b16 %v1359, %v1358
      %v1562 = vpack.c.b16 %v1361, %v1360
      %v1563 = vpack.c.b16 %v1363, %v1362
      %v1564 = vpack.c.b16 %v1365, %v1364
      %v1565 = vpack.c.b16 %v1367, %v1366
      %v1566 = vpack.c.b16 %v1369, %v1368
      %v1567 = vpack.c.b16 %v1371, %v1370
      %v1568 = vpack.c.b16 %v1373, %v1372
      %v1569 = vpack.c.b16 %v1375, %v1374
      %v1570 = vpack.c.b16 %v1377, %v1376
      %v1571 = vpack.c.b16 %v1379, %v1378
      %v1572 = vpack.c.b16 %v1381, %v1380
      %v1573 = vpack.c.b16 %v1383, %v1382
      %v1574 = vpack.c.b16 %v1385, %v1384
      %v1575 = vpack.c.b16 %v1387, %v1386
      %v1576 = vpack.c.b16 %v1389, %v1388
      %v1577 = vpack.c.b16 %v1391, %v1390
      %v1578 = vpack.c.b16 %v1393, %v1392
      %v1579 = vpack.c.b16 %v1395, %v1394
      %v1580 = vpack.c.b16 %v1397, %v1396
      %v1581 = vpack.c.b16 %v1399, %v1398
      %v1582 = vpack.c.b16 %v1401, %v1400
      %v1583 = vpack.c.b16 %v1403, %v1402
      %v1584 = vpack.c.b16 %v1405, %v1404
      %v1585 = vpack.c.b16 %v1407, %v1406
      %v1586 = vpack.c.b16 %v1409, %v1408
      %v1587 = vpack.c.b16 %v1411, %v1410
      %v1588 = vpack.c.b16 %v1413, %v1412
      %v1589 = vpack.c.b16 %v1415, %v1414
      %v1590 = vpack.c.b16 %v1417, %v1416
      %v1591 = vpack.c.b16 %v1419, %v1418
      %v1592 = vpack.c.b16 %v1421, %v1420
      %v1593 = vpack.c.b16 %v1423, %v1422
      %v1594 = vpack.c.b16 %v1425, %v1424
      %v1595 = vpack.c.b16 %v1427, %v1426
      %v1596 = vpack.c.b16 %v1429, %v1428
      %v1597 = vpack.c.b16 %v1431, %v1430
      %v1598 = vpack.c.b16 %v1433, %v1432
      %v1599 = vpack.c.b16 %v1435, %v1434
      %v1600 = vpack.c.b16 %v1437, %v1436
      %v1601 = vpack.c.b16 %v1439, %v1438
      %v1602 = vpack.c.b16 %v1441, %v1440
      %v1603 = vpack.c.b16 %v1443, %v1442
      %v1604 = vpack.c.b16 %v1445, %v1444
      %v1605 = vpack.c.b16 %v1447, %v1446
      %v1606 = vpack.c.b16 %v1449, %v1448
      %v1607 = vpack.c.b16 %v1451, %v1450
      %v1608 = vpack.c.b16 %v1453, %v1452
      %v1609 = vpack.c.b16 %v1455, %v1454
      %v1610 = vpack.c.b16 %v1457, %v1456
      %v1611 = vpack.c.b16 %v1459, %v1458
      %v1612 = vpack.c.b16 %v1461, %v1460
      %v1613 = vpack.c.b16 %v1463, %v1462
      %v1614 = vpack.c.b16 %v1465, %v1464
      %v1615 = vpack.c.b16 %v1467, %v1466
      %v1616 = vpack.c.b16 %v1469, %v1468
      %v1617 = vpack.c.b16 %v1471, %v1470
      %v1618 = vpack.c.b16 %v1473, %v1472
      %v1619 = vpack.c.b16 %v1475, %v1474
      %v1620 = vpack.c.b16 %v1477, %v1476
      %v1621 = vpack.c.b16 %v1479, %v1478
      %v1622 = vpack.c.b16 %v1481, %v1480
      %v1623 = vpack.c.b16 %v1483, %v1482
      %v1624 = vpack.c.b16 %v1485, %v1484
      %v1625 = vpack.c.b16 %v1487, %v1486
      %v1626 = vpack.c.b16 %v1489, %v1488
      %v1627 = vpack.c.b16 %v1491, %v1490
      %v1628 = vpack.c.b16 %v1493, %v1492
      %v1629 = vpack.c.b16 %v1495, %v1494
      %v1630 = vpack.c.b16 %v1497, %v1496
      %v1631 = vpack.c.b16 %v1499, %v1498
      %v1632 = vpack.c.b16 %v1501, %v1500
      %v1633 = vpack.c.b16 %v1503, %v1502
      %v1634 = vpack.c.b16 %v1505, %v1504
      %v1635 = vpack.c.b16 %v1507, %v1506
      %v1636 = vpack.c.b16 %v1509, %v1508
      %v1637 = vpack.c.b16 %v1511, %v1510
      %v1638 = vpack.c.b16 %v1513, %v1512
      %v1639 = vpack.c.b16 %v1515, %v1514
      %v1640 = vpack.c.b16 %v1517, %v1516
      %v1641 = vpack.c.b16 %v1519, %v1518
      %v1642 = vpack.c.b16 %v1521, %v1520
      %v1643 = vpack.c.b16 %v1523, %v1522
      %v1644 = vpack.c.b16 %v1525, %v1524
      %v1645 = vpack.c.b16 %v1527, %v1526
      %v1646 = vpack.c.b16 %v1529, %v1528
      %v1647 = vpack.c.b16 %v1531, %v1530
      %v1648 = vpack.c.b16 %v1533, %v1532
      %v1649 = vpack.c.b16 %v1535, %v1534
      %v1650 = vpack.c.b16 %v1537, %v1536
      %v1651 = vpack.c.b16 %v1539, %v1538
      %v1652 = vpack.c.b16 %v1541, %v1540
      %v1653 = vpack.c.b16 %v1543, %v1542
      %v1654 = vpack.c.b16 %v1545, %v1544
      %v1655 = vpack.c.b16 %v1547, %v1546
      %vm1764 = vcmask 523264
      %v1766 = vsel %vm1764, %v913, 0
      %v1769 = vsel %vm1764, %v927, 0
      %v1772 = vsel %vm1764, %v941, 0
      %v1775 = vsel %vm1764, %v955, 0
      %v1778 = vsel %vm1764, %v969, 0
      %v1781 = vsel %vm1764, %v983, 0
      %v1784 = vsel %vm1764, %v997, 0
      %v1787 = vsel %vm1764, %v1011, 0
      %1789 = vmatprep.subr.bf16.mxu0 0
      %1790 = vmatpush1.bf16.msra.mxu0 %v1548
      %1791 = vmatprep.subr.bf16.mxu0 0
      %1792 = vmatpush1.bf16.msra.mxu0 %v1549
      %1793 = vmatprep.subr.bf16.mxu0 0
      %1794 = vmatpush1.bf16.msra.mxu0 %v1550
      %1795 = vmatprep.subr.bf16.mxu0 0
      %1796 = vmatpush1.bf16.msra.mxu0 %v1551
      %1797 = vmatprep.subr.bf16.mxu0 0
      %1798 = vmatpush1.bf16.msra.mxu0 %v1552
      %1799 = vmatprep.subr.bf16.mxu0 0
      %1800 = vmatpush1.bf16.msra.mxu0 %v1553
      %1801 = vmatprep.subr.bf16.mxu0 0
      %1802 = vmatpush1.bf16.msra.mxu0 %v1554
      %1803 = vmatprep.subr.bf16.mxu0 0
      %1804 = vmatpush1.bf16.msra.mxu0 %v1555
      %1805 = vmatprep.subr.bf16.mxu0 0
      %1806 = vmatpush1.bf16.msra.mxu0 %v1556
      %1807 = vmatprep.subr.bf16.mxu0 0
      %1808 = vmatpush1.bf16.msra.mxu0 %v1557
      %1809 = vmatprep.subr.bf16.mxu0 0
      %1810 = vmatpush1.bf16.msra.mxu0 %v1558
      %1811 = vmatprep.subr.bf16.mxu0 0
      %1812 = vmatpush1.bf16.msra.mxu0 %v1559
      %1813 = vmatprep.subr.bf16.mxu0 0
      %1814 = vmatpush1.bf16.msra.mxu0 %v1560
      %1815 = vmatprep.subr.bf16.mxu0 0
      %1816 = vmatpush1.bf16.msra.mxu0 %v1561
      %1817 = vmatprep.subr.bf16.mxu0 0
      %1818 = vmatpush1.bf16.msra.mxu0 %v1562
      %1819 = vmatprep.subr.bf16.mxu0 0
      %1820 = vmatpush1.bf16.msra.mxu0 %v1563
      %1821 = vmatprep.mubr.bf16.mxu0 %v901
      %1822 = vmatmul.mubr.bf16.gmra.mrb[0].mxu0 %v900
      %v1823 = vpop.f32.mrb[0].mxu0
      %v1824 = vadd.f32 %v562, %v1823
      %v1825 = vpop.f32.mrb[0].mxu0
      %v1826 = vpop.f32.mrb[0].mxu0
      %v1827 = vadd.f32 %v562, %v1826
      %v1828 = vpop.f32.mrb[0].mxu0
      %1829 = vmatprep.mubr.bf16.mxu0 %v915
      %1830 = vmatmul.mubr.bf16.gmra.mrb[0].mxu0 %v914
      %v1831 = vpop.f32.mrb[0].mxu0
      %v1832 = vadd.f32 %v562, %v1831
      %v1833 = vpop.f32.mrb[0].mxu0
      %v1834 = vpop.f32.mrb[0].mxu0
      %v1835 = vadd.f32 %v562, %v1834
      %v1836 = vpop.f32.mrb[0].mxu0
      %1837 = vmatprep.mubr.bf16.mxu0 %v929
      %1838 = vmatmul.mubr.bf16.gmra.mrb[0].mxu0 %v928
      %v1839 = vpop.f32.mrb[0].mxu0
      %v1840 = vadd.f32 %v562, %v1839
      %v1841 = vpop.f32.mrb[0].mxu0
      %v1842 = vpop.f32.mrb[0].mxu0
      %v1843 = vadd.f32 %v562, %v1842
      %v1844 = vpop.f32.mrb[0].mxu0
      %1845 = vmatprep.mubr.bf16.mxu0 %v943
      %1846 = vmatmul.mubr.bf16.gmra.mrb[0].mxu0 %v942
      %v1847 = vpop.f32.mrb[0].mxu0
      %v1848 = vadd.f32 %v562, %v1847
      %v1849 = vpop.f32.mrb[0].mxu0
      %v1850 = vpop.f32.mrb[0].mxu0
      %v1851 = vadd.f32 %v562, %v1850
      %v1852 = vpop.f32.mrb[0].mxu0
      %1853 = vmatprep.mubr.bf16.mxu0 %v957
      %1854 = vmatmul.mubr.bf16.gmra.mrb[0].mxu0 %v956
      %v1855 = vpop.f32.mrb[0].mxu0
      %v1856 = vadd.f32 %v562, %v1855
      %v1857 = vpop.f32.mrb[0].mxu0
      %v1858 = vpop.f32.mrb[0].mxu0
      %v1859 = vadd.f32 %v562, %v1858
      %v1860 = vpop.f32.mrb[0].mxu0
      %1861 = vmatprep.mubr.bf16.mxu0 %v971
      %1862 = vmatmul.mubr.bf16.gmra.mrb[0].mxu0 %v970
      %v1863 = vpop.f32.mrb[0].mxu0
      %v1864 = vadd.f32 %v562, %v1863
      %v1865 = vpop.f32.mrb[0].mxu0
      %v1866 = vpop.f32.mrb[0].mxu0
      %v1867 = vadd.f32 %v562, %v1866
      %v1868 = vpop.f32.mrb[0].mxu0
      %1869 = vmatprep.mubr.bf16.mxu0 %v985
      %1870 = vmatmul.mubr.bf16.gmra.mrb[0].mxu0 %v984
      %v1871 = vpop.f32.mrb[0].mxu0
      %v1872 = vadd.f32 %v562, %v1871
      %v1873 = vpop.f32.mrb[0].mxu0
      %v1874 = vpop.f32.mrb[0].mxu0
      %v1875 = vadd.f32 %v562, %v1874
      %v1876 = vpop.f32.mrb[0].mxu0
      %1877 = vmatprep.mubr.bf16.mxu0 %v999
      %1878 = vmatmul.mubr.bf16.gmra.mrb[0].mxu0 %v998
      %v1879 = vpop.f32.mrb[0].mxu0
      %v1880 = vadd.f32 %v562, %v1879
      %v1881 = vpop.f32.mrb[0].mxu0
      %v1882 = vpop.f32.mrb[0].mxu0
      %v1883 = vadd.f32 %v562, %v1882
      %v1884 = vpop.f32.mrb[0].mxu0
      %1885 = vdwg.mxu0
      %1886 = vmatprep.subr.bf16.mxu0 0
      %1887 = vmatpush1.bf16.msra.mxu0 %v1564
      %1888 = vmatprep.subr.bf16.mxu0 0
      %1889 = vmatpush1.bf16.msra.mxu0 %v1565
      %1890 = vmatprep.subr.bf16.mxu0 0
      %1891 = vmatpush1.bf16.msra.mxu0 %v1566
      %1892 = vmatprep.subr.bf16.mxu0 0
      %1893 = vmatpush1.bf16.msra.mxu0 %v1567
      %1894 = vmatprep.subr.bf16.mxu0 0
      %1895 = vmatpush1.bf16.msra.mxu0 %v1568
      %1896 = vmatprep.subr.bf16.mxu0 0
      %1897 = vmatpush1.bf16.msra.mxu0 %v1569
      %1898 = vmatprep.subr.bf16.mxu0 0
      %1899 = vmatpush1.bf16.msra.mxu0 %v1570
      %1900 = vmatprep.subr.bf16.mxu0 0
      %1901 = vmatpush1.bf16.msra.mxu0 %v1571
      %1902 = vmatprep.subr.bf16.mxu0 0
      %1903 = vmatpush1.bf16.msra.mxu0 %v1572
      %1904 = vmatprep.subr.bf16.mxu0 0
      %1905 = vmatpush1.bf16.msra.mxu0 %v1573
      %1906 = vmatprep.subr.bf16.mxu0 0
      %1907 = vmatpush1.bf16.msra.mxu0 %v1574
      %1908 = vmatprep.subr.bf16.mxu0 0
      %1909 = vmatpush1.bf16.msra.mxu0 %v1575
      %1910 = vmatprep.subr.bf16.mxu0 0
      %1911 = vmatpush1.bf16.msra.mxu0 %v1576
      %1912 = vmatprep.subr.bf16.mxu0 0
      %1913 = vmatpush1.bf16.msra.mxu0 %v1577
      %1914 = vmatprep.subr.bf16.mxu0 0
      %1915 = vmatpush1.bf16.msra.mxu0 %v1578
      %1916 = vmatprep.subr.bf16.mxu0 0
      %1917 = vmatpush1.bf16.msra.mxu0 %v1579
      %1918 = vmatprep.mubr.bf16.mxu0 %v903
      %1919 = vmatmul.mubr.bf16.gmra.mrb[0].mxu0 %v902
      %v1920 = vpop.f32.mrb[0].mxu0
      %v1921 = vadd.f32 %v1824, %v1920
      %v1922 = vpop.f32.mrb[0].mxu0
      %v1923 = vpop.f32.mrb[0].mxu0
      %v1924 = vadd.f32 %v1827, %v1923
      %v1925 = vpop.f32.mrb[0].mxu0
      %1926 = vmatprep.mubr.bf16.mxu0 %v917
      %1927 = vmatmul.mubr.bf16.gmra.mrb[0].mxu0 %v916
      %v1928 = vpop.f32.mrb[0].mxu0
      %v1929 = vadd.f32 %v1832, %v1928
      %v1930 = vpop.f32.mrb[0].mxu0
      %v1931 = vpop.f32.mrb[0].mxu0
      %v1932 = vadd.f32 %v1835, %v1931
      %v1933 = vpop.f32.mrb[0].mxu0
      %1934 = vmatprep.mubr.bf16.mxu0 %v931
      %1935 = vmatmul.mubr.bf16.gmra.mrb[0].mxu0 %v930
      %v1936 = vpop.f32.mrb[0].mxu0
      %v1937 = vadd.f32 %v1840, %v1936
      %v1938 = vpop.f32.mrb[0].mxu0
      %v1939 = vpop.f32.mrb[0].mxu0
      %v1940 = vadd.f32 %v1843, %v1939
      %v1941 = vpop.f32.mrb[0].mxu0
      %1942 = vmatprep.mubr.bf16.mxu0 %v945
      %1943 = vmatmul.mubr.bf16.gmra.mrb[0].mxu0 %v944
      %v1944 = vpop.f32.mrb[0].mxu0
      %v1945 = vadd.f32 %v1848, %v1944
      %v1946 = vpop.f32.mrb[0].mxu0
      %v1947 = vpop.f32.mrb[0].mxu0
      %v1948 = vadd.f32 %v1851, %v1947
      %v1949 = vpop.f32.mrb[0].mxu0
      %1950 = vmatprep.mubr.bf16.mxu0 %v959
      %1951 = vmatmul.mubr.bf16.gmra.mrb[0].mxu0 %v958
      %v1952 = vpop.f32.mrb[0].mxu0
      %v1953 = vadd.f32 %v1856, %v1952
      %v1954 = vpop.f32.mrb[0].mxu0
      %v1955 = vpop.f32.mrb[0].mxu0
      %v1956 = vadd.f32 %v1859, %v1955
      %v1957 = vpop.f32.mrb[0].mxu0
      %1958 = vmatprep.mubr.bf16.mxu0 %v973
      %1959 = vmatmul.mubr.bf16.gmra.mrb[0].mxu0 %v972
      %v1960 = vpop.f32.mrb[0].mxu0
      %v1961 = vadd.f32 %v1864, %v1960
      %v1962 = vpop.f32.mrb[0].mxu0
      %v1963 = vpop.f32.mrb[0].mxu0
      %v1964 = vadd.f32 %v1867, %v1963
      %v1965 = vpop.f32.mrb[0].mxu0
      %1966 = vmatprep.mubr.bf16.mxu0 %v987
      %1967 = vmatmul.mubr.bf16.gmra.mrb[0].mxu0 %v986
      %v1968 = vpop.f32.mrb[0].mxu0
      %v1969 = vadd.f32 %v1872, %v1968
      %v1970 = vpop.f32.mrb[0].mxu0
      %v1971 = vpop.f32.mrb[0].mxu0
      %v1972 = vadd.f32 %v1875, %v1971
      %v1973 = vpop.f32.mrb[0].mxu0
      %1974 = vmatprep.mubr.bf16.mxu0 %v1001
      %1975 = vmatmul.mubr.bf16.gmra.mrb[0].mxu0 %v1000
      %v1976 = vpop.f32.mrb[0].mxu0
      %v1977 = vadd.f32 %v1880, %v1976
      %v1978 = vpop.f32.mrb[0].mxu0
      %v1979 = vpop.f32.mrb[0].mxu0
      %v1980 = vadd.f32 %v1883, %v1979
      %v1981 = vpop.f32.mrb[0].mxu0
      %1982 = vdwg.mxu0
      %1983 = vmatprep.subr.bf16.mxu0 0
      %1984 = vmatpush1.bf16.msra.mxu0 %v1580
      %1985 = vmatprep.subr.bf16.mxu0 0
      %1986 = vmatpush1.bf16.msra.mxu0 %v1581
      %1987 = vmatprep.subr.bf16.mxu0 0
      %1988 = vmatpush1.bf16.msra.mxu0 %v1582
      %1989 = vmatprep.subr.bf16.mxu0 0
      %1990 = vmatpush1.bf16.msra.mxu0 %v1583
      %1991 = vmatprep.subr.bf16.mxu0 0
      %1992 = vmatpush1.bf16.msra.mxu0 %v1584
      %1993 = vmatprep.subr.bf16.mxu0 0
      %1994 = vmatpush1.bf16.msra.mxu0 %v1585
      %1995 = vmatprep.subr.bf16.mxu0 0
      %1996 = vmatpush1.bf16.msra.mxu0 %v1586
      %1997 = vmatprep.subr.bf16.mxu0 0
      %1998 = vmatpush1.bf16.msra.mxu0 %v1587
      %1999 = vmatprep.subr.bf16.mxu0 0
      %2000 = vmatpush1.bf16.msra.mxu0 %v1588
      %2001 = vmatprep.subr.bf16.mxu0 0
      %2002 = vmatpush1.bf16.msra.mxu0 %v1589
      %2003 = vmatprep.subr.bf16.mxu0 0
      %2004 = vmatpush1.bf16.msra.mxu0 %v1590
      %2005 = vmatprep.subr.bf16.mxu0 0
      %2006 = vmatpush1.bf16.msra.mxu0 %v1591
      %2007 = vmatprep.subr.bf16.mxu0 0
      %2008 = vmatpush1.bf16.msra.mxu0 %v1592
      %2009 = vmatprep.subr.bf16.mxu0 0
      %2010 = vmatpush1.bf16.msra.mxu0 %v1593
      %2011 = vmatprep.subr.bf16.mxu0 0
      %2012 = vmatpush1.bf16.msra.mxu0 %v1594
      %2013 = vmatprep.subr.bf16.mxu0 0
      %2014 = vmatpush1.bf16.msra.mxu0 %v1595
      %2015 = vmatprep.mubr.bf16.mxu0 %v905
      %2016 = vmatmul.mubr.bf16.gmra.mrb[0].mxu0 %v904
      %v2017 = vpop.f32.mrb[0].mxu0
      %v2018 = vadd.f32 %v1921, %v2017
      %v2019 = vpop.f32.mrb[0].mxu0
      %v2020 = vpop.f32.mrb[0].mxu0
      %v2021 = vadd.f32 %v1924, %v2020
      %v2022 = vpop.f32.mrb[0].mxu0
      %2023 = vmatprep.mubr.bf16.mxu0 %v919
      %2024 = vmatmul.mubr.bf16.gmra.mrb[0].mxu0 %v918
      %v2025 = vpop.f32.mrb[0].mxu0
      %v2026 = vadd.f32 %v1929, %v2025
      %v2027 = vpop.f32.mrb[0].mxu0
      %v2028 = vpop.f32.mrb[0].mxu0
      %v2029 = vadd.f32 %v1932, %v2028
      %v2030 = vpop.f32.mrb[0].mxu0
      %2031 = vmatprep.mubr.bf16.mxu0 %v933
      %2032 = vmatmul.mubr.bf16.gmra.mrb[0].mxu0 %v932
      %v2033 = vpop.f32.mrb[0].mxu0
      %v2034 = vadd.f32 %v1937, %v2033
      %v2035 = vpop.f32.mrb[0].mxu0
      %v2036 = vpop.f32.mrb[0].mxu0
      %v2037 = vadd.f32 %v1940, %v2036
      %v2038 = vpop.f32.mrb[0].mxu0
      %2039 = vmatprep.mubr.bf16.mxu0 %v947
      %2040 = vmatmul.mubr.bf16.gmra.mrb[0].mxu0 %v946
      %v2041 = vpop.f32.mrb[0].mxu0
      %v2042 = vadd.f32 %v1945, %v2041
      %v2043 = vpop.f32.mrb[0].mxu0
      %v2044 = vpop.f32.mrb[0].mxu0
      %v2045 = vadd.f32 %v1948, %v2044
      %v2046 = vpop.f32.mrb[0].mxu0
      %2047 = vmatprep.mubr.bf16.mxu0 %v961
      %2048 = vmatmul.mubr.bf16.gmra.mrb[0].mxu0 %v960
      %v2049 = vpop.f32.mrb[0].mxu0
      %v2050 = vadd.f32 %v1953, %v2049
      %v2051 = vpop.f32.mrb[0].mxu0
      %v2052 = vpop.f32.mrb[0].mxu0
      %v2053 = vadd.f32 %v1956, %v2052
      %v2054 = vpop.f32.mrb[0].mxu0
      %2055 = vmatprep.mubr.bf16.mxu0 %v975
      %2056 = vmatmul.mubr.bf16.gmra.mrb[0].mxu0 %v974
      %v2057 = vpop.f32.mrb[0].mxu0
      %v2058 = vadd.f32 %v1961, %v2057
      %v2059 = vpop.f32.mrb[0].mxu0
      %v2060 = vpop.f32.mrb[0].mxu0
      %v2061 = vadd.f32 %v1964, %v2060
      %v2062 = vpop.f32.mrb[0].mxu0
      %2063 = vmatprep.mubr.bf16.mxu0 %v989
      %2064 = vmatmul.mubr.bf16.gmra.mrb[0].mxu0 %v988
      %v2065 = vpop.f32.mrb[0].mxu0
      %v2066 = vadd.f32 %v1969, %v2065
      %v2067 = vpop.f32.mrb[0].mxu0
      %v2068 = vpop.f32.mrb[0].mxu0
      %v2069 = vadd.f32 %v1972, %v2068
      %v2070 = vpop.f32.mrb[0].mxu0
      %2071 = vmatprep.mubr.bf16.mxu0 %v1003
      %2072 = vmatmul.mubr.bf16.gmra.mrb[0].mxu0 %v1002
      %v2073 = vpop.f32.mrb[0].mxu0
      %v2074 = vadd.f32 %v1977, %v2073
      %v2075 = vpop.f32.mrb[0].mxu0
      %v2076 = vpop.f32.mrb[0].mxu0
      %v2077 = vadd.f32 %v1980, %v2076
      %v2078 = vpop.f32.mrb[0].mxu0
      %2079 = vdwg.mxu0
      %2080 = vmatprep.subr.bf16.mxu0 0
      %2081 = vmatpush1.bf16.msra.mxu0 %v1596
      %2082 = vmatprep.subr.bf16.mxu0 0
      %2083 = vmatpush1.bf16.msra.mxu0 %v1597
      %2084 = vmatprep.subr.bf16.mxu0 0
      %2085 = vmatpush1.bf16.msra.mxu0 %v1598
      %2086 = vmatprep.subr.bf16.mxu0 0
      %2087 = vmatpush1.bf16.msra.mxu0 %v1599
      %2088 = vmatprep.subr.bf16.mxu0 0
      %2089 = vmatpush1.bf16.msra.mxu0 %v1600
      %2090 = vmatprep.subr.bf16.mxu0 0
      %2091 = vmatpush1.bf16.msra.mxu0 %v1601
      %2092 = vmatprep.subr.bf16.mxu0 0
      %2093 = vmatpush1.bf16.msra.mxu0 %v1602
      %2094 = vmatprep.subr.bf16.mxu0 0
      %2095 = vmatpush1.bf16.msra.mxu0 %v1603
      %2096 = vmatprep.subr.bf16.mxu0 0
      %2097 = vmatpush1.bf16.msra.mxu0 %v1604
      %2098 = vmatprep.subr.bf16.mxu0 0
      %2099 = vmatpush1.bf16.msra.mxu0 %v1605
      %2100 = vmatprep.subr.bf16.mxu0 0
      %2101 = vmatpush1.bf16.msra.mxu0 %v1606
      %2102 = vmatprep.subr.bf16.mxu0 0
      %2103 = vmatpush1.bf16.msra.mxu0 %v1607
      %2104 = vmatprep.subr.bf16.mxu0 0
      %2105 = vmatpush1.bf16.msra.mxu0 %v1608
      %2106 = vmatprep.subr.bf16.mxu0 0
      %2107 = vmatpush1.bf16.msra.mxu0 %v1609
      %2108 = vmatprep.subr.bf16.mxu0 0
      %2109 = vmatpush1.bf16.msra.mxu0 %v1610
      %2110 = vmatprep.subr.bf16.mxu0 0
      %2111 = vmatpush1.bf16.msra.mxu0 %v1611
      %2112 = vmatprep.mubr.bf16.mxu0 %v907
      %2113 = vmatmul.mubr.bf16.gmra.mrb[0].mxu0 %v906
      %v2114 = vpop.f32.mrb[0].mxu0
      %v2115 = vadd.f32 %v2018, %v2114
      %v2116 = vpop.f32.mrb[0].mxu0
      %v2117 = vpop.f32.mrb[0].mxu0
      %v2118 = vadd.f32 %v2021, %v2117
      %v2119 = vpop.f32.mrb[0].mxu0
      %2120 = vmatprep.mubr.bf16.mxu0 %v921
      %2121 = vmatmul.mubr.bf16.gmra.mrb[0].mxu0 %v920
      %v2122 = vpop.f32.mrb[0].mxu0
      %v2123 = vadd.f32 %v2026, %v2122
      %v2124 = vpop.f32.mrb[0].mxu0
      %v2125 = vpop.f32.mrb[0].mxu0
      %v2126 = vadd.f32 %v2029, %v2125
      %v2127 = vpop.f32.mrb[0].mxu0
      %2128 = vmatprep.mubr.bf16.mxu0 %v935
      %2129 = vmatmul.mubr.bf16.gmra.mrb[0].mxu0 %v934
      %v2130 = vpop.f32.mrb[0].mxu0
      %v2131 = vadd.f32 %v2034, %v2130
      %v2132 = vpop.f32.mrb[0].mxu0
      %v2133 = vpop.f32.mrb[0].mxu0
      %v2134 = vadd.f32 %v2037, %v2133
      %v2135 = vpop.f32.mrb[0].mxu0
      %2136 = vmatprep.mubr.bf16.mxu0 %v949
      %2137 = vmatmul.mubr.bf16.gmra.mrb[0].mxu0 %v948
      %v2138 = vpop.f32.mrb[0].mxu0
      %v2139 = vadd.f32 %v2042, %v2138
      %v2140 = vpop.f32.mrb[0].mxu0
      %v2141 = vpop.f32.mrb[0].mxu0
      %v2142 = vadd.f32 %v2045, %v2141
      %v2143 = vpop.f32.mrb[0].mxu0
      %2144 = vmatprep.mubr.bf16.mxu0 %v963
      %2145 = vmatmul.mubr.bf16.gmra.mrb[0].mxu0 %v962
      %v2146 = vpop.f32.mrb[0].mxu0
      %v2147 = vadd.f32 %v2050, %v2146
      %v2148 = vpop.f32.mrb[0].mxu0
      %v2149 = vpop.f32.mrb[0].mxu0
      %v2150 = vadd.f32 %v2053, %v2149
      %v2151 = vpop.f32.mrb[0].mxu0
      %2152 = vmatprep.mubr.bf16.mxu0 %v977
      %2153 = vmatmul.mubr.bf16.gmra.mrb[0].mxu0 %v976
      %v2154 = vpop.f32.mrb[0].mxu0
      %v2155 = vadd.f32 %v2058, %v2154
      %v2156 = vpop.f32.mrb[0].mxu0
      %v2157 = vpop.f32.mrb[0].mxu0
      %v2158 = vadd.f32 %v2061, %v2157
      %v2159 = vpop.f32.mrb[0].mxu0
      %2160 = vmatprep.mubr.bf16.mxu0 %v991
      %2161 = vmatmul.mubr.bf16.gmra.mrb[0].mxu0 %v990
      %v2162 = vpop.f32.mrb[0].mxu0
      %v2163 = vadd.f32 %v2066, %v2162
      %v2164 = vpop.f32.mrb[0].mxu0
      %v2165 = vpop.f32.mrb[0].mxu0
      %v2166 = vadd.f32 %v2069, %v2165
      %v2167 = vpop.f32.mrb[0].mxu0
      %2168 = vmatprep.mubr.bf16.mxu0 %v1005
      %2169 = vmatmul.mubr.bf16.gmra.mrb[0].mxu0 %v1004
      %v2170 = vpop.f32.mrb[0].mxu0
      %v2171 = vadd.f32 %v2074, %v2170
      %v2172 = vpop.f32.mrb[0].mxu0
      %v2173 = vpop.f32.mrb[0].mxu0
      %v2174 = vadd.f32 %v2077, %v2173
      %v2175 = vpop.f32.mrb[0].mxu0
      %2176 = vdwg.mxu0
      %2177 = vmatprep.subr.bf16.mxu0 0
      %2178 = vmatpush1.bf16.msra.mxu0 %v1612
      %2179 = vmatprep.subr.bf16.mxu0 0
      %2180 = vmatpush1.bf16.msra.mxu0 %v1613
      %2181 = vmatprep.subr.bf16.mxu0 0
      %2182 = vmatpush1.bf16.msra.mxu0 %v1614
      %2183 = vmatprep.subr.bf16.mxu0 0
      %2184 = vmatpush1.bf16.msra.mxu0 %v1615
      %2185 = vmatprep.subr.bf16.mxu0 0
      %2186 = vmatpush1.bf16.msra.mxu0 %v1616
      %2187 = vmatprep.subr.bf16.mxu0 0
      %2188 = vmatpush1.bf16.msra.mxu0 %v1617
      %2189 = vmatprep.subr.bf16.mxu0 0
      %2190 = vmatpush1.bf16.msra.mxu0 %v1618
      %2191 = vmatprep.subr.bf16.mxu0 0
      %2192 = vmatpush1.bf16.msra.mxu0 %v1619
      %2193 = vmatprep.subr.bf16.mxu0 0
      %2194 = vmatpush1.bf16.msra.mxu0 %v1620
      %2195 = vmatprep.subr.bf16.mxu0 0
      %2196 = vmatpush1.bf16.msra.mxu0 %v1621
      %2197 = vmatprep.subr.bf16.mxu0 0
      %2198 = vmatpush1.bf16.msra.mxu0 %v1622
      %2199 = vmatprep.subr.bf16.mxu0 0
      %2200 = vmatpush1.bf16.msra.mxu0 %v1623
      %2201 = vmatprep.subr.bf16.mxu0 0
      %2202 = vmatpush1.bf16.msra.mxu0 %v1624
      %2203 = vmatprep.subr.bf16.mxu0 0
      %2204 = vmatpush1.bf16.msra.mxu0 %v1625
      %2205 = vmatprep.subr.bf16.mxu0 0
      %2206 = vmatpush1.bf16.msra.mxu0 %v1626
      %2207 = vmatprep.subr.bf16.mxu0 0
      %2208 = vmatpush1.bf16.msra.mxu0 %v1627
      %2209 = vmatprep.mubr.bf16.mxu0 %v909
      %2210 = vmatmul.mubr.bf16.gmra.mrb[0].mxu0 %v908
      %v2211 = vpop.f32.mrb[0].mxu0
      %v2212 = vadd.f32 %v2115, %v2211
      %v2213 = vpop.f32.mrb[0].mxu0
      %v2214 = vpop.f32.mrb[0].mxu0
      %v2215 = vadd.f32 %v2118, %v2214
      %v2216 = vpop.f32.mrb[0].mxu0
      %2217 = vmatprep.mubr.bf16.mxu0 %v923
      %2218 = vmatmul.mubr.bf16.gmra.mrb[0].mxu0 %v922
      %v2219 = vpop.f32.mrb[0].mxu0
      %v2220 = vadd.f32 %v2123, %v2219
      %v2221 = vpop.f32.mrb[0].mxu0
      %v2222 = vpop.f32.mrb[0].mxu0
      %v2223 = vadd.f32 %v2126, %v2222
      %v2224 = vpop.f32.mrb[0].mxu0
      %2225 = vmatprep.mubr.bf16.mxu0 %v937
      %2226 = vmatmul.mubr.bf16.gmra.mrb[0].mxu0 %v936
      %v2227 = vpop.f32.mrb[0].mxu0
      %v2228 = vadd.f32 %v2131, %v2227
      %v2229 = vpop.f32.mrb[0].mxu0
      %v2230 = vpop.f32.mrb[0].mxu0
      %v2231 = vadd.f32 %v2134, %v2230
      %v2232 = vpop.f32.mrb[0].mxu0
      %2233 = vmatprep.mubr.bf16.mxu0 %v951
      %2234 = vmatmul.mubr.bf16.gmra.mrb[0].mxu0 %v950
      %v2235 = vpop.f32.mrb[0].mxu0
      %v2236 = vadd.f32 %v2139, %v2235
      %v2237 = vpop.f32.mrb[0].mxu0
      %v2238 = vpop.f32.mrb[0].mxu0
      %v2239 = vadd.f32 %v2142, %v2238
      %v2240 = vpop.f32.mrb[0].mxu0
      %2241 = vmatprep.mubr.bf16.mxu0 %v965
      %2242 = vmatmul.mubr.bf16.gmra.mrb[0].mxu0 %v964
      %v2243 = vpop.f32.mrb[0].mxu0
      %v2244 = vadd.f32 %v2147, %v2243
      %v2245 = vpop.f32.mrb[0].mxu0
      %v2246 = vpop.f32.mrb[0].mxu0
      %v2247 = vadd.f32 %v2150, %v2246
      %v2248 = vpop.f32.mrb[0].mxu0
      %2249 = vmatprep.mubr.bf16.mxu0 %v979
      %2250 = vmatmul.mubr.bf16.gmra.mrb[0].mxu0 %v978
      %v2251 = vpop.f32.mrb[0].mxu0
      %v2252 = vadd.f32 %v2155, %v2251
      %v2253 = vpop.f32.mrb[0].mxu0
      %v2254 = vpop.f32.mrb[0].mxu0
      %v2255 = vadd.f32 %v2158, %v2254
      %v2256 = vpop.f32.mrb[0].mxu0
      %2257 = vmatprep.mubr.bf16.mxu0 %v993
      %2258 = vmatmul.mubr.bf16.gmra.mrb[0].mxu0 %v992
      %v2259 = vpop.f32.mrb[0].mxu0
      %v2260 = vadd.f32 %v2163, %v2259
      %v2261 = vpop.f32.mrb[0].mxu0
      %v2262 = vpop.f32.mrb[0].mxu0
      %v2263 = vadd.f32 %v2166, %v2262
      %v2264 = vpop.f32.mrb[0].mxu0
      %2265 = vmatprep.mubr.bf16.mxu0 %v1007
      %2266 = vmatmul.mubr.bf16.gmra.mrb[0].mxu0 %v1006
      %v2267 = vpop.f32.mrb[0].mxu0
      %v2268 = vadd.f32 %v2171, %v2267
      %v2269 = vpop.f32.mrb[0].mxu0
      %v2270 = vpop.f32.mrb[0].mxu0
      %v2271 = vadd.f32 %v2174, %v2270
      %v2272 = vpop.f32.mrb[0].mxu0
      %2273 = vdwg.mxu0
      %2274 = vmatprep.subr.bf16.mxu0 0
      %2275 = vmatpush1.bf16.msra.mxu0 %v1628
      %2276 = vmatprep.subr.bf16.mxu0 0
      %2277 = vmatpush1.bf16.msra.mxu0 %v1629
      %2278 = vmatprep.subr.bf16.mxu0 0
      %2279 = vmatpush1.bf16.msra.mxu0 %v1630
      %2280 = vmatprep.subr.bf16.mxu0 0
      %2281 = vmatpush1.bf16.msra.mxu0 %v1631
      %2282 = vmatprep.subr.bf16.mxu0 0
      %2283 = vmatpush1.bf16.msra.mxu0 %v1632
      %2284 = vmatprep.subr.bf16.mxu0 0
      %2285 = vmatpush1.bf16.msra.mxu0 %v1633
      %2286 = vmatprep.subr.bf16.mxu0 0
      %2287 = vmatpush1.bf16.msra.mxu0 %v1634
      %2288 = vmatprep.subr.bf16.mxu0 0
      %2289 = vmatpush1.bf16.msra.mxu0 %v1635
      %2290 = vmatprep.subr.bf16.mxu0 0
      %2291 = vmatpush1.bf16.msra.mxu0 %v1636
      %2292 = vmatprep.subr.bf16.mxu0 0
      %2293 = vmatpush1.bf16.msra.mxu0 %v1637
      %2294 = vmatprep.subr.bf16.mxu0 0
      %2295 = vmatpush1.bf16.msra.mxu0 %v1638
      %2296 = vmatprep.subr.bf16.mxu0 0
      %2297 = vmatpush1.bf16.msra.mxu0 %v1639
      %2298 = vmatprep.subr.bf16.mxu0 0
      %2299 = vmatpush1.bf16.msra.mxu0 %v1640
      %2300 = vmatprep.subr.bf16.mxu0 0
      %2301 = vmatpush1.bf16.msra.mxu0 %v1641
      %2302 = vmatprep.subr.bf16.mxu0 0
      %2303 = vmatpush1.bf16.msra.mxu0 %v1642
      %2304 = vmatprep.subr.bf16.mxu0 0
      %2305 = vmatpush1.bf16.msra.mxu0 %v1643
      %2306 = vmatprep.mubr.bf16.mxu0 %v911
      %2307 = vmatmul.mubr.bf16.gmra.mrb[0].mxu0 %v910
      %v2308 = vpop.f32.mrb[0].mxu0
      %v2309 = vadd.f32 %v2212, %v2308
      %v2310 = vpop.f32.mrb[0].mxu0
      %v2311 = vpop.f32.mrb[0].mxu0
      %v2312 = vadd.f32 %v2215, %v2311
      %v2313 = vpop.f32.mrb[0].mxu0
      %2314 = vmatprep.mubr.bf16.mxu0 %v925
      %2315 = vmatmul.mubr.bf16.gmra.mrb[0].mxu0 %v924
      %v2316 = vpop.f32.mrb[0].mxu0
      %v2317 = vadd.f32 %v2220, %v2316
      %v2318 = vpop.f32.mrb[0].mxu0
      %v2319 = vpop.f32.mrb[0].mxu0
      %v2320 = vadd.f32 %v2223, %v2319
      %v2321 = vpop.f32.mrb[0].mxu0
      %2322 = vmatprep.mubr.bf16.mxu0 %v939
      %2323 = vmatmul.mubr.bf16.gmra.mrb[0].mxu0 %v938
      %v2324 = vpop.f32.mrb[0].mxu0
      %v2325 = vadd.f32 %v2228, %v2324
      %v2326 = vpop.f32.mrb[0].mxu0
      %v2327 = vpop.f32.mrb[0].mxu0
      %v2328 = vadd.f32 %v2231, %v2327
      %v2329 = vpop.f32.mrb[0].mxu0
      %2330 = vmatprep.mubr.bf16.mxu0 %v953
      %2331 = vmatmul.mubr.bf16.gmra.mrb[0].mxu0 %v952
      %v2332 = vpop.f32.mrb[0].mxu0
      %v2333 = vadd.f32 %v2236, %v2332
      %v2334 = vpop.f32.mrb[0].mxu0
      %v2335 = vpop.f32.mrb[0].mxu0
      %v2336 = vadd.f32 %v2239, %v2335
      %v2337 = vpop.f32.mrb[0].mxu0
      %2338 = vmatprep.mubr.bf16.mxu0 %v967
      %2339 = vmatmul.mubr.bf16.gmra.mrb[0].mxu0 %v966
      %v2340 = vpop.f32.mrb[0].mxu0
      %v2341 = vadd.f32 %v2244, %v2340
      %v2342 = vpop.f32.mrb[0].mxu0
      %v2343 = vpop.f32.mrb[0].mxu0
      %v2344 = vadd.f32 %v2247, %v2343
      %v2345 = vpop.f32.mrb[0].mxu0
      %2346 = vmatprep.mubr.bf16.mxu0 %v981
      %2347 = vmatmul.mubr.bf16.gmra.mrb[0].mxu0 %v980
      %v2348 = vpop.f32.mrb[0].mxu0
      %v2349 = vadd.f32 %v2252, %v2348
      %v2350 = vpop.f32.mrb[0].mxu0
      %v2351 = vpop.f32.mrb[0].mxu0
      %v2352 = vadd.f32 %v2255, %v2351
      %v2353 = vpop.f32.mrb[0].mxu0
      %2354 = vmatprep.mubr.bf16.mxu0 %v995
      %2355 = vmatmul.mubr.bf16.gmra.mrb[0].mxu0 %v994
      %v2356 = vpop.f32.mrb[0].mxu0
      %v2357 = vadd.f32 %v2260, %v2356
      %v2358 = vpop.f32.mrb[0].mxu0
      %v2359 = vpop.f32.mrb[0].mxu0
      %v2360 = vadd.f32 %v2263, %v2359
      %v2361 = vpop.f32.mrb[0].mxu0
      %2362 = vmatprep.mubr.bf16.mxu0 %v1009
      %2363 = vmatmul.mubr.bf16.gmra.mrb[0].mxu0 %v1008
      %v2364 = vpop.f32.mrb[0].mxu0
      %v2365 = vadd.f32 %v2268, %v2364
      %v2366 = vpop.f32.mrb[0].mxu0
      %v2367 = vpop.f32.mrb[0].mxu0
      %v2368 = vadd.f32 %v2271, %v2367
      %v2369 = vpop.f32.mrb[0].mxu0
      %2370 = vdwg.mxu0
      %2371 = vmatprep.subr.bf16.mxu0 0
      %2372 = vmatpush1.bf16.msra.mxu0 %v1644
      %2373 = vmatprep.subr.bf16.mxu0 0
      %2374 = vmatpush1.bf16.msra.mxu0 %v1645
      %2375 = vmatprep.subr.bf16.mxu0 0
      %2376 = vmatpush1.bf16.msra.mxu0 %v1646
      %2377 = vmatprep.subr.bf16.mxu0 0
      %2378 = vmatpush1.bf16.msra.mxu0 %v1647
      %2379 = vmatprep.subr.bf16.mxu0 0
      %2380 = vmatpush1.bf16.msra.mxu0 %v1648
      %2381 = vmatprep.subr.bf16.mxu0 0
      %2382 = vmatpush1.bf16.msra.mxu0 %v1649
      %2383 = vmatprep.subr.bf16.mxu0 0
      %2384 = vmatpush1.bf16.msra.mxu0 %v1650
      %2385 = vmatprep.subr.bf16.mxu0 0
      %2386 = vmatpush1.bf16.msra.mxu0 %v1651
      %2387 = vmatprep.subr.bf16.mxu0 0
      %2388 = vmatpush1.bf16.msra.mxu0 %v1652
      %2389 = vmatprep.subr.bf16.mxu0 0
      %2390 = vmatpush1.bf16.msra.mxu0 %v1653
      %2391 = vmatprep.subr.bf16.mxu0 0
      %2392 = vmatpush1.bf16.msra.mxu0 %v1654
      %2393 = vmatprep.subr.bf16.mxu0 0
      %2394 = vmatpush1.bf16.msra.mxu0 %v1655
      %2395 = vmatprep.subr.bf16.mxu0 0
      %2396 = vmatpush1.bf16.msra.mxu0 0
      %2397 = vmatprep.subr.bf16.mxu0 0
      %2398 = vmatpush1.bf16.msra.mxu0 0
      %2399 = vmatprep.subr.bf16.mxu0 0
      %2400 = vmatpush1.bf16.msra.mxu0 0
      %2401 = vmatprep.subr.bf16.mxu0 0
      %2402 = vmatpush1.bf16.msra.mxu0 0
      %2403 = vmatprep.mubr.bf16.mxu0 %v1766
      %2404 = vmatmul.mubr.bf16.gmra.mrb[0].mxu0 %v912
      %v2405 = vpop.f32.mrb[0].mxu0
      %v2406 = vadd.f32 %v2309, %v2405
      %v2407 = vpop.f32.mrb[0].mxu0
      %v2408 = vpop.f32.mrb[0].mxu0
      %v2409 = vadd.f32 %v2312, %v2408
      %v2410 = vpop.f32.mrb[0].mxu0
      %2411 = vmatprep.mubr.bf16.mxu0 %v1769
      %2412 = vmatmul.mubr.bf16.gmra.mrb[0].mxu0 %v926
      %v2413 = vpop.f32.mrb[0].mxu0
      %v2414 = vadd.f32 %v2317, %v2413
      %v2415 = vpop.f32.mrb[0].mxu0
      %v2416 = vpop.f32.mrb[0].mxu0
      %v2417 = vadd.f32 %v2320, %v2416
      %v2418 = vpop.f32.mrb[0].mxu0
      %2419 = vmatprep.mubr.bf16.mxu0 %v1772
      %2420 = vmatmul.mubr.bf16.gmra.mrb[0].mxu0 %v940
      %v2421 = vpop.f32.mrb[0].mxu0
      %v2422 = vadd.f32 %v2325, %v2421
      %v2423 = vpop.f32.mrb[0].mxu0
      %v2424 = vpop.f32.mrb[0].mxu0
      %v2425 = vadd.f32 %v2328, %v2424
      %v2426 = vpop.f32.mrb[0].mxu0
      %2427 = vmatprep.mubr.bf16.mxu0 %v1775
      %2428 = vmatmul.mubr.bf16.gmra.mrb[0].mxu0 %v954
      %v2429 = vpop.f32.mrb[0].mxu0
      %v2430 = vadd.f32 %v2333, %v2429
      %v2431 = vpop.f32.mrb[0].mxu0
      %v2432 = vpop.f32.mrb[0].mxu0
      %v2433 = vadd.f32 %v2336, %v2432
      %v2434 = vpop.f32.mrb[0].mxu0
      %2435 = vmatprep.mubr.bf16.mxu0 %v1778
      %2436 = vmatmul.mubr.bf16.gmra.mrb[0].mxu0 %v968
      %v2437 = vpop.f32.mrb[0].mxu0
      %v2438 = vadd.f32 %v2341, %v2437
      %v2439 = vpop.f32.mrb[0].mxu0
      %v2440 = vpop.f32.mrb[0].mxu0
      %v2441 = vadd.f32 %v2344, %v2440
      %v2442 = vpop.f32.mrb[0].mxu0
      %2443 = vmatprep.mubr.bf16.mxu0 %v1781
      %2444 = vmatmul.mubr.bf16.gmra.mrb[0].mxu0 %v982
      %v2445 = vpop.f32.mrb[0].mxu0
      %v2446 = vadd.f32 %v2349, %v2445
      %v2447 = vpop.f32.mrb[0].mxu0
      %v2448 = vpop.f32.mrb[0].mxu0
      %v2449 = vadd.f32 %v2352, %v2448
      %v2450 = vpop.f32.mrb[0].mxu0
      %2451 = vmatprep.mubr.bf16.mxu0 %v1784
      %2452 = vmatmul.mubr.bf16.gmra.mrb[0].mxu0 %v996
      %v2453 = vpop.f32.mrb[0].mxu0
      %v2454 = vadd.f32 %v2357, %v2453
      %v2455 = vpop.f32.mrb[0].mxu0
      %v2456 = vpop.f32.mrb[0].mxu0
      %v2457 = vadd.f32 %v2360, %v2456
      %v2458 = vpop.f32.mrb[0].mxu0
      %2459 = vmatprep.mubr.bf16.mxu0 %v1787
      %2460 = vmatmul.mubr.bf16.gmra.mrb[0].mxu0 %v1010
      %v2461 = vpop.f32.mrb[0].mxu0
      %v2462 = vadd.f32 %v2365, %v2461
      %v2463 = vpop.f32.mrb[0].mxu0
      %v2464 = vpop.f32.mrb[0].mxu0
      %v2465 = vadd.f32 %v2368, %v2464
      %v2466 = vpop.f32.mrb[0].mxu0
      %2467 = vdwg.mxu0
      %vm2468 = vcmp.ge.f32.partialorder %v2406, 0.0
      %vm2469 = vcmp.ge.f32.partialorder %v2409, 0.0
      %vm2470 = vcmp.ge.f32.partialorder %v2414, 0.0
      %vm2471 = vcmp.ge.f32.partialorder %v2417, 0.0
      %vm2472 = vcmp.ge.f32.partialorder %v2422, 0.0
      %vm2473 = vcmp.ge.f32.partialorder %v2425, 0.0
      %vm2474 = vcmp.ge.f32.partialorder %v2430, 0.0
      %vm2475 = vcmp.ge.f32.partialorder %v2433, 0.0
      %vm2476 = vcmp.ge.f32.partialorder %v2438, 0.0
      %vm2477 = vcmp.ge.f32.partialorder %v2441, 0.0
      %vm2478 = vcmp.ge.f32.partialorder %v2446, 0.0
      %vm2479 = vcmp.ge.f32.partialorder %v2449, 0.0
      %vm2480 = vcmp.ge.f32.partialorder %v2454, 0.0
      %vm2481 = vcmp.ge.f32.partialorder %v2457, 0.0
      %vm2482 = vcmp.ge.f32.partialorder %v2462, 0.0
      %vm2483 = vcmp.ge.f32.partialorder %v2465, 0.0
      %v2484 = vmul.f32 %v2406, 0.2
      %v2485 = vmul.f32 %v2409, 0.2
      %v2486 = vmul.f32 %v2414, 0.2
      %v2487 = vmul.f32 %v2417, 0.2
      %v2488 = vmul.f32 %v2422, 0.2
      %v2489 = vmul.f32 %v2425, 0.2
      %v2490 = vmul.f32 %v2430, 0.2
      %v2491 = vmul.f32 %v2433, 0.2
      %v2492 = vmul.f32 %v2438, 0.2
      %v2493 = vmul.f32 %v2441, 0.2
      %v2494 = vmul.f32 %v2446, 0.2
      %v2495 = vmul.f32 %v2449, 0.2
      %v2496 = vmul.f32 %v2454, 0.2
      %v2497 = vmul.f32 %v2457, 0.2
      %v2498 = vmul.f32 %v2462, 0.2
      %v2499 = vmul.f32 %v2465, 0.2
      %v2500 = vsel %vm2468, %v2406, %v2484
      %v2501 = vsel %vm2469, %v2409, %v2485
      %v2502 = vsel %vm2470, %v2414, %v2486
      %v2503 = vsel %vm2471, %v2417, %v2487
      %v2504 = vsel %vm2472, %v2422, %v2488
      %v2505 = vsel %vm2473, %v2425, %v2489
      %v2506 = vsel %vm2474, %v2430, %v2490
      %v2507 = vsel %vm2475, %v2433, %v2491
      %v2508 = vsel %vm2476, %v2438, %v2492
      %v2509 = vsel %vm2477, %v2441, %v2493
      %v2510 = vsel %vm2478, %v2446, %v2494
      %v2511 = vsel %vm2479, %v2449, %v2495
      %v2512 = vsel %vm2480, %v2454, %v2496
      %v2513 = vsel %vm2481, %v2457, %v2497
      %v2514 = vsel %vm2482, %v2462, %v2498
      %v2515 = vsel %vm2483, %v2465, %v2499
      %v2516 = vpack.c.bf16 %v2501, %v2500
      %v2517 = vpack.c.bf16 %v2503, %v2502
      %v2518 = vpack.c.bf16 %v2505, %v2504
      %v2519 = vpack.c.bf16 %v2507, %v2506
      %v2520 = vpack.c.bf16 %v2509, %v2508
      %v2521 = vpack.c.bf16 %v2511, %v2510
      %v2522 = vpack.c.bf16 %v2513, %v2512
      %v2523 = vpack.c.bf16 %v2515, %v2514
      %v2532 = vunpack.c.l.b16 %v2516
      %v2533 = vunpack.c.h.b16 %v2516
      %v2534 = vunpack.c.l.b16 %v2517
      %v2535 = vunpack.c.h.b16 %v2517
      %v2536 = vunpack.c.l.b16 %v2518
      %v2537 = vunpack.c.h.b16 %v2518
      %v2538 = vunpack.c.l.b16 %v2519
      %v2539 = vunpack.c.h.b16 %v2519
      %v2540 = vunpack.c.l.b16 %v2520
      %v2541 = vunpack.c.h.b16 %v2520
      %v2542 = vunpack.c.l.b16 %v2521
      %v2543 = vunpack.c.h.b16 %v2521
      %v2544 = vunpack.c.l.b16 %v2522
      %v2545 = vunpack.c.h.b16 %v2522
      %v2546 = vunpack.c.l.b16 %v2523
      %v2547 = vunpack.c.h.b16 %v2523
      %v2548 = vpack.c.b16 %v2532, %v2532
      %v2549 = vpack.c.b16 %v2533, %v2533
      %v2550 = vpack.c.b16 %v2534, %v2534
      %v2551 = vpack.c.b16 %v2535, %v2535
      %v2552 = vpack.c.b16 %v2536, %v2536
      %v2553 = vpack.c.b16 %v2537, %v2537
      %v2554 = vpack.c.b16 %v2538, %v2538
      %v2555 = vpack.c.b16 %v2539, %v2539
      %v2556 = vpack.c.b16 %v2540, %v2540
      %v2557 = vpack.c.b16 %v2541, %v2541
      %v2558 = vpack.c.b16 %v2542, %v2542
      %v2559 = vpack.c.b16 %v2543, %v2543
      %v2560 = vpack.c.b16 %v2544, %v2544
      %v2561 = vpack.c.b16 %v2545, %v2545
      %v2562 = vpack.c.b16 %v2546, %v2546
      %v2563 = vpack.c.b16 %v2547, %v2547
      %2580 = vst [vmem:[%s226] sm:$0xf] %v2548
      %2581 = vst [vmem:[%s226 + $0x4] sm:$0xf] %v2549
      %2582 = vst [vmem:[%s226 + $0x8] sm:$0xf] %v2550
      %2583 = vst [vmem:[%s226 + $0xc] sm:$0xf] %v2551
      %2584 = vst [vmem:[%s226 + $0x10] sm:$0xf] %v2552
      %2585 = vst [vmem:[%s226 + $0x14] sm:$0xf] %v2553
      %2586 = vst [vmem:[%s226 + $0x18] sm:$0xf] %v2554
      %2587 = vst [vmem:[%s226 + $0x1c] sm:$0xf] %v2555
      %2588 = vst [vmem:[%s226 + $0x20] sm:$0xf] %v2556
      %2589 = vst [vmem:[%s226 + $0x24] sm:$0xf] %v2557
      %2590 = vst [vmem:[%s226 + $0x28] sm:$0xf] %v2558
      %2591 = vst [vmem:[%s226 + $0x2c] sm:$0xf] %v2559
      %2592 = vst [vmem:[%s226 + $0x30] sm:$0xf] %v2560
      %2593 = vst [vmem:[%s226 + $0x34] sm:$0xf] %v2561
      %2594 = vst [vmem:[%s226 + $0x38] sm:$0xf] %v2562
      %2595 = vst [vmem:[%s226 + $0x3c] sm:$0xf] %v2563
      %s2596 = smul.u32 16, %s19
      %p2597 = scmp.lt.s32.totalorder %s2596, 63
      %s2598 = scalar_select %p2597, %s2596, 63
      %p2599 = scmp.lt.s32.totalorder %s18, 0
      %s2600 = scalar_select %p2599, %s18, 0
      %s2601 = sadd.s32 %s2600, %s2598
      %s2602 = smul.addr %s2601, 4
      %s2603 = scalar_lea.vmem %s3, %s2602
      // Predicated region
      $region33: #{_lambda_.4} parent=31 // pred_check
        %p2604 = pneg %p124
      $region34: #{_lambda_.4} parent=31 // pred_check_branch
        %2606 = sbr.rel (%p2604) target = $region36
      $region35: #{_lambda_.4} parent=31 // pred_region
        %s2607 = smul.u32 16, %s19
      $region36: #{_lambda_.4} parent=31 // pred_fallthru
        _
    $region32: #{_lambda_.4} parent=5 // pred_fallthru
      _
    %p2608 = scmp.le.s32.totalorder 2, %s9
    // Predicated region
    $region37: #{_lambda_.4} parent=5 // pred_check
      %p2609 = pneg %p2608
    $region38: #{_lambda_.4} parent=5 // pred_check_branch
      %2611 = sbr.rel (%p2609) target = $region40
    $region39: #{_lambda_.4} parent=5 // pred_region
      %s2612 = ssub.s32 %s9, 2
      // Predicated region
      $region41: #{_lambda_.4} parent=39 // pred_check
        %p2613 = pneg %p130
      $region42: #{_lambda_.4} parent=39 // pred_check_branch
        %2615 = sbr.rel (%p2613) target = $region44
      $region43: #{_lambda_.4} parent=39 // pred_region
        %s2616 = smul.u32 16, %s21
        %p2617 = scmp.lt.s32.totalorder %s2616, 63
        %s2618 = scalar_select %p2617, %s2616, 63
        %p2619 = scmp.lt.s32.totalorder %s20, 0
        %s2620 = scalar_select %p2619, %s20, 0
        %s2621 = sadd.s32 %s2620, %s2618
        %s2622 = smul.addr %s2621, 4
        %s2623 = scalar_lea.vmem %s3, %s2622
      $region44: #{_lambda_.4} parent=39 // pred_fallthru
        _
    $region40: #{_lambda_.4} parent=5 // pred_fallthru
      _
  $region6: #{_lambda_.4} parent=0 // loop_footer
    %s13 = sadd.s32 1, %s9
  $region7: #{_lambda_.4} parent=0 // loop_footer_branch
    %8 = sbr.rel target = $region3
  $region8: #{_lambda_.4} parent=0 // loop_exit
    _

// kernel: _lambda_.5
$region0: #{_lambda_.5}
  #allocation0 [shape = 'u32[]', space=smem, size = 0x4, offset = 0x4, fixed_abs, tag = 'smem constant byte address 0x4 - core index']
  #allocation1 [shape = 'u32[144,128]{1,0:T(1,128)}', space=vmem, size = 0x12000, scoped, tag = 'internal scratch']
  %s0 = inlined_call_operand.vmem [shape: bf16[128,3456], index: 0, kind: input, shape index: {}]
  %s1 = inlined_call_operand.vmem [shape: bf16[3456,256], index: 1, kind: input, shape index: {}]
  %s2 = inlined_call_operand.vmem [shape: f32[1,256], index: 2, kind: input, shape index: {}]
  %s3 = inlined_call_operand.vmem [shape: bf16[128,256], index: 3, kind: output, shape index: {}]
  %s4 = sld [smem:[#allocation0]]
  $region123: #{_lambda_.5} parent=0
    _
  %s6 = ssub.s32 1, %s4
  %s7 = scalar_select 0, %s6, %s4
  $region1: #{_lambda_.5} parent=0
    #allocation2 [shape = 'u8[1769472]{0}', space=vmem, size = 0x1b0000, scoped, tag = 'input window, operand 1']
    #allocation3 [shape = 'u8[32768]{0}', space=vmem, size = 0x8000, scoped, tag = 'output window, operand 0']
    loop: start=0, step=1, limit=6
    $region2: #{_lambda_.5} parent=1 // loop_pre_header
      _
    $region3: #{_lambda_.5} parent=1 // loop_header
      %s9 = sphi 0, %s13
      %p10 = scmp.ge.s32.totalorder %s9, 6
      %s16 = sphi 0, %s28
      %s17 = sphi 0, %s24
      %s18 = sphi 0, %s16
      %s19 = sphi 0, %s17
      %s20 = sphi 0, %s18
      %s21 = sphi 0, %s19
      %s31 = sphi 0, %s33
      %s34 = sphi 0, %s31
      %s35 = sphi 0, %s34
      %s51 = sphi 0, %s35
      %s57 = sphi 0, %s59
      %s60 = sphi 0, %s57
      %s61 = sphi 0, %s60
      %s77 = sphi 0, %s61
      %s83 = sphi 0, %s85
      %s86 = sphi 0, %s83
      %s87 = sphi 0, %s86
      %s103 = sphi 0, %s87
      %s111 = sphi 0, %s113
      %s114 = sphi 0, %s111
      %s115 = sphi 0, %s114
      %s131 = sphi 0, %s115
    $region4: #{_lambda_.5} parent=1 // loop_header_branch
      %12 = sbr.rel (%p10) target = $region8
    $region5: #{_lambda_.5} parent=1 // loop_body
      %s14 = ssub.s32 %s9, 1
      %s15 = ssub.s32 %s9, 2
      %s22 = sadd.s32 1, %s17
      %p23 = scmp.ge.s32.totalorder %s22, 2
      %s24 = scalar_select %p23, 0, %s22
      %s25 = sadd.s32 1, %s16
      %s26 = scalar_select %p23, %s25, %s16
      %p27 = scmp.ge.s32.totalorder %s26, 2
      %s28 = scalar_select %p27, 0, %s26
      %s29 = ssub.s32 %s17, %s24
      %p30 = scmp.eq.s32.totalorder %s29, 0
      %s32 = sadd.s32 %s31, 1
      %s33 = scalar_select %p30, %s31, %s32
      %p36 = pneg %p30
      %p37 = scmp.eq.s32.totalorder %s9, 3
      %p38 = por %p36, %p37
      %p39 = scmp.ne.s32.totalorder %s31, %s34
      %p40 = scmp.eq.s32.totalorder %s9, 0
      %p41 = por %p39, %p40
      %p42 = scmp.ne.s32.totalorder %s31, %s34
      %p43 = scmp.eq.s32.totalorder %s14, 3
      %p44 = por %p42, %p43
      %p45 = scmp.ne.s32.totalorder %s34, %s35
      %p46 = scmp.eq.s32.totalorder %s14, 0
      %p47 = por %p45, %p46
      %p48 = scmp.ne.s32.totalorder %s34, %s35
      %p49 = scmp.eq.s32.totalorder %s15, 3
      %p50 = por %p48, %p49
      %p52 = scmp.ne.s32.totalorder %s35, %s51
      %p53 = scmp.eq.s32.totalorder %s15, 0
      %p54 = por %p52, %p53
      %s55 = ssub.s32 %s16, %s28
      %p56 = scmp.eq.s32.totalorder %s55, 0
      %s58 = sadd.s32 %s57, 1
      %s59 = scalar_select %p56, %s57, %s58
      %p62 = pneg %p56
      %p63 = scmp.eq.s32.totalorder %s9, 3
      %p64 = por %p62, %p63
      %p65 = scmp.ne.s32.totalorder %s57, %s60
      %p66 = scmp.eq.s32.totalorder %s9, 0
      %p67 = por %p65, %p66
      %p68 = scmp.ne.s32.totalorder %s57, %s60
      %p69 = scmp.eq.s32.totalorder %s14, 3
      %p70 = por %p68, %p69
      %p71 = scmp.ne.s32.totalorder %s60, %s61
      %p72 = scmp.eq.s32.totalorder %s14, 0
      %p73 = por %p71, %p72
      %p74 = scmp.ne.s32.totalorder %s60, %s61
      %p75 = scmp.eq.s32.totalorder %s15, 3
      %p76 = por %p74, %p75
      %p78 = scmp.ne.s32.totalorder %s61, %s77
      %p79 = scmp.eq.s32.totalorder %s15, 0
      %p80 = por %p78, %p79
      %s81 = ssub.s32 %s16, %s28
      %p82 = scmp.eq.s32.totalorder %s81, 0
      %s84 = sadd.s32 %s83, 1
      %s85 = scalar_select %p82, %s83, %s84
      %p88 = pneg %p82
      %p89 = scmp.eq.s32.totalorder %s9, 3
      %p90 = por %p88, %p89
      %p91 = scmp.ne.s32.totalorder %s83, %s86
      %p92 = scmp.eq.s32.totalorder %s9, 0
      %p93 = por %p91, %p92
      %p94 = scmp.ne.s32.totalorder %s83, %s86
      %p95 = scmp.eq.s32.totalorder %s14, 3
      %p96 = por %p94, %p95
      %p97 = scmp.ne.s32.totalorder %s86, %s87
      %p98 = scmp.eq.s32.totalorder %s14, 0
      %p99 = por %p97, %p98
      %p100 = scmp.ne.s32.totalorder %s86, %s87
      %p101 = scmp.eq.s32.totalorder %s15, 3
      %p102 = por %p100, %p101
      %p104 = scmp.ne.s32.totalorder %s87, %s103
      %p105 = scmp.eq.s32.totalorder %s15, 0
      %p106 = por %p104, %p105
      %s107 = ssub.s32 %s17, %s24
      %s108 = ssub.s32 %s16, %s28
      %s109 = sor.u32 %s107, %s108
      %p110 = scmp.eq.s32.totalorder %s109, 0
      %s112 = sadd.s32 %s111, 1
      %s113 = scalar_select %p110, %s111, %s112
      %p116 = pneg %p110
      %p117 = scmp.eq.s32.totalorder %s9, 3
      %p118 = por %p116, %p117
      %p119 = scmp.ne.s32.totalorder %s111, %s114
      %p120 = scmp.eq.s32.totalorder %s9, 0
      %p121 = por %p119, %p120
      %p122 = scmp.ne.s32.totalorder %s111, %s114
      %p123 = scmp.eq.s32.totalorder %s14, 3
      %p124 = por %p122, %p123
      %p125 = scmp.ne.s32.totalorder %s114, %s115
      %p126 = scmp.eq.s32.totalorder %s14, 0
      %p127 = por %p125, %p126
      %p128 = scmp.ne.s32.totalorder %s114, %s115
      %p129 = scmp.eq.s32.totalorder %s15, 3
      %p130 = por %p128, %p129
      %p132 = scmp.ne.s32.totalorder %s115, %s131
      %p133 = scmp.eq.s32.totalorder %s15, 0
      %p134 = por %p132, %p133
      %p135 = scmp.le.s32.totalorder 1, %s9
      %p136 = scmp.lt.s32.totalorder %s9, 5
      %p137 = pnand %p135, %p136
      %p138 = pneg %p137
      // Predicated region
      $region9: #{_lambda_.5} parent=5 // pred_check
        _
      $region10: #{_lambda_.5} parent=5 // pred_check_branch
        %140 = sbr.rel (%p137) target = $region12
      $region11: #{_lambda_.5} parent=5 // pred_region
        %s141 = ssub.s32 %s9, 1
      $region12: #{_lambda_.5} parent=5 // pred_fallthru
        _
      %p142 = scmp.lt.s32.totalorder %s9, 4
      // Predicated region
      $region13: #{_lambda_.5} parent=5 // pred_check
        %p143 = pneg %p142
      $region14: #{_lambda_.5} parent=5 // pred_check_branch
        %145 = sbr.rel (%p143) target = $region16
      $region15: #{_lambda_.5} parent=5 // pred_region
        // Predicated region
        $region17: #{_lambda_.5} parent=15 // pred_check
          %p146 = pneg %p41
        $region18: #{_lambda_.5} parent=15 // pred_check_branch
          %148 = sbr.rel (%p146) target = $region20
        $region19: #{_lambda_.5} parent=15 // pred_region
          %s149 = smul.u32 8, %s17
          %p150 = scmp.lt.s32.totalorder %s149, 15
          %s151 = scalar_select %p150, %s149, 15
          %s152 = smul.addr %s151, 27
          %s153 = smul.addr %s152, 4
          %s154 = scalar_lea.vmem %s0, %s153
          %s155 = smul.u32 8, %s17
        $region20: #{_lambda_.5} parent=15 // pred_fallthru
          _
        // Predicated region
        $region21: #{_lambda_.5} parent=15 // pred_check
          %p156 = pneg %p67
        $region22: #{_lambda_.5} parent=15 // pred_check_branch
          %158 = sbr.rel (%p156) target = $region24
        $region23: #{_lambda_.5} parent=15 // pred_region
          %s159 = sand.u32 %s57, 1
          %s160 = sand.u32 %s57, 1
          %s161 = smul.addr %s160, 1728
          %s162 = scalar_lea.vmem [#allocation2], %s161
          %s163 = smul.addr %s16, 4
          %s164 = scalar_lea.vmem %s1, %s163
          // Predicated region
          $region25: #{_lambda_.5} parent=23 // pred_check
            _
          $region26: #{_lambda_.5} parent=23 // pred_check_branch
            %166 = sbr.rel (0) target = $region28
          $region27: #{_lambda_.5} parent=23 // pred_region
            // Predicated region
            $region29: #{_lambda_.5} parent=27 // pred_check
              _
            $region30: #{_lambda_.5} parent=27 // pred_check_branch
              %168 = sbr.rel target = $region32
            $region31: #{_lambda_.5} parent=27 // pred_region
              // Predicated region
              $region44: #{_lambda_.5} parent=31 // pred_check
                _
              $region45: #{_lambda_.5} parent=31 // pred_check_branch
                %1045 = sbr.rel (0) target = $region47
              $region46: #{_lambda_.5} parent=31 // pred_region
                loop: start=0, step=1, limit=1
                $region48: #{_lambda_.5} parent=46 // loop_pre_header
                  _
                $region49: #{_lambda_.5} parent=46 // loop_header
                  %s1047 = sphi 0, %s1051
                  %p1048 = scmp.ge.s32.totalorder %s1047, 1
                  %s1052 = sphi %s164, %s164
                  %s1053 = sphi %s162, %s162
                $region50: #{_lambda_.5} parent=46 // loop_header_branch
                  %1050 = sbr.rel (%p1048) target = $region54
                $region51: #{_lambda_.5} parent=46 // loop_body
                  _
                $region52: #{_lambda_.5} parent=46 // loop_footer
                  %s1051 = sadd.s32 1, %s1047
                $region53: #{_lambda_.5} parent=46 // loop_footer_branch
                  %1046 = sbr.rel target = $region49
                $region54: #{_lambda_.5} parent=46 // loop_exit
                  _
                loop: start=0, step=1, limit=1
                $region55: #{_lambda_.5} parent=46 // loop_pre_header
                  _
                $region56: #{_lambda_.5} parent=46 // loop_header
                  %s1056 = sphi 0, %s1060
                  %p1057 = scmp.ge.s32.totalorder %s1056, 1
                  %s1061 = sphi %s164, %s164
                  %s1062 = sphi %s162, %s162
                $region57: #{_lambda_.5} parent=46 // loop_header_branch
                  %1059 = sbr.rel (%p1057) target = $region61
                $region58: #{_lambda_.5} parent=46 // loop_body
                  %v1063 = vld [vmem:[%s1061] sm:$0xf]
                  %1064 = vst [vmem:[%s1062] sm:$0xf] %v1063
                  %v1065 = vld [vmem:[%s1061 + $0x8] sm:$0xf]
                  %1066 = vst [vmem:[%s1062 + $0x4] sm:$0xf] %v1065
                  %v1067 = vld [vmem:[%s1061 + $0x10] sm:$0xf]
                  %1068 = vst [vmem:[%s1062 + $0x8] sm:$0xf] %v1067
                  %v1069 = vld [vmem:[%s1061 + $0x18] sm:$0xf]
                  %1070 = vst [vmem:[%s1062 + $0xc] sm:$0xf] %v1069
                  %v1071 = vld [vmem:[%s1061 + $0x20] sm:$0xf]
                  %1072 = vst [vmem:[%s1062 + $0x10] sm:$0xf] %v1071
                  %v1073 = vld [vmem:[%s1061 + $0x28] sm:$0xf]
                  %1074 = vst [vmem:[%s1062 + $0x14] sm:$0xf] %v1073
                  %v1075 = vld [vmem:[%s1061 + $0x30] sm:$0xf]
                  %1076 = vst [vmem:[%s1062 + $0x18] sm:$0xf] %v1075
                  %v1077 = vld [vmem:[%s1061 + $0x38] sm:$0xf]
                  %1078 = vst [vmem:[%s1062 + $0x1c] sm:$0xf] %v1077
                  %v1079 = vld [vmem:[%s1061 + $0x40] sm:$0xf]
                  %1080 = vst [vmem:[%s1062 + $0x20] sm:$0xf] %v1079
                  %v1081 = vld [vmem:[%s1061 + $0x48] sm:$0xf]
                  %1082 = vst [vmem:[%s1062 + $0x24] sm:$0xf] %v1081
                  %v1083 = vld [vmem:[%s1061 + $0x50] sm:$0xf]
                  %1084 = vst [vmem:[%s1062 + $0x28] sm:$0xf] %v1083
                  %v1085 = vld [vmem:[%s1061 + $0x58] sm:$0xf]
                  %1086 = vst [vmem:[%s1062 + $0x2c] sm:$0xf] %v1085
                  %v1087 = vld [vmem:[%s1061 + $0x60] sm:$0xf]
                  %1088 = vst [vmem:[%s1062 + $0x30] sm:$0xf] %v1087
                  %v1089 = vld [vmem:[%s1061 + $0x68] sm:$0xf]
                  %1090 = vst [vmem:[%s1062 + $0x34] sm:$0xf] %v1089
                  %v1091 = vld [vmem:[%s1061 + $0x70] sm:$0xf]
                  %1092 = vst [vmem:[%s1062 + $0x38] sm:$0xf] %v1091
                  %v1093 = vld [vmem:[%s1061 + $0x78] sm:$0xf]
                  %1094 = vst [vmem:[%s1062 + $0x3c] sm:$0xf] %v1093
                  %v1095 = vld [vmem:[%s1061 + $0x80] sm:$0xf]
                  %1096 = vst [vmem:[%s1062 + $0x40] sm:$0xf] %v1095
                  %v1097 = vld [vmem:[%s1061 + $0x88] sm:$0xf]
                  %1098 = vst [vmem:[%s1062 + $0x44] sm:$0xf] %v1097
                  %v1099 = vld [vmem:[%s1061 + $0x90] sm:$0xf]
                  %1100 = vst [vmem:[%s1062 + $0x48] sm:$0xf] %v1099
                  %v1101 = vld [vmem:[%s1061 + $0x98] sm:$0xf]
                  %1102 = vst [vmem:[%s1062 + $0x4c] sm:$0xf] %v1101
                  %v1103 = vld [vmem:[%s1061 + $0xa0] sm:$0xf]
                  %1104 = vst [vmem:[%s1062 + $0x50] sm:$0xf] %v1103
                  %v1105 = vld [vmem:[%s1061 + $0xa8] sm:$0xf]
                  %1106 = vst [vmem:[%s1062 + $0x54] sm:$0xf] %v1105
                  %v1107 = vld [vmem:[%s1061 + $0xb0] sm:$0xf]
                  %1108 = vst [vmem:[%s1062 + $0x58] sm:$0xf] %v1107
                  %v1109 = vld [vmem:[%s1061 + $0xb8] sm:$0xf]
                  %1110 = vst [vmem:[%s1062 + $0x5c] sm:$0xf] %v1109
                  %v1111 = vld [vmem:[%s1061 + $0xc0] sm:$0xf]
                  %1112 = vst [vmem:[%s1062 + $0x60] sm:$0xf] %v1111
                  %v1113 = vld [vmem:[%s1061 + $0xc8] sm:$0xf]
                  %1114 = vst [vmem:[%s1062 + $0x64] sm:$0xf] %v1113
                  %v1115 = vld [vmem:[%s1061 + $0xd0] sm:$0xf]
                  %1116 = vst [vmem:[%s1062 + $0x68] sm:$0xf] %v1115
                  %v1117 = vld [vmem:[%s1061 + $0xd8] sm:$0xf]
                  %1118 = vst [vmem:[%s1062 + $0x6c] sm:$0xf] %v1117
                  %v1119 = vld [vmem:[%s1061 + $0xe0] sm:$0xf]
                  %1120 = vst [vmem:[%s1062 + $0x70] sm:$0xf] %v1119
                  %v1121 = vld [vmem:[%s1061 + $0xe8] sm:$0xf]
                  %1122 = vst [vmem:[%s1062 + $0x74] sm:$0xf] %v1121
                  %v1123 = vld [vmem:[%s1061 + $0xf0] sm:$0xf]
                  %1124 = vst [vmem:[%s1062 + $0x78] sm:$0xf] %v1123
                  %v1125 = vld [vmem:[%s1061 + $0xf8] sm:$0xf]
                  %1126 = vst [vmem:[%s1062 + $0x7c] sm:$0xf] %v1125
                  %v1127 = vld [vmem:[%s1061 + $0x100] sm:$0xf]
                  %1128 = vst [vmem:[%s1062 + $0x80] sm:$0xf] %v1127
                  %v1129 = vld [vmem:[%s1061 + $0x108] sm:$0xf]
                  %1130 = vst [vmem:[%s1062 + $0x84] sm:$0xf] %v1129
                  %v1131 = vld [vmem:[%s1061 + $0x110] sm:$0xf]
                  %1132 = vst [vmem:[%s1062 + $0x88] sm:$0xf] %v1131
                  %v1133 = vld [vmem:[%s1061 + $0x118] sm:$0xf]
                  %1134 = vst [vmem:[%s1062 + $0x8c] sm:$0xf] %v1133
                  %v1135 = vld [vmem:[%s1061 + $0x120] sm:$0xf]
                  %1136 = vst [vmem:[%s1062 + $0x90] sm:$0xf] %v1135
                  %v1137 = vld [vmem:[%s1061 + $0x128] sm:$0xf]
                  %1138 = vst [vmem:[%s1062 + $0x94] sm:$0xf] %v1137
                  %v1139 = vld [vmem:[%s1061 + $0x130] sm:$0xf]
                  %1140 = vst [vmem:[%s1062 + $0x98] sm:$0xf] %v1139
                  %v1141 = vld [vmem:[%s1061 + $0x138] sm:$0xf]
                  %1142 = vst [vmem:[%s1062 + $0x9c] sm:$0xf] %v1141
                  %v1143 = vld [vmem:[%s1061 + $0x140] sm:$0xf]
                  %1144 = vst [vmem:[%s1062 + $0xa0] sm:$0xf] %v1143
                  %v1145 = vld [vmem:[%s1061 + $0x148] sm:$0xf]
                  %1146 = vst [vmem:[%s1062 + $0xa4] sm:$0xf] %v1145
                  %v1147 = vld [vmem:[%s1061 + $0x150] sm:$0xf]
                  %1148 = vst [vmem:[%s1062 + $0xa8] sm:$0xf] %v1147
                  %v1149 = vld [vmem:[%s1061 + $0x158] sm:$0xf]
                  %1150 = vst [vmem:[%s1062 + $0xac] sm:$0xf] %v1149
                  %v1151 = vld [vmem:[%s1061 + $0x160] sm:$0xf]
                  %1152 = vst [vmem:[%s1062 + $0xb0] sm:$0xf] %v1151
                  %v1153 = vld [vmem:[%s1061 + $0x168] sm:$0xf]
                  %1154 = vst [vmem:[%s1062 + $0xb4] sm:$0xf] %v1153
                  %v1155 = vld [vmem:[%s1061 + $0x170] sm:$0xf]
                  %1156 = vst [vmem:[%s1062 + $0xb8] sm:$0xf] %v1155
                  %v1157 = vld [vmem:[%s1061 + $0x178] sm:$0xf]
                  %1158 = vst [vmem:[%s1062 + $0xbc] sm:$0xf] %v1157
                  %v1159 = vld [vmem:[%s1061 + $0x180] sm:$0xf]
                  %1160 = vst [vmem:[%s1062 + $0xc0] sm:$0xf] %v1159
                  %v1161 = vld [vmem:[%s1061 + $0x188] sm:$0xf]
                  %1162 = vst [vmem:[%s1062 + $0xc4] sm:$0xf] %v1161
                  %v1163 = vld [vmem:[%s1061 + $0x190] sm:$0xf]
                  %1164 = vst [vmem:[%s1062 + $0xc8] sm:$0xf] %v1163
                  %v1165 = vld [vmem:[%s1061 + $0x198] sm:$0xf]
                  %1166 = vst [vmem:[%s1062 + $0xcc] sm:$0xf] %v1165
                  %v1167 = vld [vmem:[%s1061 + $0x1a0] sm:$0xf]
                  %1168 = vst [vmem:[%s1062 + $0xd0] sm:$0xf] %v1167
                  %v1169 = vld [vmem:[%s1061 + $0x1a8] sm:$0xf]
                  %1170 = vst [vmem:[%s1062 + $0xd4] sm:$0xf] %v1169
                  %v1171 = vld [vmem:[%s1061 + $0x1b0] sm:$0xf]
                  %1172 = vst [vmem:[%s1062 + $0xd8] sm:$0xf] %v1171
                  %v1173 = vld [vmem:[%s1061 + $0x1b8] sm:$0xf]
                  %1174 = vst [vmem:[%s1062 + $0xdc] sm:$0xf] %v1173
                  %v1175 = vld [vmem:[%s1061 + $0x1c0] sm:$0xf]
                  %1176 = vst [vmem:[%s1062 + $0xe0] sm:$0xf] %v1175
                  %v1177 = vld [vmem:[%s1061 + $0x1c8] sm:$0xf]
                  %1178 = vst [vmem:[%s1062 + $0xe4] sm:$0xf] %v1177
                  %v1179 = vld [vmem:[%s1061 + $0x1d0] sm:$0xf]
                  %1180 = vst [vmem:[%s1062 + $0xe8] sm:$0xf] %v1179
                  %v1181 = vld [vmem:[%s1061 + $0x1d8] sm:$0xf]
                  %1182 = vst [vmem:[%s1062 + $0xec] sm:$0xf] %v1181
                  %v1183 = vld [vmem:[%s1061 + $0x1e0] sm:$0xf]
                  %1184 = vst [vmem:[%s1062 + $0xf0] sm:$0xf] %v1183
                  %v1185 = vld [vmem:[%s1061 + $0x1e8] sm:$0xf]
                  %1186 = vst [vmem:[%s1062 + $0xf4] sm:$0xf] %v1185
                  %v1187 = vld [vmem:[%s1061 + $0x1f0] sm:$0xf]
                  %1188 = vst [vmem:[%s1062 + $0xf8] sm:$0xf] %v1187
                  %v1189 = vld [vmem:[%s1061 + $0x1f8] sm:$0xf]
                  %1190 = vst [vmem:[%s1062 + $0xfc] sm:$0xf] %v1189
                  %v1191 = vld [vmem:[%s1061 + $0x200] sm:$0xf]
                  %1192 = vst [vmem:[%s1062 + $0x100] sm:$0xf] %v1191
                  %v1193 = vld [vmem:[%s1061 + $0x208] sm:$0xf]
                  %1194 = vst [vmem:[%s1062 + $0x104] sm:$0xf] %v1193
                  %v1195 = vld [vmem:[%s1061 + $0x210] sm:$0xf]
                  %1196 = vst [vmem:[%s1062 + $0x108] sm:$0xf] %v1195
                  %v1197 = vld [vmem:[%s1061 + $0x218] sm:$0xf]
                  %1198 = vst [vmem:[%s1062 + $0x10c] sm:$0xf] %v1197
                  %v1199 = vld [vmem:[%s1061 + $0x220] sm:$0xf]
                  %1200 = vst [vmem:[%s1062 + $0x110] sm:$0xf] %v1199
                  %v1201 = vld [vmem:[%s1061 + $0x228] sm:$0xf]
                  %1202 = vst [vmem:[%s1062 + $0x114] sm:$0xf] %v1201
                  %v1203 = vld [vmem:[%s1061 + $0x230] sm:$0xf]
                  %1204 = vst [vmem:[%s1062 + $0x118] sm:$0xf] %v1203
                  %v1205 = vld [vmem:[%s1061 + $0x238] sm:$0xf]
                  %1206 = vst [vmem:[%s1062 + $0x11c] sm:$0xf] %v1205
                  %v1207 = vld [vmem:[%s1061 + $0x240] sm:$0xf]
                  %1208 = vst [vmem:[%s1062 + $0x120] sm:$0xf] %v1207
                  %v1209 = vld [vmem:[%s1061 + $0x248] sm:$0xf]
                  %1210 = vst [vmem:[%s1062 + $0x124] sm:$0xf] %v1209
                  %v1211 = vld [vmem:[%s1061 + $0x250] sm:$0xf]
                  %1212 = vst [vmem:[%s1062 + $0x128] sm:$0xf] %v1211
                  %v1213 = vld [vmem:[%s1061 + $0x258] sm:$0xf]
                  %1214 = vst [vmem:[%s1062 + $0x12c] sm:$0xf] %v1213
                  %v1215 = vld [vmem:[%s1061 + $0x260] sm:$0xf]
                  %1216 = vst [vmem:[%s1062 + $0x130] sm:$0xf] %v1215
                  %v1217 = vld [vmem:[%s1061 + $0x268] sm:$0xf]
                  %1218 = vst [vmem:[%s1062 + $0x134] sm:$0xf] %v1217
                  %v1219 = vld [vmem:[%s1061 + $0x270] sm:$0xf]
                  %1220 = vst [vmem:[%s1062 + $0x138] sm:$0xf] %v1219
                  %v1221 = vld [vmem:[%s1061 + $0x278] sm:$0xf]
                  %1222 = vst [vmem:[%s1062 + $0x13c] sm:$0xf] %v1221
                  %v1223 = vld [vmem:[%s1061 + $0x280] sm:$0xf]
                  %1224 = vst [vmem:[%s1062 + $0x140] sm:$0xf] %v1223
                  %v1225 = vld [vmem:[%s1061 + $0x288] sm:$0xf]
                  %1226 = vst [vmem:[%s1062 + $0x144] sm:$0xf] %v1225
                  %v1227 = vld [vmem:[%s1061 + $0x290] sm:$0xf]
                  %1228 = vst [vmem:[%s1062 + $0x148] sm:$0xf] %v1227
                  %v1229 = vld [vmem:[%s1061 + $0x298] sm:$0xf]
                  %1230 = vst [vmem:[%s1062 + $0x14c] sm:$0xf] %v1229
                  %v1231 = vld [vmem:[%s1061 + $0x2a0] sm:$0xf]
                  %1232 = vst [vmem:[%s1062 + $0x150] sm:$0xf] %v1231
                  %v1233 = vld [vmem:[%s1061 + $0x2a8] sm:$0xf]
                  %1234 = vst [vmem:[%s1062 + $0x154] sm:$0xf] %v1233
                  %v1235 = vld [vmem:[%s1061 + $0x2b0] sm:$0xf]
                  %1236 = vst [vmem:[%s1062 + $0x158] sm:$0xf] %v1235
                  %v1237 = vld [vmem:[%s1061 + $0x2b8] sm:$0xf]
                  %1238 = vst [vmem:[%s1062 + $0x15c] sm:$0xf] %v1237
                  %v1239 = vld [vmem:[%s1061 + $0x2c0] sm:$0xf]
                  %1240 = vst [vmem:[%s1062 + $0x160] sm:$0xf] %v1239
                  %v1241 = vld [vmem:[%s1061 + $0x2c8] sm:$0xf]
                  %1242 = vst [vmem:[%s1062 + $0x164] sm:$0xf] %v1241
                  %v1243 = vld [vmem:[%s1061 + $0x2d0] sm:$0xf]
                  %1244 = vst [vmem:[%s1062 + $0x168] sm:$0xf] %v1243
                  %v1245 = vld [vmem:[%s1061 + $0x2d8] sm:$0xf]
                  %1246 = vst [vmem:[%s1062 + $0x16c] sm:$0xf] %v1245
                  %v1247 = vld [vmem:[%s1061 + $0x2e0] sm:$0xf]
                  %1248 = vst [vmem:[%s1062 + $0x170] sm:$0xf] %v1247
                  %v1249 = vld [vmem:[%s1061 + $0x2e8] sm:$0xf]
                  %1250 = vst [vmem:[%s1062 + $0x174] sm:$0xf] %v1249
                  %v1251 = vld [vmem:[%s1061 + $0x2f0] sm:$0xf]
                  %1252 = vst [vmem:[%s1062 + $0x178] sm:$0xf] %v1251
                  %v1253 = vld [vmem:[%s1061 + $0x2f8] sm:$0xf]
                  %1254 = vst [vmem:[%s1062 + $0x17c] sm:$0xf] %v1253
                  %v1255 = vld [vmem:[%s1061 + $0x300] sm:$0xf]
                  %1256 = vst [vmem:[%s1062 + $0x180] sm:$0xf] %v1255
                  %v1257 = vld [vmem:[%s1061 + $0x308] sm:$0xf]
                  %1258 = vst [vmem:[%s1062 + $0x184] sm:$0xf] %v1257
                  %v1259 = vld [vmem:[%s1061 + $0x310] sm:$0xf]
                  %1260 = vst [vmem:[%s1062 + $0x188] sm:$0xf] %v1259
                  %v1261 = vld [vmem:[%s1061 + $0x318] sm:$0xf]
                  %1262 = vst [vmem:[%s1062 + $0x18c] sm:$0xf] %v1261
                  %v1263 = vld [vmem:[%s1061 + $0x320] sm:$0xf]
                  %1264 = vst [vmem:[%s1062 + $0x190] sm:$0xf] %v1263
                  %v1265 = vld [vmem:[%s1061 + $0x328] sm:$0xf]
                  %1266 = vst [vmem:[%s1062 + $0x194] sm:$0xf] %v1265
                  %v1267 = vld [vmem:[%s1061 + $0x330] sm:$0xf]
                  %1268 = vst [vmem:[%s1062 + $0x198] sm:$0xf] %v1267
                  %v1269 = vld [vmem:[%s1061 + $0x338] sm:$0xf]
                  %1270 = vst [vmem:[%s1062 + $0x19c] sm:$0xf] %v1269
                  %v1271 = vld [vmem:[%s1061 + $0x340] sm:$0xf]
                  %1272 = vst [vmem:[%s1062 + $0x1a0] sm:$0xf] %v1271
                  %v1273 = vld [vmem:[%s1061 + $0x348] sm:$0xf]
                  %1274 = vst [vmem:[%s1062 + $0x1a4] sm:$0xf] %v1273
                  %v1275 = vld [vmem:[%s1061 + $0x350] sm:$0xf]
                  %1276 = vst [vmem:[%s1062 + $0x1a8] sm:$0xf] %v1275
                  %v1277 = vld [vmem:[%s1061 + $0x358] sm:$0xf]
                  %1278 = vst [vmem:[%s1062 + $0x1ac] sm:$0xf] %v1277
                  %v1279 = vld [vmem:[%s1061 + $0x360] sm:$0xf]
                  %1280 = vst [vmem:[%s1062 + $0x1b0] sm:$0xf] %v1279
                  %v1281 = vld [vmem:[%s1061 + $0x368] sm:$0xf]
                  %1282 = vst [vmem:[%s1062 + $0x1b4] sm:$0xf] %v1281
                  %v1283 = vld [vmem:[%s1061 + $0x370] sm:$0xf]
                  %1284 = vst [vmem:[%s1062 + $0x1b8] sm:$0xf] %v1283
                  %v1285 = vld [vmem:[%s1061 + $0x378] sm:$0xf]
                  %1286 = vst [vmem:[%s1062 + $0x1bc] sm:$0xf] %v1285
                  %v1287 = vld [vmem:[%s1061 + $0x380] sm:$0xf]
                  %1288 = vst [vmem:[%s1062 + $0x1c0] sm:$0xf] %v1287
                  %v1289 = vld [vmem:[%s1061 + $0x388] sm:$0xf]
                  %1290 = vst [vmem:[%s1062 + $0x1c4] sm:$0xf] %v1289
                  %v1291 = vld [vmem:[%s1061 + $0x390] sm:$0xf]
                  %1292 = vst [vmem:[%s1062 + $0x1c8] sm:$0xf] %v1291
                  %v1293 = vld [vmem:[%s1061 + $0x398] sm:$0xf]
                  %1294 = vst [vmem:[%s1062 + $0x1cc] sm:$0xf] %v1293
                  %v1295 = vld [vmem:[%s1061 + $0x3a0] sm:$0xf]
                  %1296 = vst [vmem:[%s1062 + $0x1d0] sm:$0xf] %v1295
                  %v1297 = vld [vmem:[%s1061 + $0x3a8] sm:$0xf]
                  %1298 = vst [vmem:[%s1062 + $0x1d4] sm:$0xf] %v1297
                  %v1299 = vld [vmem:[%s1061 + $0x3b0] sm:$0xf]
                  %1300 = vst [vmem:[%s1062 + $0x1d8] sm:$0xf] %v1299
                  %v1301 = vld [vmem:[%s1061 + $0x3b8] sm:$0xf]
                  %1302 = vst [vmem:[%s1062 + $0x1dc] sm:$0xf] %v1301
                  %v1303 = vld [vmem:[%s1061 + $0x3c0] sm:$0xf]
                  %1304 = vst [vmem:[%s1062 + $0x1e0] sm:$0xf] %v1303
                  %v1305 = vld [vmem:[%s1061 + $0x3c8] sm:$0xf]
                  %1306 = vst [vmem:[%s1062 + $0x1e4] sm:$0xf] %v1305
                  %v1307 = vld [vmem:[%s1061 + $0x3d0] sm:$0xf]
                  %1308 = vst [vmem:[%s1062 + $0x1e8] sm:$0xf] %v1307
                  %v1309 = vld [vmem:[%s1061 + $0x3d8] sm:$0xf]
                  %1310 = vst [vmem:[%s1062 + $0x1ec] sm:$0xf] %v1309
                  %v1311 = vld [vmem:[%s1061 + $0x3e0] sm:$0xf]
                  %1312 = vst [vmem:[%s1062 + $0x1f0] sm:$0xf] %v1311
                  %v1313 = vld [vmem:[%s1061 + $0x3e8] sm:$0xf]
                  %1314 = vst [vmem:[%s1062 + $0x1f4] sm:$0xf] %v1313
                  %v1315 = vld [vmem:[%s1061 + $0x3f0] sm:$0xf]
                  %1316 = vst [vmem:[%s1062 + $0x1f8] sm:$0xf] %v1315
                  %v1317 = vld [vmem:[%s1061 + $0x3f8] sm:$0xf]
                  %1318 = vst [vmem:[%s1062 + $0x1fc] sm:$0xf] %v1317
                  %v1319 = vld [vmem:[%s1061 + $0x400] sm:$0xf]
                  %1320 = vst [vmem:[%s1062 + $0x200] sm:$0xf] %v1319
                  %v1321 = vld [vmem:[%s1061 + $0x408] sm:$0xf]
                  %1322 = vst [vmem:[%s1062 + $0x204] sm:$0xf] %v1321
                  %v1323 = vld [vmem:[%s1061 + $0x410] sm:$0xf]
                  %1324 = vst [vmem:[%s1062 + $0x208] sm:$0xf] %v1323
                  %v1325 = vld [vmem:[%s1061 + $0x418] sm:$0xf]
                  %1326 = vst [vmem:[%s1062 + $0x20c] sm:$0xf] %v1325
                  %v1327 = vld [vmem:[%s1061 + $0x420] sm:$0xf]
                  %1328 = vst [vmem:[%s1062 + $0x210] sm:$0xf] %v1327
                  %v1329 = vld [vmem:[%s1061 + $0x428] sm:$0xf]
                  %1330 = vst [vmem:[%s1062 + $0x214] sm:$0xf] %v1329
                  %v1331 = vld [vmem:[%s1061 + $0x430] sm:$0xf]
                  %1332 = vst [vmem:[%s1062 + $0x218] sm:$0xf] %v1331
                  %v1333 = vld [vmem:[%s1061 + $0x438] sm:$0xf]
                  %1334 = vst [vmem:[%s1062 + $0x21c] sm:$0xf] %v1333
                  %v1335 = vld [vmem:[%s1061 + $0x440] sm:$0xf]
                  %1336 = vst [vmem:[%s1062 + $0x220] sm:$0xf] %v1335
                  %v1337 = vld [vmem:[%s1061 + $0x448] sm:$0xf]
                  %1338 = vst [vmem:[%s1062 + $0x224] sm:$0xf] %v1337
                  %v1339 = vld [vmem:[%s1061 + $0x450] sm:$0xf]
                  %1340 = vst [vmem:[%s1062 + $0x228] sm:$0xf] %v1339
                  %v1341 = vld [vmem:[%s1061 + $0x458] sm:$0xf]
                  %1342 = vst [vmem:[%s1062 + $0x22c] sm:$0xf] %v1341
                  %v1343 = vld [vmem:[%s1061 + $0x460] sm:$0xf]
                  %1344 = vst [vmem:[%s1062 + $0x230] sm:$0xf] %v1343
                  %v1345 = vld [vmem:[%s1061 + $0x468] sm:$0xf]
                  %1346 = vst [vmem:[%s1062 + $0x234] sm:$0xf] %v1345
                  %v1347 = vld [vmem:[%s1061 + $0x470] sm:$0xf]
                  %1348 = vst [vmem:[%s1062 + $0x238] sm:$0xf] %v1347
                  %v1349 = vld [vmem:[%s1061 + $0x478] sm:$0xf]
                  %1350 = vst [vmem:[%s1062 + $0x23c] sm:$0xf] %v1349
                  %v1351 = vld [vmem:[%s1061 + $0x480] sm:$0xf]
                  %1352 = vst [vmem:[%s1062 + $0x240] sm:$0xf] %v1351
                  %v1353 = vld [vmem:[%s1061 + $0x488] sm:$0xf]
                  %1354 = vst [vmem:[%s1062 + $0x244] sm:$0xf] %v1353
                  %v1355 = vld [vmem:[%s1061 + $0x490] sm:$0xf]
                  %1356 = vst [vmem:[%s1062 + $0x248] sm:$0xf] %v1355
                  %v1357 = vld [vmem:[%s1061 + $0x498] sm:$0xf]
                  %1358 = vst [vmem:[%s1062 + $0x24c] sm:$0xf] %v1357
                  %v1359 = vld [vmem:[%s1061 + $0x4a0] sm:$0xf]
                  %1360 = vst [vmem:[%s1062 + $0x250] sm:$0xf] %v1359
                  %v1361 = vld [vmem:[%s1061 + $0x4a8] sm:$0xf]
                  %1362 = vst [vmem:[%s1062 + $0x254] sm:$0xf] %v1361
                  %v1363 = vld [vmem:[%s1061 + $0x4b0] sm:$0xf]
                  %1364 = vst [vmem:[%s1062 + $0x258] sm:$0xf] %v1363
                  %v1365 = vld [vmem:[%s1061 + $0x4b8] sm:$0xf]
                  %1366 = vst [vmem:[%s1062 + $0x25c] sm:$0xf] %v1365
                  %v1367 = vld [vmem:[%s1061 + $0x4c0] sm:$0xf]
                  %1368 = vst [vmem:[%s1062 + $0x260] sm:$0xf] %v1367
                  %v1369 = vld [vmem:[%s1061 + $0x4c8] sm:$0xf]
                  %1370 = vst [vmem:[%s1062 + $0x264] sm:$0xf] %v1369
                  %v1371 = vld [vmem:[%s1061 + $0x4d0] sm:$0xf]
                  %1372 = vst [vmem:[%s1062 + $0x268] sm:$0xf] %v1371
                  %v1373 = vld [vmem:[%s1061 + $0x4d8] sm:$0xf]
                  %1374 = vst [vmem:[%s1062 + $0x26c] sm:$0xf] %v1373
                  %v1375 = vld [vmem:[%s1061 + $0x4e0] sm:$0xf]
                  %1376 = vst [vmem:[%s1062 + $0x270] sm:$0xf] %v1375
                  %v1377 = vld [vmem:[%s1061 + $0x4e8] sm:$0xf]
                  %1378 = vst [vmem:[%s1062 + $0x274] sm:$0xf] %v1377
                  %v1379 = vld [vmem:[%s1061 + $0x4f0] sm:$0xf]
                  %1380 = vst [vmem:[%s1062 + $0x278] sm:$0xf] %v1379
                  %v1381 = vld [vmem:[%s1061 + $0x4f8] sm:$0xf]
                  %1382 = vst [vmem:[%s1062 + $0x27c] sm:$0xf] %v1381
                  %v1383 = vld [vmem:[%s1061 + $0x500] sm:$0xf]
                  %1384 = vst [vmem:[%s1062 + $0x280] sm:$0xf] %v1383
                  %v1385 = vld [vmem:[%s1061 + $0x508] sm:$0xf]
                  %1386 = vst [vmem:[%s1062 + $0x284] sm:$0xf] %v1385
                  %v1387 = vld [vmem:[%s1061 + $0x510] sm:$0xf]
                  %1388 = vst [vmem:[%s1062 + $0x288] sm:$0xf] %v1387
                  %v1389 = vld [vmem:[%s1061 + $0x518] sm:$0xf]
                  %1390 = vst [vmem:[%s1062 + $0x28c] sm:$0xf] %v1389
                  %v1391 = vld [vmem:[%s1061 + $0x520] sm:$0xf]
                  %1392 = vst [vmem:[%s1062 + $0x290] sm:$0xf] %v1391
                  %v1393 = vld [vmem:[%s1061 + $0x528] sm:$0xf]
                  %1394 = vst [vmem:[%s1062 + $0x294] sm:$0xf] %v1393
                  %v1395 = vld [vmem:[%s1061 + $0x530] sm:$0xf]
                  %1396 = vst [vmem:[%s1062 + $0x298] sm:$0xf] %v1395
                  %v1397 = vld [vmem:[%s1061 + $0x538] sm:$0xf]
                  %1398 = vst [vmem:[%s1062 + $0x29c] sm:$0xf] %v1397
                  %v1399 = vld [vmem:[%s1061 + $0x540] sm:$0xf]
                  %1400 = vst [vmem:[%s1062 + $0x2a0] sm:$0xf] %v1399
                  %v1401 = vld [vmem:[%s1061 + $0x548] sm:$0xf]
                  %1402 = vst [vmem:[%s1062 + $0x2a4] sm:$0xf] %v1401
                  %v1403 = vld [vmem:[%s1061 + $0x550] sm:$0xf]
                  %1404 = vst [vmem:[%s1062 + $0x2a8] sm:$0xf] %v1403
                  %v1405 = vld [vmem:[%s1061 + $0x558] sm:$0xf]
                  %1406 = vst [vmem:[%s1062 + $0x2ac] sm:$0xf] %v1405
                  %v1407 = vld [vmem:[%s1061 + $0x560] sm:$0xf]
                  %1408 = vst [vmem:[%s1062 + $0x2b0] sm:$0xf] %v1407
                  %v1409 = vld [vmem:[%s1061 + $0x568] sm:$0xf]
                  %1410 = vst [vmem:[%s1062 + $0x2b4] sm:$0xf] %v1409
                  %v1411 = vld [vmem:[%s1061 + $0x570] sm:$0xf]
                  %1412 = vst [vmem:[%s1062 + $0x2b8] sm:$0xf] %v1411
                  %v1413 = vld [vmem:[%s1061 + $0x578] sm:$0xf]
                  %1414 = vst [vmem:[%s1062 + $0x2bc] sm:$0xf] %v1413
                  %v1415 = vld [vmem:[%s1061 + $0x580] sm:$0xf]
                  %1416 = vst [vmem:[%s1062 + $0x2c0] sm:$0xf] %v1415
                  %v1417 = vld [vmem:[%s1061 + $0x588] sm:$0xf]
                  %1418 = vst [vmem:[%s1062 + $0x2c4] sm:$0xf] %v1417
                  %v1419 = vld [vmem:[%s1061 + $0x590] sm:$0xf]
                  %1420 = vst [vmem:[%s1062 + $0x2c8] sm:$0xf] %v1419
                  %v1421 = vld [vmem:[%s1061 + $0x598] sm:$0xf]
                  %1422 = vst [vmem:[%s1062 + $0x2cc] sm:$0xf] %v1421
                  %v1423 = vld [vmem:[%s1061 + $0x5a0] sm:$0xf]
                  %1424 = vst [vmem:[%s1062 + $0x2d0] sm:$0xf] %v1423
                  %v1425 = vld [vmem:[%s1061 + $0x5a8] sm:$0xf]
                  %1426 = vst [vmem:[%s1062 + $0x2d4] sm:$0xf] %v1425
                  %v1427 = vld [vmem:[%s1061 + $0x5b0] sm:$0xf]
                  %1428 = vst [vmem:[%s1062 + $0x2d8] sm:$0xf] %v1427
                  %v1429 = vld [vmem:[%s1061 + $0x5b8] sm:$0xf]
                  %1430 = vst [vmem:[%s1062 + $0x2dc] sm:$0xf] %v1429
                  %v1431 = vld [vmem:[%s1061 + $0x5c0] sm:$0xf]
                  %1432 = vst [vmem:[%s1062 + $0x2e0] sm:$0xf] %v1431
                  %v1433 = vld [vmem:[%s1061 + $0x5c8] sm:$0xf]
                  %1434 = vst [vmem:[%s1062 + $0x2e4] sm:$0xf] %v1433
                  %v1435 = vld [vmem:[%s1061 + $0x5d0] sm:$0xf]
                  %1436 = vst [vmem:[%s1062 + $0x2e8] sm:$0xf] %v1435
                  %v1437 = vld [vmem:[%s1061 + $0x5d8] sm:$0xf]
                  %1438 = vst [vmem:[%s1062 + $0x2ec] sm:$0xf] %v1437
                  %v1439 = vld [vmem:[%s1061 + $0x5e0] sm:$0xf]
                  %1440 = vst [vmem:[%s1062 + $0x2f0] sm:$0xf] %v1439
                  %v1441 = vld [vmem:[%s1061 + $0x5e8] sm:$0xf]
                  %1442 = vst [vmem:[%s1062 + $0x2f4] sm:$0xf] %v1441
                  %v1443 = vld [vmem:[%s1061 + $0x5f0] sm:$0xf]
                  %1444 = vst [vmem:[%s1062 + $0x2f8] sm:$0xf] %v1443
                  %v1445 = vld [vmem:[%s1061 + $0x5f8] sm:$0xf]
                  %1446 = vst [vmem:[%s1062 + $0x2fc] sm:$0xf] %v1445
                  %v1447 = vld [vmem:[%s1061 + $0x600] sm:$0xf]
                  %1448 = vst [vmem:[%s1062 + $0x300] sm:$0xf] %v1447
                  %v1449 = vld [vmem:[%s1061 + $0x608] sm:$0xf]
                  %1450 = vst [vmem:[%s1062 + $0x304] sm:$0xf] %v1449
                  %v1451 = vld [vmem:[%s1061 + $0x610] sm:$0xf]
                  %1452 = vst [vmem:[%s1062 + $0x308] sm:$0xf] %v1451
                  %v1453 = vld [vmem:[%s1061 + $0x618] sm:$0xf]
                  %1454 = vst [vmem:[%s1062 + $0x30c] sm:$0xf] %v1453
                  %v1455 = vld [vmem:[%s1061 + $0x620] sm:$0xf]
                  %1456 = vst [vmem:[%s1062 + $0x310] sm:$0xf] %v1455
                  %v1457 = vld [vmem:[%s1061 + $0x628] sm:$0xf]
                  %1458 = vst [vmem:[%s1062 + $0x314] sm:$0xf] %v1457
                  %v1459 = vld [vmem:[%s1061 + $0x630] sm:$0xf]
                  %1460 = vst [vmem:[%s1062 + $0x318] sm:$0xf] %v1459
                  %v1461 = vld [vmem:[%s1061 + $0x638] sm:$0xf]
                  %1462 = vst [vmem:[%s1062 + $0x31c] sm:$0xf] %v1461
                  %v1463 = vld [vmem:[%s1061 + $0x640] sm:$0xf]
                  %1464 = vst [vmem:[%s1062 + $0x320] sm:$0xf] %v1463
                  %v1465 = vld [vmem:[%s1061 + $0x648] sm:$0xf]
                  %1466 = vst [vmem:[%s1062 + $0x324] sm:$0xf] %v1465
                  %v1467 = vld [vmem:[%s1061 + $0x650] sm:$0xf]
                  %1468 = vst [vmem:[%s1062 + $0x328] sm:$0xf] %v1467
                  %v1469 = vld [vmem:[%s1061 + $0x658] sm:$0xf]
                  %1470 = vst [vmem:[%s1062 + $0x32c] sm:$0xf] %v1469
                  %v1471 = vld [vmem:[%s1061 + $0x660] sm:$0xf]
                  %1472 = vst [vmem:[%s1062 + $0x330] sm:$0xf] %v1471
                  %v1473 = vld [vmem:[%s1061 + $0x668] sm:$0xf]
                  %1474 = vst [vmem:[%s1062 + $0x334] sm:$0xf] %v1473
                  %v1475 = vld [vmem:[%s1061 + $0x670] sm:$0xf]
                  %1476 = vst [vmem:[%s1062 + $0x338] sm:$0xf] %v1475
                  %v1477 = vld [vmem:[%s1061 + $0x678] sm:$0xf]
                  %1478 = vst [vmem:[%s1062 + $0x33c] sm:$0xf] %v1477
                  %v1479 = vld [vmem:[%s1061 + $0x680] sm:$0xf]
                  %1480 = vst [vmem:[%s1062 + $0x340] sm:$0xf] %v1479
                  %v1481 = vld [vmem:[%s1061 + $0x688] sm:$0xf]
                  %1482 = vst [vmem:[%s1062 + $0x344] sm:$0xf] %v1481
                  %v1483 = vld [vmem:[%s1061 + $0x690] sm:$0xf]
                  %1484 = vst [vmem:[%s1062 + $0x348] sm:$0xf] %v1483
                  %v1485 = vld [vmem:[%s1061 + $0x698] sm:$0xf]
                  %1486 = vst [vmem:[%s1062 + $0x34c] sm:$0xf] %v1485
                  %v1487 = vld [vmem:[%s1061 + $0x6a0] sm:$0xf]
                  %1488 = vst [vmem:[%s1062 + $0x350] sm:$0xf] %v1487
                  %v1489 = vld [vmem:[%s1061 + $0x6a8] sm:$0xf]
                  %1490 = vst [vmem:[%s1062 + $0x354] sm:$0xf] %v1489
                  %v1491 = vld [vmem:[%s1061 + $0x6b0] sm:$0xf]
                  %1492 = vst [vmem:[%s1062 + $0x358] sm:$0xf] %v1491
                  %v1493 = vld [vmem:[%s1061 + $0x6b8] sm:$0xf]
                  %1494 = vst [vmem:[%s1062 + $0x35c] sm:$0xf] %v1493
                  %v1495 = vld [vmem:[%s1061 + $0x6c0] sm:$0xf]
                  %1496 = vst [vmem:[%s1062 + $0x360] sm:$0xf] %v1495
                  %v1497 = vld [vmem:[%s1061 + $0x6c8] sm:$0xf]
                  %1498 = vst [vmem:[%s1062 + $0x364] sm:$0xf] %v1497
                  %v1499 = vld [vmem:[%s1061 + $0x6d0] sm:$0xf]
                  %1500 = vst [vmem:[%s1062 + $0x368] sm:$0xf] %v1499
                  %v1501 = vld [vmem:[%s1061 + $0x6d8] sm:$0xf]
                  %1502 = vst [vmem:[%s1062 + $0x36c] sm:$0xf] %v1501
                  %v1503 = vld [vmem:[%s1061 + $0x6e0] sm:$0xf]
                  %1504 = vst [vmem:[%s1062 + $0x370] sm:$0xf] %v1503
                  %v1505 = vld [vmem:[%s1061 + $0x6e8] sm:$0xf]
                  %1506 = vst [vmem:[%s1062 + $0x374] sm:$0xf] %v1505
                  %v1507 = vld [vmem:[%s1061 + $0x6f0] sm:$0xf]
                  %1508 = vst [vmem:[%s1062 + $0x378] sm:$0xf] %v1507
                  %v1509 = vld [vmem:[%s1061 + $0x6f8] sm:$0xf]
                  %1510 = vst [vmem:[%s1062 + $0x37c] sm:$0xf] %v1509
                  %v1511 = vld [vmem:[%s1061 + $0x700] sm:$0xf]
                  %1512 = vst [vmem:[%s1062 + $0x380] sm:$0xf] %v1511
                  %v1513 = vld [vmem:[%s1061 + $0x708] sm:$0xf]
                  %1514 = vst [vmem:[%s1062 + $0x384] sm:$0xf] %v1513
                  %v1515 = vld [vmem:[%s1061 + $0x710] sm:$0xf]
                  %1516 = vst [vmem:[%s1062 + $0x388] sm:$0xf] %v1515
                  %v1517 = vld [vmem:[%s1061 + $0x718] sm:$0xf]
                  %1518 = vst [vmem:[%s1062 + $0x38c] sm:$0xf] %v1517
                  %v1519 = vld [vmem:[%s1061 + $0x720] sm:$0xf]
                  %1520 = vst [vmem:[%s1062 + $0x390] sm:$0xf] %v1519
                  %v1521 = vld [vmem:[%s1061 + $0x728] sm:$0xf]
                  %1522 = vst [vmem:[%s1062 + $0x394] sm:$0xf] %v1521
                  %v1523 = vld [vmem:[%s1061 + $0x730] sm:$0xf]
                  %1524 = vst [vmem:[%s1062 + $0x398] sm:$0xf] %v1523
                  %v1525 = vld [vmem:[%s1061 + $0x738] sm:$0xf]
                  %1526 = vst [vmem:[%s1062 + $0x39c] sm:$0xf] %v1525
                  %v1527 = vld [vmem:[%s1061 + $0x740] sm:$0xf]
                  %1528 = vst [vmem:[%s1062 + $0x3a0] sm:$0xf] %v1527
                  %v1529 = vld [vmem:[%s1061 + $0x748] sm:$0xf]
                  %1530 = vst [vmem:[%s1062 + $0x3a4] sm:$0xf] %v1529
                  %v1531 = vld [vmem:[%s1061 + $0x750] sm:$0xf]
                  %1532 = vst [vmem:[%s1062 + $0x3a8] sm:$0xf] %v1531
                  %v1533 = vld [vmem:[%s1061 + $0x758] sm:$0xf]
                  %1534 = vst [vmem:[%s1062 + $0x3ac] sm:$0xf] %v1533
                  %v1535 = vld [vmem:[%s1061 + $0x760] sm:$0xf]
                  %1536 = vst [vmem:[%s1062 + $0x3b0] sm:$0xf] %v1535
                  %v1537 = vld [vmem:[%s1061 + $0x768] sm:$0xf]
                  %1538 = vst [vmem:[%s1062 + $0x3b4] sm:$0xf] %v1537
                  %v1539 = vld [vmem:[%s1061 + $0x770] sm:$0xf]
                  %1540 = vst [vmem:[%s1062 + $0x3b8] sm:$0xf] %v1539
                  %v1541 = vld [vmem:[%s1061 + $0x778] sm:$0xf]
                  %1542 = vst [vmem:[%s1062 + $0x3bc] sm:$0xf] %v1541
                  %v1543 = vld [vmem:[%s1061 + $0x780] sm:$0xf]
                  %1544 = vst [vmem:[%s1062 + $0x3c0] sm:$0xf] %v1543
                  %v1545 = vld [vmem:[%s1061 + $0x788] sm:$0xf]
                  %1546 = vst [vmem:[%s1062 + $0x3c4] sm:$0xf] %v1545
                  %v1547 = vld [vmem:[%s1061 + $0x790] sm:$0xf]
                  %1548 = vst [vmem:[%s1062 + $0x3c8] sm:$0xf] %v1547
                  %v1549 = vld [vmem:[%s1061 + $0x798] sm:$0xf]
                  %1550 = vst [vmem:[%s1062 + $0x3cc] sm:$0xf] %v1549
                  %v1551 = vld [vmem:[%s1061 + $0x7a0] sm:$0xf]
                  %1552 = vst [vmem:[%s1062 + $0x3d0] sm:$0xf] %v1551
                  %v1553 = vld [vmem:[%s1061 + $0x7a8] sm:$0xf]
                  %1554 = vst [vmem:[%s1062 + $0x3d4] sm:$0xf] %v1553
                  %v1555 = vld [vmem:[%s1061 + $0x7b0] sm:$0xf]
                  %1556 = vst [vmem:[%s1062 + $0x3d8] sm:$0xf] %v1555
                  %v1557 = vld [vmem:[%s1061 + $0x7b8] sm:$0xf]
                  %1558 = vst [vmem:[%s1062 + $0x3dc] sm:$0xf] %v1557
                  %v1559 = vld [vmem:[%s1061 + $0x7c0] sm:$0xf]
                  %1560 = vst [vmem:[%s1062 + $0x3e0] sm:$0xf] %v1559
                  %v1561 = vld [vmem:[%s1061 + $0x7c8] sm:$0xf]
                  %1562 = vst [vmem:[%s1062 + $0x3e4] sm:$0xf] %v1561
                  %v1563 = vld [vmem:[%s1061 + $0x7d0] sm:$0xf]
                  %1564 = vst [vmem:[%s1062 + $0x3e8] sm:$0xf] %v1563
                  %v1565 = vld [vmem:[%s1061 + $0x7d8] sm:$0xf]
                  %1566 = vst [vmem:[%s1062 + $0x3ec] sm:$0xf] %v1565
                  %v1567 = vld [vmem:[%s1061 + $0x7e0] sm:$0xf]
                  %1568 = vst [vmem:[%s1062 + $0x3f0] sm:$0xf] %v1567
                  %v1569 = vld [vmem:[%s1061 + $0x7e8] sm:$0xf]
                  %1570 = vst [vmem:[%s1062 + $0x3f4] sm:$0xf] %v1569
                  %v1571 = vld [vmem:[%s1061 + $0x7f0] sm:$0xf]
                  %1572 = vst [vmem:[%s1062 + $0x3f8] sm:$0xf] %v1571
                  %v1573 = vld [vmem:[%s1061 + $0x7f8] sm:$0xf]
                  %1574 = vst [vmem:[%s1062 + $0x3fc] sm:$0xf] %v1573
                  %v1575 = vld [vmem:[%s1061 + $0x800] sm:$0xf]
                  %1576 = vst [vmem:[%s1062 + $0x400] sm:$0xf] %v1575
                  %v1577 = vld [vmem:[%s1061 + $0x808] sm:$0xf]
                  %1578 = vst [vmem:[%s1062 + $0x404] sm:$0xf] %v1577
                  %v1579 = vld [vmem:[%s1061 + $0x810] sm:$0xf]
                  %1580 = vst [vmem:[%s1062 + $0x408] sm:$0xf] %v1579
                  %v1581 = vld [vmem:[%s1061 + $0x818] sm:$0xf]
                  %1582 = vst [vmem:[%s1062 + $0x40c] sm:$0xf] %v1581
                  %v1583 = vld [vmem:[%s1061 + $0x820] sm:$0xf]
                  %1584 = vst [vmem:[%s1062 + $0x410] sm:$0xf] %v1583
                  %v1585 = vld [vmem:[%s1061 + $0x828] sm:$0xf]
                  %1586 = vst [vmem:[%s1062 + $0x414] sm:$0xf] %v1585
                  %v1587 = vld [vmem:[%s1061 + $0x830] sm:$0xf]
                  %1588 = vst [vmem:[%s1062 + $0x418] sm:$0xf] %v1587
                  %v1589 = vld [vmem:[%s1061 + $0x838] sm:$0xf]
                  %1590 = vst [vmem:[%s1062 + $0x41c] sm:$0xf] %v1589
                  %v1591 = vld [vmem:[%s1061 + $0x840] sm:$0xf]
                  %1592 = vst [vmem:[%s1062 + $0x420] sm:$0xf] %v1591
                  %v1593 = vld [vmem:[%s1061 + $0x848] sm:$0xf]
                  %1594 = vst [vmem:[%s1062 + $0x424] sm:$0xf] %v1593
                  %v1595 = vld [vmem:[%s1061 + $0x850] sm:$0xf]
                  %1596 = vst [vmem:[%s1062 + $0x428] sm:$0xf] %v1595
                  %v1597 = vld [vmem:[%s1061 + $0x858] sm:$0xf]
                  %1598 = vst [vmem:[%s1062 + $0x42c] sm:$0xf] %v1597
                  %v1599 = vld [vmem:[%s1061 + $0x860] sm:$0xf]
                  %1600 = vst [vmem:[%s1062 + $0x430] sm:$0xf] %v1599
                  %v1601 = vld [vmem:[%s1061 + $0x868] sm:$0xf]
                  %1602 = vst [vmem:[%s1062 + $0x434] sm:$0xf] %v1601
                  %v1603 = vld [vmem:[%s1061 + $0x870] sm:$0xf]
                  %1604 = vst [vmem:[%s1062 + $0x438] sm:$0xf] %v1603
                  %v1605 = vld [vmem:[%s1061 + $0x878] sm:$0xf]
                  %1606 = vst [vmem:[%s1062 + $0x43c] sm:$0xf] %v1605
                  %v1607 = vld [vmem:[%s1061 + $0x880] sm:$0xf]
                  %1608 = vst [vmem:[%s1062 + $0x440] sm:$0xf] %v1607
                  %v1609 = vld [vmem:[%s1061 + $0x888] sm:$0xf]
                  %1610 = vst [vmem:[%s1062 + $0x444] sm:$0xf] %v1609
                  %v1611 = vld [vmem:[%s1061 + $0x890] sm:$0xf]
                  %1612 = vst [vmem:[%s1062 + $0x448] sm:$0xf] %v1611
                  %v1613 = vld [vmem:[%s1061 + $0x898] sm:$0xf]
                  %1614 = vst [vmem:[%s1062 + $0x44c] sm:$0xf] %v1613
                  %v1615 = vld [vmem:[%s1061 + $0x8a0] sm:$0xf]
                  %1616 = vst [vmem:[%s1062 + $0x450] sm:$0xf] %v1615
                  %v1617 = vld [vmem:[%s1061 + $0x8a8] sm:$0xf]
                  %1618 = vst [vmem:[%s1062 + $0x454] sm:$0xf] %v1617
                  %v1619 = vld [vmem:[%s1061 + $0x8b0] sm:$0xf]
                  %1620 = vst [vmem:[%s1062 + $0x458] sm:$0xf] %v1619
                  %v1621 = vld [vmem:[%s1061 + $0x8b8] sm:$0xf]
                  %1622 = vst [vmem:[%s1062 + $0x45c] sm:$0xf] %v1621
                  %v1623 = vld [vmem:[%s1061 + $0x8c0] sm:$0xf]
                  %1624 = vst [vmem:[%s1062 + $0x460] sm:$0xf] %v1623
                  %v1625 = vld [vmem:[%s1061 + $0x8c8] sm:$0xf]
                  %1626 = vst [vmem:[%s1062 + $0x464] sm:$0xf] %v1625
                  %v1627 = vld [vmem:[%s1061 + $0x8d0] sm:$0xf]
                  %1628 = vst [vmem:[%s1062 + $0x468] sm:$0xf] %v1627
                  %v1629 = vld [vmem:[%s1061 + $0x8d8] sm:$0xf]
                  %1630 = vst [vmem:[%s1062 + $0x46c] sm:$0xf] %v1629
                  %v1631 = vld [vmem:[%s1061 + $0x8e0] sm:$0xf]
                  %1632 = vst [vmem:[%s1062 + $0x470] sm:$0xf] %v1631
                  %v1633 = vld [vmem:[%s1061 + $0x8e8] sm:$0xf]
                  %1634 = vst [vmem:[%s1062 + $0x474] sm:$0xf] %v1633
                  %v1635 = vld [vmem:[%s1061 + $0x8f0] sm:$0xf]
                  %1636 = vst [vmem:[%s1062 + $0x478] sm:$0xf] %v1635
                  %v1637 = vld [vmem:[%s1061 + $0x8f8] sm:$0xf]
                  %1638 = vst [vmem:[%s1062 + $0x47c] sm:$0xf] %v1637
                  %v1639 = vld [vmem:[%s1061 + $0x900] sm:$0xf]
                  %1640 = vst [vmem:[%s1062 + $0x480] sm:$0xf] %v1639
                  %v1641 = vld [vmem:[%s1061 + $0x908] sm:$0xf]
                  %1642 = vst [vmem:[%s1062 + $0x484] sm:$0xf] %v1641
                  %v1643 = vld [vmem:[%s1061 + $0x910] sm:$0xf]
                  %1644 = vst [vmem:[%s1062 + $0x488] sm:$0xf] %v1643
                  %v1645 = vld [vmem:[%s1061 + $0x918] sm:$0xf]
                  %1646 = vst [vmem:[%s1062 + $0x48c] sm:$0xf] %v1645
                  %v1647 = vld [vmem:[%s1061 + $0x920] sm:$0xf]
                  %1648 = vst [vmem:[%s1062 + $0x490] sm:$0xf] %v1647
                  %v1649 = vld [vmem:[%s1061 + $0x928] sm:$0xf]
                  %1650 = vst [vmem:[%s1062 + $0x494] sm:$0xf] %v1649
                  %v1651 = vld [vmem:[%s1061 + $0x930] sm:$0xf]
                  %1652 = vst [vmem:[%s1062 + $0x498] sm:$0xf] %v1651
                  %v1653 = vld [vmem:[%s1061 + $0x938] sm:$0xf]
                  %1654 = vst [vmem:[%s1062 + $0x49c] sm:$0xf] %v1653
                  %v1655 = vld [vmem:[%s1061 + $0x940] sm:$0xf]
                  %1656 = vst [vmem:[%s1062 + $0x4a0] sm:$0xf] %v1655
                  %v1657 = vld [vmem:[%s1061 + $0x948] sm:$0xf]
                  %1658 = vst [vmem:[%s1062 + $0x4a4] sm:$0xf] %v1657
                  %v1659 = vld [vmem:[%s1061 + $0x950] sm:$0xf]
                  %1660 = vst [vmem:[%s1062 + $0x4a8] sm:$0xf] %v1659
                  %v1661 = vld [vmem:[%s1061 + $0x958] sm:$0xf]
                  %1662 = vst [vmem:[%s1062 + $0x4ac] sm:$0xf] %v1661
                  %v1663 = vld [vmem:[%s1061 + $0x960] sm:$0xf]
                  %1664 = vst [vmem:[%s1062 + $0x4b0] sm:$0xf] %v1663
                  %v1665 = vld [vmem:[%s1061 + $0x968] sm:$0xf]
                  %1666 = vst [vmem:[%s1062 + $0x4b4] sm:$0xf] %v1665
                  %v1667 = vld [vmem:[%s1061 + $0x970] sm:$0xf]
                  %1668 = vst [vmem:[%s1062 + $0x4b8] sm:$0xf] %v1667
                  %v1669 = vld [vmem:[%s1061 + $0x978] sm:$0xf]
                  %1670 = vst [vmem:[%s1062 + $0x4bc] sm:$0xf] %v1669
                  %v1671 = vld [vmem:[%s1061 + $0x980] sm:$0xf]
                  %1672 = vst [vmem:[%s1062 + $0x4c0] sm:$0xf] %v1671
                  %v1673 = vld [vmem:[%s1061 + $0x988] sm:$0xf]
                  %1674 = vst [vmem:[%s1062 + $0x4c4] sm:$0xf] %v1673
                  %v1675 = vld [vmem:[%s1061 + $0x990] sm:$0xf]
                  %1676 = vst [vmem:[%s1062 + $0x4c8] sm:$0xf] %v1675
                  %v1677 = vld [vmem:[%s1061 + $0x998] sm:$0xf]
                  %1678 = vst [vmem:[%s1062 + $0x4cc] sm:$0xf] %v1677
                  %v1679 = vld [vmem:[%s1061 + $0x9a0] sm:$0xf]
                  %1680 = vst [vmem:[%s1062 + $0x4d0] sm:$0xf] %v1679
                  %v1681 = vld [vmem:[%s1061 + $0x9a8] sm:$0xf]
                  %1682 = vst [vmem:[%s1062 + $0x4d4] sm:$0xf] %v1681
                  %v1683 = vld [vmem:[%s1061 + $0x9b0] sm:$0xf]
                  %1684 = vst [vmem:[%s1062 + $0x4d8] sm:$0xf] %v1683
                  %v1685 = vld [vmem:[%s1061 + $0x9b8] sm:$0xf]
                  %1686 = vst [vmem:[%s1062 + $0x4dc] sm:$0xf] %v1685
                  %v1687 = vld [vmem:[%s1061 + $0x9c0] sm:$0xf]
                  %1688 = vst [vmem:[%s1062 + $0x4e0] sm:$0xf] %v1687
                  %v1689 = vld [vmem:[%s1061 + $0x9c8] sm:$0xf]
                  %1690 = vst [vmem:[%s1062 + $0x4e4] sm:$0xf] %v1689
                  %v1691 = vld [vmem:[%s1061 + $0x9d0] sm:$0xf]
                  %1692 = vst [vmem:[%s1062 + $0x4e8] sm:$0xf] %v1691
                  %v1693 = vld [vmem:[%s1061 + $0x9d8] sm:$0xf]
                  %1694 = vst [vmem:[%s1062 + $0x4ec] sm:$0xf] %v1693
                  %v1695 = vld [vmem:[%s1061 + $0x9e0] sm:$0xf]
                  %1696 = vst [vmem:[%s1062 + $0x4f0] sm:$0xf] %v1695
                  %v1697 = vld [vmem:[%s1061 + $0x9e8] sm:$0xf]
                  %1698 = vst [vmem:[%s1062 + $0x4f4] sm:$0xf] %v1697
                  %v1699 = vld [vmem:[%s1061 + $0x9f0] sm:$0xf]
                  %1700 = vst [vmem:[%s1062 + $0x4f8] sm:$0xf] %v1699
                  %v1701 = vld [vmem:[%s1061 + $0x9f8] sm:$0xf]
                  %1702 = vst [vmem:[%s1062 + $0x4fc] sm:$0xf] %v1701
                  %v1703 = vld [vmem:[%s1061 + $0xa00] sm:$0xf]
                  %1704 = vst [vmem:[%s1062 + $0x500] sm:$0xf] %v1703
                  %v1705 = vld [vmem:[%s1061 + $0xa08] sm:$0xf]
                  %1706 = vst [vmem:[%s1062 + $0x504] sm:$0xf] %v1705
                  %v1707 = vld [vmem:[%s1061 + $0xa10] sm:$0xf]
                  %1708 = vst [vmem:[%s1062 + $0x508] sm:$0xf] %v1707
                  %v1709 = vld [vmem:[%s1061 + $0xa18] sm:$0xf]
                  %1710 = vst [vmem:[%s1062 + $0x50c] sm:$0xf] %v1709
                  %v1711 = vld [vmem:[%s1061 + $0xa20] sm:$0xf]
                  %1712 = vst [vmem:[%s1062 + $0x510] sm:$0xf] %v1711
                  %v1713 = vld [vmem:[%s1061 + $0xa28] sm:$0xf]
                  %1714 = vst [vmem:[%s1062 + $0x514] sm:$0xf] %v1713
                  %v1715 = vld [vmem:[%s1061 + $0xa30] sm:$0xf]
                  %1716 = vst [vmem:[%s1062 + $0x518] sm:$0xf] %v1715
                  %v1717 = vld [vmem:[%s1061 + $0xa38] sm:$0xf]
                  %1718 = vst [vmem:[%s1062 + $0x51c] sm:$0xf] %v1717
                  %v1719 = vld [vmem:[%s1061 + $0xa40] sm:$0xf]
                  %1720 = vst [vmem:[%s1062 + $0x520] sm:$0xf] %v1719
                  %v1721 = vld [vmem:[%s1061 + $0xa48] sm:$0xf]
                  %1722 = vst [vmem:[%s1062 + $0x524] sm:$0xf] %v1721
                  %v1723 = vld [vmem:[%s1061 + $0xa50] sm:$0xf]
                  %1724 = vst [vmem:[%s1062 + $0x528] sm:$0xf] %v1723
                  %v1725 = vld [vmem:[%s1061 + $0xa58] sm:$0xf]
                  %1726 = vst [vmem:[%s1062 + $0x52c] sm:$0xf] %v1725
                  %v1727 = vld [vmem:[%s1061 + $0xa60] sm:$0xf]
                  %1728 = vst [vmem:[%s1062 + $0x530] sm:$0xf] %v1727
                  %v1729 = vld [vmem:[%s1061 + $0xa68] sm:$0xf]
                  %1730 = vst [vmem:[%s1062 + $0x534] sm:$0xf] %v1729
                  %v1731 = vld [vmem:[%s1061 + $0xa70] sm:$0xf]
                  %1732 = vst [vmem:[%s1062 + $0x538] sm:$0xf] %v1731
                  %v1733 = vld [vmem:[%s1061 + $0xa78] sm:$0xf]
                  %1734 = vst [vmem:[%s1062 + $0x53c] sm:$0xf] %v1733
                  %v1735 = vld [vmem:[%s1061 + $0xa80] sm:$0xf]
                  %1736 = vst [vmem:[%s1062 + $0x540] sm:$0xf] %v1735
                  %v1737 = vld [vmem:[%s1061 + $0xa88] sm:$0xf]
                  %1738 = vst [vmem:[%s1062 + $0x544] sm:$0xf] %v1737
                  %v1739 = vld [vmem:[%s1061 + $0xa90] sm:$0xf]
                  %1740 = vst [vmem:[%s1062 + $0x548] sm:$0xf] %v1739
                  %v1741 = vld [vmem:[%s1061 + $0xa98] sm:$0xf]
                  %1742 = vst [vmem:[%s1062 + $0x54c] sm:$0xf] %v1741
                  %v1743 = vld [vmem:[%s1061 + $0xaa0] sm:$0xf]
                  %1744 = vst [vmem:[%s1062 + $0x550] sm:$0xf] %v1743
                  %v1745 = vld [vmem:[%s1061 + $0xaa8] sm:$0xf]
                  %1746 = vst [vmem:[%s1062 + $0x554] sm:$0xf] %v1745
                  %v1747 = vld [vmem:[%s1061 + $0xab0] sm:$0xf]
                  %1748 = vst [vmem:[%s1062 + $0x558] sm:$0xf] %v1747
                  %v1749 = vld [vmem:[%s1061 + $0xab8] sm:$0xf]
                  %1750 = vst [vmem:[%s1062 + $0x55c] sm:$0xf] %v1749
                  %v1751 = vld [vmem:[%s1061 + $0xac0] sm:$0xf]
                  %1752 = vst [vmem:[%s1062 + $0x560] sm:$0xf] %v1751
                  %v1753 = vld [vmem:[%s1061 + $0xac8] sm:$0xf]
                  %1754 = vst [vmem:[%s1062 + $0x564] sm:$0xf] %v1753
                  %v1755 = vld [vmem:[%s1061 + $0xad0] sm:$0xf]
                  %1756 = vst [vmem:[%s1062 + $0x568] sm:$0xf] %v1755
                  %v1757 = vld [vmem:[%s1061 + $0xad8] sm:$0xf]
                  %1758 = vst [vmem:[%s1062 + $0x56c] sm:$0xf] %v1757
                  %v1759 = vld [vmem:[%s1061 + $0xae0] sm:$0xf]
                  %1760 = vst [vmem:[%s1062 + $0x570] sm:$0xf] %v1759
                  %v1761 = vld [vmem:[%s1061 + $0xae8] sm:$0xf]
                  %1762 = vst [vmem:[%s1062 + $0x574] sm:$0xf] %v1761
                  %v1763 = vld [vmem:[%s1061 + $0xaf0] sm:$0xf]
                  %1764 = vst [vmem:[%s1062 + $0x578] sm:$0xf] %v1763
                  %v1765 = vld [vmem:[%s1061 + $0xaf8] sm:$0xf]
                  %1766 = vst [vmem:[%s1062 + $0x57c] sm:$0xf] %v1765
                  %v1767 = vld [vmem:[%s1061 + $0xb00] sm:$0xf]
                  %1768 = vst [vmem:[%s1062 + $0x580] sm:$0xf] %v1767
                  %v1769 = vld [vmem:[%s1061 + $0xb08] sm:$0xf]
                  %1770 = vst [vmem:[%s1062 + $0x584] sm:$0xf] %v1769
                  %v1771 = vld [vmem:[%s1061 + $0xb10] sm:$0xf]
                  %1772 = vst [vmem:[%s1062 + $0x588] sm:$0xf] %v1771
                  %v1773 = vld [vmem:[%s1061 + $0xb18] sm:$0xf]
                  %1774 = vst [vmem:[%s1062 + $0x58c] sm:$0xf] %v1773
                  %v1775 = vld [vmem:[%s1061 + $0xb20] sm:$0xf]
                  %1776 = vst [vmem:[%s1062 + $0x590] sm:$0xf] %v1775
                  %v1777 = vld [vmem:[%s1061 + $0xb28] sm:$0xf]
                  %1778 = vst [vmem:[%s1062 + $0x594] sm:$0xf] %v1777
                  %v1779 = vld [vmem:[%s1061 + $0xb30] sm:$0xf]
                  %1780 = vst [vmem:[%s1062 + $0x598] sm:$0xf] %v1779
                  %v1781 = vld [vmem:[%s1061 + $0xb38] sm:$0xf]
                  %1782 = vst [vmem:[%s1062 + $0x59c] sm:$0xf] %v1781
                  %v1783 = vld [vmem:[%s1061 + $0xb40] sm:$0xf]
                  %1784 = vst [vmem:[%s1062 + $0x5a0] sm:$0xf] %v1783
                  %v1785 = vld [vmem:[%s1061 + $0xb48] sm:$0xf]
                  %1786 = vst [vmem:[%s1062 + $0x5a4] sm:$0xf] %v1785
                  %v1787 = vld [vmem:[%s1061 + $0xb50] sm:$0xf]
                  %1788 = vst [vmem:[%s1062 + $0x5a8] sm:$0xf] %v1787
                  %v1789 = vld [vmem:[%s1061 + $0xb58] sm:$0xf]
                  %1790 = vst [vmem:[%s1062 + $0x5ac] sm:$0xf] %v1789
                  %v1791 = vld [vmem:[%s1061 + $0xb60] sm:$0xf]
                  %1792 = vst [vmem:[%s1062 + $0x5b0] sm:$0xf] %v1791
                  %v1793 = vld [vmem:[%s1061 + $0xb68] sm:$0xf]
                  %1794 = vst [vmem:[%s1062 + $0x5b4] sm:$0xf] %v1793
                  %v1795 = vld [vmem:[%s1061 + $0xb70] sm:$0xf]
                  %1796 = vst [vmem:[%s1062 + $0x5b8] sm:$0xf] %v1795
                  %v1797 = vld [vmem:[%s1061 + $0xb78] sm:$0xf]
                  %1798 = vst [vmem:[%s1062 + $0x5bc] sm:$0xf] %v1797
                  %v1799 = vld [vmem:[%s1061 + $0xb80] sm:$0xf]
                  %1800 = vst [vmem:[%s1062 + $0x5c0] sm:$0xf] %v1799
                  %v1801 = vld [vmem:[%s1061 + $0xb88] sm:$0xf]
                  %1802 = vst [vmem:[%s1062 + $0x5c4] sm:$0xf] %v1801
                  %v1803 = vld [vmem:[%s1061 + $0xb90] sm:$0xf]
                  %1804 = vst [vmem:[%s1062 + $0x5c8] sm:$0xf] %v1803
                  %v1805 = vld [vmem:[%s1061 + $0xb98] sm:$0xf]
                  %1806 = vst [vmem:[%s1062 + $0x5cc] sm:$0xf] %v1805
                  %v1807 = vld [vmem:[%s1061 + $0xba0] sm:$0xf]
                  %1808 = vst [vmem:[%s1062 + $0x5d0] sm:$0xf] %v1807
                  %v1809 = vld [vmem:[%s1061 + $0xba8] sm:$0xf]
                  %1810 = vst [vmem:[%s1062 + $0x5d4] sm:$0xf] %v1809
                  %v1811 = vld [vmem:[%s1061 + $0xbb0] sm:$0xf]
                  %1812 = vst [vmem:[%s1062 + $0x5d8] sm:$0xf] %v1811
                  %v1813 = vld [vmem:[%s1061 + $0xbb8] sm:$0xf]
                  %1814 = vst [vmem:[%s1062 + $0x5dc] sm:$0xf] %v1813
                  %v1815 = vld [vmem:[%s1061 + $0xbc0] sm:$0xf]
                  %1816 = vst [vmem:[%s1062 + $0x5e0] sm:$0xf] %v1815
                  %v1817 = vld [vmem:[%s1061 + $0xbc8] sm:$0xf]
                  %1818 = vst [vmem:[%s1062 + $0x5e4] sm:$0xf] %v1817
                  %v1819 = vld [vmem:[%s1061 + $0xbd0] sm:$0xf]
                  %1820 = vst [vmem:[%s1062 + $0x5e8] sm:$0xf] %v1819
                  %v1821 = vld [vmem:[%s1061 + $0xbd8] sm:$0xf]
                  %1822 = vst [vmem:[%s1062 + $0x5ec] sm:$0xf] %v1821
                  %v1823 = vld [vmem:[%s1061 + $0xbe0] sm:$0xf]
                  %1824 = vst [vmem:[%s1062 + $0x5f0] sm:$0xf] %v1823
                  %v1825 = vld [vmem:[%s1061 + $0xbe8] sm:$0xf]
                  %1826 = vst [vmem:[%s1062 + $0x5f4] sm:$0xf] %v1825
                  %v1827 = vld [vmem:[%s1061 + $0xbf0] sm:$0xf]
                  %1828 = vst [vmem:[%s1062 + $0x5f8] sm:$0xf] %v1827
                  %v1829 = vld [vmem:[%s1061 + $0xbf8] sm:$0xf]
                  %1830 = vst [vmem:[%s1062 + $0x5fc] sm:$0xf] %v1829
                  %v1831 = vld [vmem:[%s1061 + $0xc00] sm:$0xf]
                  %1832 = vst [vmem:[%s1062 + $0x600] sm:$0xf] %v1831
                  %v1833 = vld [vmem:[%s1061 + $0xc08] sm:$0xf]
                  %1834 = vst [vmem:[%s1062 + $0x604] sm:$0xf] %v1833
                  %v1835 = vld [vmem:[%s1061 + $0xc10] sm:$0xf]
                  %1836 = vst [vmem:[%s1062 + $0x608] sm:$0xf] %v1835
                  %v1837 = vld [vmem:[%s1061 + $0xc18] sm:$0xf]
                  %1838 = vst [vmem:[%s1062 + $0x60c] sm:$0xf] %v1837
                  %v1839 = vld [vmem:[%s1061 + $0xc20] sm:$0xf]
                  %1840 = vst [vmem:[%s1062 + $0x610] sm:$0xf] %v1839
                  %v1841 = vld [vmem:[%s1061 + $0xc28] sm:$0xf]
                  %1842 = vst [vmem:[%s1062 + $0x614] sm:$0xf] %v1841
                  %v1843 = vld [vmem:[%s1061 + $0xc30] sm:$0xf]
                  %1844 = vst [vmem:[%s1062 + $0x618] sm:$0xf] %v1843
                  %v1845 = vld [vmem:[%s1061 + $0xc38] sm:$0xf]
                  %1846 = vst [vmem:[%s1062 + $0x61c] sm:$0xf] %v1845
                  %v1847 = vld [vmem:[%s1061 + $0xc40] sm:$0xf]
                  %1848 = vst [vmem:[%s1062 + $0x620] sm:$0xf] %v1847
                  %v1849 = vld [vmem:[%s1061 + $0xc48] sm:$0xf]
                  %1850 = vst [vmem:[%s1062 + $0x624] sm:$0xf] %v1849
                  %v1851 = vld [vmem:[%s1061 + $0xc50] sm:$0xf]
                  %1852 = vst [vmem:[%s1062 + $0x628] sm:$0xf] %v1851
                  %v1853 = vld [vmem:[%s1061 + $0xc58] sm:$0xf]
                  %1854 = vst [vmem:[%s1062 + $0x62c] sm:$0xf] %v1853
                  %v1855 = vld [vmem:[%s1061 + $0xc60] sm:$0xf]
                  %1856 = vst [vmem:[%s1062 + $0x630] sm:$0xf] %v1855
                  %v1857 = vld [vmem:[%s1061 + $0xc68] sm:$0xf]
                  %1858 = vst [vmem:[%s1062 + $0x634] sm:$0xf] %v1857
                  %v1859 = vld [vmem:[%s1061 + $0xc70] sm:$0xf]
                  %1860 = vst [vmem:[%s1062 + $0x638] sm:$0xf] %v1859
                  %v1861 = vld [vmem:[%s1061 + $0xc78] sm:$0xf]
                  %1862 = vst [vmem:[%s1062 + $0x63c] sm:$0xf] %v1861
                  %v1863 = vld [vmem:[%s1061 + $0xc80] sm:$0xf]
                  %1864 = vst [vmem:[%s1062 + $0x640] sm:$0xf] %v1863
                  %v1865 = vld [vmem:[%s1061 + $0xc88] sm:$0xf]
                  %1866 = vst [vmem:[%s1062 + $0x644] sm:$0xf] %v1865
                  %v1867 = vld [vmem:[%s1061 + $0xc90] sm:$0xf]
                  %1868 = vst [vmem:[%s1062 + $0x648] sm:$0xf] %v1867
                  %v1869 = vld [vmem:[%s1061 + $0xc98] sm:$0xf]
                  %1870 = vst [vmem:[%s1062 + $0x64c] sm:$0xf] %v1869
                  %v1871 = vld [vmem:[%s1061 + $0xca0] sm:$0xf]
                  %1872 = vst [vmem:[%s1062 + $0x650] sm:$0xf] %v1871
                  %v1873 = vld [vmem:[%s1061 + $0xca8] sm:$0xf]
                  %1874 = vst [vmem:[%s1062 + $0x654] sm:$0xf] %v1873
                  %v1875 = vld [vmem:[%s1061 + $0xcb0] sm:$0xf]
                  %1876 = vst [vmem:[%s1062 + $0x658] sm:$0xf] %v1875
                  %v1877 = vld [vmem:[%s1061 + $0xcb8] sm:$0xf]
                  %1878 = vst [vmem:[%s1062 + $0x65c] sm:$0xf] %v1877
                  %v1879 = vld [vmem:[%s1061 + $0xcc0] sm:$0xf]
                  %1880 = vst [vmem:[%s1062 + $0x660] sm:$0xf] %v1879
                  %v1881 = vld [vmem:[%s1061 + $0xcc8] sm:$0xf]
                  %1882 = vst [vmem:[%s1062 + $0x664] sm:$0xf] %v1881
                  %v1883 = vld [vmem:[%s1061 + $0xcd0] sm:$0xf]
                  %1884 = vst [vmem:[%s1062 + $0x668] sm:$0xf] %v1883
                  %v1885 = vld [vmem:[%s1061 + $0xcd8] sm:$0xf]
                  %1886 = vst [vmem:[%s1062 + $0x66c] sm:$0xf] %v1885
                  %v1887 = vld [vmem:[%s1061 + $0xce0] sm:$0xf]
                  %1888 = vst [vmem:[%s1062 + $0x670] sm:$0xf] %v1887
                  %v1889 = vld [vmem:[%s1061 + $0xce8] sm:$0xf]
                  %1890 = vst [vmem:[%s1062 + $0x674] sm:$0xf] %v1889
                  %v1891 = vld [vmem:[%s1061 + $0xcf0] sm:$0xf]
                  %1892 = vst [vmem:[%s1062 + $0x678] sm:$0xf] %v1891
                  %v1893 = vld [vmem:[%s1061 + $0xcf8] sm:$0xf]
                  %1894 = vst [vmem:[%s1062 + $0x67c] sm:$0xf] %v1893
                  %v1895 = vld [vmem:[%s1061 + $0xd00] sm:$0xf]
                  %1896 = vst [vmem:[%s1062 + $0x680] sm:$0xf] %v1895
                  %v1897 = vld [vmem:[%s1061 + $0xd08] sm:$0xf]
                  %1898 = vst [vmem:[%s1062 + $0x684] sm:$0xf] %v1897
                  %v1899 = vld [vmem:[%s1061 + $0xd10] sm:$0xf]
                  %1900 = vst [vmem:[%s1062 + $0x688] sm:$0xf] %v1899
                  %v1901 = vld [vmem:[%s1061 + $0xd18] sm:$0xf]
                  %1902 = vst [vmem:[%s1062 + $0x68c] sm:$0xf] %v1901
                  %v1903 = vld [vmem:[%s1061 + $0xd20] sm:$0xf]
                  %1904 = vst [vmem:[%s1062 + $0x690] sm:$0xf] %v1903
                  %v1905 = vld [vmem:[%s1061 + $0xd28] sm:$0xf]
                  %1906 = vst [vmem:[%s1062 + $0x694] sm:$0xf] %v1905
                  %v1907 = vld [vmem:[%s1061 + $0xd30] sm:$0xf]
                  %1908 = vst [vmem:[%s1062 + $0x698] sm:$0xf] %v1907
                  %v1909 = vld [vmem:[%s1061 + $0xd38] sm:$0xf]
                  %1910 = vst [vmem:[%s1062 + $0x69c] sm:$0xf] %v1909
                  %v1911 = vld [vmem:[%s1061 + $0xd40] sm:$0xf]
                  %1912 = vst [vmem:[%s1062 + $0x6a0] sm:$0xf] %v1911
                  %v1913 = vld [vmem:[%s1061 + $0xd48] sm:$0xf]
                  %1914 = vst [vmem:[%s1062 + $0x6a4] sm:$0xf] %v1913
                  %v1915 = vld [vmem:[%s1061 + $0xd50] sm:$0xf]
                  %1916 = vst [vmem:[%s1062 + $0x6a8] sm:$0xf] %v1915
                  %v1917 = vld [vmem:[%s1061 + $0xd58] sm:$0xf]
                  %1918 = vst [vmem:[%s1062 + $0x6ac] sm:$0xf] %v1917
                  %v1919 = vld [vmem:[%s1061 + $0xd60] sm:$0xf]
                  %1920 = vst [vmem:[%s1062 + $0x6b0] sm:$0xf] %v1919
                  %v1921 = vld [vmem:[%s1061 + $0xd68] sm:$0xf]
                  %1922 = vst [vmem:[%s1062 + $0x6b4] sm:$0xf] %v1921
                  %v1923 = vld [vmem:[%s1061 + $0xd70] sm:$0xf]
                  %1924 = vst [vmem:[%s1062 + $0x6b8] sm:$0xf] %v1923
                  %v1925 = vld [vmem:[%s1061 + $0xd78] sm:$0xf]
                  %1926 = vst [vmem:[%s1062 + $0x6bc] sm:$0xf] %v1925
                $region59: #{_lambda_.5} parent=46 // loop_footer
                  %s1060 = sadd.s32 1, %s1056
                $region60: #{_lambda_.5} parent=46 // loop_footer_branch
                  %1055 = sbr.rel target = $region56
                $region61: #{_lambda_.5} parent=46 // loop_exit
                  _
              $region47: #{_lambda_.5} parent=31 // pred_fallthru
                _
            $region32: #{_lambda_.5} parent=27 // pred_fallthru
              _
            // Predicated region
            $region33: #{_lambda_.5} parent=27 // pred_check
              _
            $region34: #{_lambda_.5} parent=27 // pred_check_branch
              %170 = sbr.rel (0) target = $region36
            $region35: #{_lambda_.5} parent=27 // pred_region
              loop: start=0, step=1, limit=1
              $region37: #{_lambda_.5} parent=35 // loop_pre_header
                _
              $region38: #{_lambda_.5} parent=35 // loop_header
                %s173 = sphi 0, %s177
                %p174 = scmp.ge.s32.totalorder %s173, 1
                %s178 = sphi %s164, %s164
                %s179 = sphi %s162, %s162
              $region39: #{_lambda_.5} parent=35 // loop_header_branch
                %176 = sbr.rel (%p174) target = $region43
              $region40: #{_lambda_.5} parent=35 // loop_body
                %v180 = vld [vmem:[%s178] sm:$0xf]
                %181 = vst [vmem:[%s179] sm:$0xf] %v180
                %v182 = vld [vmem:[%s178 + $0x8] sm:$0xf]
                %183 = vst [vmem:[%s179 + $0x4] sm:$0xf] %v182
                %v184 = vld [vmem:[%s178 + $0x10] sm:$0xf]
                %185 = vst [vmem:[%s179 + $0x8] sm:$0xf] %v184
                %v186 = vld [vmem:[%s178 + $0x18] sm:$0xf]
                %187 = vst [vmem:[%s179 + $0xc] sm:$0xf] %v186
                %v188 = vld [vmem:[%s178 + $0x20] sm:$0xf]
                %189 = vst [vmem:[%s179 + $0x10] sm:$0xf] %v188
                %v190 = vld [vmem:[%s178 + $0x28] sm:$0xf]
                %191 = vst [vmem:[%s179 + $0x14] sm:$0xf] %v190
                %v192 = vld [vmem:[%s178 + $0x30] sm:$0xf]
                %193 = vst [vmem:[%s179 + $0x18] sm:$0xf] %v192
                %v194 = vld [vmem:[%s178 + $0x38] sm:$0xf]
                %195 = vst [vmem:[%s179 + $0x1c] sm:$0xf] %v194
                %v196 = vld [vmem:[%s178 + $0x40] sm:$0xf]
                %197 = vst [vmem:[%s179 + $0x20] sm:$0xf] %v196
                %v198 = vld [vmem:[%s178 + $0x48] sm:$0xf]
                %199 = vst [vmem:[%s179 + $0x24] sm:$0xf] %v198
                %v200 = vld [vmem:[%s178 + $0x50] sm:$0xf]
                %201 = vst [vmem:[%s179 + $0x28] sm:$0xf] %v200
                %v202 = vld [vmem:[%s178 + $0x58] sm:$0xf]
                %203 = vst [vmem:[%s179 + $0x2c] sm:$0xf] %v202
                %v204 = vld [vmem:[%s178 + $0x60] sm:$0xf]
                %205 = vst [vmem:[%s179 + $0x30] sm:$0xf] %v204
                %v206 = vld [vmem:[%s178 + $0x68] sm:$0xf]
                %207 = vst [vmem:[%s179 + $0x34] sm:$0xf] %v206
                %v208 = vld [vmem:[%s178 + $0x70] sm:$0xf]
                %209 = vst [vmem:[%s179 + $0x38] sm:$0xf] %v208
                %v210 = vld [vmem:[%s178 + $0x78] sm:$0xf]
                %211 = vst [vmem:[%s179 + $0x3c] sm:$0xf] %v210
                %v212 = vld [vmem:[%s178 + $0x80] sm:$0xf]
                %213 = vst [vmem:[%s179 + $0x40] sm:$0xf] %v212
                %v214 = vld [vmem:[%s178 + $0x88] sm:$0xf]
                %215 = vst [vmem:[%s179 + $0x44] sm:$0xf] %v214
                %v216 = vld [vmem:[%s178 + $0x90] sm:$0xf]
                %217 = vst [vmem:[%s179 + $0x48] sm:$0xf] %v216
                %v218 = vld [vmem:[%s178 + $0x98] sm:$0xf]
                %219 = vst [vmem:[%s179 + $0x4c] sm:$0xf] %v218
                %v220 = vld [vmem:[%s178 + $0xa0] sm:$0xf]
                %221 = vst [vmem:[%s179 + $0x50] sm:$0xf] %v220
                %v222 = vld [vmem:[%s178 + $0xa8] sm:$0xf]
                %223 = vst [vmem:[%s179 + $0x54] sm:$0xf] %v222
                %v224 = vld [vmem:[%s178 + $0xb0] sm:$0xf]
                %225 = vst [vmem:[%s179 + $0x58] sm:$0xf] %v224
                %v226 = vld [vmem:[%s178 + $0xb8] sm:$0xf]
                %227 = vst [vmem:[%s179 + $0x5c] sm:$0xf] %v226
                %v228 = vld [vmem:[%s178 + $0xc0] sm:$0xf]
                %229 = vst [vmem:[%s179 + $0x60] sm:$0xf] %v228
                %v230 = vld [vmem:[%s178 + $0xc8] sm:$0xf]
                %231 = vst [vmem:[%s179 + $0x64] sm:$0xf] %v230
                %v232 = vld [vmem:[%s178 + $0xd0] sm:$0xf]
                %233 = vst [vmem:[%s179 + $0x68] sm:$0xf] %v232
                %v234 = vld [vmem:[%s178 + $0xd8] sm:$0xf]
                %235 = vst [vmem:[%s179 + $0x6c] sm:$0xf] %v234
                %v236 = vld [vmem:[%s178 + $0xe0] sm:$0xf]
                %237 = vst [vmem:[%s179 + $0x70] sm:$0xf] %v236
                %v238 = vld [vmem:[%s178 + $0xe8] sm:$0xf]
                %239 = vst [vmem:[%s179 + $0x74] sm:$0xf] %v238
                %v240 = vld [vmem:[%s178 + $0xf0] sm:$0xf]
                %241 = vst [vmem:[%s179 + $0x78] sm:$0xf] %v240
                %v242 = vld [vmem:[%s178 + $0xf8] sm:$0xf]
                %243 = vst [vmem:[%s179 + $0x7c] sm:$0xf] %v242
                %v244 = vld [vmem:[%s178 + $0x100] sm:$0xf]
                %245 = vst [vmem:[%s179 + $0x80] sm:$0xf] %v244
                %v246 = vld [vmem:[%s178 + $0x108] sm:$0xf]
                %247 = vst [vmem:[%s179 + $0x84] sm:$0xf] %v246
                %v248 = vld [vmem:[%s178 + $0x110] sm:$0xf]
                %249 = vst [vmem:[%s179 + $0x88] sm:$0xf] %v248
                %v250 = vld [vmem:[%s178 + $0x118] sm:$0xf]
                %251 = vst [vmem:[%s179 + $0x8c] sm:$0xf] %v250
                %v252 = vld [vmem:[%s178 + $0x120] sm:$0xf]
                %253 = vst [vmem:[%s179 + $0x90] sm:$0xf] %v252
                %v254 = vld [vmem:[%s178 + $0x128] sm:$0xf]
                %255 = vst [vmem:[%s179 + $0x94] sm:$0xf] %v254
                %v256 = vld [vmem:[%s178 + $0x130] sm:$0xf]
                %257 = vst [vmem:[%s179 + $0x98] sm:$0xf] %v256
                %v258 = vld [vmem:[%s178 + $0x138] sm:$0xf]
                %259 = vst [vmem:[%s179 + $0x9c] sm:$0xf] %v258
                %v260 = vld [vmem:[%s178 + $0x140] sm:$0xf]
                %261 = vst [vmem:[%s179 + $0xa0] sm:$0xf] %v260
                %v262 = vld [vmem:[%s178 + $0x148] sm:$0xf]
                %263 = vst [vmem:[%s179 + $0xa4] sm:$0xf] %v262
                %v264 = vld [vmem:[%s178 + $0x150] sm:$0xf]
                %265 = vst [vmem:[%s179 + $0xa8] sm:$0xf] %v264
                %v266 = vld [vmem:[%s178 + $0x158] sm:$0xf]
                %267 = vst [vmem:[%s179 + $0xac] sm:$0xf] %v266
                %v268 = vld [vmem:[%s178 + $0x160] sm:$0xf]
                %269 = vst [vmem:[%s179 + $0xb0] sm:$0xf] %v268
                %v270 = vld [vmem:[%s178 + $0x168] sm:$0xf]
                %271 = vst [vmem:[%s179 + $0xb4] sm:$0xf] %v270
                %v272 = vld [vmem:[%s178 + $0x170] sm:$0xf]
                %273 = vst [vmem:[%s179 + $0xb8] sm:$0xf] %v272
                %v274 = vld [vmem:[%s178 + $0x178] sm:$0xf]
                %275 = vst [vmem:[%s179 + $0xbc] sm:$0xf] %v274
                %v276 = vld [vmem:[%s178 + $0x180] sm:$0xf]
                %277 = vst [vmem:[%s179 + $0xc0] sm:$0xf] %v276
                %v278 = vld [vmem:[%s178 + $0x188] sm:$0xf]
                %279 = vst [vmem:[%s179 + $0xc4] sm:$0xf] %v278
                %v280 = vld [vmem:[%s178 + $0x190] sm:$0xf]
                %281 = vst [vmem:[%s179 + $0xc8] sm:$0xf] %v280
                %v282 = vld [vmem:[%s178 + $0x198] sm:$0xf]
                %283 = vst [vmem:[%s179 + $0xcc] sm:$0xf] %v282
                %v284 = vld [vmem:[%s178 + $0x1a0] sm:$0xf]
                %285 = vst [vmem:[%s179 + $0xd0] sm:$0xf] %v284
                %v286 = vld [vmem:[%s178 + $0x1a8] sm:$0xf]
                %287 = vst [vmem:[%s179 + $0xd4] sm:$0xf] %v286
                %v288 = vld [vmem:[%s178 + $0x1b0] sm:$0xf]
                %289 = vst [vmem:[%s179 + $0xd8] sm:$0xf] %v288
                %v290 = vld [vmem:[%s178 + $0x1b8] sm:$0xf]
                %291 = vst [vmem:[%s179 + $0xdc] sm:$0xf] %v290
                %v292 = vld [vmem:[%s178 + $0x1c0] sm:$0xf]
                %293 = vst [vmem:[%s179 + $0xe0] sm:$0xf] %v292
                %v294 = vld [vmem:[%s178 + $0x1c8] sm:$0xf]
                %295 = vst [vmem:[%s179 + $0xe4] sm:$0xf] %v294
                %v296 = vld [vmem:[%s178 + $0x1d0] sm:$0xf]
                %297 = vst [vmem:[%s179 + $0xe8] sm:$0xf] %v296
                %v298 = vld [vmem:[%s178 + $0x1d8] sm:$0xf]
                %299 = vst [vmem:[%s179 + $0xec] sm:$0xf] %v298
                %v300 = vld [vmem:[%s178 + $0x1e0] sm:$0xf]
                %301 = vst [vmem:[%s179 + $0xf0] sm:$0xf] %v300
                %v302 = vld [vmem:[%s178 + $0x1e8] sm:$0xf]
                %303 = vst [vmem:[%s179 + $0xf4] sm:$0xf] %v302
                %v304 = vld [vmem:[%s178 + $0x1f0] sm:$0xf]
                %305 = vst [vmem:[%s179 + $0xf8] sm:$0xf] %v304
                %v306 = vld [vmem:[%s178 + $0x1f8] sm:$0xf]
                %307 = vst [vmem:[%s179 + $0xfc] sm:$0xf] %v306
                %v308 = vld [vmem:[%s178 + $0x200] sm:$0xf]
                %309 = vst [vmem:[%s179 + $0x100] sm:$0xf] %v308
                %v310 = vld [vmem:[%s178 + $0x208] sm:$0xf]
                %311 = vst [vmem:[%s179 + $0x104] sm:$0xf] %v310
                %v312 = vld [vmem:[%s178 + $0x210] sm:$0xf]
                %313 = vst [vmem:[%s179 + $0x108] sm:$0xf] %v312
                %v314 = vld [vmem:[%s178 + $0x218] sm:$0xf]
                %315 = vst [vmem:[%s179 + $0x10c] sm:$0xf] %v314
                %v316 = vld [vmem:[%s178 + $0x220] sm:$0xf]
                %317 = vst [vmem:[%s179 + $0x110] sm:$0xf] %v316
                %v318 = vld [vmem:[%s178 + $0x228] sm:$0xf]
                %319 = vst [vmem:[%s179 + $0x114] sm:$0xf] %v318
                %v320 = vld [vmem:[%s178 + $0x230] sm:$0xf]
                %321 = vst [vmem:[%s179 + $0x118] sm:$0xf] %v320
                %v322 = vld [vmem:[%s178 + $0x238] sm:$0xf]
                %323 = vst [vmem:[%s179 + $0x11c] sm:$0xf] %v322
                %v324 = vld [vmem:[%s178 + $0x240] sm:$0xf]
                %325 = vst [vmem:[%s179 + $0x120] sm:$0xf] %v324
                %v326 = vld [vmem:[%s178 + $0x248] sm:$0xf]
                %327 = vst [vmem:[%s179 + $0x124] sm:$0xf] %v326
                %v328 = vld [vmem:[%s178 + $0x250] sm:$0xf]
                %329 = vst [vmem:[%s179 + $0x128] sm:$0xf] %v328
                %v330 = vld [vmem:[%s178 + $0x258] sm:$0xf]
                %331 = vst [vmem:[%s179 + $0x12c] sm:$0xf] %v330
                %v332 = vld [vmem:[%s178 + $0x260] sm:$0xf]
                %333 = vst [vmem:[%s179 + $0x130] sm:$0xf] %v332
                %v334 = vld [vmem:[%s178 + $0x268] sm:$0xf]
                %335 = vst [vmem:[%s179 + $0x134] sm:$0xf] %v334
                %v336 = vld [vmem:[%s178 + $0x270] sm:$0xf]
                %337 = vst [vmem:[%s179 + $0x138] sm:$0xf] %v336
                %v338 = vld [vmem:[%s178 + $0x278] sm:$0xf]
                %339 = vst [vmem:[%s179 + $0x13c] sm:$0xf] %v338
                %v340 = vld [vmem:[%s178 + $0x280] sm:$0xf]
                %341 = vst [vmem:[%s179 + $0x140] sm:$0xf] %v340
                %v342 = vld [vmem:[%s178 + $0x288] sm:$0xf]
                %343 = vst [vmem:[%s179 + $0x144] sm:$0xf] %v342
                %v344 = vld [vmem:[%s178 + $0x290] sm:$0xf]
                %345 = vst [vmem:[%s179 + $0x148] sm:$0xf] %v344
                %v346 = vld [vmem:[%s178 + $0x298] sm:$0xf]
                %347 = vst [vmem:[%s179 + $0x14c] sm:$0xf] %v346
                %v348 = vld [vmem:[%s178 + $0x2a0] sm:$0xf]
                %349 = vst [vmem:[%s179 + $0x150] sm:$0xf] %v348
                %v350 = vld [vmem:[%s178 + $0x2a8] sm:$0xf]
                %351 = vst [vmem:[%s179 + $0x154] sm:$0xf] %v350
                %v352 = vld [vmem:[%s178 + $0x2b0] sm:$0xf]
                %353 = vst [vmem:[%s179 + $0x158] sm:$0xf] %v352
                %v354 = vld [vmem:[%s178 + $0x2b8] sm:$0xf]
                %355 = vst [vmem:[%s179 + $0x15c] sm:$0xf] %v354
                %v356 = vld [vmem:[%s178 + $0x2c0] sm:$0xf]
                %357 = vst [vmem:[%s179 + $0x160] sm:$0xf] %v356
                %v358 = vld [vmem:[%s178 + $0x2c8] sm:$0xf]
                %359 = vst [vmem:[%s179 + $0x164] sm:$0xf] %v358
                %v360 = vld [vmem:[%s178 + $0x2d0] sm:$0xf]
                %361 = vst [vmem:[%s179 + $0x168] sm:$0xf] %v360
                %v362 = vld [vmem:[%s178 + $0x2d8] sm:$0xf]
                %363 = vst [vmem:[%s179 + $0x16c] sm:$0xf] %v362
                %v364 = vld [vmem:[%s178 + $0x2e0] sm:$0xf]
                %365 = vst [vmem:[%s179 + $0x170] sm:$0xf] %v364
                %v366 = vld [vmem:[%s178 + $0x2e8] sm:$0xf]
                %367 = vst [vmem:[%s179 + $0x174] sm:$0xf] %v366
                %v368 = vld [vmem:[%s178 + $0x2f0] sm:$0xf]
                %369 = vst [vmem:[%s179 + $0x178] sm:$0xf] %v368
                %v370 = vld [vmem:[%s178 + $0x2f8] sm:$0xf]
                %371 = vst [vmem:[%s179 + $0x17c] sm:$0xf] %v370
                %v372 = vld [vmem:[%s178 + $0x300] sm:$0xf]
                %373 = vst [vmem:[%s179 + $0x180] sm:$0xf] %v372
                %v374 = vld [vmem:[%s178 + $0x308] sm:$0xf]
                %375 = vst [vmem:[%s179 + $0x184] sm:$0xf] %v374
                %v376 = vld [vmem:[%s178 + $0x310] sm:$0xf]
                %377 = vst [vmem:[%s179 + $0x188] sm:$0xf] %v376
                %v378 = vld [vmem:[%s178 + $0x318] sm:$0xf]
                %379 = vst [vmem:[%s179 + $0x18c] sm:$0xf] %v378
                %v380 = vld [vmem:[%s178 + $0x320] sm:$0xf]
                %381 = vst [vmem:[%s179 + $0x190] sm:$0xf] %v380
                %v382 = vld [vmem:[%s178 + $0x328] sm:$0xf]
                %383 = vst [vmem:[%s179 + $0x194] sm:$0xf] %v382
                %v384 = vld [vmem:[%s178 + $0x330] sm:$0xf]
                %385 = vst [vmem:[%s179 + $0x198] sm:$0xf] %v384
                %v386 = vld [vmem:[%s178 + $0x338] sm:$0xf]
                %387 = vst [vmem:[%s179 + $0x19c] sm:$0xf] %v386
                %v388 = vld [vmem:[%s178 + $0x340] sm:$0xf]
                %389 = vst [vmem:[%s179 + $0x1a0] sm:$0xf] %v388
                %v390 = vld [vmem:[%s178 + $0x348] sm:$0xf]
                %391 = vst [vmem:[%s179 + $0x1a4] sm:$0xf] %v390
                %v392 = vld [vmem:[%s178 + $0x350] sm:$0xf]
                %393 = vst [vmem:[%s179 + $0x1a8] sm:$0xf] %v392
                %v394 = vld [vmem:[%s178 + $0x358] sm:$0xf]
                %395 = vst [vmem:[%s179 + $0x1ac] sm:$0xf] %v394
                %v396 = vld [vmem:[%s178 + $0x360] sm:$0xf]
                %397 = vst [vmem:[%s179 + $0x1b0] sm:$0xf] %v396
                %v398 = vld [vmem:[%s178 + $0x368] sm:$0xf]
                %399 = vst [vmem:[%s179 + $0x1b4] sm:$0xf] %v398
                %v400 = vld [vmem:[%s178 + $0x370] sm:$0xf]
                %401 = vst [vmem:[%s179 + $0x1b8] sm:$0xf] %v400
                %v402 = vld [vmem:[%s178 + $0x378] sm:$0xf]
                %403 = vst [vmem:[%s179 + $0x1bc] sm:$0xf] %v402
                %v404 = vld [vmem:[%s178 + $0x380] sm:$0xf]
                %405 = vst [vmem:[%s179 + $0x1c0] sm:$0xf] %v404
                %v406 = vld [vmem:[%s178 + $0x388] sm:$0xf]
                %407 = vst [vmem:[%s179 + $0x1c4] sm:$0xf] %v406
                %v408 = vld [vmem:[%s178 + $0x390] sm:$0xf]
                %409 = vst [vmem:[%s179 + $0x1c8] sm:$0xf] %v408
                %v410 = vld [vmem:[%s178 + $0x398] sm:$0xf]
                %411 = vst [vmem:[%s179 + $0x1cc] sm:$0xf] %v410
                %v412 = vld [vmem:[%s178 + $0x3a0] sm:$0xf]
                %413 = vst [vmem:[%s179 + $0x1d0] sm:$0xf] %v412
                %v414 = vld [vmem:[%s178 + $0x3a8] sm:$0xf]
                %415 = vst [vmem:[%s179 + $0x1d4] sm:$0xf] %v414
                %v416 = vld [vmem:[%s178 + $0x3b0] sm:$0xf]
                %417 = vst [vmem:[%s179 + $0x1d8] sm:$0xf] %v416
                %v418 = vld [vmem:[%s178 + $0x3b8] sm:$0xf]
                %419 = vst [vmem:[%s179 + $0x1dc] sm:$0xf] %v418
                %v420 = vld [vmem:[%s178 + $0x3c0] sm:$0xf]
                %421 = vst [vmem:[%s179 + $0x1e0] sm:$0xf] %v420
                %v422 = vld [vmem:[%s178 + $0x3c8] sm:$0xf]
                %423 = vst [vmem:[%s179 + $0x1e4] sm:$0xf] %v422
                %v424 = vld [vmem:[%s178 + $0x3d0] sm:$0xf]
                %425 = vst [vmem:[%s179 + $0x1e8] sm:$0xf] %v424
                %v426 = vld [vmem:[%s178 + $0x3d8] sm:$0xf]
                %427 = vst [vmem:[%s179 + $0x1ec] sm:$0xf] %v426
                %v428 = vld [vmem:[%s178 + $0x3e0] sm:$0xf]
                %429 = vst [vmem:[%s179 + $0x1f0] sm:$0xf] %v428
                %v430 = vld [vmem:[%s178 + $0x3e8] sm:$0xf]
                %431 = vst [vmem:[%s179 + $0x1f4] sm:$0xf] %v430
                %v432 = vld [vmem:[%s178 + $0x3f0] sm:$0xf]
                %433 = vst [vmem:[%s179 + $0x1f8] sm:$0xf] %v432
                %v434 = vld [vmem:[%s178 + $0x3f8] sm:$0xf]
                %435 = vst [vmem:[%s179 + $0x1fc] sm:$0xf] %v434
                %v436 = vld [vmem:[%s178 + $0x400] sm:$0xf]
                %437 = vst [vmem:[%s179 + $0x200] sm:$0xf] %v436
                %v438 = vld [vmem:[%s178 + $0x408] sm:$0xf]
                %439 = vst [vmem:[%s179 + $0x204] sm:$0xf] %v438
                %v440 = vld [vmem:[%s178 + $0x410] sm:$0xf]
                %441 = vst [vmem:[%s179 + $0x208] sm:$0xf] %v440
                %v442 = vld [vmem:[%s178 + $0x418] sm:$0xf]
                %443 = vst [vmem:[%s179 + $0x20c] sm:$0xf] %v442
                %v444 = vld [vmem:[%s178 + $0x420] sm:$0xf]
                %445 = vst [vmem:[%s179 + $0x210] sm:$0xf] %v444
                %v446 = vld [vmem:[%s178 + $0x428] sm:$0xf]
                %447 = vst [vmem:[%s179 + $0x214] sm:$0xf] %v446
                %v448 = vld [vmem:[%s178 + $0x430] sm:$0xf]
                %449 = vst [vmem:[%s179 + $0x218] sm:$0xf] %v448
                %v450 = vld [vmem:[%s178 + $0x438] sm:$0xf]
                %451 = vst [vmem:[%s179 + $0x21c] sm:$0xf] %v450
                %v452 = vld [vmem:[%s178 + $0x440] sm:$0xf]
                %453 = vst [vmem:[%s179 + $0x220] sm:$0xf] %v452
                %v454 = vld [vmem:[%s178 + $0x448] sm:$0xf]
                %455 = vst [vmem:[%s179 + $0x224] sm:$0xf] %v454
                %v456 = vld [vmem:[%s178 + $0x450] sm:$0xf]
                %457 = vst [vmem:[%s179 + $0x228] sm:$0xf] %v456
                %v458 = vld [vmem:[%s178 + $0x458] sm:$0xf]
                %459 = vst [vmem:[%s179 + $0x22c] sm:$0xf] %v458
                %v460 = vld [vmem:[%s178 + $0x460] sm:$0xf]
                %461 = vst [vmem:[%s179 + $0x230] sm:$0xf] %v460
                %v462 = vld [vmem:[%s178 + $0x468] sm:$0xf]
                %463 = vst [vmem:[%s179 + $0x234] sm:$0xf] %v462
                %v464 = vld [vmem:[%s178 + $0x470] sm:$0xf]
                %465 = vst [vmem:[%s179 + $0x238] sm:$0xf] %v464
                %v466 = vld [vmem:[%s178 + $0x478] sm:$0xf]
                %467 = vst [vmem:[%s179 + $0x23c] sm:$0xf] %v466
                %v468 = vld [vmem:[%s178 + $0x480] sm:$0xf]
                %469 = vst [vmem:[%s179 + $0x240] sm:$0xf] %v468
                %v470 = vld [vmem:[%s178 + $0x488] sm:$0xf]
                %471 = vst [vmem:[%s179 + $0x244] sm:$0xf] %v470
                %v472 = vld [vmem:[%s178 + $0x490] sm:$0xf]
                %473 = vst [vmem:[%s179 + $0x248] sm:$0xf] %v472
                %v474 = vld [vmem:[%s178 + $0x498] sm:$0xf]
                %475 = vst [vmem:[%s179 + $0x24c] sm:$0xf] %v474
                %v476 = vld [vmem:[%s178 + $0x4a0] sm:$0xf]
                %477 = vst [vmem:[%s179 + $0x250] sm:$0xf] %v476
                %v478 = vld [vmem:[%s178 + $0x4a8] sm:$0xf]
                %479 = vst [vmem:[%s179 + $0x254] sm:$0xf] %v478
                %v480 = vld [vmem:[%s178 + $0x4b0] sm:$0xf]
                %481 = vst [vmem:[%s179 + $0x258] sm:$0xf] %v480
                %v482 = vld [vmem:[%s178 + $0x4b8] sm:$0xf]
                %483 = vst [vmem:[%s179 + $0x25c] sm:$0xf] %v482
                %v484 = vld [vmem:[%s178 + $0x4c0] sm:$0xf]
                %485 = vst [vmem:[%s179 + $0x260] sm:$0xf] %v484
                %v486 = vld [vmem:[%s178 + $0x4c8] sm:$0xf]
                %487 = vst [vmem:[%s179 + $0x264] sm:$0xf] %v486
                %v488 = vld [vmem:[%s178 + $0x4d0] sm:$0xf]
                %489 = vst [vmem:[%s179 + $0x268] sm:$0xf] %v488
                %v490 = vld [vmem:[%s178 + $0x4d8] sm:$0xf]
                %491 = vst [vmem:[%s179 + $0x26c] sm:$0xf] %v490
                %v492 = vld [vmem:[%s178 + $0x4e0] sm:$0xf]
                %493 = vst [vmem:[%s179 + $0x270] sm:$0xf] %v492
                %v494 = vld [vmem:[%s178 + $0x4e8] sm:$0xf]
                %495 = vst [vmem:[%s179 + $0x274] sm:$0xf] %v494
                %v496 = vld [vmem:[%s178 + $0x4f0] sm:$0xf]
                %497 = vst [vmem:[%s179 + $0x278] sm:$0xf] %v496
                %v498 = vld [vmem:[%s178 + $0x4f8] sm:$0xf]
                %499 = vst [vmem:[%s179 + $0x27c] sm:$0xf] %v498
                %v500 = vld [vmem:[%s178 + $0x500] sm:$0xf]
                %501 = vst [vmem:[%s179 + $0x280] sm:$0xf] %v500
                %v502 = vld [vmem:[%s178 + $0x508] sm:$0xf]
                %503 = vst [vmem:[%s179 + $0x284] sm:$0xf] %v502
                %v504 = vld [vmem:[%s178 + $0x510] sm:$0xf]
                %505 = vst [vmem:[%s179 + $0x288] sm:$0xf] %v504
                %v506 = vld [vmem:[%s178 + $0x518] sm:$0xf]
                %507 = vst [vmem:[%s179 + $0x28c] sm:$0xf] %v506
                %v508 = vld [vmem:[%s178 + $0x520] sm:$0xf]
                %509 = vst [vmem:[%s179 + $0x290] sm:$0xf] %v508
                %v510 = vld [vmem:[%s178 + $0x528] sm:$0xf]
                %511 = vst [vmem:[%s179 + $0x294] sm:$0xf] %v510
                %v512 = vld [vmem:[%s178 + $0x530] sm:$0xf]
                %513 = vst [vmem:[%s179 + $0x298] sm:$0xf] %v512
                %v514 = vld [vmem:[%s178 + $0x538] sm:$0xf]
                %515 = vst [vmem:[%s179 + $0x29c] sm:$0xf] %v514
                %v516 = vld [vmem:[%s178 + $0x540] sm:$0xf]
                %517 = vst [vmem:[%s179 + $0x2a0] sm:$0xf] %v516
                %v518 = vld [vmem:[%s178 + $0x548] sm:$0xf]
                %519 = vst [vmem:[%s179 + $0x2a4] sm:$0xf] %v518
                %v520 = vld [vmem:[%s178 + $0x550] sm:$0xf]
                %521 = vst [vmem:[%s179 + $0x2a8] sm:$0xf] %v520
                %v522 = vld [vmem:[%s178 + $0x558] sm:$0xf]
                %523 = vst [vmem:[%s179 + $0x2ac] sm:$0xf] %v522
                %v524 = vld [vmem:[%s178 + $0x560] sm:$0xf]
                %525 = vst [vmem:[%s179 + $0x2b0] sm:$0xf] %v524
                %v526 = vld [vmem:[%s178 + $0x568] sm:$0xf]
                %527 = vst [vmem:[%s179 + $0x2b4] sm:$0xf] %v526
                %v528 = vld [vmem:[%s178 + $0x570] sm:$0xf]
                %529 = vst [vmem:[%s179 + $0x2b8] sm:$0xf] %v528
                %v530 = vld [vmem:[%s178 + $0x578] sm:$0xf]
                %531 = vst [vmem:[%s179 + $0x2bc] sm:$0xf] %v530
                %v532 = vld [vmem:[%s178 + $0x580] sm:$0xf]
                %533 = vst [vmem:[%s179 + $0x2c0] sm:$0xf] %v532
                %v534 = vld [vmem:[%s178 + $0x588] sm:$0xf]
                %535 = vst [vmem:[%s179 + $0x2c4] sm:$0xf] %v534
                %v536 = vld [vmem:[%s178 + $0x590] sm:$0xf]
                %537 = vst [vmem:[%s179 + $0x2c8] sm:$0xf] %v536
                %v538 = vld [vmem:[%s178 + $0x598] sm:$0xf]
                %539 = vst [vmem:[%s179 + $0x2cc] sm:$0xf] %v538
                %v540 = vld [vmem:[%s178 + $0x5a0] sm:$0xf]
                %541 = vst [vmem:[%s179 + $0x2d0] sm:$0xf] %v540
                %v542 = vld [vmem:[%s178 + $0x5a8] sm:$0xf]
                %543 = vst [vmem:[%s179 + $0x2d4] sm:$0xf] %v542
                %v544 = vld [vmem:[%s178 + $0x5b0] sm:$0xf]
                %545 = vst [vmem:[%s179 + $0x2d8] sm:$0xf] %v544
                %v546 = vld [vmem:[%s178 + $0x5b8] sm:$0xf]
                %547 = vst [vmem:[%s179 + $0x2dc] sm:$0xf] %v546
                %v548 = vld [vmem:[%s178 + $0x5c0] sm:$0xf]
                %549 = vst [vmem:[%s179 + $0x2e0] sm:$0xf] %v548
                %v550 = vld [vmem:[%s178 + $0x5c8] sm:$0xf]
                %551 = vst [vmem:[%s179 + $0x2e4] sm:$0xf] %v550
                %v552 = vld [vmem:[%s178 + $0x5d0] sm:$0xf]
                %553 = vst [vmem:[%s179 + $0x2e8] sm:$0xf] %v552
                %v554 = vld [vmem:[%s178 + $0x5d8] sm:$0xf]
                %555 = vst [vmem:[%s179 + $0x2ec] sm:$0xf] %v554
                %v556 = vld [vmem:[%s178 + $0x5e0] sm:$0xf]
                %557 = vst [vmem:[%s179 + $0x2f0] sm:$0xf] %v556
                %v558 = vld [vmem:[%s178 + $0x5e8] sm:$0xf]
                %559 = vst [vmem:[%s179 + $0x2f4] sm:$0xf] %v558
                %v560 = vld [vmem:[%s178 + $0x5f0] sm:$0xf]
                %561 = vst [vmem:[%s179 + $0x2f8] sm:$0xf] %v560
                %v562 = vld [vmem:[%s178 + $0x5f8] sm:$0xf]
                %563 = vst [vmem:[%s179 + $0x2fc] sm:$0xf] %v562
                %v564 = vld [vmem:[%s178 + $0x600] sm:$0xf]
                %565 = vst [vmem:[%s179 + $0x300] sm:$0xf] %v564
                %v566 = vld [vmem:[%s178 + $0x608] sm:$0xf]
                %567 = vst [vmem:[%s179 + $0x304] sm:$0xf] %v566
                %v568 = vld [vmem:[%s178 + $0x610] sm:$0xf]
                %569 = vst [vmem:[%s179 + $0x308] sm:$0xf] %v568
                %v570 = vld [vmem:[%s178 + $0x618] sm:$0xf]
                %571 = vst [vmem:[%s179 + $0x30c] sm:$0xf] %v570
                %v572 = vld [vmem:[%s178 + $0x620] sm:$0xf]
                %573 = vst [vmem:[%s179 + $0x310] sm:$0xf] %v572
                %v574 = vld [vmem:[%s178 + $0x628] sm:$0xf]
                %575 = vst [vmem:[%s179 + $0x314] sm:$0xf] %v574
                %v576 = vld [vmem:[%s178 + $0x630] sm:$0xf]
                %577 = vst [vmem:[%s179 + $0x318] sm:$0xf] %v576
                %v578 = vld [vmem:[%s178 + $0x638] sm:$0xf]
                %579 = vst [vmem:[%s179 + $0x31c] sm:$0xf] %v578
                %v580 = vld [vmem:[%s178 + $0x640] sm:$0xf]
                %581 = vst [vmem:[%s179 + $0x320] sm:$0xf] %v580
                %v582 = vld [vmem:[%s178 + $0x648] sm:$0xf]
                %583 = vst [vmem:[%s179 + $0x324] sm:$0xf] %v582
                %v584 = vld [vmem:[%s178 + $0x650] sm:$0xf]
                %585 = vst [vmem:[%s179 + $0x328] sm:$0xf] %v584
                %v586 = vld [vmem:[%s178 + $0x658] sm:$0xf]
                %587 = vst [vmem:[%s179 + $0x32c] sm:$0xf] %v586
                %v588 = vld [vmem:[%s178 + $0x660] sm:$0xf]
                %589 = vst [vmem:[%s179 + $0x330] sm:$0xf] %v588
                %v590 = vld [vmem:[%s178 + $0x668] sm:$0xf]
                %591 = vst [vmem:[%s179 + $0x334] sm:$0xf] %v590
                %v592 = vld [vmem:[%s178 + $0x670] sm:$0xf]
                %593 = vst [vmem:[%s179 + $0x338] sm:$0xf] %v592
                %v594 = vld [vmem:[%s178 + $0x678] sm:$0xf]
                %595 = vst [vmem:[%s179 + $0x33c] sm:$0xf] %v594
                %v596 = vld [vmem:[%s178 + $0x680] sm:$0xf]
                %597 = vst [vmem:[%s179 + $0x340] sm:$0xf] %v596
                %v598 = vld [vmem:[%s178 + $0x688] sm:$0xf]
                %599 = vst [vmem:[%s179 + $0x344] sm:$0xf] %v598
                %v600 = vld [vmem:[%s178 + $0x690] sm:$0xf]
                %601 = vst [vmem:[%s179 + $0x348] sm:$0xf] %v600
                %v602 = vld [vmem:[%s178 + $0x698] sm:$0xf]
                %603 = vst [vmem:[%s179 + $0x34c] sm:$0xf] %v602
                %v604 = vld [vmem:[%s178 + $0x6a0] sm:$0xf]
                %605 = vst [vmem:[%s179 + $0x350] sm:$0xf] %v604
                %v606 = vld [vmem:[%s178 + $0x6a8] sm:$0xf]
                %607 = vst [vmem:[%s179 + $0x354] sm:$0xf] %v606
                %v608 = vld [vmem:[%s178 + $0x6b0] sm:$0xf]
                %609 = vst [vmem:[%s179 + $0x358] sm:$0xf] %v608
                %v610 = vld [vmem:[%s178 + $0x6b8] sm:$0xf]
                %611 = vst [vmem:[%s179 + $0x35c] sm:$0xf] %v610
                %v612 = vld [vmem:[%s178 + $0x6c0] sm:$0xf]
                %613 = vst [vmem:[%s179 + $0x360] sm:$0xf] %v612
                %v614 = vld [vmem:[%s178 + $0x6c8] sm:$0xf]
                %615 = vst [vmem:[%s179 + $0x364] sm:$0xf] %v614
                %v616 = vld [vmem:[%s178 + $0x6d0] sm:$0xf]
                %617 = vst [vmem:[%s179 + $0x368] sm:$0xf] %v616
                %v618 = vld [vmem:[%s178 + $0x6d8] sm:$0xf]
                %619 = vst [vmem:[%s179 + $0x36c] sm:$0xf] %v618
                %v620 = vld [vmem:[%s178 + $0x6e0] sm:$0xf]
                %621 = vst [vmem:[%s179 + $0x370] sm:$0xf] %v620
                %v622 = vld [vmem:[%s178 + $0x6e8] sm:$0xf]
                %623 = vst [vmem:[%s179 + $0x374] sm:$0xf] %v622
                %v624 = vld [vmem:[%s178 + $0x6f0] sm:$0xf]
                %625 = vst [vmem:[%s179 + $0x378] sm:$0xf] %v624
                %v626 = vld [vmem:[%s178 + $0x6f8] sm:$0xf]
                %627 = vst [vmem:[%s179 + $0x37c] sm:$0xf] %v626
                %v628 = vld [vmem:[%s178 + $0x700] sm:$0xf]
                %629 = vst [vmem:[%s179 + $0x380] sm:$0xf] %v628
                %v630 = vld [vmem:[%s178 + $0x708] sm:$0xf]
                %631 = vst [vmem:[%s179 + $0x384] sm:$0xf] %v630
                %v632 = vld [vmem:[%s178 + $0x710] sm:$0xf]
                %633 = vst [vmem:[%s179 + $0x388] sm:$0xf] %v632
                %v634 = vld [vmem:[%s178 + $0x718] sm:$0xf]
                %635 = vst [vmem:[%s179 + $0x38c] sm:$0xf] %v634
                %v636 = vld [vmem:[%s178 + $0x720] sm:$0xf]
                %637 = vst [vmem:[%s179 + $0x390] sm:$0xf] %v636
                %v638 = vld [vmem:[%s178 + $0x728] sm:$0xf]
                %639 = vst [vmem:[%s179 + $0x394] sm:$0xf] %v638
                %v640 = vld [vmem:[%s178 + $0x730] sm:$0xf]
                %641 = vst [vmem:[%s179 + $0x398] sm:$0xf] %v640
                %v642 = vld [vmem:[%s178 + $0x738] sm:$0xf]
                %643 = vst [vmem:[%s179 + $0x39c] sm:$0xf] %v642
                %v644 = vld [vmem:[%s178 + $0x740] sm:$0xf]
                %645 = vst [vmem:[%s179 + $0x3a0] sm:$0xf] %v644
                %v646 = vld [vmem:[%s178 + $0x748] sm:$0xf]
                %647 = vst [vmem:[%s179 + $0x3a4] sm:$0xf] %v646
                %v648 = vld [vmem:[%s178 + $0x750] sm:$0xf]
                %649 = vst [vmem:[%s179 + $0x3a8] sm:$0xf] %v648
                %v650 = vld [vmem:[%s178 + $0x758] sm:$0xf]
                %651 = vst [vmem:[%s179 + $0x3ac] sm:$0xf] %v650
                %v652 = vld [vmem:[%s178 + $0x760] sm:$0xf]
                %653 = vst [vmem:[%s179 + $0x3b0] sm:$0xf] %v652
                %v654 = vld [vmem:[%s178 + $0x768] sm:$0xf]
                %655 = vst [vmem:[%s179 + $0x3b4] sm:$0xf] %v654
                %v656 = vld [vmem:[%s178 + $0x770] sm:$0xf]
                %657 = vst [vmem:[%s179 + $0x3b8] sm:$0xf] %v656
                %v658 = vld [vmem:[%s178 + $0x778] sm:$0xf]
                %659 = vst [vmem:[%s179 + $0x3bc] sm:$0xf] %v658
                %v660 = vld [vmem:[%s178 + $0x780] sm:$0xf]
                %661 = vst [vmem:[%s179 + $0x3c0] sm:$0xf] %v660
                %v662 = vld [vmem:[%s178 + $0x788] sm:$0xf]
                %663 = vst [vmem:[%s179 + $0x3c4] sm:$0xf] %v662
                %v664 = vld [vmem:[%s178 + $0x790] sm:$0xf]
                %665 = vst [vmem:[%s179 + $0x3c8] sm:$0xf] %v664
                %v666 = vld [vmem:[%s178 + $0x798] sm:$0xf]
                %667 = vst [vmem:[%s179 + $0x3cc] sm:$0xf] %v666
                %v668 = vld [vmem:[%s178 + $0x7a0] sm:$0xf]
                %669 = vst [vmem:[%s179 + $0x3d0] sm:$0xf] %v668
                %v670 = vld [vmem:[%s178 + $0x7a8] sm:$0xf]
                %671 = vst [vmem:[%s179 + $0x3d4] sm:$0xf] %v670
                %v672 = vld [vmem:[%s178 + $0x7b0] sm:$0xf]
                %673 = vst [vmem:[%s179 + $0x3d8] sm:$0xf] %v672
                %v674 = vld [vmem:[%s178 + $0x7b8] sm:$0xf]
                %675 = vst [vmem:[%s179 + $0x3dc] sm:$0xf] %v674
                %v676 = vld [vmem:[%s178 + $0x7c0] sm:$0xf]
                %677 = vst [vmem:[%s179 + $0x3e0] sm:$0xf] %v676
                %v678 = vld [vmem:[%s178 + $0x7c8] sm:$0xf]
                %679 = vst [vmem:[%s179 + $0x3e4] sm:$0xf] %v678
                %v680 = vld [vmem:[%s178 + $0x7d0] sm:$0xf]
                %681 = vst [vmem:[%s179 + $0x3e8] sm:$0xf] %v680
                %v682 = vld [vmem:[%s178 + $0x7d8] sm:$0xf]
                %683 = vst [vmem:[%s179 + $0x3ec] sm:$0xf] %v682
                %v684 = vld [vmem:[%s178 + $0x7e0] sm:$0xf]
                %685 = vst [vmem:[%s179 + $0x3f0] sm:$0xf] %v684
                %v686 = vld [vmem:[%s178 + $0x7e8] sm:$0xf]
                %687 = vst [vmem:[%s179 + $0x3f4] sm:$0xf] %v686
                %v688 = vld [vmem:[%s178 + $0x7f0] sm:$0xf]
                %689 = vst [vmem:[%s179 + $0x3f8] sm:$0xf] %v688
                %v690 = vld [vmem:[%s178 + $0x7f8] sm:$0xf]
                %691 = vst [vmem:[%s179 + $0x3fc] sm:$0xf] %v690
                %v692 = vld [vmem:[%s178 + $0x800] sm:$0xf]
                %693 = vst [vmem:[%s179 + $0x400] sm:$0xf] %v692
                %v694 = vld [vmem:[%s178 + $0x808] sm:$0xf]
                %695 = vst [vmem:[%s179 + $0x404] sm:$0xf] %v694
                %v696 = vld [vmem:[%s178 + $0x810] sm:$0xf]
                %697 = vst [vmem:[%s179 + $0x408] sm:$0xf] %v696
                %v698 = vld [vmem:[%s178 + $0x818] sm:$0xf]
                %699 = vst [vmem:[%s179 + $0x40c] sm:$0xf] %v698
                %v700 = vld [vmem:[%s178 + $0x820] sm:$0xf]
                %701 = vst [vmem:[%s179 + $0x410] sm:$0xf] %v700
                %v702 = vld [vmem:[%s178 + $0x828] sm:$0xf]
                %703 = vst [vmem:[%s179 + $0x414] sm:$0xf] %v702
                %v704 = vld [vmem:[%s178 + $0x830] sm:$0xf]
                %705 = vst [vmem:[%s179 + $0x418] sm:$0xf] %v704
                %v706 = vld [vmem:[%s178 + $0x838] sm:$0xf]
                %707 = vst [vmem:[%s179 + $0x41c] sm:$0xf] %v706
                %v708 = vld [vmem:[%s178 + $0x840] sm:$0xf]
                %709 = vst [vmem:[%s179 + $0x420] sm:$0xf] %v708
                %v710 = vld [vmem:[%s178 + $0x848] sm:$0xf]
                %711 = vst [vmem:[%s179 + $0x424] sm:$0xf] %v710
                %v712 = vld [vmem:[%s178 + $0x850] sm:$0xf]
                %713 = vst [vmem:[%s179 + $0x428] sm:$0xf] %v712
                %v714 = vld [vmem:[%s178 + $0x858] sm:$0xf]
                %715 = vst [vmem:[%s179 + $0x42c] sm:$0xf] %v714
                %v716 = vld [vmem:[%s178 + $0x860] sm:$0xf]
                %717 = vst [vmem:[%s179 + $0x430] sm:$0xf] %v716
                %v718 = vld [vmem:[%s178 + $0x868] sm:$0xf]
                %719 = vst [vmem:[%s179 + $0x434] sm:$0xf] %v718
                %v720 = vld [vmem:[%s178 + $0x870] sm:$0xf]
                %721 = vst [vmem:[%s179 + $0x438] sm:$0xf] %v720
                %v722 = vld [vmem:[%s178 + $0x878] sm:$0xf]
                %723 = vst [vmem:[%s179 + $0x43c] sm:$0xf] %v722
                %v724 = vld [vmem:[%s178 + $0x880] sm:$0xf]
                %725 = vst [vmem:[%s179 + $0x440] sm:$0xf] %v724
                %v726 = vld [vmem:[%s178 + $0x888] sm:$0xf]
                %727 = vst [vmem:[%s179 + $0x444] sm:$0xf] %v726
                %v728 = vld [vmem:[%s178 + $0x890] sm:$0xf]
                %729 = vst [vmem:[%s179 + $0x448] sm:$0xf] %v728
                %v730 = vld [vmem:[%s178 + $0x898] sm:$0xf]
                %731 = vst [vmem:[%s179 + $0x44c] sm:$0xf] %v730
                %v732 = vld [vmem:[%s178 + $0x8a0] sm:$0xf]
                %733 = vst [vmem:[%s179 + $0x450] sm:$0xf] %v732
                %v734 = vld [vmem:[%s178 + $0x8a8] sm:$0xf]
                %735 = vst [vmem:[%s179 + $0x454] sm:$0xf] %v734
                %v736 = vld [vmem:[%s178 + $0x8b0] sm:$0xf]
                %737 = vst [vmem:[%s179 + $0x458] sm:$0xf] %v736
                %v738 = vld [vmem:[%s178 + $0x8b8] sm:$0xf]
                %739 = vst [vmem:[%s179 + $0x45c] sm:$0xf] %v738
                %v740 = vld [vmem:[%s178 + $0x8c0] sm:$0xf]
                %741 = vst [vmem:[%s179 + $0x460] sm:$0xf] %v740
                %v742 = vld [vmem:[%s178 + $0x8c8] sm:$0xf]
                %743 = vst [vmem:[%s179 + $0x464] sm:$0xf] %v742
                %v744 = vld [vmem:[%s178 + $0x8d0] sm:$0xf]
                %745 = vst [vmem:[%s179 + $0x468] sm:$0xf] %v744
                %v746 = vld [vmem:[%s178 + $0x8d8] sm:$0xf]
                %747 = vst [vmem:[%s179 + $0x46c] sm:$0xf] %v746
                %v748 = vld [vmem:[%s178 + $0x8e0] sm:$0xf]
                %749 = vst [vmem:[%s179 + $0x470] sm:$0xf] %v748
                %v750 = vld [vmem:[%s178 + $0x8e8] sm:$0xf]
                %751 = vst [vmem:[%s179 + $0x474] sm:$0xf] %v750
                %v752 = vld [vmem:[%s178 + $0x8f0] sm:$0xf]
                %753 = vst [vmem:[%s179 + $0x478] sm:$0xf] %v752
                %v754 = vld [vmem:[%s178 + $0x8f8] sm:$0xf]
                %755 = vst [vmem:[%s179 + $0x47c] sm:$0xf] %v754
                %v756 = vld [vmem:[%s178 + $0x900] sm:$0xf]
                %757 = vst [vmem:[%s179 + $0x480] sm:$0xf] %v756
                %v758 = vld [vmem:[%s178 + $0x908] sm:$0xf]
                %759 = vst [vmem:[%s179 + $0x484] sm:$0xf] %v758
                %v760 = vld [vmem:[%s178 + $0x910] sm:$0xf]
                %761 = vst [vmem:[%s179 + $0x488] sm:$0xf] %v760
                %v762 = vld [vmem:[%s178 + $0x918] sm:$0xf]
                %763 = vst [vmem:[%s179 + $0x48c] sm:$0xf] %v762
                %v764 = vld [vmem:[%s178 + $0x920] sm:$0xf]
                %765 = vst [vmem:[%s179 + $0x490] sm:$0xf] %v764
                %v766 = vld [vmem:[%s178 + $0x928] sm:$0xf]
                %767 = vst [vmem:[%s179 + $0x494] sm:$0xf] %v766
                %v768 = vld [vmem:[%s178 + $0x930] sm:$0xf]
                %769 = vst [vmem:[%s179 + $0x498] sm:$0xf] %v768
                %v770 = vld [vmem:[%s178 + $0x938] sm:$0xf]
                %771 = vst [vmem:[%s179 + $0x49c] sm:$0xf] %v770
                %v772 = vld [vmem:[%s178 + $0x940] sm:$0xf]
                %773 = vst [vmem:[%s179 + $0x4a0] sm:$0xf] %v772
                %v774 = vld [vmem:[%s178 + $0x948] sm:$0xf]
                %775 = vst [vmem:[%s179 + $0x4a4] sm:$0xf] %v774
                %v776 = vld [vmem:[%s178 + $0x950] sm:$0xf]
                %777 = vst [vmem:[%s179 + $0x4a8] sm:$0xf] %v776
                %v778 = vld [vmem:[%s178 + $0x958] sm:$0xf]
                %779 = vst [vmem:[%s179 + $0x4ac] sm:$0xf] %v778
                %v780 = vld [vmem:[%s178 + $0x960] sm:$0xf]
                %781 = vst [vmem:[%s179 + $0x4b0] sm:$0xf] %v780
                %v782 = vld [vmem:[%s178 + $0x968] sm:$0xf]
                %783 = vst [vmem:[%s179 + $0x4b4] sm:$0xf] %v782
                %v784 = vld [vmem:[%s178 + $0x970] sm:$0xf]
                %785 = vst [vmem:[%s179 + $0x4b8] sm:$0xf] %v784
                %v786 = vld [vmem:[%s178 + $0x978] sm:$0xf]
                %787 = vst [vmem:[%s179 + $0x4bc] sm:$0xf] %v786
                %v788 = vld [vmem:[%s178 + $0x980] sm:$0xf]
                %789 = vst [vmem:[%s179 + $0x4c0] sm:$0xf] %v788
                %v790 = vld [vmem:[%s178 + $0x988] sm:$0xf]
                %791 = vst [vmem:[%s179 + $0x4c4] sm:$0xf] %v790
                %v792 = vld [vmem:[%s178 + $0x990] sm:$0xf]
                %793 = vst [vmem:[%s179 + $0x4c8] sm:$0xf] %v792
                %v794 = vld [vmem:[%s178 + $0x998] sm:$0xf]
                %795 = vst [vmem:[%s179 + $0x4cc] sm:$0xf] %v794
                %v796 = vld [vmem:[%s178 + $0x9a0] sm:$0xf]
                %797 = vst [vmem:[%s179 + $0x4d0] sm:$0xf] %v796
                %v798 = vld [vmem:[%s178 + $0x9a8] sm:$0xf]
                %799 = vst [vmem:[%s179 + $0x4d4] sm:$0xf] %v798
                %v800 = vld [vmem:[%s178 + $0x9b0] sm:$0xf]
                %801 = vst [vmem:[%s179 + $0x4d8] sm:$0xf] %v800
                %v802 = vld [vmem:[%s178 + $0x9b8] sm:$0xf]
                %803 = vst [vmem:[%s179 + $0x4dc] sm:$0xf] %v802
                %v804 = vld [vmem:[%s178 + $0x9c0] sm:$0xf]
                %805 = vst [vmem:[%s179 + $0x4e0] sm:$0xf] %v804
                %v806 = vld [vmem:[%s178 + $0x9c8] sm:$0xf]
                %807 = vst [vmem:[%s179 + $0x4e4] sm:$0xf] %v806
                %v808 = vld [vmem:[%s178 + $0x9d0] sm:$0xf]
                %809 = vst [vmem:[%s179 + $0x4e8] sm:$0xf] %v808
                %v810 = vld [vmem:[%s178 + $0x9d8] sm:$0xf]
                %811 = vst [vmem:[%s179 + $0x4ec] sm:$0xf] %v810
                %v812 = vld [vmem:[%s178 + $0x9e0] sm:$0xf]
                %813 = vst [vmem:[%s179 + $0x4f0] sm:$0xf] %v812
                %v814 = vld [vmem:[%s178 + $0x9e8] sm:$0xf]
                %815 = vst [vmem:[%s179 + $0x4f4] sm:$0xf] %v814
                %v816 = vld [vmem:[%s178 + $0x9f0] sm:$0xf]
                %817 = vst [vmem:[%s179 + $0x4f8] sm:$0xf] %v816
                %v818 = vld [vmem:[%s178 + $0x9f8] sm:$0xf]
                %819 = vst [vmem:[%s179 + $0x4fc] sm:$0xf] %v818
                %v820 = vld [vmem:[%s178 + $0xa00] sm:$0xf]
                %821 = vst [vmem:[%s179 + $0x500] sm:$0xf] %v820
                %v822 = vld [vmem:[%s178 + $0xa08] sm:$0xf]
                %823 = vst [vmem:[%s179 + $0x504] sm:$0xf] %v822
                %v824 = vld [vmem:[%s178 + $0xa10] sm:$0xf]
                %825 = vst [vmem:[%s179 + $0x508] sm:$0xf] %v824
                %v826 = vld [vmem:[%s178 + $0xa18] sm:$0xf]
                %827 = vst [vmem:[%s179 + $0x50c] sm:$0xf] %v826
                %v828 = vld [vmem:[%s178 + $0xa20] sm:$0xf]
                %829 = vst [vmem:[%s179 + $0x510] sm:$0xf] %v828
                %v830 = vld [vmem:[%s178 + $0xa28] sm:$0xf]
                %831 = vst [vmem:[%s179 + $0x514] sm:$0xf] %v830
                %v832 = vld [vmem:[%s178 + $0xa30] sm:$0xf]
                %833 = vst [vmem:[%s179 + $0x518] sm:$0xf] %v832
                %v834 = vld [vmem:[%s178 + $0xa38] sm:$0xf]
                %835 = vst [vmem:[%s179 + $0x51c] sm:$0xf] %v834
                %v836 = vld [vmem:[%s178 + $0xa40] sm:$0xf]
                %837 = vst [vmem:[%s179 + $0x520] sm:$0xf] %v836
                %v838 = vld [vmem:[%s178 + $0xa48] sm:$0xf]
                %839 = vst [vmem:[%s179 + $0x524] sm:$0xf] %v838
                %v840 = vld [vmem:[%s178 + $0xa50] sm:$0xf]
                %841 = vst [vmem:[%s179 + $0x528] sm:$0xf] %v840
                %v842 = vld [vmem:[%s178 + $0xa58] sm:$0xf]
                %843 = vst [vmem:[%s179 + $0x52c] sm:$0xf] %v842
                %v844 = vld [vmem:[%s178 + $0xa60] sm:$0xf]
                %845 = vst [vmem:[%s179 + $0x530] sm:$0xf] %v844
                %v846 = vld [vmem:[%s178 + $0xa68] sm:$0xf]
                %847 = vst [vmem:[%s179 + $0x534] sm:$0xf] %v846
                %v848 = vld [vmem:[%s178 + $0xa70] sm:$0xf]
                %849 = vst [vmem:[%s179 + $0x538] sm:$0xf] %v848
                %v850 = vld [vmem:[%s178 + $0xa78] sm:$0xf]
                %851 = vst [vmem:[%s179 + $0x53c] sm:$0xf] %v850
                %v852 = vld [vmem:[%s178 + $0xa80] sm:$0xf]
                %853 = vst [vmem:[%s179 + $0x540] sm:$0xf] %v852
                %v854 = vld [vmem:[%s178 + $0xa88] sm:$0xf]
                %855 = vst [vmem:[%s179 + $0x544] sm:$0xf] %v854
                %v856 = vld [vmem:[%s178 + $0xa90] sm:$0xf]
                %857 = vst [vmem:[%s179 + $0x548] sm:$0xf] %v856
                %v858 = vld [vmem:[%s178 + $0xa98] sm:$0xf]
                %859 = vst [vmem:[%s179 + $0x54c] sm:$0xf] %v858
                %v860 = vld [vmem:[%s178 + $0xaa0] sm:$0xf]
                %861 = vst [vmem:[%s179 + $0x550] sm:$0xf] %v860
                %v862 = vld [vmem:[%s178 + $0xaa8] sm:$0xf]
                %863 = vst [vmem:[%s179 + $0x554] sm:$0xf] %v862
                %v864 = vld [vmem:[%s178 + $0xab0] sm:$0xf]
                %865 = vst [vmem:[%s179 + $0x558] sm:$0xf] %v864
                %v866 = vld [vmem:[%s178 + $0xab8] sm:$0xf]
                %867 = vst [vmem:[%s179 + $0x55c] sm:$0xf] %v866
                %v868 = vld [vmem:[%s178 + $0xac0] sm:$0xf]
                %869 = vst [vmem:[%s179 + $0x560] sm:$0xf] %v868
                %v870 = vld [vmem:[%s178 + $0xac8] sm:$0xf]
                %871 = vst [vmem:[%s179 + $0x564] sm:$0xf] %v870
                %v872 = vld [vmem:[%s178 + $0xad0] sm:$0xf]
                %873 = vst [vmem:[%s179 + $0x568] sm:$0xf] %v872
                %v874 = vld [vmem:[%s178 + $0xad8] sm:$0xf]
                %875 = vst [vmem:[%s179 + $0x56c] sm:$0xf] %v874
                %v876 = vld [vmem:[%s178 + $0xae0] sm:$0xf]
                %877 = vst [vmem:[%s179 + $0x570] sm:$0xf] %v876
                %v878 = vld [vmem:[%s178 + $0xae8] sm:$0xf]
                %879 = vst [vmem:[%s179 + $0x574] sm:$0xf] %v878
                %v880 = vld [vmem:[%s178 + $0xaf0] sm:$0xf]
                %881 = vst [vmem:[%s179 + $0x578] sm:$0xf] %v880
                %v882 = vld [vmem:[%s178 + $0xaf8] sm:$0xf]
                %883 = vst [vmem:[%s179 + $0x57c] sm:$0xf] %v882
                %v884 = vld [vmem:[%s178 + $0xb00] sm:$0xf]
                %885 = vst [vmem:[%s179 + $0x580] sm:$0xf] %v884
                %v886 = vld [vmem:[%s178 + $0xb08] sm:$0xf]
                %887 = vst [vmem:[%s179 + $0x584] sm:$0xf] %v886
                %v888 = vld [vmem:[%s178 + $0xb10] sm:$0xf]
                %889 = vst [vmem:[%s179 + $0x588] sm:$0xf] %v888
                %v890 = vld [vmem:[%s178 + $0xb18] sm:$0xf]
                %891 = vst [vmem:[%s179 + $0x58c] sm:$0xf] %v890
                %v892 = vld [vmem:[%s178 + $0xb20] sm:$0xf]
                %893 = vst [vmem:[%s179 + $0x590] sm:$0xf] %v892
                %v894 = vld [vmem:[%s178 + $0xb28] sm:$0xf]
                %895 = vst [vmem:[%s179 + $0x594] sm:$0xf] %v894
                %v896 = vld [vmem:[%s178 + $0xb30] sm:$0xf]
                %897 = vst [vmem:[%s179 + $0x598] sm:$0xf] %v896
                %v898 = vld [vmem:[%s178 + $0xb38] sm:$0xf]
                %899 = vst [vmem:[%s179 + $0x59c] sm:$0xf] %v898
                %v900 = vld [vmem:[%s178 + $0xb40] sm:$0xf]
                %901 = vst [vmem:[%s179 + $0x5a0] sm:$0xf] %v900
                %v902 = vld [vmem:[%s178 + $0xb48] sm:$0xf]
                %903 = vst [vmem:[%s179 + $0x5a4] sm:$0xf] %v902
                %v904 = vld [vmem:[%s178 + $0xb50] sm:$0xf]
                %905 = vst [vmem:[%s179 + $0x5a8] sm:$0xf] %v904
                %v906 = vld [vmem:[%s178 + $0xb58] sm:$0xf]
                %907 = vst [vmem:[%s179 + $0x5ac] sm:$0xf] %v906
                %v908 = vld [vmem:[%s178 + $0xb60] sm:$0xf]
                %909 = vst [vmem:[%s179 + $0x5b0] sm:$0xf] %v908
                %v910 = vld [vmem:[%s178 + $0xb68] sm:$0xf]
                %911 = vst [vmem:[%s179 + $0x5b4] sm:$0xf] %v910
                %v912 = vld [vmem:[%s178 + $0xb70] sm:$0xf]
                %913 = vst [vmem:[%s179 + $0x5b8] sm:$0xf] %v912
                %v914 = vld [vmem:[%s178 + $0xb78] sm:$0xf]
                %915 = vst [vmem:[%s179 + $0x5bc] sm:$0xf] %v914
                %v916 = vld [vmem:[%s178 + $0xb80] sm:$0xf]
                %917 = vst [vmem:[%s179 + $0x5c0] sm:$0xf] %v916
                %v918 = vld [vmem:[%s178 + $0xb88] sm:$0xf]
                %919 = vst [vmem:[%s179 + $0x5c4] sm:$0xf] %v918
                %v920 = vld [vmem:[%s178 + $0xb90] sm:$0xf]
                %921 = vst [vmem:[%s179 + $0x5c8] sm:$0xf] %v920
                %v922 = vld [vmem:[%s178 + $0xb98] sm:$0xf]
                %923 = vst [vmem:[%s179 + $0x5cc] sm:$0xf] %v922
                %v924 = vld [vmem:[%s178 + $0xba0] sm:$0xf]
                %925 = vst [vmem:[%s179 + $0x5d0] sm:$0xf] %v924
                %v926 = vld [vmem:[%s178 + $0xba8] sm:$0xf]
                %927 = vst [vmem:[%s179 + $0x5d4] sm:$0xf] %v926
                %v928 = vld [vmem:[%s178 + $0xbb0] sm:$0xf]
                %929 = vst [vmem:[%s179 + $0x5d8] sm:$0xf] %v928
                %v930 = vld [vmem:[%s178 + $0xbb8] sm:$0xf]
                %931 = vst [vmem:[%s179 + $0x5dc] sm:$0xf] %v930
                %v932 = vld [vmem:[%s178 + $0xbc0] sm:$0xf]
                %933 = vst [vmem:[%s179 + $0x5e0] sm:$0xf] %v932
                %v934 = vld [vmem:[%s178 + $0xbc8] sm:$0xf]
                %935 = vst [vmem:[%s179 + $0x5e4] sm:$0xf] %v934
                %v936 = vld [vmem:[%s178 + $0xbd0] sm:$0xf]
                %937 = vst [vmem:[%s179 + $0x5e8] sm:$0xf] %v936
                %v938 = vld [vmem:[%s178 + $0xbd8] sm:$0xf]
                %939 = vst [vmem:[%s179 + $0x5ec] sm:$0xf] %v938
                %v940 = vld [vmem:[%s178 + $0xbe0] sm:$0xf]
                %941 = vst [vmem:[%s179 + $0x5f0] sm:$0xf] %v940
                %v942 = vld [vmem:[%s178 + $0xbe8] sm:$0xf]
                %943 = vst [vmem:[%s179 + $0x5f4] sm:$0xf] %v942
                %v944 = vld [vmem:[%s178 + $0xbf0] sm:$0xf]
                %945 = vst [vmem:[%s179 + $0x5f8] sm:$0xf] %v944
                %v946 = vld [vmem:[%s178 + $0xbf8] sm:$0xf]
                %947 = vst [vmem:[%s179 + $0x5fc] sm:$0xf] %v946
                %v948 = vld [vmem:[%s178 + $0xc00] sm:$0xf]
                %949 = vst [vmem:[%s179 + $0x600] sm:$0xf] %v948
                %v950 = vld [vmem:[%s178 + $0xc08] sm:$0xf]
                %951 = vst [vmem:[%s179 + $0x604] sm:$0xf] %v950
                %v952 = vld [vmem:[%s178 + $0xc10] sm:$0xf]
                %953 = vst [vmem:[%s179 + $0x608] sm:$0xf] %v952
                %v954 = vld [vmem:[%s178 + $0xc18] sm:$0xf]
                %955 = vst [vmem:[%s179 + $0x60c] sm:$0xf] %v954
                %v956 = vld [vmem:[%s178 + $0xc20] sm:$0xf]
                %957 = vst [vmem:[%s179 + $0x610] sm:$0xf] %v956
                %v958 = vld [vmem:[%s178 + $0xc28] sm:$0xf]
                %959 = vst [vmem:[%s179 + $0x614] sm:$0xf] %v958
                %v960 = vld [vmem:[%s178 + $0xc30] sm:$0xf]
                %961 = vst [vmem:[%s179 + $0x618] sm:$0xf] %v960
                %v962 = vld [vmem:[%s178 + $0xc38] sm:$0xf]
                %963 = vst [vmem:[%s179 + $0x61c] sm:$0xf] %v962
                %v964 = vld [vmem:[%s178 + $0xc40] sm:$0xf]
                %965 = vst [vmem:[%s179 + $0x620] sm:$0xf] %v964
                %v966 = vld [vmem:[%s178 + $0xc48] sm:$0xf]
                %967 = vst [vmem:[%s179 + $0x624] sm:$0xf] %v966
                %v968 = vld [vmem:[%s178 + $0xc50] sm:$0xf]
                %969 = vst [vmem:[%s179 + $0x628] sm:$0xf] %v968
                %v970 = vld [vmem:[%s178 + $0xc58] sm:$0xf]
                %971 = vst [vmem:[%s179 + $0x62c] sm:$0xf] %v970
                %v972 = vld [vmem:[%s178 + $0xc60] sm:$0xf]
                %973 = vst [vmem:[%s179 + $0x630] sm:$0xf] %v972
                %v974 = vld [vmem:[%s178 + $0xc68] sm:$0xf]
                %975 = vst [vmem:[%s179 + $0x634] sm:$0xf] %v974
                %v976 = vld [vmem:[%s178 + $0xc70] sm:$0xf]
                %977 = vst [vmem:[%s179 + $0x638] sm:$0xf] %v976
                %v978 = vld [vmem:[%s178 + $0xc78] sm:$0xf]
                %979 = vst [vmem:[%s179 + $0x63c] sm:$0xf] %v978
                %v980 = vld [vmem:[%s178 + $0xc80] sm:$0xf]
                %981 = vst [vmem:[%s179 + $0x640] sm:$0xf] %v980
                %v982 = vld [vmem:[%s178 + $0xc88] sm:$0xf]
                %983 = vst [vmem:[%s179 + $0x644] sm:$0xf] %v982
                %v984 = vld [vmem:[%s178 + $0xc90] sm:$0xf]
                %985 = vst [vmem:[%s179 + $0x648] sm:$0xf] %v984
                %v986 = vld [vmem:[%s178 + $0xc98] sm:$0xf]
                %987 = vst [vmem:[%s179 + $0x64c] sm:$0xf] %v986
                %v988 = vld [vmem:[%s178 + $0xca0] sm:$0xf]
                %989 = vst [vmem:[%s179 + $0x650] sm:$0xf] %v988
                %v990 = vld [vmem:[%s178 + $0xca8] sm:$0xf]
                %991 = vst [vmem:[%s179 + $0x654] sm:$0xf] %v990
                %v992 = vld [vmem:[%s178 + $0xcb0] sm:$0xf]
                %993 = vst [vmem:[%s179 + $0x658] sm:$0xf] %v992
                %v994 = vld [vmem:[%s178 + $0xcb8] sm:$0xf]
                %995 = vst [vmem:[%s179 + $0x65c] sm:$0xf] %v994
                %v996 = vld [vmem:[%s178 + $0xcc0] sm:$0xf]
                %997 = vst [vmem:[%s179 + $0x660] sm:$0xf] %v996
                %v998 = vld [vmem:[%s178 + $0xcc8] sm:$0xf]
                %999 = vst [vmem:[%s179 + $0x664] sm:$0xf] %v998
                %v1000 = vld [vmem:[%s178 + $0xcd0] sm:$0xf]
                %1001 = vst [vmem:[%s179 + $0x668] sm:$0xf] %v1000
                %v1002 = vld [vmem:[%s178 + $0xcd8] sm:$0xf]
                %1003 = vst [vmem:[%s179 + $0x66c] sm:$0xf] %v1002
                %v1004 = vld [vmem:[%s178 + $0xce0] sm:$0xf]
                %1005 = vst [vmem:[%s179 + $0x670] sm:$0xf] %v1004
                %v1006 = vld [vmem:[%s178 + $0xce8] sm:$0xf]
                %1007 = vst [vmem:[%s179 + $0x674] sm:$0xf] %v1006
                %v1008 = vld [vmem:[%s178 + $0xcf0] sm:$0xf]
                %1009 = vst [vmem:[%s179 + $0x678] sm:$0xf] %v1008
                %v1010 = vld [vmem:[%s178 + $0xcf8] sm:$0xf]
                %1011 = vst [vmem:[%s179 + $0x67c] sm:$0xf] %v1010
                %v1012 = vld [vmem:[%s178 + $0xd00] sm:$0xf]
                %1013 = vst [vmem:[%s179 + $0x680] sm:$0xf] %v1012
                %v1014 = vld [vmem:[%s178 + $0xd08] sm:$0xf]
                %1015 = vst [vmem:[%s179 + $0x684] sm:$0xf] %v1014
                %v1016 = vld [vmem:[%s178 + $0xd10] sm:$0xf]
                %1017 = vst [vmem:[%s179 + $0x688] sm:$0xf] %v1016
                %v1018 = vld [vmem:[%s178 + $0xd18] sm:$0xf]
                %1019 = vst [vmem:[%s179 + $0x68c] sm:$0xf] %v1018
                %v1020 = vld [vmem:[%s178 + $0xd20] sm:$0xf]
                %1021 = vst [vmem:[%s179 + $0x690] sm:$0xf] %v1020
                %v1022 = vld [vmem:[%s178 + $0xd28] sm:$0xf]
                %1023 = vst [vmem:[%s179 + $0x694] sm:$0xf] %v1022
                %v1024 = vld [vmem:[%s178 + $0xd30] sm:$0xf]
                %1025 = vst [vmem:[%s179 + $0x698] sm:$0xf] %v1024
                %v1026 = vld [vmem:[%s178 + $0xd38] sm:$0xf]
                %1027 = vst [vmem:[%s179 + $0x69c] sm:$0xf] %v1026
                %v1028 = vld [vmem:[%s178 + $0xd40] sm:$0xf]
                %1029 = vst [vmem:[%s179 + $0x6a0] sm:$0xf] %v1028
                %v1030 = vld [vmem:[%s178 + $0xd48] sm:$0xf]
                %1031 = vst [vmem:[%s179 + $0x6a4] sm:$0xf] %v1030
                %v1032 = vld [vmem:[%s178 + $0xd50] sm:$0xf]
                %1033 = vst [vmem:[%s179 + $0x6a8] sm:$0xf] %v1032
                %v1034 = vld [vmem:[%s178 + $0xd58] sm:$0xf]
                %1035 = vst [vmem:[%s179 + $0x6ac] sm:$0xf] %v1034
                %v1036 = vld [vmem:[%s178 + $0xd60] sm:$0xf]
                %1037 = vst [vmem:[%s179 + $0x6b0] sm:$0xf] %v1036
                %v1038 = vld [vmem:[%s178 + $0xd68] sm:$0xf]
                %1039 = vst [vmem:[%s179 + $0x6b4] sm:$0xf] %v1038
                %v1040 = vld [vmem:[%s178 + $0xd70] sm:$0xf]
                %1041 = vst [vmem:[%s179 + $0x6b8] sm:$0xf] %v1040
                %v1042 = vld [vmem:[%s178 + $0xd78] sm:$0xf]
                %1043 = vst [vmem:[%s179 + $0x6bc] sm:$0xf] %v1042
              $region41: #{_lambda_.5} parent=35 // loop_footer
                %s177 = sadd.s32 1, %s173
              $region42: #{_lambda_.5} parent=35 // loop_footer_branch
                %172 = sbr.rel target = $region38
              $region43: #{_lambda_.5} parent=35 // loop_exit
                _
            $region36: #{_lambda_.5} parent=27 // pred_fallthru
              _
          $region28: #{_lambda_.5} parent=23 // pred_fallthru
            _
          %1927 = vnop
        $region24: #{_lambda_.5} parent=15 // pred_fallthru
          _
        // Predicated region
        $region62: #{_lambda_.5} parent=15 // pred_check
          %p1928 = pneg %p93
        $region63: #{_lambda_.5} parent=15 // pred_check_branch
          %1930 = sbr.rel (%p1928) target = $region65
        $region64: #{_lambda_.5} parent=15 // pred_region
          %p1931 = scmp.lt.s32.totalorder %s16, 1
          %s1932 = scalar_select %p1931, %s16, 1
          %s1933 = scalar_lea.vmem %s2, %s1932
        $region65: #{_lambda_.5} parent=15 // pred_fallthru
          _
      $region16: #{_lambda_.5} parent=5 // pred_fallthru
        _
      %p1934 = scmp.le.s32.totalorder 1, %s9
      %p1935 = scmp.lt.s32.totalorder %s9, 5
      %p1936 = pnand %p1934, %p1935
      %p1937 = pneg %p1936
      // Predicated region
      $region66: #{_lambda_.5} parent=5 // pred_check
        _
      $region67: #{_lambda_.5} parent=5 // pred_check_branch
        %1939 = sbr.rel (%p1936) target = $region69
      $region68: #{_lambda_.5} parent=5 // pred_region
        %s1940 = ssub.s32 %s9, 1
        %s1941 = sand.u32 %s60, 1
        %s1942 = sand.u32 %s60, 1
        %s1943 = smul.addr %s1942, 1728
        %s1944 = scalar_lea.vmem [#allocation2], %s1943
        // Predicated region
        $region70: #{_lambda_.5} parent=68 // pred_check
          %p1945 = pneg %p73
        $region71: #{_lambda_.5} parent=68 // pred_check_branch
          %1947 = sbr.rel (%p1945) target = $region73
        $region72: #{_lambda_.5} parent=68 // pred_region
          _
        $region73: #{_lambda_.5} parent=68 // pred_fallthru
          _
        %s1948 = smul.u32 8, %s19
        %p1949 = scmp.lt.s32.totalorder %s1948, 15
        %s1950 = scalar_select %p1949, %s1948, 15
        %s1951 = smul.addr %s1950, 27
        %s1952 = smul.addr %s1951, 4
        %s1953 = scalar_lea.vmem %s0, %s1952
        %p1954 = pneg %p47
        %p1955 = pneg %p44
        %s1956 = sand.u32 %s60, 1
        %s1957 = sand.u32 %s60, 1
        %s1958 = smul.addr %s1957, 1728
        %s1959 = scalar_lea.vmem [#allocation2], %s1958
        %p1960 = pneg %p73
        %p1961 = pneg %p70
        %p1962 = scmp.lt.s32.totalorder %s18, 1
        %s1963 = scalar_select %p1962, %s18, 1
        %s1964 = scalar_lea.vmem %s2, %s1963
        %p1965 = pneg %p99
        %p1966 = pneg %p96
        %p1967 = pneg %p127
        %p1968 = pneg %p124
        %s1969 = sand.u32 %s114, 1
        %s1970 = sand.u32 %s114, 1
        %s1971 = smul.addr %s1970, 32
        %s1972 = scalar_lea.vmem [#allocation3], %s1971
        %s1973 = smul.u32 8, %s19
        %p1974 = scmp.lt.s32.totalorder %s1973, 15
        %s1975 = scalar_select %p1974, %s1973, 15
        %s1976 = smul.addr %s1975, 27
        %s1977 = smul.addr %s1976, 4
        %s1978 = scalar_lea.vmem %s0, %s1977
        %s1979 = smul.u32 8, %s19
        %p1980 = scmp.lt.s32.totalorder %s18, 1
        %s1981 = scalar_select %p1980, %s18, 1
        %s1982 = scalar_lea.vmem %s2, %s1981
        %s1983 = smul.u32 8, %s19
        %v1985 = vld [vmem:[%s1978] sm:$0xff]
        %v1986 = vld [vmem:[%s1978 + $0x8] sm:$0xff]
        %v1987 = vld [vmem:[%s1978 + $0x10] sm:$0xff]
        %v1988 = vld [vmem:[%s1978 + $0x18] sm:$0xff]
        %v1989 = vld [vmem:[%s1978 + $0x20] sm:$0xff]
        %v1990 = vld [vmem:[%s1978 + $0x28] sm:$0xff]
        %v1991 = vld [vmem:[%s1978 + $0x30] sm:$0xff]
        %v1992 = vld [vmem:[%s1978 + $0x38] sm:$0xff]
        %v1993 = vld [vmem:[%s1978 + $0x40] sm:$0xff]
        %v1994 = vld [vmem:[%s1978 + $0x48] sm:$0xff]
        %v1995 = vld [vmem:[%s1978 + $0x50] sm:$0xff]
        %v1996 = vld [vmem:[%s1978 + $0x58] sm:$0xff]
        %v1997 = vld [vmem:[%s1978 + $0x60] sm:$0xff]
        %v1998 = vld [vmem:[%s1978 + $0x68] sm:$0xf]
        %v1999 = vld [vmem:[%s1978 + $0x6c] sm:$0xff]
        %v2000 = vld [vmem:[%s1978 + $0x74] sm:$0xff]
        %v2001 = vld [vmem:[%s1978 + $0x7c] sm:$0xff]
        %v2002 = vld [vmem:[%s1978 + $0x84] sm:$0xff]
        %v2003 = vld [vmem:[%s1978 + $0x8c] sm:$0xff]
        %v2004 = vld [vmem:[%s1978 + $0x94] sm:$0xff]
        %v2005 = vld [vmem:[%s1978 + $0x9c] sm:$0xff]
        %v2006 = vld [vmem:[%s1978 + $0xa4] sm:$0xff]
        %v2007 = vld [vmem:[%s1978 + $0xac] sm:$0xff]
        %v2008 = vld [vmem:[%s1978 + $0xb4] sm:$0xff]
        %v2009 = vld [vmem:[%s1978 + $0xbc] sm:$0xff]
        %v2010 = vld [vmem:[%s1978 + $0xc4] sm:$0xff]
        %v2011 = vld [vmem:[%s1978 + $0xcc] sm:$0xff]
        %v2012 = vld [vmem:[%s1978 + $0xd4] sm:$0xf]
        %v2013 = vld [vmem:[%s1978 + $0xd8] sm:$0xff]
        %v2014 = vld [vmem:[%s1978 + $0xe0] sm:$0xff]
        %v2015 = vld [vmem:[%s1978 + $0xe8] sm:$0xff]
        %v2016 = vld [vmem:[%s1978 + $0xf0] sm:$0xff]
        %v2017 = vld [vmem:[%s1978 + $0xf8] sm:$0xff]
        %v2018 = vld [vmem:[%s1978 + $0x100] sm:$0xff]
        %v2019 = vld [vmem:[%s1978 + $0x108] sm:$0xff]
        %v2020 = vld [vmem:[%s1978 + $0x110] sm:$0xff]
        %v2021 = vld [vmem:[%s1978 + $0x118] sm:$0xff]
        %v2022 = vld [vmem:[%s1978 + $0x120] sm:$0xff]
        %v2023 = vld [vmem:[%s1978 + $0x128] sm:$0xff]
        %v2024 = vld [vmem:[%s1978 + $0x130] sm:$0xff]
        %v2025 = vld [vmem:[%s1978 + $0x138] sm:$0xff]
        %v2026 = vld [vmem:[%s1978 + $0x140] sm:$0xf]
        %v2027 = vld [vmem:[%s1978 + $0x144] sm:$0xff]
        %v2028 = vld [vmem:[%s1978 + $0x14c] sm:$0xff]
        %v2029 = vld [vmem:[%s1978 + $0x154] sm:$0xff]
        %v2030 = vld [vmem:[%s1978 + $0x15c] sm:$0xff]
        %v2031 = vld [vmem:[%s1978 + $0x164] sm:$0xff]
        %v2032 = vld [vmem:[%s1978 + $0x16c] sm:$0xff]
        %v2033 = vld [vmem:[%s1978 + $0x174] sm:$0xff]
        %v2034 = vld [vmem:[%s1978 + $0x17c] sm:$0xff]
        %v2035 = vld [vmem:[%s1978 + $0x184] sm:$0xff]
        %v2036 = vld [vmem:[%s1978 + $0x18c] sm:$0xff]
        %v2037 = vld [vmem:[%s1978 + $0x194] sm:$0xff]
        %v2038 = vld [vmem:[%s1978 + $0x19c] sm:$0xff]
        %v2039 = vld [vmem:[%s1978 + $0x1a4] sm:$0xff]
        %v2040 = vld [vmem:[%s1978 + $0x1ac] sm:$0xf]
        %v2041 = vld [vmem:[%s1978 + $0x1b0] sm:$0xff]
        %v2042 = vld [vmem:[%s1978 + $0x1b8] sm:$0xff]
        %v2043 = vld [vmem:[%s1978 + $0x1c0] sm:$0xff]
        %v2044 = vld [vmem:[%s1978 + $0x1c8] sm:$0xff]
        %v2045 = vld [vmem:[%s1978 + $0x1d0] sm:$0xff]
        %v2046 = vld [vmem:[%s1978 + $0x1d8] sm:$0xff]
        %v2047 = vld [vmem:[%s1978 + $0x1e0] sm:$0xff]
        %v2048 = vld [vmem:[%s1978 + $0x1e8] sm:$0xff]
        %v2049 = vld [vmem:[%s1978 + $0x1f0] sm:$0xff]
        %v2050 = vld [vmem:[%s1978 + $0x1f8] sm:$0xff]
        %v2051 = vld [vmem:[%s1978 + $0x200] sm:$0xff]
        %v2052 = vld [vmem:[%s1978 + $0x208] sm:$0xff]
        %v2053 = vld [vmem:[%s1978 + $0x210] sm:$0xff]
        %v2054 = vld [vmem:[%s1978 + $0x218] sm:$0xf]
        %v2055 = vld [vmem:[%s1978 + $0x21c] sm:$0xff]
        %v2056 = vld [vmem:[%s1978 + $0x224] sm:$0xff]
        %v2057 = vld [vmem:[%s1978 + $0x22c] sm:$0xff]
        %v2058 = vld [vmem:[%s1978 + $0x234] sm:$0xff]
        %v2059 = vld [vmem:[%s1978 + $0x23c] sm:$0xff]
        %v2060 = vld [vmem:[%s1978 + $0x244] sm:$0xff]
        %v2061 = vld [vmem:[%s1978 + $0x24c] sm:$0xff]
        %v2062 = vld [vmem:[%s1978 + $0x254] sm:$0xff]
        %v2063 = vld [vmem:[%s1978 + $0x25c] sm:$0xff]
        %v2064 = vld [vmem:[%s1978 + $0x264] sm:$0xff]
        %v2065 = vld [vmem:[%s1978 + $0x26c] sm:$0xff]
        %v2066 = vld [vmem:[%s1978 + $0x274] sm:$0xff]
        %v2067 = vld [vmem:[%s1978 + $0x27c] sm:$0xff]
        %v2068 = vld [vmem:[%s1978 + $0x284] sm:$0xf]
        %v2069 = vld [vmem:[%s1978 + $0x288] sm:$0xff]
        %v2070 = vld [vmem:[%s1978 + $0x290] sm:$0xff]
        %v2071 = vld [vmem:[%s1978 + $0x298] sm:$0xff]
        %v2072 = vld [vmem:[%s1978 + $0x2a0] sm:$0xff]
        %v2073 = vld [vmem:[%s1978 + $0x2a8] sm:$0xff]
        %v2074 = vld [vmem:[%s1978 + $0x2b0] sm:$0xff]
        %v2075 = vld [vmem:[%s1978 + $0x2b8] sm:$0xff]
        %v2076 = vld [vmem:[%s1978 + $0x2c0] sm:$0xff]
        %v2077 = vld [vmem:[%s1978 + $0x2c8] sm:$0xff]
        %v2078 = vld [vmem:[%s1978 + $0x2d0] sm:$0xff]
        %v2079 = vld [vmem:[%s1978 + $0x2d8] sm:$0xff]
        %v2080 = vld [vmem:[%s1978 + $0x2e0] sm:$0xff]
        %v2081 = vld [vmem:[%s1978 + $0x2e8] sm:$0xff]
        %v2082 = vld [vmem:[%s1978 + $0x2f0] sm:$0xf]
        %v2083 = vld [vmem:[%s1978 + $0x2f4] sm:$0xff]
        %v2084 = vld [vmem:[%s1978 + $0x2fc] sm:$0xff]
        %v2085 = vld [vmem:[%s1978 + $0x304] sm:$0xff]
        %v2086 = vld [vmem:[%s1978 + $0x30c] sm:$0xff]
        %v2087 = vld [vmem:[%s1978 + $0x314] sm:$0xff]
        %v2088 = vld [vmem:[%s1978 + $0x31c] sm:$0xff]
        %v2089 = vld [vmem:[%s1978 + $0x324] sm:$0xff]
        %v2090 = vld [vmem:[%s1978 + $0x32c] sm:$0xff]
        %v2091 = vld [vmem:[%s1978 + $0x334] sm:$0xff]
        %v2092 = vld [vmem:[%s1978 + $0x33c] sm:$0xff]
        %v2093 = vld [vmem:[%s1978 + $0x344] sm:$0xff]
        %v2094 = vld [vmem:[%s1978 + $0x34c] sm:$0xff]
        %v2095 = vld [vmem:[%s1978 + $0x354] sm:$0xff]
        %v2096 = vld [vmem:[%s1978 + $0x35c] sm:$0xf]
        %v2097 = vld [vmem:[%s1944] sm:$0xf]
        %v2098 = vld [vmem:[%s1944 + $0x4] sm:$0xf]
        %v2099 = vld [vmem:[%s1944 + $0x8] sm:$0xf]
        %v2100 = vld [vmem:[%s1944 + $0xc] sm:$0xf]
        %v2101 = vld [vmem:[%s1944 + $0x10] sm:$0xf]
        %v2102 = vld [vmem:[%s1944 + $0x14] sm:$0xf]
        %v2103 = vld [vmem:[%s1944 + $0x18] sm:$0xf]
        %v2104 = vld [vmem:[%s1944 + $0x1c] sm:$0xf]
        %v2105 = vld [vmem:[%s1944 + $0x20] sm:$0xf]
        %v2106 = vld [vmem:[%s1944 + $0x24] sm:$0xf]
        %v2107 = vld [vmem:[%s1944 + $0x28] sm:$0xf]
        %v2108 = vld [vmem:[%s1944 + $0x2c] sm:$0xf]
        %v2109 = vld [vmem:[%s1944 + $0x30] sm:$0xf]
        %v2110 = vld [vmem:[%s1944 + $0x34] sm:$0xf]
        %v2111 = vld [vmem:[%s1944 + $0x38] sm:$0xf]
        %v2112 = vld [vmem:[%s1944 + $0x3c] sm:$0xf]
        %v2113 = vld [vmem:[%s1944 + $0x40] sm:$0xf]
        %v2114 = vld [vmem:[%s1944 + $0x44] sm:$0xf]
        %v2115 = vld [vmem:[%s1944 + $0x48] sm:$0xf]
        %v2116 = vld [vmem:[%s1944 + $0x4c] sm:$0xf]
        %v2117 = vld [vmem:[%s1944 + $0x50] sm:$0xf]
        %v2118 = vld [vmem:[%s1944 + $0x54] sm:$0xf]
        %v2119 = vld [vmem:[%s1944 + $0x58] sm:$0xf]
        %v2120 = vld [vmem:[%s1944 + $0x5c] sm:$0xf]
        %v2121 = vld [vmem:[%s1944 + $0x60] sm:$0xf]
        %v2122 = vld [vmem:[%s1944 + $0x64] sm:$0xf]
        %v2123 = vld [vmem:[%s1944 + $0x68] sm:$0xf]
        %v2124 = vld [vmem:[%s1944 + $0x6c] sm:$0xf]
        %v2125 = vld [vmem:[%s1944 + $0x70] sm:$0xf]
        %v2126 = vld [vmem:[%s1944 + $0x74] sm:$0xf]
        %v2127 = vld [vmem:[%s1944 + $0x78] sm:$0xf]
        %v2128 = vld [vmem:[%s1944 + $0x7c] sm:$0xf]
        %v2129 = vld [vmem:[%s1944 + $0x80] sm:$0xf]
        %v2130 = vld [vmem:[%s1944 + $0x84] sm:$0xf]
        %v2131 = vld [vmem:[%s1944 + $0x88] sm:$0xf]
        %v2132 = vld [vmem:[%s1944 + $0x8c] sm:$0xf]
        %v2133 = vld [vmem:[%s1944 + $0x90] sm:$0xf]
        %v2134 = vld [vmem:[%s1944 + $0x94] sm:$0xf]
        %v2135 = vld [vmem:[%s1944 + $0x98] sm:$0xf]
        %v2136 = vld [vmem:[%s1944 + $0x9c] sm:$0xf]
        %v2137 = vld [vmem:[%s1944 + $0xa0] sm:$0xf]
        %v2138 = vld [vmem:[%s1944 + $0xa4] sm:$0xf]
        %v2139 = vld [vmem:[%s1944 + $0xa8] sm:$0xf]
        %v2140 = vld [vmem:[%s1944 + $0xac] sm:$0xf]
        %v2141 = vld [vmem:[%s1944 + $0xb0] sm:$0xf]
        %v2142 = vld [vmem:[%s1944 + $0xb4] sm:$0xf]
        %v2143 = vld [vmem:[%s1944 + $0xb8] sm:$0xf]
        %v2144 = vld [vmem:[%s1944 + $0xbc] sm:$0xf]
        %v2145 = vld [vmem:[%s1944 + $0xc0] sm:$0xf]
        %v2146 = vld [vmem:[%s1944 + $0xc4] sm:$0xf]
        %v2147 = vld [vmem:[%s1944 + $0xc8] sm:$0xf]
        %v2148 = vld [vmem:[%s1944 + $0xcc] sm:$0xf]
        %v2149 = vld [vmem:[%s1944 + $0xd0] sm:$0xf]
        %v2150 = vld [vmem:[%s1944 + $0xd4] sm:$0xf]
        %v2151 = vld [vmem:[%s1944 + $0xd8] sm:$0xf]
        %v2152 = vld [vmem:[%s1944 + $0xdc] sm:$0xf]
        %v2153 = vld [vmem:[%s1944 + $0xe0] sm:$0xf]
        %v2154 = vld [vmem:[%s1944 + $0xe4] sm:$0xf]
        %v2155 = vld [vmem:[%s1944 + $0xe8] sm:$0xf]
        %v2156 = vld [vmem:[%s1944 + $0xec] sm:$0xf]
        %v2157 = vld [vmem:[%s1944 + $0xf0] sm:$0xf]
        %v2158 = vld [vmem:[%s1944 + $0xf4] sm:$0xf]
        %v2159 = vld [vmem:[%s1944 + $0xf8] sm:$0xf]
        %v2160 = vld [vmem:[%s1944 + $0xfc] sm:$0xf]
        %v2161 = vld [vmem:[%s1944 + $0x100] sm:$0xf]
        %v2162 = vld [vmem:[%s1944 + $0x104] sm:$0xf]
        %v2163 = vld [vmem:[%s1944 + $0x108] sm:$0xf]
        %v2164 = vld [vmem:[%s1944 + $0x10c] sm:$0xf]
        %v2165 = vld [vmem:[%s1944 + $0x110] sm:$0xf]
        %v2166 = vld [vmem:[%s1944 + $0x114] sm:$0xf]
        %v2167 = vld [vmem:[%s1944 + $0x118] sm:$0xf]
        %v2168 = vld [vmem:[%s1944 + $0x11c] sm:$0xf]
        %v2169 = vld [vmem:[%s1944 + $0x120] sm:$0xf]
        %v2170 = vld [vmem:[%s1944 + $0x124] sm:$0xf]
        %v2171 = vld [vmem:[%s1944 + $0x128] sm:$0xf]
        %v2172 = vld [vmem:[%s1944 + $0x12c] sm:$0xf]
        %v2173 = vld [vmem:[%s1944 + $0x130] sm:$0xf]
        %v2174 = vld [vmem:[%s1944 + $0x134] sm:$0xf]
        %v2175 = vld [vmem:[%s1944 + $0x138] sm:$0xf]
        %v2176 = vld [vmem:[%s1944 + $0x13c] sm:$0xf]
        %v2177 = vld [vmem:[%s1944 + $0x140] sm:$0xf]
        %v2178 = vld [vmem:[%s1944 + $0x144] sm:$0xf]
        %v2179 = vld [vmem:[%s1944 + $0x148] sm:$0xf]
        %v2180 = vld [vmem:[%s1944 + $0x14c] sm:$0xf]
        %v2181 = vld [vmem:[%s1944 + $0x150] sm:$0xf]
        %v2182 = vld [vmem:[%s1944 + $0x154] sm:$0xf]
        %v2183 = vld [vmem:[%s1944 + $0x158] sm:$0xf]
        %v2184 = vld [vmem:[%s1944 + $0x15c] sm:$0xf]
        %v2185 = vld [vmem:[%s1944 + $0x160] sm:$0xf]
        %v2186 = vld [vmem:[%s1944 + $0x164] sm:$0xf]
        %v2187 = vld [vmem:[%s1944 + $0x168] sm:$0xf]
        %v2188 = vld [vmem:[%s1944 + $0x16c] sm:$0xf]
        %v2189 = vld [vmem:[%s1944 + $0x170] sm:$0xf]
        %v2190 = vld [vmem:[%s1944 + $0x174] sm:$0xf]
        %v2191 = vld [vmem:[%s1944 + $0x178] sm:$0xf]
        %v2192 = vld [vmem:[%s1944 + $0x17c] sm:$0xf]
        %v2193 = vld [vmem:[%s1944 + $0x180] sm:$0xf]
        %v2194 = vld [vmem:[%s1944 + $0x184] sm:$0xf]
        %v2195 = vld [vmem:[%s1944 + $0x188] sm:$0xf]
        %v2196 = vld [vmem:[%s1944 + $0x18c] sm:$0xf]
        %v2197 = vld [vmem:[%s1944 + $0x190] sm:$0xf]
        %v2198 = vld [vmem:[%s1944 + $0x194] sm:$0xf]
        %v2199 = vld [vmem:[%s1944 + $0x198] sm:$0xf]
        %v2200 = vld [vmem:[%s1944 + $0x19c] sm:$0xf]
        %v2201 = vld [vmem:[%s1944 + $0x1a0] sm:$0xf]
        %v2202 = vld [vmem:[%s1944 + $0x1a4] sm:$0xf]
        %v2203 = vld [vmem:[%s1944 + $0x1a8] sm:$0xf]
        %v2204 = vld [vmem:[%s1944 + $0x1ac] sm:$0xf]
        %v2205 = vld [vmem:[%s1944 + $0x1b0] sm:$0xf]
        %v2206 = vld [vmem:[%s1944 + $0x1b4] sm:$0xf]
        %v2207 = vld [vmem:[%s1944 + $0x1b8] sm:$0xf]
        %v2208 = vld [vmem:[%s1944 + $0x1bc] sm:$0xf]
        %v2209 = vld [vmem:[%s1944 + $0x1c0] sm:$0xf]
        %v2210 = vld [vmem:[%s1944 + $0x1c4] sm:$0xf]
        %v2211 = vld [vmem:[%s1944 + $0x1c8] sm:$0xf]
        %v2212 = vld [vmem:[%s1944 + $0x1cc] sm:$0xf]
        %v2213 = vld [vmem:[%s1944 + $0x1d0] sm:$0xf]
        %v2214 = vld [vmem:[%s1944 + $0x1d4] sm:$0xf]
        %v2215 = vld [vmem:[%s1944 + $0x1d8] sm:$0xf]
        %v2216 = vld [vmem:[%s1944 + $0x1dc] sm:$0xf]
        %v2217 = vld [vmem:[%s1944 + $0x1e0] sm:$0xf]
        %v2218 = vld [vmem:[%s1944 + $0x1e4] sm:$0xf]
        %v2219 = vld [vmem:[%s1944 + $0x1e8] sm:$0xf]
        %v2220 = vld [vmem:[%s1944 + $0x1ec] sm:$0xf]
        %v2221 = vld [vmem:[%s1944 + $0x1f0] sm:$0xf]
        %v2222 = vld [vmem:[%s1944 + $0x1f4] sm:$0xf]
        %v2223 = vld [vmem:[%s1944 + $0x1f8] sm:$0xf]
        %v2224 = vld [vmem:[%s1944 + $0x1fc] sm:$0xf]
        %v2225 = vld [vmem:[%s1944 + $0x200] sm:$0xf]
        %v2226 = vld [vmem:[%s1944 + $0x204] sm:$0xf]
        %v2227 = vld [vmem:[%s1944 + $0x208] sm:$0xf]
        %v2228 = vld [vmem:[%s1944 + $0x20c] sm:$0xf]
        %v2229 = vld [vmem:[%s1944 + $0x210] sm:$0xf]
        %v2230 = vld [vmem:[%s1944 + $0x214] sm:$0xf]
        %v2231 = vld [vmem:[%s1944 + $0x218] sm:$0xf]
        %v2232 = vld [vmem:[%s1944 + $0x21c] sm:$0xf]
        %v2233 = vld [vmem:[%s1944 + $0x220] sm:$0xf]
        %v2234 = vld [vmem:[%s1944 + $0x224] sm:$0xf]
        %v2235 = vld [vmem:[%s1944 + $0x228] sm:$0xf]
        %v2236 = vld [vmem:[%s1944 + $0x22c] sm:$0xf]
        %v2237 = vld [vmem:[%s1944 + $0x230] sm:$0xf]
        %v2238 = vld [vmem:[%s1944 + $0x234] sm:$0xf]
        %v2239 = vld [vmem:[%s1944 + $0x238] sm:$0xf]
        %v2240 = vld [vmem:[%s1944 + $0x23c] sm:$0xf]
        %v2241 = vld [vmem:[%s1944 + $0x240] sm:$0xf]
        %v2242 = vld [vmem:[%s1944 + $0x244] sm:$0xf]
        %v2243 = vld [vmem:[%s1944 + $0x248] sm:$0xf]
        %v2244 = vld [vmem:[%s1944 + $0x24c] sm:$0xf]
        %v2245 = vld [vmem:[%s1944 + $0x250] sm:$0xf]
        %v2246 = vld [vmem:[%s1944 + $0x254] sm:$0xf]
        %v2247 = vld [vmem:[%s1944 + $0x258] sm:$0xf]
        %v2248 = vld [vmem:[%s1944 + $0x25c] sm:$0xf]
        %v2249 = vld [vmem:[%s1944 + $0x260] sm:$0xf]
        %v2250 = vld [vmem:[%s1944 + $0x264] sm:$0xf]
        %v2251 = vld [vmem:[%s1944 + $0x268] sm:$0xf]
        %v2252 = vld [vmem:[%s1944 + $0x26c] sm:$0xf]
        %v2253 = vld [vmem:[%s1944 + $0x270] sm:$0xf]
        %v2254 = vld [vmem:[%s1944 + $0x274] sm:$0xf]
        %v2255 = vld [vmem:[%s1944 + $0x278] sm:$0xf]
        %v2256 = vld [vmem:[%s1944 + $0x27c] sm:$0xf]
        %v2257 = vld [vmem:[%s1944 + $0x280] sm:$0xf]
        %v2258 = vld [vmem:[%s1944 + $0x284] sm:$0xf]
        %v2259 = vld [vmem:[%s1944 + $0x288] sm:$0xf]
        %v2260 = vld [vmem:[%s1944 + $0x28c] sm:$0xf]
        %v2261 = vld [vmem:[%s1944 + $0x290] sm:$0xf]
        %v2262 = vld [vmem:[%s1944 + $0x294] sm:$0xf]
        %v2263 = vld [vmem:[%s1944 + $0x298] sm:$0xf]
        %v2264 = vld [vmem:[%s1944 + $0x29c] sm:$0xf]
        %v2265 = vld [vmem:[%s1944 + $0x2a0] sm:$0xf]
        %v2266 = vld [vmem:[%s1944 + $0x2a4] sm:$0xf]
        %v2267 = vld [vmem:[%s1944 + $0x2a8] sm:$0xf]
        %v2268 = vld [vmem:[%s1944 + $0x2ac] sm:$0xf]
        %v2269 = vld [vmem:[%s1944 + $0x2b0] sm:$0xf]
        %v2270 = vld [vmem:[%s1944 + $0x2b4] sm:$0xf]
        %v2271 = vld [vmem:[%s1944 + $0x2b8] sm:$0xf]
        %v2272 = vld [vmem:[%s1944 + $0x2bc] sm:$0xf]
        %v2273 = vld [vmem:[%s1944 + $0x2c0] sm:$0xf]
        %v2274 = vld [vmem:[%s1944 + $0x2c4] sm:$0xf]
        %v2275 = vld [vmem:[%s1944 + $0x2c8] sm:$0xf]
        %v2276 = vld [vmem:[%s1944 + $0x2cc] sm:$0xf]
        %v2277 = vld [vmem:[%s1944 + $0x2d0] sm:$0xf]
        %v2278 = vld [vmem:[%s1944 + $0x2d4] sm:$0xf]
        %v2279 = vld [vmem:[%s1944 + $0x2d8] sm:$0xf]
        %v2280 = vld [vmem:[%s1944 + $0x2dc] sm:$0xf]
        %v2281 = vld [vmem:[%s1944 + $0x2e0] sm:$0xf]
        %v2282 = vld [vmem:[%s1944 + $0x2e4] sm:$0xf]
        %v2283 = vld [vmem:[%s1944 + $0x2e8] sm:$0xf]
        %v2284 = vld [vmem:[%s1944 + $0x2ec] sm:$0xf]
        %v2285 = vld [vmem:[%s1944 + $0x2f0] sm:$0xf]
        %v2286 = vld [vmem:[%s1944 + $0x2f4] sm:$0xf]
        %v2287 = vld [vmem:[%s1944 + $0x2f8] sm:$0xf]
        %v2288 = vld [vmem:[%s1944 + $0x2fc] sm:$0xf]
        %v2289 = vld [vmem:[%s1944 + $0x300] sm:$0xf]
        %v2290 = vld [vmem:[%s1944 + $0x304] sm:$0xf]
        %v2291 = vld [vmem:[%s1944 + $0x308] sm:$0xf]
        %v2292 = vld [vmem:[%s1944 + $0x30c] sm:$0xf]
        %v2293 = vld [vmem:[%s1944 + $0x310] sm:$0xf]
        %v2294 = vld [vmem:[%s1944 + $0x314] sm:$0xf]
        %v2295 = vld [vmem:[%s1944 + $0x318] sm:$0xf]
        %v2296 = vld [vmem:[%s1944 + $0x31c] sm:$0xf]
        %v2297 = vld [vmem:[%s1944 + $0x320] sm:$0xf]
        %v2298 = vld [vmem:[%s1944 + $0x324] sm:$0xf]
        %v2299 = vld [vmem:[%s1944 + $0x328] sm:$0xf]
        %v2300 = vld [vmem:[%s1944 + $0x32c] sm:$0xf]
        %v2301 = vld [vmem:[%s1944 + $0x330] sm:$0xf]
        %v2302 = vld [vmem:[%s1944 + $0x334] sm:$0xf]
        %v2303 = vld [vmem:[%s1944 + $0x338] sm:$0xf]
        %v2304 = vld [vmem:[%s1944 + $0x33c] sm:$0xf]
        %v2305 = vld [vmem:[%s1944 + $0x340] sm:$0xf]
        %v2306 = vld [vmem:[%s1944 + $0x344] sm:$0xf]
        %v2307 = vld [vmem:[%s1944 + $0x348] sm:$0xf]
        %v2308 = vld [vmem:[%s1944 + $0x34c] sm:$0xf]
        %v2309 = vld [vmem:[%s1944 + $0x350] sm:$0xf]
        %v2310 = vld [vmem:[%s1944 + $0x354] sm:$0xf]
        %v2311 = vld [vmem:[%s1944 + $0x358] sm:$0xf]
        %v2312 = vld [vmem:[%s1944 + $0x35c] sm:$0xf]
        %v2313 = vld [vmem:[%s1944 + $0x360] sm:$0xf]
        %v2314 = vld [vmem:[%s1944 + $0x364] sm:$0xf]
        %v2315 = vld [vmem:[%s1944 + $0x368] sm:$0xf]
        %v2316 = vld [vmem:[%s1944 + $0x36c] sm:$0xf]
        %v2317 = vld [vmem:[%s1944 + $0x370] sm:$0xf]
        %v2318 = vld [vmem:[%s1944 + $0x374] sm:$0xf]
        %v2319 = vld [vmem:[%s1944 + $0x378] sm:$0xf]
        %v2320 = vld [vmem:[%s1944 + $0x37c] sm:$0xf]
        %v2321 = vld [vmem:[%s1944 + $0x380] sm:$0xf]
        %v2322 = vld [vmem:[%s1944 + $0x384] sm:$0xf]
        %v2323 = vld [vmem:[%s1944 + $0x388] sm:$0xf]
        %v2324 = vld [vmem:[%s1944 + $0x38c] sm:$0xf]
        %v2325 = vld [vmem:[%s1944 + $0x390] sm:$0xf]
        %v2326 = vld [vmem:[%s1944 + $0x394] sm:$0xf]
        %v2327 = vld [vmem:[%s1944 + $0x398] sm:$0xf]
        %v2328 = vld [vmem:[%s1944 + $0x39c] sm:$0xf]
        %v2329 = vld [vmem:[%s1944 + $0x3a0] sm:$0xf]
        %v2330 = vld [vmem:[%s1944 + $0x3a4] sm:$0xf]
        %v2331 = vld [vmem:[%s1944 + $0x3a8] sm:$0xf]
        %v2332 = vld [vmem:[%s1944 + $0x3ac] sm:$0xf]
        %v2333 = vld [vmem:[%s1944 + $0x3b0] sm:$0xf]
        %v2334 = vld [vmem:[%s1944 + $0x3b4] sm:$0xf]
        %v2335 = vld [vmem:[%s1944 + $0x3b8] sm:$0xf]
        %v2336 = vld [vmem:[%s1944 + $0x3bc] sm:$0xf]
        %v2337 = vld [vmem:[%s1944 + $0x3c0] sm:$0xf]
        %v2338 = vld [vmem:[%s1944 + $0x3c4] sm:$0xf]
        %v2339 = vld [vmem:[%s1944 + $0x3c8] sm:$0xf]
        %v2340 = vld [vmem:[%s1944 + $0x3cc] sm:$0xf]
        %v2341 = vld [vmem:[%s1944 + $0x3d0] sm:$0xf]
        %v2342 = vld [vmem:[%s1944 + $0x3d4] sm:$0xf]
        %v2343 = vld [vmem:[%s1944 + $0x3d8] sm:$0xf]
        %v2344 = vld [vmem:[%s1944 + $0x3dc] sm:$0xf]
        %v2345 = vld [vmem:[%s1944 + $0x3e0] sm:$0xf]
        %v2346 = vld [vmem:[%s1944 + $0x3e4] sm:$0xf]
        %v2347 = vld [vmem:[%s1944 + $0x3e8] sm:$0xf]
        %v2348 = vld [vmem:[%s1944 + $0x3ec] sm:$0xf]
        %v2349 = vld [vmem:[%s1944 + $0x3f0] sm:$0xf]
        %v2350 = vld [vmem:[%s1944 + $0x3f4] sm:$0xf]
        %v2351 = vld [vmem:[%s1944 + $0x3f8] sm:$0xf]
        %v2352 = vld [vmem:[%s1944 + $0x3fc] sm:$0xf]
        %v2353 = vld [vmem:[%s1944 + $0x400] sm:$0xf]
        %v2354 = vld [vmem:[%s1944 + $0x404] sm:$0xf]
        %v2355 = vld [vmem:[%s1944 + $0x408] sm:$0xf]
        %v2356 = vld [vmem:[%s1944 + $0x40c] sm:$0xf]
        %v2357 = vld [vmem:[%s1944 + $0x410] sm:$0xf]
        %v2358 = vld [vmem:[%s1944 + $0x414] sm:$0xf]
        %v2359 = vld [vmem:[%s1944 + $0x418] sm:$0xf]
        %v2360 = vld [vmem:[%s1944 + $0x41c] sm:$0xf]
        %v2361 = vld [vmem:[%s1944 + $0x420] sm:$0xf]
        %v2362 = vld [vmem:[%s1944 + $0x424] sm:$0xf]
        %v2363 = vld [vmem:[%s1944 + $0x428] sm:$0xf]
        %v2364 = vld [vmem:[%s1944 + $0x42c] sm:$0xf]
        %v2365 = vld [vmem:[%s1944 + $0x430] sm:$0xf]
        %v2366 = vld [vmem:[%s1944 + $0x434] sm:$0xf]
        %v2367 = vld [vmem:[%s1944 + $0x438] sm:$0xf]
        %v2368 = vld [vmem:[%s1944 + $0x43c] sm:$0xf]
        %v2369 = vld [vmem:[%s1944 + $0x440] sm:$0xf]
        %v2370 = vld [vmem:[%s1944 + $0x444] sm:$0xf]
        %v2371 = vld [vmem:[%s1944 + $0x448] sm:$0xf]
        %v2372 = vld [vmem:[%s1944 + $0x44c] sm:$0xf]
        %v2373 = vld [vmem:[%s1944 + $0x450] sm:$0xf]
        %v2374 = vld [vmem:[%s1944 + $0x454] sm:$0xf]
        %v2375 = vld [vmem:[%s1944 + $0x458] sm:$0xf]
        %v2376 = vld [vmem:[%s1944 + $0x45c] sm:$0xf]
        %v2377 = vld [vmem:[%s1944 + $0x460] sm:$0xf]
        %v2378 = vld [vmem:[%s1944 + $0x464] sm:$0xf]
        %v2379 = vld [vmem:[%s1944 + $0x468] sm:$0xf]
        %v2380 = vld [vmem:[%s1944 + $0x46c] sm:$0xf]
        %v2381 = vld [vmem:[%s1944 + $0x470] sm:$0xf]
        %v2382 = vld [vmem:[%s1944 + $0x474] sm:$0xf]
        %v2383 = vld [vmem:[%s1944 + $0x478] sm:$0xf]
        %v2384 = vld [vmem:[%s1944 + $0x47c] sm:$0xf]
        %v2385 = vld [vmem:[%s1944 + $0x480] sm:$0xf]
        %v2386 = vld [vmem:[%s1944 + $0x484] sm:$0xf]
        %v2387 = vld [vmem:[%s1944 + $0x488] sm:$0xf]
        %v2388 = vld [vmem:[%s1944 + $0x48c] sm:$0xf]
        %v2389 = vld [vmem:[%s1944 + $0x490] sm:$0xf]
        %v2390 = vld [vmem:[%s1944 + $0x494] sm:$0xf]
        %v2391 = vld [vmem:[%s1944 + $0x498] sm:$0xf]
        %v2392 = vld [vmem:[%s1944 + $0x49c] sm:$0xf]
        %v2393 = vld [vmem:[%s1944 + $0x4a0] sm:$0xf]
        %v2394 = vld [vmem:[%s1944 + $0x4a4] sm:$0xf]
        %v2395 = vld [vmem:[%s1944 + $0x4a8] sm:$0xf]
        %v2396 = vld [vmem:[%s1944 + $0x4ac] sm:$0xf]
        %v2397 = vld [vmem:[%s1944 + $0x4b0] sm:$0xf]
        %v2398 = vld [vmem:[%s1944 + $0x4b4] sm:$0xf]
        %v2399 = vld [vmem:[%s1944 + $0x4b8] sm:$0xf]
        %v2400 = vld [vmem:[%s1944 + $0x4bc] sm:$0xf]
        %v2401 = vld [vmem:[%s1944 + $0x4c0] sm:$0xf]
        %v2402 = vld [vmem:[%s1944 + $0x4c4] sm:$0xf]
        %v2403 = vld [vmem:[%s1944 + $0x4c8] sm:$0xf]
        %v2404 = vld [vmem:[%s1944 + $0x4cc] sm:$0xf]
        %v2405 = vld [vmem:[%s1944 + $0x4d0] sm:$0xf]
        %v2406 = vld [vmem:[%s1944 + $0x4d4] sm:$0xf]
        %v2407 = vld [vmem:[%s1944 + $0x4d8] sm:$0xf]
        %v2408 = vld [vmem:[%s1944 + $0x4dc] sm:$0xf]
        %v2409 = vld [vmem:[%s1944 + $0x4e0] sm:$0xf]
        %v2410 = vld [vmem:[%s1944 + $0x4e4] sm:$0xf]
        %v2411 = vld [vmem:[%s1944 + $0x4e8] sm:$0xf]
        %v2412 = vld [vmem:[%s1944 + $0x4ec] sm:$0xf]
        %v2413 = vld [vmem:[%s1944 + $0x4f0] sm:$0xf]
        %v2414 = vld [vmem:[%s1944 + $0x4f4] sm:$0xf]
        %v2415 = vld [vmem:[%s1944 + $0x4f8] sm:$0xf]
        %v2416 = vld [vmem:[%s1944 + $0x4fc] sm:$0xf]
        %v2417 = vld [vmem:[%s1944 + $0x500] sm:$0xf]
        %v2418 = vld [vmem:[%s1944 + $0x504] sm:$0xf]
        %v2419 = vld [vmem:[%s1944 + $0x508] sm:$0xf]
        %v2420 = vld [vmem:[%s1944 + $0x50c] sm:$0xf]
        %v2421 = vld [vmem:[%s1944 + $0x510] sm:$0xf]
        %v2422 = vld [vmem:[%s1944 + $0x514] sm:$0xf]
        %v2423 = vld [vmem:[%s1944 + $0x518] sm:$0xf]
        %v2424 = vld [vmem:[%s1944 + $0x51c] sm:$0xf]
        %v2425 = vld [vmem:[%s1944 + $0x520] sm:$0xf]
        %v2426 = vld [vmem:[%s1944 + $0x524] sm:$0xf]
        %v2427 = vld [vmem:[%s1944 + $0x528] sm:$0xf]
        %v2428 = vld [vmem:[%s1944 + $0x52c] sm:$0xf]
        %v2429 = vld [vmem:[%s1944 + $0x530] sm:$0xf]
        %v2430 = vld [vmem:[%s1944 + $0x534] sm:$0xf]
        %v2431 = vld [vmem:[%s1944 + $0x538] sm:$0xf]
        %v2432 = vld [vmem:[%s1944 + $0x53c] sm:$0xf]
        %v2433 = vld [vmem:[%s1944 + $0x540] sm:$0xf]
        %v2434 = vld [vmem:[%s1944 + $0x544] sm:$0xf]
        %v2435 = vld [vmem:[%s1944 + $0x548] sm:$0xf]
        %v2436 = vld [vmem:[%s1944 + $0x54c] sm:$0xf]
        %v2437 = vld [vmem:[%s1944 + $0x550] sm:$0xf]
        %v2438 = vld [vmem:[%s1944 + $0x554] sm:$0xf]
        %v2439 = vld [vmem:[%s1944 + $0x558] sm:$0xf]
        %v2440 = vld [vmem:[%s1944 + $0x55c] sm:$0xf]
        %v2441 = vld [vmem:[%s1944 + $0x560] sm:$0xf]
        %v2442 = vld [vmem:[%s1944 + $0x564] sm:$0xf]
        %v2443 = vld [vmem:[%s1944 + $0x568] sm:$0xf]
        %v2444 = vld [vmem:[%s1944 + $0x56c] sm:$0xf]
        %v2445 = vld [vmem:[%s1944 + $0x570] sm:$0xf]
        %v2446 = vld [vmem:[%s1944 + $0x574] sm:$0xf]
        %v2447 = vld [vmem:[%s1944 + $0x578] sm:$0xf]
        %v2448 = vld [vmem:[%s1944 + $0x57c] sm:$0xf]
        %v2449 = vld [vmem:[%s1944 + $0x580] sm:$0xf]
        %v2450 = vld [vmem:[%s1944 + $0x584] sm:$0xf]
        %v2451 = vld [vmem:[%s1944 + $0x588] sm:$0xf]
        %v2452 = vld [vmem:[%s1944 + $0x58c] sm:$0xf]
        %v2453 = vld [vmem:[%s1944 + $0x590] sm:$0xf]
        %v2454 = vld [vmem:[%s1944 + $0x594] sm:$0xf]
        %v2455 = vld [vmem:[%s1944 + $0x598] sm:$0xf]
        %v2456 = vld [vmem:[%s1944 + $0x59c] sm:$0xf]
        %v2457 = vld [vmem:[%s1944 + $0x5a0] sm:$0xf]
        %v2458 = vld [vmem:[%s1944 + $0x5a4] sm:$0xf]
        %v2459 = vld [vmem:[%s1944 + $0x5a8] sm:$0xf]
        %v2460 = vld [vmem:[%s1944 + $0x5ac] sm:$0xf]
        %v2461 = vld [vmem:[%s1944 + $0x5b0] sm:$0xf]
        %v2462 = vld [vmem:[%s1944 + $0x5b4] sm:$0xf]
        %v2463 = vld [vmem:[%s1944 + $0x5b8] sm:$0xf]
        %v2464 = vld [vmem:[%s1944 + $0x5bc] sm:$0xf]
        %v2465 = vld [vmem:[%s1944 + $0x5c0] sm:$0xf]
        %v2466 = vld [vmem:[%s1944 + $0x5c4] sm:$0xf]
        %v2467 = vld [vmem:[%s1944 + $0x5c8] sm:$0xf]
        %v2468 = vld [vmem:[%s1944 + $0x5cc] sm:$0xf]
        %v2469 = vld [vmem:[%s1944 + $0x5d0] sm:$0xf]
        %v2470 = vld [vmem:[%s1944 + $0x5d4] sm:$0xf]
        %v2471 = vld [vmem:[%s1944 + $0x5d8] sm:$0xf]
        %v2472 = vld [vmem:[%s1944 + $0x5dc] sm:$0xf]
        %v2473 = vld [vmem:[%s1944 + $0x5e0] sm:$0xf]
        %v2474 = vld [vmem:[%s1944 + $0x5e4] sm:$0xf]
        %v2475 = vld [vmem:[%s1944 + $0x5e8] sm:$0xf]
        %v2476 = vld [vmem:[%s1944 + $0x5ec] sm:$0xf]
        %v2477 = vld [vmem:[%s1944 + $0x5f0] sm:$0xf]
        %v2478 = vld [vmem:[%s1944 + $0x5f4] sm:$0xf]
        %v2479 = vld [vmem:[%s1944 + $0x5f8] sm:$0xf]
        %v2480 = vld [vmem:[%s1944 + $0x5fc] sm:$0xf]
        %v2481 = vld [vmem:[%s1944 + $0x600] sm:$0xf]
        %v2482 = vld [vmem:[%s1944 + $0x604] sm:$0xf]
        %v2483 = vld [vmem:[%s1944 + $0x608] sm:$0xf]
        %v2484 = vld [vmem:[%s1944 + $0x60c] sm:$0xf]
        %v2485 = vld [vmem:[%s1944 + $0x610] sm:$0xf]
        %v2486 = vld [vmem:[%s1944 + $0x614] sm:$0xf]
        %v2487 = vld [vmem:[%s1944 + $0x618] sm:$0xf]
        %v2488 = vld [vmem:[%s1944 + $0x61c] sm:$0xf]
        %v2489 = vld [vmem:[%s1944 + $0x620] sm:$0xf]
        %v2490 = vld [vmem:[%s1944 + $0x624] sm:$0xf]
        %v2491 = vld [vmem:[%s1944 + $0x628] sm:$0xf]
        %v2492 = vld [vmem:[%s1944 + $0x62c] sm:$0xf]
        %v2493 = vld [vmem:[%s1944 + $0x630] sm:$0xf]
        %v2494 = vld [vmem:[%s1944 + $0x634] sm:$0xf]
        %v2495 = vld [vmem:[%s1944 + $0x638] sm:$0xf]
        %v2496 = vld [vmem:[%s1944 + $0x63c] sm:$0xf]
        %v2497 = vld [vmem:[%s1944 + $0x640] sm:$0xf]
        %v2498 = vld [vmem:[%s1944 + $0x644] sm:$0xf]
        %v2499 = vld [vmem:[%s1944 + $0x648] sm:$0xf]
        %v2500 = vld [vmem:[%s1944 + $0x64c] sm:$0xf]
        %v2501 = vld [vmem:[%s1944 + $0x650] sm:$0xf]
        %v2502 = vld [vmem:[%s1944 + $0x654] sm:$0xf]
        %v2503 = vld [vmem:[%s1944 + $0x658] sm:$0xf]
        %v2504 = vld [vmem:[%s1944 + $0x65c] sm:$0xf]
        %v2505 = vld [vmem:[%s1944 + $0x660] sm:$0xf]
        %v2506 = vld [vmem:[%s1944 + $0x664] sm:$0xf]
        %v2507 = vld [vmem:[%s1944 + $0x668] sm:$0xf]
        %v2508 = vld [vmem:[%s1944 + $0x66c] sm:$0xf]
        %v2509 = vld [vmem:[%s1944 + $0x670] sm:$0xf]
        %v2510 = vld [vmem:[%s1944 + $0x674] sm:$0xf]
        %v2511 = vld [vmem:[%s1944 + $0x678] sm:$0xf]
        %v2512 = vld [vmem:[%s1944 + $0x67c] sm:$0xf]
        %v2513 = vld [vmem:[%s1944 + $0x680] sm:$0xf]
        %v2514 = vld [vmem:[%s1944 + $0x684] sm:$0xf]
        %v2515 = vld [vmem:[%s1944 + $0x688] sm:$0xf]
        %v2516 = vld [vmem:[%s1944 + $0x68c] sm:$0xf]
        %v2517 = vld [vmem:[%s1944 + $0x690] sm:$0xf]
        %v2518 = vld [vmem:[%s1944 + $0x694] sm:$0xf]
        %v2519 = vld [vmem:[%s1944 + $0x698] sm:$0xf]
        %v2520 = vld [vmem:[%s1944 + $0x69c] sm:$0xf]
        %v2521 = vld [vmem:[%s1944 + $0x6a0] sm:$0xf]
        %v2522 = vld [vmem:[%s1944 + $0x6a4] sm:$0xf]
        %v2523 = vld [vmem:[%s1944 + $0x6a8] sm:$0xf]
        %v2524 = vld [vmem:[%s1944 + $0x6ac] sm:$0xf]
        %v2525 = vld [vmem:[%s1944 + $0x6b0] sm:$0xf]
        %v2526 = vld [vmem:[%s1944 + $0x6b4] sm:$0xf]
        %v2527 = vld [vmem:[%s1944 + $0x6b8] sm:$0xf]
        %v2528 = vld [vmem:[%s1944 + $0x6bc] sm:$0xf]
        %v2529 = vld [vmem:[%s1982] sm:$0x1]
        %v2531 = vlaneseq
        %v2532 = vshrl.u32 %v2531, 7
        %v2533 = vsub.s32 0, %v2532
        %v2534 = vrot.slane %v2529, %v2533
        %v2648 = vunpack.c.l.b16 %v1985
        %v2649 = vunpack.c.h.b16 %v1985
        %v2650 = vunpack.c.l.b16 %v1986
        %v2651 = vunpack.c.h.b16 %v1986
        %v2652 = vunpack.c.l.b16 %v1987
        %v2653 = vunpack.c.h.b16 %v1987
        %v2654 = vunpack.c.l.b16 %v1988
        %v2655 = vunpack.c.h.b16 %v1988
        %v2656 = vunpack.c.l.b16 %v1989
        %v2657 = vunpack.c.h.b16 %v1989
        %v2658 = vunpack.c.l.b16 %v1990
        %v2659 = vunpack.c.h.b16 %v1990
        %v2660 = vunpack.c.l.b16 %v1991
        %v2661 = vunpack.c.h.b16 %v1991
        %v2662 = vunpack.c.l.b16 %v1992
        %v2663 = vunpack.c.h.b16 %v1992
        %v2664 = vunpack.c.l.b16 %v1993
        %v2665 = vunpack.c.h.b16 %v1993
        %v2666 = vunpack.c.l.b16 %v1994
        %v2667 = vunpack.c.h.b16 %v1994
        %v2668 = vunpack.c.l.b16 %v1995
        %v2669 = vunpack.c.h.b16 %v1995
        %v2670 = vunpack.c.l.b16 %v1996
        %v2671 = vunpack.c.h.b16 %v1996
        %v2672 = vunpack.c.l.b16 %v1997
        %v2673 = vunpack.c.h.b16 %v1997
        %v2674 = vunpack.c.l.b16 %v1998
        %v2675 = vunpack.c.l.b16 %v1999
        %v2676 = vunpack.c.h.b16 %v1999
        %v2677 = vunpack.c.l.b16 %v2000
        %v2678 = vunpack.c.h.b16 %v2000
        %v2679 = vunpack.c.l.b16 %v2001
        %v2680 = vunpack.c.h.b16 %v2001
        %v2681 = vunpack.c.l.b16 %v2002
        %v2682 = vunpack.c.h.b16 %v2002
        %v2683 = vunpack.c.l.b16 %v2003
        %v2684 = vunpack.c.h.b16 %v2003
        %v2685 = vunpack.c.l.b16 %v2004
        %v2686 = vunpack.c.h.b16 %v2004
        %v2687 = vunpack.c.l.b16 %v2005
        %v2688 = vunpack.c.h.b16 %v2005
        %v2689 = vunpack.c.l.b16 %v2006
        %v2690 = vunpack.c.h.b16 %v2006
        %v2691 = vunpack.c.l.b16 %v2007
        %v2692 = vunpack.c.h.b16 %v2007
        %v2693 = vunpack.c.l.b16 %v2008
        %v2694 = vunpack.c.h.b16 %v2008
        %v2695 = vunpack.c.l.b16 %v2009
        %v2696 = vunpack.c.h.b16 %v2009
        %v2697 = vunpack.c.l.b16 %v2010
        %v2698 = vunpack.c.h.b16 %v2010
        %v2699 = vunpack.c.l.b16 %v2011
        %v2700 = vunpack.c.h.b16 %v2011
        %v2701 = vunpack.c.l.b16 %v2012
        %v2702 = vunpack.c.l.b16 %v2013
        %v2703 = vunpack.c.h.b16 %v2013
        %v2704 = vunpack.c.l.b16 %v2014
        %v2705 = vunpack.c.h.b16 %v2014
        %v2706 = vunpack.c.l.b16 %v2015
        %v2707 = vunpack.c.h.b16 %v2015
        %v2708 = vunpack.c.l.b16 %v2016
        %v2709 = vunpack.c.h.b16 %v2016
        %v2710 = vunpack.c.l.b16 %v2017
        %v2711 = vunpack.c.h.b16 %v2017
        %v2712 = vunpack.c.l.b16 %v2018
        %v2713 = vunpack.c.h.b16 %v2018
        %v2714 = vunpack.c.l.b16 %v2019
        %v2715 = vunpack.c.h.b16 %v2019
        %v2716 = vunpack.c.l.b16 %v2020
        %v2717 = vunpack.c.h.b16 %v2020
        %v2718 = vunpack.c.l.b16 %v2021
        %v2719 = vunpack.c.h.b16 %v2021
        %v2720 = vunpack.c.l.b16 %v2022
        %v2721 = vunpack.c.h.b16 %v2022
        %v2722 = vunpack.c.l.b16 %v2023
        %v2723 = vunpack.c.h.b16 %v2023
        %v2724 = vunpack.c.l.b16 %v2024
        %v2725 = vunpack.c.h.b16 %v2024
        %v2726 = vunpack.c.l.b16 %v2025
        %v2727 = vunpack.c.h.b16 %v2025
        %v2728 = vunpack.c.l.b16 %v2026
        %v2729 = vunpack.c.l.b16 %v2027
        %v2730 = vunpack.c.h.b16 %v2027
        %v2731 = vunpack.c.l.b16 %v2028
        %v2732 = vunpack.c.h.b16 %v2028
        %v2733 = vunpack.c.l.b16 %v2029
        %v2734 = vunpack.c.h.b16 %v2029
        %v2735 = vunpack.c.l.b16 %v2030
        %v2736 = vunpack.c.h.b16 %v2030
        %v2737 = vunpack.c.l.b16 %v2031
        %v2738 = vunpack.c.h.b16 %v2031
        %v2739 = vunpack.c.l.b16 %v2032
        %v2740 = vunpack.c.h.b16 %v2032
        %v2741 = vunpack.c.l.b16 %v2033
        %v2742 = vunpack.c.h.b16 %v2033
        %v2743 = vunpack.c.l.b16 %v2034
        %v2744 = vunpack.c.h.b16 %v2034
        %v2745 = vunpack.c.l.b16 %v2035
        %v2746 = vunpack.c.h.b16 %v2035
        %v2747 = vunpack.c.l.b16 %v2036
        %v2748 = vunpack.c.h.b16 %v2036
        %v2749 = vunpack.c.l.b16 %v2037
        %v2750 = vunpack.c.h.b16 %v2037
        %v2751 = vunpack.c.l.b16 %v2038
        %v2752 = vunpack.c.h.b16 %v2038
        %v2753 = vunpack.c.l.b16 %v2039
        %v2754 = vunpack.c.h.b16 %v2039
        %v2755 = vunpack.c.l.b16 %v2040
        %v2756 = vunpack.c.l.b16 %v2041
        %v2757 = vunpack.c.h.b16 %v2041
        %v2758 = vunpack.c.l.b16 %v2042
        %v2759 = vunpack.c.h.b16 %v2042
        %v2760 = vunpack.c.l.b16 %v2043
        %v2761 = vunpack.c.h.b16 %v2043
        %v2762 = vunpack.c.l.b16 %v2044
        %v2763 = vunpack.c.h.b16 %v2044
        %v2764 = vunpack.c.l.b16 %v2045
        %v2765 = vunpack.c.h.b16 %v2045
        %v2766 = vunpack.c.l.b16 %v2046
        %v2767 = vunpack.c.h.b16 %v2046
        %v2768 = vunpack.c.l.b16 %v2047
        %v2769 = vunpack.c.h.b16 %v2047
        %v2770 = vunpack.c.l.b16 %v2048
        %v2771 = vunpack.c.h.b16 %v2048
        %v2772 = vunpack.c.l.b16 %v2049
        %v2773 = vunpack.c.h.b16 %v2049
        %v2774 = vunpack.c.l.b16 %v2050
        %v2775 = vunpack.c.h.b16 %v2050
        %v2776 = vunpack.c.l.b16 %v2051
        %v2777 = vunpack.c.h.b16 %v2051
        %v2778 = vunpack.c.l.b16 %v2052
        %v2779 = vunpack.c.h.b16 %v2052
        %v2780 = vunpack.c.l.b16 %v2053
        %v2781 = vunpack.c.h.b16 %v2053
        %v2782 = vunpack.c.l.b16 %v2054
        %v2783 = vunpack.c.l.b16 %v2055
        %v2784 = vunpack.c.h.b16 %v2055
        %v2785 = vunpack.c.l.b16 %v2056
        %v2786 = vunpack.c.h.b16 %v2056
        %v2787 = vunpack.c.l.b16 %v2057
        %v2788 = vunpack.c.h.b16 %v2057
        %v2789 = vunpack.c.l.b16 %v2058
        %v2790 = vunpack.c.h.b16 %v2058
        %v2791 = vunpack.c.l.b16 %v2059
        %v2792 = vunpack.c.h.b16 %v2059
        %v2793 = vunpack.c.l.b16 %v2060
        %v2794 = vunpack.c.h.b16 %v2060
        %v2795 = vunpack.c.l.b16 %v2061
        %v2796 = vunpack.c.h.b16 %v2061
        %v2797 = vunpack.c.l.b16 %v2062
        %v2798 = vunpack.c.h.b16 %v2062
        %v2799 = vunpack.c.l.b16 %v2063
        %v2800 = vunpack.c.h.b16 %v2063
        %v2801 = vunpack.c.l.b16 %v2064
        %v2802 = vunpack.c.h.b16 %v2064
        %v2803 = vunpack.c.l.b16 %v2065
        %v2804 = vunpack.c.h.b16 %v2065
        %v2805 = vunpack.c.l.b16 %v2066
        %v2806 = vunpack.c.h.b16 %v2066
        %v2807 = vunpack.c.l.b16 %v2067
        %v2808 = vunpack.c.h.b16 %v2067
        %v2809 = vunpack.c.l.b16 %v2068
        %v2810 = vunpack.c.l.b16 %v2069
        %v2811 = vunpack.c.h.b16 %v2069
        %v2812 = vunpack.c.l.b16 %v2070
        %v2813 = vunpack.c.h.b16 %v2070
        %v2814 = vunpack.c.l.b16 %v2071
        %v2815 = vunpack.c.h.b16 %v2071
        %v2816 = vunpack.c.l.b16 %v2072
        %v2817 = vunpack.c.h.b16 %v2072
        %v2818 = vunpack.c.l.b16 %v2073
        %v2819 = vunpack.c.h.b16 %v2073
        %v2820 = vunpack.c.l.b16 %v2074
        %v2821 = vunpack.c.h.b16 %v2074
        %v2822 = vunpack.c.l.b16 %v2075
        %v2823 = vunpack.c.h.b16 %v2075
        %v2824 = vunpack.c.l.b16 %v2076
        %v2825 = vunpack.c.h.b16 %v2076
        %v2826 = vunpack.c.l.b16 %v2077
        %v2827 = vunpack.c.h.b16 %v2077
        %v2828 = vunpack.c.l.b16 %v2078
        %v2829 = vunpack.c.h.b16 %v2078
        %v2830 = vunpack.c.l.b16 %v2079
        %v2831 = vunpack.c.h.b16 %v2079
        %v2832 = vunpack.c.l.b16 %v2080
        %v2833 = vunpack.c.h.b16 %v2080
        %v2834 = vunpack.c.l.b16 %v2081
        %v2835 = vunpack.c.h.b16 %v2081
        %v2836 = vunpack.c.l.b16 %v2082
        %v2837 = vunpack.c.l.b16 %v2083
        %v2838 = vunpack.c.h.b16 %v2083
        %v2839 = vunpack.c.l.b16 %v2084
        %v2840 = vunpack.c.h.b16 %v2084
        %v2841 = vunpack.c.l.b16 %v2085
        %v2842 = vunpack.c.h.b16 %v2085
        %v2843 = vunpack.c.l.b16 %v2086
        %v2844 = vunpack.c.h.b16 %v2086
        %v2845 = vunpack.c.l.b16 %v2087
        %v2846 = vunpack.c.h.b16 %v2087
        %v2847 = vunpack.c.l.b16 %v2088
        %v2848 = vunpack.c.h.b16 %v2088
        %v2849 = vunpack.c.l.b16 %v2089
        %v2850 = vunpack.c.h.b16 %v2089
        %v2851 = vunpack.c.l.b16 %v2090
        %v2852 = vunpack.c.h.b16 %v2090
        %v2853 = vunpack.c.l.b16 %v2091
        %v2854 = vunpack.c.h.b16 %v2091
        %v2855 = vunpack.c.l.b16 %v2092
        %v2856 = vunpack.c.h.b16 %v2092
        %v2857 = vunpack.c.l.b16 %v2093
        %v2858 = vunpack.c.h.b16 %v2093
        %v2859 = vunpack.c.l.b16 %v2094
        %v2860 = vunpack.c.h.b16 %v2094
        %v2861 = vunpack.c.l.b16 %v2095
        %v2862 = vunpack.c.h.b16 %v2095
        %v2863 = vunpack.c.l.b16 %v2096
        %v2864 = vpack.c.b16 %v2675, %v2648
        %v2865 = vpack.c.b16 %v2676, %v2649
        %v2866 = vpack.c.b16 %v2677, %v2650
        %v2867 = vpack.c.b16 %v2678, %v2651
        %v2868 = vpack.c.b16 %v2679, %v2652
        %v2869 = vpack.c.b16 %v2680, %v2653
        %v2870 = vpack.c.b16 %v2681, %v2654
        %v2871 = vpack.c.b16 %v2682, %v2655
        %v2872 = vpack.c.b16 %v2683, %v2656
        %v2873 = vpack.c.b16 %v2684, %v2657
        %v2874 = vpack.c.b16 %v2685, %v2658
        %v2875 = vpack.c.b16 %v2686, %v2659
        %v2876 = vpack.c.b16 %v2687, %v2660
        %v2877 = vpack.c.b16 %v2688, %v2661
        %v2878 = vpack.c.b16 %v2689, %v2662
        %v2879 = vpack.c.b16 %v2690, %v2663
        %v2880 = vpack.c.b16 %v2691, %v2664
        %v2881 = vpack.c.b16 %v2692, %v2665
        %v2882 = vpack.c.b16 %v2693, %v2666
        %v2883 = vpack.c.b16 %v2694, %v2667
        %v2884 = vpack.c.b16 %v2695, %v2668
        %v2885 = vpack.c.b16 %v2696, %v2669
        %v2886 = vpack.c.b16 %v2697, %v2670
        %v2887 = vpack.c.b16 %v2698, %v2671
        %v2888 = vpack.c.b16 %v2699, %v2672
        %v2889 = vpack.c.b16 %v2700, %v2673
        %v2890 = vpack.c.b16 %v2701, %v2674
        %v2891 = vpack.c.b16 %v2729, %v2702
        %v2892 = vpack.c.b16 %v2730, %v2703
        %v2893 = vpack.c.b16 %v2731, %v2704
        %v2894 = vpack.c.b16 %v2732, %v2705
        %v2895 = vpack.c.b16 %v2733, %v2706
        %v2896 = vpack.c.b16 %v2734, %v2707
        %v2897 = vpack.c.b16 %v2735, %v2708
        %v2898 = vpack.c.b16 %v2736, %v2709
        %v2899 = vpack.c.b16 %v2737, %v2710
        %v2900 = vpack.c.b16 %v2738, %v2711
        %v2901 = vpack.c.b16 %v2739, %v2712
        %v2902 = vpack.c.b16 %v2740, %v2713
        %v2903 = vpack.c.b16 %v2741, %v2714
        %v2904 = vpack.c.b16 %v2742, %v2715
        %v2905 = vpack.c.b16 %v2743, %v2716
        %v2906 = vpack.c.b16 %v2744, %v2717
        %v2907 = vpack.c.b16 %v2745, %v2718
        %v2908 = vpack.c.b16 %v2746, %v2719
        %v2909 = vpack.c.b16 %v2747, %v2720
        %v2910 = vpack.c.b16 %v2748, %v2721
        %v2911 = vpack.c.b16 %v2749, %v2722
        %v2912 = vpack.c.b16 %v2750, %v2723
        %v2913 = vpack.c.b16 %v2751, %v2724
        %v2914 = vpack.c.b16 %v2752, %v2725
        %v2915 = vpack.c.b16 %v2753, %v2726
        %v2916 = vpack.c.b16 %v2754, %v2727
        %v2917 = vpack.c.b16 %v2755, %v2728
        %v2918 = vpack.c.b16 %v2783, %v2756
        %v2919 = vpack.c.b16 %v2784, %v2757
        %v2920 = vpack.c.b16 %v2785, %v2758
        %v2921 = vpack.c.b16 %v2786, %v2759
        %v2922 = vpack.c.b16 %v2787, %v2760
        %v2923 = vpack.c.b16 %v2788, %v2761
        %v2924 = vpack.c.b16 %v2789, %v2762
        %v2925 = vpack.c.b16 %v2790, %v2763
        %v2926 = vpack.c.b16 %v2791, %v2764
        %v2927 = vpack.c.b16 %v2792, %v2765
        %v2928 = vpack.c.b16 %v2793, %v2766
        %v2929 = vpack.c.b16 %v2794, %v2767
        %v2930 = vpack.c.b16 %v2795, %v2768
        %v2931 = vpack.c.b16 %v2796, %v2769
        %v2932 = vpack.c.b16 %v2797, %v2770
        %v2933 = vpack.c.b16 %v2798, %v2771
        %v2934 = vpack.c.b16 %v2799, %v2772
        %v2935 = vpack.c.b16 %v2800, %v2773
        %v2936 = vpack.c.b16 %v2801, %v2774
        %v2937 = vpack.c.b16 %v2802, %v2775
        %v2938 = vpack.c.b16 %v2803, %v2776
        %v2939 = vpack.c.b16 %v2804, %v2777
        %v2940 = vpack.c.b16 %v2805, %v2778
        %v2941 = vpack.c.b16 %v2806, %v2779
        %v2942 = vpack.c.b16 %v2807, %v2780
        %v2943 = vpack.c.b16 %v2808, %v2781
        %v2944 = vpack.c.b16 %v2809, %v2782
        %v2945 = vpack.c.b16 %v2837, %v2810
        %v2946 = vpack.c.b16 %v2838, %v2811
        %v2947 = vpack.c.b16 %v2839, %v2812
        %v2948 = vpack.c.b16 %v2840, %v2813
        %v2949 = vpack.c.b16 %v2841, %v2814
        %v2950 = vpack.c.b16 %v2842, %v2815
        %v2951 = vpack.c.b16 %v2843, %v2816
        %v2952 = vpack.c.b16 %v2844, %v2817
        %v2953 = vpack.c.b16 %v2845, %v2818
        %v2954 = vpack.c.b16 %v2846, %v2819
        %v2955 = vpack.c.b16 %v2847, %v2820
        %v2956 = vpack.c.b16 %v2848, %v2821
        %v2957 = vpack.c.b16 %v2849, %v2822
        %v2958 = vpack.c.b16 %v2850, %v2823
        %v2959 = vpack.c.b16 %v2851, %v2824
        %v2960 = vpack.c.b16 %v2852, %v2825
        %v2961 = vpack.c.b16 %v2853, %v2826
        %v2962 = vpack.c.b16 %v2854, %v2827
        %v2963 = vpack.c.b16 %v2855, %v2828
        %v2964 = vpack.c.b16 %v2856, %v2829
        %v2965 = vpack.c.b16 %v2857, %v2830
        %v2966 = vpack.c.b16 %v2858, %v2831
        %v2967 = vpack.c.b16 %v2859, %v2832
        %v2968 = vpack.c.b16 %v2860, %v2833
        %v2969 = vpack.c.b16 %v2861, %v2834
        %v2970 = vpack.c.b16 %v2862, %v2835
        %v2971 = vpack.c.b16 %v2863, %v2836
        %v3512 = vunpack.c.l.b16 %v2097
        %v3513 = vunpack.c.l.b16 %v2098
        %v3514 = vunpack.c.l.b16 %v2099
        %v3515 = vunpack.c.l.b16 %v2100
        %v3516 = vunpack.c.l.b16 %v2101
        %v3517 = vunpack.c.l.b16 %v2102
        %v3518 = vunpack.c.l.b16 %v2103
        %v3519 = vunpack.c.l.b16 %v2104
        %v3520 = vunpack.c.l.b16 %v2105
        %v3521 = vunpack.c.l.b16 %v2106
        %v3522 = vunpack.c.l.b16 %v2107
        %v3523 = vunpack.c.l.b16 %v2108
        %v3524 = vunpack.c.l.b16 %v2109
        %v3525 = vunpack.c.l.b16 %v2110
        %v3526 = vunpack.c.l.b16 %v2111
        %v3527 = vunpack.c.l.b16 %v2112
        %v3528 = vunpack.c.l.b16 %v2113
        %v3529 = vunpack.c.l.b16 %v2114
        %v3530 = vunpack.c.l.b16 %v2115
        %v3531 = vunpack.c.l.b16 %v2116
        %v3532 = vunpack.c.l.b16 %v2117
        %v3533 = vunpack.c.l.b16 %v2118
        %v3534 = vunpack.c.l.b16 %v2119
        %v3535 = vunpack.c.l.b16 %v2120
        %v3536 = vunpack.c.l.b16 %v2121
        %v3537 = vunpack.c.l.b16 %v2122
        %v3538 = vunpack.c.l.b16 %v2123
        %v3539 = vunpack.c.l.b16 %v2124
        %v3540 = vunpack.c.l.b16 %v2125
        %v3541 = vunpack.c.l.b16 %v2126
        %v3542 = vunpack.c.l.b16 %v2127
        %v3543 = vunpack.c.l.b16 %v2128
        %v3544 = vunpack.c.l.b16 %v2129
        %v3545 = vunpack.c.l.b16 %v2130
        %v3546 = vunpack.c.l.b16 %v2131
        %v3547 = vunpack.c.l.b16 %v2132
        %v3548 = vunpack.c.l.b16 %v2133
        %v3549 = vunpack.c.l.b16 %v2134
        %v3550 = vunpack.c.l.b16 %v2135
        %v3551 = vunpack.c.l.b16 %v2136
        %v3552 = vunpack.c.l.b16 %v2137
        %v3553 = vunpack.c.l.b16 %v2138
        %v3554 = vunpack.c.l.b16 %v2139
        %v3555 = vunpack.c.l.b16 %v2140
        %v3556 = vunpack.c.l.b16 %v2141
        %v3557 = vunpack.c.l.b16 %v2142
        %v3558 = vunpack.c.l.b16 %v2143
        %v3559 = vunpack.c.l.b16 %v2144
        %v3560 = vunpack.c.l.b16 %v2145
        %v3561 = vunpack.c.l.b16 %v2146
        %v3562 = vunpack.c.l.b16 %v2147
        %v3563 = vunpack.c.l.b16 %v2148
        %v3564 = vunpack.c.l.b16 %v2149
        %v3565 = vunpack.c.l.b16 %v2150
        %v3566 = vunpack.c.l.b16 %v2151
        %v3567 = vunpack.c.l.b16 %v2152
        %v3568 = vunpack.c.l.b16 %v2153
        %v3569 = vunpack.c.l.b16 %v2154
        %v3570 = vunpack.c.l.b16 %v2155
        %v3571 = vunpack.c.l.b16 %v2156
        %v3572 = vunpack.c.l.b16 %v2157
        %v3573 = vunpack.c.l.b16 %v2158
        %v3574 = vunpack.c.l.b16 %v2159
        %v3575 = vunpack.c.l.b16 %v2160
        %v3576 = vunpack.c.l.b16 %v2161
        %v3577 = vunpack.c.l.b16 %v2162
        %v3578 = vunpack.c.l.b16 %v2163
        %v3579 = vunpack.c.l.b16 %v2164
        %v3580 = vunpack.c.l.b16 %v2165
        %v3581 = vunpack.c.l.b16 %v2166
        %v3582 = vunpack.c.l.b16 %v2167
        %v3583 = vunpack.c.l.b16 %v2168
        %v3584 = vunpack.c.l.b16 %v2169
        %v3585 = vunpack.c.l.b16 %v2170
        %v3586 = vunpack.c.l.b16 %v2171
        %v3587 = vunpack.c.l.b16 %v2172
        %v3588 = vunpack.c.l.b16 %v2173
        %v3589 = vunpack.c.l.b16 %v2174
        %v3590 = vunpack.c.l.b16 %v2175
        %v3591 = vunpack.c.l.b16 %v2176
        %v3592 = vunpack.c.l.b16 %v2177
        %v3593 = vunpack.c.l.b16 %v2178
        %v3594 = vunpack.c.l.b16 %v2179
        %v3595 = vunpack.c.l.b16 %v2180
        %v3596 = vunpack.c.l.b16 %v2181
        %v3597 = vunpack.c.l.b16 %v2182
        %v3598 = vunpack.c.l.b16 %v2183
        %v3599 = vunpack.c.l.b16 %v2184
        %v3600 = vunpack.c.l.b16 %v2185
        %v3601 = vunpack.c.l.b16 %v2186
        %v3602 = vunpack.c.l.b16 %v2187
        %v3603 = vunpack.c.l.b16 %v2188
        %v3604 = vunpack.c.l.b16 %v2189
        %v3605 = vunpack.c.l.b16 %v2190
        %v3606 = vunpack.c.l.b16 %v2191
        %v3607 = vunpack.c.l.b16 %v2192
        %v3608 = vunpack.c.l.b16 %v2193
        %v3609 = vunpack.c.l.b16 %v2194
        %v3610 = vunpack.c.l.b16 %v2195
        %v3611 = vunpack.c.l.b16 %v2196
        %v3612 = vunpack.c.l.b16 %v2197
        %v3613 = vunpack.c.l.b16 %v2198
        %v3614 = vunpack.c.l.b16 %v2199
        %v3615 = vunpack.c.l.b16 %v2200
        %v3616 = vunpack.c.l.b16 %v2201
        %v3617 = vunpack.c.l.b16 %v2202
        %v3618 = vunpack.c.l.b16 %v2203
        %v3619 = vunpack.c.l.b16 %v2204
        %v3620 = vunpack.c.l.b16 %v2205
        %v3621 = vunpack.c.l.b16 %v2206
        %v3622 = vunpack.c.l.b16 %v2207
        %v3623 = vunpack.c.l.b16 %v2208
        %v3624 = vunpack.c.l.b16 %v2209
        %v3625 = vunpack.c.l.b16 %v2210
        %v3626 = vunpack.c.l.b16 %v2211
        %v3627 = vunpack.c.l.b16 %v2212
        %v3628 = vunpack.c.l.b16 %v2213
        %v3629 = vunpack.c.l.b16 %v2214
        %v3630 = vunpack.c.l.b16 %v2215
        %v3631 = vunpack.c.l.b16 %v2216
        %v3632 = vunpack.c.l.b16 %v2217
        %v3633 = vunpack.c.l.b16 %v2218
        %v3634 = vunpack.c.l.b16 %v2219
        %v3635 = vunpack.c.l.b16 %v2220
        %v3636 = vunpack.c.l.b16 %v2221
        %v3637 = vunpack.c.l.b16 %v2222
        %v3638 = vunpack.c.l.b16 %v2223
        %v3639 = vunpack.c.l.b16 %v2224
        %v3640 = vunpack.c.l.b16 %v2225
        %v3641 = vunpack.c.l.b16 %v2226
        %v3642 = vunpack.c.l.b16 %v2227
        %v3643 = vunpack.c.l.b16 %v2228
        %v3644 = vunpack.c.l.b16 %v2229
        %v3645 = vunpack.c.l.b16 %v2230
        %v3646 = vunpack.c.l.b16 %v2231
        %v3647 = vunpack.c.l.b16 %v2232
        %v3648 = vunpack.c.l.b16 %v2233
        %v3649 = vunpack.c.l.b16 %v2234
        %v3650 = vunpack.c.l.b16 %v2235
        %v3651 = vunpack.c.l.b16 %v2236
        %v3652 = vunpack.c.l.b16 %v2237
        %v3653 = vunpack.c.l.b16 %v2238
        %v3654 = vunpack.c.l.b16 %v2239
        %v3655 = vunpack.c.l.b16 %v2240
        %v3656 = vunpack.c.l.b16 %v2241
        %v3657 = vunpack.c.l.b16 %v2242
        %v3658 = vunpack.c.l.b16 %v2243
        %v3659 = vunpack.c.l.b16 %v2244
        %v3660 = vunpack.c.l.b16 %v2245
        %v3661 = vunpack.c.l.b16 %v2246
        %v3662 = vunpack.c.l.b16 %v2247
        %v3663 = vunpack.c.l.b16 %v2248
        %v3664 = vunpack.c.l.b16 %v2249
        %v3665 = vunpack.c.l.b16 %v2250
        %v3666 = vunpack.c.l.b16 %v2251
        %v3667 = vunpack.c.l.b16 %v2252
        %v3668 = vunpack.c.l.b16 %v2253
        %v3669 = vunpack.c.l.b16 %v2254
        %v3670 = vunpack.c.l.b16 %v2255
        %v3671 = vunpack.c.l.b16 %v2256
        %v3672 = vunpack.c.l.b16 %v2257
        %v3673 = vunpack.c.l.b16 %v2258
        %v3674 = vunpack.c.l.b16 %v2259
        %v3675 = vunpack.c.l.b16 %v2260
        %v3676 = vunpack.c.l.b16 %v2261
        %v3677 = vunpack.c.l.b16 %v2262
        %v3678 = vunpack.c.l.b16 %v2263
        %v3679 = vunpack.c.l.b16 %v2264
        %v3680 = vunpack.c.l.b16 %v2265
        %v3681 = vunpack.c.l.b16 %v2266
        %v3682 = vunpack.c.l.b16 %v2267
        %v3683 = vunpack.c.l.b16 %v2268
        %v3684 = vunpack.c.l.b16 %v2269
        %v3685 = vunpack.c.l.b16 %v2270
        %v3686 = vunpack.c.l.b16 %v2271
        %v3687 = vunpack.c.l.b16 %v2272
        %v3688 = vunpack.c.l.b16 %v2273
        %v3689 = vunpack.c.l.b16 %v2274
        %v3690 = vunpack.c.l.b16 %v2275
        %v3691 = vunpack.c.l.b16 %v2276
        %v3692 = vunpack.c.l.b16 %v2277
        %v3693 = vunpack.c.l.b16 %v2278
        %v3694 = vunpack.c.l.b16 %v2279
        %v3695 = vunpack.c.l.b16 %v2280
        %v3696 = vunpack.c.l.b16 %v2281
        %v3697 = vunpack.c.l.b16 %v2282
        %v3698 = vunpack.c.l.b16 %v2283
        %v3699 = vunpack.c.l.b16 %v2284
        %v3700 = vunpack.c.l.b16 %v2285
        %v3701 = vunpack.c.l.b16 %v2286
        %v3702 = vunpack.c.l.b16 %v2287
        %v3703 = vunpack.c.l.b16 %v2288
        %v3704 = vunpack.c.l.b16 %v2289
        %v3705 = vunpack.c.l.b16 %v2290
        %v3706 = vunpack.c.l.b16 %v2291
        %v3707 = vunpack.c.l.b16 %v2292
        %v3708 = vunpack.c.l.b16 %v2293
        %v3709 = vunpack.c.l.b16 %v2294
        %v3710 = vunpack.c.l.b16 %v2295
        %v3711 = vunpack.c.l.b16 %v2296
        %v3712 = vunpack.c.l.b16 %v2297
        %v3713 = vunpack.c.l.b16 %v2298
        %v3714 = vunpack.c.l.b16 %v2299
        %v3715 = vunpack.c.l.b16 %v2300
        %v3716 = vunpack.c.l.b16 %v2301
        %v3717 = vunpack.c.l.b16 %v2302
        %v3718 = vunpack.c.l.b16 %v2303
        %v3719 = vunpack.c.l.b16 %v2304
        %v3720 = vunpack.c.l.b16 %v2305
        %v3721 = vunpack.c.l.b16 %v2306
        %v3722 = vunpack.c.l.b16 %v2307
        %v3723 = vunpack.c.l.b16 %v2308
        %v3724 = vunpack.c.l.b16 %v2309
        %v3725 = vunpack.c.l.b16 %v2310
        %v3726 = vunpack.c.l.b16 %v2311
        %v3727 = vunpack.c.l.b16 %v2312
        %v3728 = vunpack.c.l.b16 %v2313
        %v3729 = vunpack.c.l.b16 %v2314
        %v3730 = vunpack.c.l.b16 %v2315
        %v3731 = vunpack.c.l.b16 %v2316
        %v3732 = vunpack.c.l.b16 %v2317
        %v3733 = vunpack.c.l.b16 %v2318
        %v3734 = vunpack.c.l.b16 %v2319
        %v3735 = vunpack.c.l.b16 %v2320
        %v3736 = vunpack.c.l.b16 %v2321
        %v3737 = vunpack.c.l.b16 %v2322
        %v3738 = vunpack.c.l.b16 %v2323
        %v3739 = vunpack.c.l.b16 %v2324
        %v3740 = vunpack.c.l.b16 %v2325
        %v3741 = vunpack.c.l.b16 %v2326
        %v3742 = vunpack.c.l.b16 %v2327
        %v3743 = vunpack.c.l.b16 %v2328
        %v3744 = vunpack.c.l.b16 %v2329
        %v3745 = vunpack.c.l.b16 %v2330
        %v3746 = vunpack.c.l.b16 %v2331
        %v3747 = vunpack.c.l.b16 %v2332
        %v3748 = vunpack.c.l.b16 %v2333
        %v3749 = vunpack.c.l.b16 %v2334
        %v3750 = vunpack.c.l.b16 %v2335
        %v3751 = vunpack.c.l.b16 %v2336
        %v3752 = vunpack.c.l.b16 %v2337
        %v3753 = vunpack.c.l.b16 %v2338
        %v3754 = vunpack.c.l.b16 %v2339
        %v3755 = vunpack.c.l.b16 %v2340
        %v3756 = vunpack.c.l.b16 %v2341
        %v3757 = vunpack.c.l.b16 %v2342
        %v3758 = vunpack.c.l.b16 %v2343
        %v3759 = vunpack.c.l.b16 %v2344
        %v3760 = vunpack.c.l.b16 %v2345
        %v3761 = vunpack.c.l.b16 %v2346
        %v3762 = vunpack.c.l.b16 %v2347
        %v3763 = vunpack.c.l.b16 %v2348
        %v3764 = vunpack.c.l.b16 %v2349
        %v3765 = vunpack.c.l.b16 %v2350
        %v3766 = vunpack.c.l.b16 %v2351
        %v3767 = vunpack.c.l.b16 %v2352
        %v3768 = vunpack.c.l.b16 %v2353
        %v3769 = vunpack.c.l.b16 %v2354
        %v3770 = vunpack.c.l.b16 %v2355
        %v3771 = vunpack.c.l.b16 %v2356
        %v3772 = vunpack.c.l.b16 %v2357
        %v3773 = vunpack.c.l.b16 %v2358
        %v3774 = vunpack.c.l.b16 %v2359
        %v3775 = vunpack.c.l.b16 %v2360
        %v3776 = vunpack.c.l.b16 %v2361
        %v3777 = vunpack.c.l.b16 %v2362
        %v3778 = vunpack.c.l.b16 %v2363
        %v3779 = vunpack.c.l.b16 %v2364
        %v3780 = vunpack.c.l.b16 %v2365
        %v3781 = vunpack.c.l.b16 %v2366
        %v3782 = vunpack.c.l.b16 %v2367
        %v3783 = vunpack.c.l.b16 %v2368
        %v3784 = vunpack.c.l.b16 %v2369
        %v3785 = vunpack.c.l.b16 %v2370
        %v3786 = vunpack.c.l.b16 %v2371
        %v3787 = vunpack.c.l.b16 %v2372
        %v3788 = vunpack.c.l.b16 %v2373
        %v3789 = vunpack.c.l.b16 %v2374
        %v3790 = vunpack.c.l.b16 %v2375
        %v3791 = vunpack.c.l.b16 %v2376
        %v3792 = vunpack.c.l.b16 %v2377
        %v3793 = vunpack.c.l.b16 %v2378
        %v3794 = vunpack.c.l.b16 %v2379
        %v3795 = vunpack.c.l.b16 %v2380
        %v3796 = vunpack.c.l.b16 %v2381
        %v3797 = vunpack.c.l.b16 %v2382
        %v3798 = vunpack.c.l.b16 %v2383
        %v3799 = vunpack.c.l.b16 %v2384
        %v3800 = vunpack.c.l.b16 %v2385
        %v3801 = vunpack.c.l.b16 %v2386
        %v3802 = vunpack.c.l.b16 %v2387
        %v3803 = vunpack.c.l.b16 %v2388
        %v3804 = vunpack.c.l.b16 %v2389
        %v3805 = vunpack.c.l.b16 %v2390
        %v3806 = vunpack.c.l.b16 %v2391
        %v3807 = vunpack.c.l.b16 %v2392
        %v3808 = vunpack.c.l.b16 %v2393
        %v3809 = vunpack.c.l.b16 %v2394
        %v3810 = vunpack.c.l.b16 %v2395
        %v3811 = vunpack.c.l.b16 %v2396
        %v3812 = vunpack.c.l.b16 %v2397
        %v3813 = vunpack.c.l.b16 %v2398
        %v3814 = vunpack.c.l.b16 %v2399
        %v3815 = vunpack.c.l.b16 %v2400
        %v3816 = vunpack.c.l.b16 %v2401
        %v3817 = vunpack.c.l.b16 %v2402
        %v3818 = vunpack.c.l.b16 %v2403
        %v3819 = vunpack.c.l.b16 %v2404
        %v3820 = vunpack.c.l.b16 %v2405
        %v3821 = vunpack.c.l.b16 %v2406
        %v3822 = vunpack.c.l.b16 %v2407
        %v3823 = vunpack.c.l.b16 %v2408
        %v3824 = vunpack.c.l.b16 %v2409
        %v3825 = vunpack.c.l.b16 %v2410
        %v3826 = vunpack.c.l.b16 %v2411
        %v3827 = vunpack.c.l.b16 %v2412
        %v3828 = vunpack.c.l.b16 %v2413
        %v3829 = vunpack.c.l.b16 %v2414
        %v3830 = vunpack.c.l.b16 %v2415
        %v3831 = vunpack.c.l.b16 %v2416
        %v3832 = vunpack.c.l.b16 %v2417
        %v3833 = vunpack.c.l.b16 %v2418
        %v3834 = vunpack.c.l.b16 %v2419
        %v3835 = vunpack.c.l.b16 %v2420
        %v3836 = vunpack.c.l.b16 %v2421
        %v3837 = vunpack.c.l.b16 %v2422
        %v3838 = vunpack.c.l.b16 %v2423
        %v3839 = vunpack.c.l.b16 %v2424
        %v3840 = vunpack.c.l.b16 %v2425
        %v3841 = vunpack.c.l.b16 %v2426
        %v3842 = vunpack.c.l.b16 %v2427
        %v3843 = vunpack.c.l.b16 %v2428
        %v3844 = vunpack.c.l.b16 %v2429
        %v3845 = vunpack.c.l.b16 %v2430
        %v3846 = vunpack.c.l.b16 %v2431
        %v3847 = vunpack.c.l.b16 %v2432
        %v3848 = vunpack.c.l.b16 %v2433
        %v3849 = vunpack.c.l.b16 %v2434
        %v3850 = vunpack.c.l.b16 %v2435
        %v3851 = vunpack.c.l.b16 %v2436
        %v3852 = vunpack.c.l.b16 %v2437
        %v3853 = vunpack.c.l.b16 %v2438
        %v3854 = vunpack.c.l.b16 %v2439
        %v3855 = vunpack.c.l.b16 %v2440
        %v3856 = vunpack.c.l.b16 %v2441
        %v3857 = vunpack.c.l.b16 %v2442
        %v3858 = vunpack.c.l.b16 %v2443
        %v3859 = vunpack.c.l.b16 %v2444
        %v3860 = vunpack.c.l.b16 %v2445
        %v3861 = vunpack.c.l.b16 %v2446
        %v3862 = vunpack.c.l.b16 %v2447
        %v3863 = vunpack.c.l.b16 %v2448
        %v3864 = vunpack.c.l.b16 %v2449
        %v3865 = vunpack.c.l.b16 %v2450
        %v3866 = vunpack.c.l.b16 %v2451
        %v3867 = vunpack.c.l.b16 %v2452
        %v3868 = vunpack.c.l.b16 %v2453
        %v3869 = vunpack.c.l.b16 %v2454
        %v3870 = vunpack.c.l.b16 %v2455
        %v3871 = vunpack.c.l.b16 %v2456
        %v3872 = vunpack.c.l.b16 %v2457
        %v3873 = vunpack.c.l.b16 %v2458
        %v3874 = vunpack.c.l.b16 %v2459
        %v3875 = vunpack.c.l.b16 %v2460
        %v3876 = vunpack.c.l.b16 %v2461
        %v3877 = vunpack.c.l.b16 %v2462
        %v3878 = vunpack.c.l.b16 %v2463
        %v3879 = vunpack.c.l.b16 %v2464
        %v3880 = vunpack.c.l.b16 %v2465
        %v3881 = vunpack.c.l.b16 %v2466
        %v3882 = vunpack.c.l.b16 %v2467
        %v3883 = vunpack.c.l.b16 %v2468
        %v3884 = vunpack.c.l.b16 %v2469
        %v3885 = vunpack.c.l.b16 %v2470
        %v3886 = vunpack.c.l.b16 %v2471
        %v3887 = vunpack.c.l.b16 %v2472
        %v3888 = vunpack.c.l.b16 %v2473
        %v3889 = vunpack.c.l.b16 %v2474
        %v3890 = vunpack.c.l.b16 %v2475
        %v3891 = vunpack.c.l.b16 %v2476
        %v3892 = vunpack.c.l.b16 %v2477
        %v3893 = vunpack.c.l.b16 %v2478
        %v3894 = vunpack.c.l.b16 %v2479
        %v3895 = vunpack.c.l.b16 %v2480
        %v3896 = vunpack.c.l.b16 %v2481
        %v3897 = vunpack.c.l.b16 %v2482
        %v3898 = vunpack.c.l.b16 %v2483
        %v3899 = vunpack.c.l.b16 %v2484
        %v3900 = vunpack.c.l.b16 %v2485
        %v3901 = vunpack.c.l.b16 %v2486
        %v3902 = vunpack.c.l.b16 %v2487
        %v3903 = vunpack.c.l.b16 %v2488
        %v3904 = vunpack.c.l.b16 %v2489
        %v3905 = vunpack.c.l.b16 %v2490
        %v3906 = vunpack.c.l.b16 %v2491
        %v3907 = vunpack.c.l.b16 %v2492
        %v3908 = vunpack.c.l.b16 %v2493
        %v3909 = vunpack.c.l.b16 %v2494
        %v3910 = vunpack.c.l.b16 %v2495
        %v3911 = vunpack.c.l.b16 %v2496
        %v3912 = vunpack.c.l.b16 %v2497
        %v3913 = vunpack.c.l.b16 %v2498
        %v3914 = vunpack.c.l.b16 %v2499
        %v3915 = vunpack.c.l.b16 %v2500
        %v3916 = vunpack.c.l.b16 %v2501
        %v3917 = vunpack.c.l.b16 %v2502
        %v3918 = vunpack.c.l.b16 %v2503
        %v3919 = vunpack.c.l.b16 %v2504
        %v3920 = vunpack.c.l.b16 %v2505
        %v3921 = vunpack.c.l.b16 %v2506
        %v3922 = vunpack.c.l.b16 %v2507
        %v3923 = vunpack.c.l.b16 %v2508
        %v3924 = vunpack.c.l.b16 %v2509
        %v3925 = vunpack.c.l.b16 %v2510
        %v3926 = vunpack.c.l.b16 %v2511
        %v3927 = vunpack.c.l.b16 %v2512
        %v3928 = vunpack.c.l.b16 %v2513
        %v3929 = vunpack.c.l.b16 %v2514
        %v3930 = vunpack.c.l.b16 %v2515
        %v3931 = vunpack.c.l.b16 %v2516
        %v3932 = vunpack.c.l.b16 %v2517
        %v3933 = vunpack.c.l.b16 %v2518
        %v3934 = vunpack.c.l.b16 %v2519
        %v3935 = vunpack.c.l.b16 %v2520
        %v3936 = vunpack.c.l.b16 %v2521
        %v3937 = vunpack.c.l.b16 %v2522
        %v3938 = vunpack.c.l.b16 %v2523
        %v3939 = vunpack.c.l.b16 %v2524
        %v3940 = vunpack.c.l.b16 %v2525
        %v3941 = vunpack.c.l.b16 %v2526
        %v3942 = vunpack.c.l.b16 %v2527
        %v3943 = vunpack.c.l.b16 %v2528
        %v3944 = vpack.c.b16 %v3513, %v3512
        %v3945 = vpack.c.b16 %v3515, %v3514
        %v3946 = vpack.c.b16 %v3517, %v3516
        %v3947 = vpack.c.b16 %v3519, %v3518
        %v3948 = vpack.c.b16 %v3521, %v3520
        %v3949 = vpack.c.b16 %v3523, %v3522
        %v3950 = vpack.c.b16 %v3525, %v3524
        %v3951 = vpack.c.b16 %v3527, %v3526
        %v3952 = vpack.c.b16 %v3529, %v3528
        %v3953 = vpack.c.b16 %v3531, %v3530
        %v3954 = vpack.c.b16 %v3533, %v3532
        %v3955 = vpack.c.b16 %v3535, %v3534
        %v3956 = vpack.c.b16 %v3537, %v3536
        %v3957 = vpack.c.b16 %v3539, %v3538
        %v3958 = vpack.c.b16 %v3541, %v3540
        %v3959 = vpack.c.b16 %v3543, %v3542
        %v3960 = vpack.c.b16 %v3545, %v3544
        %v3961 = vpack.c.b16 %v3547, %v3546
        %v3962 = vpack.c.b16 %v3549, %v3548
        %v3963 = vpack.c.b16 %v3551, %v3550
        %v3964 = vpack.c.b16 %v3553, %v3552
        %v3965 = vpack.c.b16 %v3555, %v3554
        %v3966 = vpack.c.b16 %v3557, %v3556
        %v3967 = vpack.c.b16 %v3559, %v3558
        %v3968 = vpack.c.b16 %v3561, %v3560
        %v3969 = vpack.c.b16 %v3563, %v3562
        %v3970 = vpack.c.b16 %v3565, %v3564
        %v3971 = vpack.c.b16 %v3567, %v3566
        %v3972 = vpack.c.b16 %v3569, %v3568
        %v3973 = vpack.c.b16 %v3571, %v3570
        %v3974 = vpack.c.b16 %v3573, %v3572
        %v3975 = vpack.c.b16 %v3575, %v3574
        %v3976 = vpack.c.b16 %v3577, %v3576
        %v3977 = vpack.c.b16 %v3579, %v3578
        %v3978 = vpack.c.b16 %v3581, %v3580
        %v3979 = vpack.c.b16 %v3583, %v3582
        %v3980 = vpack.c.b16 %v3585, %v3584
        %v3981 = vpack.c.b16 %v3587, %v3586
        %v3982 = vpack.c.b16 %v3589, %v3588
        %v3983 = vpack.c.b16 %v3591, %v3590
        %v3984 = vpack.c.b16 %v3593, %v3592
        %v3985 = vpack.c.b16 %v3595, %v3594
        %v3986 = vpack.c.b16 %v3597, %v3596
        %v3987 = vpack.c.b16 %v3599, %v3598
        %v3988 = vpack.c.b16 %v3601, %v3600
        %v3989 = vpack.c.b16 %v3603, %v3602
        %v3990 = vpack.c.b16 %v3605, %v3604
        %v3991 = vpack.c.b16 %v3607, %v3606
        %v3992 = vpack.c.b16 %v3609, %v3608
        %v3993 = vpack.c.b16 %v3611, %v3610
        %v3994 = vpack.c.b16 %v3613, %v3612
        %v3995 = vpack.c.b16 %v3615, %v3614
        %v3996 = vpack.c.b16 %v3617, %v3616
        %v3997 = vpack.c.b16 %v3619, %v3618
        %v3998 = vpack.c.b16 %v3621, %v3620
        %v3999 = vpack.c.b16 %v3623, %v3622
        %v4000 = vpack.c.b16 %v3625, %v3624
        %v4001 = vpack.c.b16 %v3627, %v3626
        %v4002 = vpack.c.b16 %v3629, %v3628
        %v4003 = vpack.c.b16 %v3631, %v3630
        %v4004 = vpack.c.b16 %v3633, %v3632
        %v4005 = vpack.c.b16 %v3635, %v3634
        %v4006 = vpack.c.b16 %v3637, %v3636
        %v4007 = vpack.c.b16 %v3639, %v3638
        %v4008 = vpack.c.b16 %v3641, %v3640
        %v4009 = vpack.c.b16 %v3643, %v3642
        %v4010 = vpack.c.b16 %v3645, %v3644
        %v4011 = vpack.c.b16 %v3647, %v3646
        %v4012 = vpack.c.b16 %v3649, %v3648
        %v4013 = vpack.c.b16 %v3651, %v3650
        %v4014 = vpack.c.b16 %v3653, %v3652
        %v4015 = vpack.c.b16 %v3655, %v3654
        %v4016 = vpack.c.b16 %v3657, %v3656
        %v4017 = vpack.c.b16 %v3659, %v3658
        %v4018 = vpack.c.b16 %v3661, %v3660
        %v4019 = vpack.c.b16 %v3663, %v3662
        %v4020 = vpack.c.b16 %v3665, %v3664
        %v4021 = vpack.c.b16 %v3667, %v3666
        %v4022 = vpack.c.b16 %v3669, %v3668
        %v4023 = vpack.c.b16 %v3671, %v3670
        %v4024 = vpack.c.b16 %v3673, %v3672
        %v4025 = vpack.c.b16 %v3675, %v3674
        %v4026 = vpack.c.b16 %v3677, %v3676
        %v4027 = vpack.c.b16 %v3679, %v3678
        %v4028 = vpack.c.b16 %v3681, %v3680
        %v4029 = vpack.c.b16 %v3683, %v3682
        %v4030 = vpack.c.b16 %v3685, %v3684
        %v4031 = vpack.c.b16 %v3687, %v3686
        %v4032 = vpack.c.b16 %v3689, %v3688
        %v4033 = vpack.c.b16 %v3691, %v3690
        %v4034 = vpack.c.b16 %v3693, %v3692
        %v4035 = vpack.c.b16 %v3695, %v3694
        %v4036 = vpack.c.b16 %v3697, %v3696
        %v4037 = vpack.c.b16 %v3699, %v3698
        %v4038 = vpack.c.b16 %v3701, %v3700
        %v4039 = vpack.c.b16 %v3703, %v3702
        %v4040 = vpack.c.b16 %v3705, %v3704
        %v4041 = vpack.c.b16 %v3707, %v3706
        %v4042 = vpack.c.b16 %v3709, %v3708
        %v4043 = vpack.c.b16 %v3711, %v3710
        %v4044 = vpack.c.b16 %v3713, %v3712
        %v4045 = vpack.c.b16 %v3715, %v3714
        %v4046 = vpack.c.b16 %v3717, %v3716
        %v4047 = vpack.c.b16 %v3719, %v3718
        %v4048 = vpack.c.b16 %v3721, %v3720
        %v4049 = vpack.c.b16 %v3723, %v3722
        %v4050 = vpack.c.b16 %v3725, %v3724
        %v4051 = vpack.c.b16 %v3727, %v3726
        %v4052 = vpack.c.b16 %v3729, %v3728
        %v4053 = vpack.c.b16 %v3731, %v3730
        %v4054 = vpack.c.b16 %v3733, %v3732
        %v4055 = vpack.c.b16 %v3735, %v3734
        %v4056 = vpack.c.b16 %v3737, %v3736
        %v4057 = vpack.c.b16 %v3739, %v3738
        %v4058 = vpack.c.b16 %v3741, %v3740
        %v4059 = vpack.c.b16 %v3743, %v3742
        %v4060 = vpack.c.b16 %v3745, %v3744
        %v4061 = vpack.c.b16 %v3747, %v3746
        %v4062 = vpack.c.b16 %v3749, %v3748
        %v4063 = vpack.c.b16 %v3751, %v3750
        %v4064 = vpack.c.b16 %v3753, %v3752
        %v4065 = vpack.c.b16 %v3755, %v3754
        %v4066 = vpack.c.b16 %v3757, %v3756
        %v4067 = vpack.c.b16 %v3759, %v3758
        %v4068 = vpack.c.b16 %v3761, %v3760
        %v4069 = vpack.c.b16 %v3763, %v3762
        %v4070 = vpack.c.b16 %v3765, %v3764
        %v4071 = vpack.c.b16 %v3767, %v3766
        %v4072 = vpack.c.b16 %v3769, %v3768
        %v4073 = vpack.c.b16 %v3771, %v3770
        %v4074 = vpack.c.b16 %v3773, %v3772
        %v4075 = vpack.c.b16 %v3775, %v3774
        %v4076 = vpack.c.b16 %v3777, %v3776
        %v4077 = vpack.c.b16 %v3779, %v3778
        %v4078 = vpack.c.b16 %v3781, %v3780
        %v4079 = vpack.c.b16 %v3783, %v3782
        %v4080 = vpack.c.b16 %v3785, %v3784
        %v4081 = vpack.c.b16 %v3787, %v3786
        %v4082 = vpack.c.b16 %v3789, %v3788
        %v4083 = vpack.c.b16 %v3791, %v3790
        %v4084 = vpack.c.b16 %v3793, %v3792
        %v4085 = vpack.c.b16 %v3795, %v3794
        %v4086 = vpack.c.b16 %v3797, %v3796
        %v4087 = vpack.c.b16 %v3799, %v3798
        %v4088 = vpack.c.b16 %v3801, %v3800
        %v4089 = vpack.c.b16 %v3803, %v3802
        %v4090 = vpack.c.b16 %v3805, %v3804
        %v4091 = vpack.c.b16 %v3807, %v3806
        %v4092 = vpack.c.b16 %v3809, %v3808
        %v4093 = vpack.c.b16 %v3811, %v3810
        %v4094 = vpack.c.b16 %v3813, %v3812
        %v4095 = vpack.c.b16 %v3815, %v3814
        %v4096 = vpack.c.b16 %v3817, %v3816
        %v4097 = vpack.c.b16 %v3819, %v3818
        %v4098 = vpack.c.b16 %v3821, %v3820
        %v4099 = vpack.c.b16 %v3823, %v3822
        %v4100 = vpack.c.b16 %v3825, %v3824
        %v4101 = vpack.c.b16 %v3827, %v3826
        %v4102 = vpack.c.b16 %v3829, %v3828
        %v4103 = vpack.c.b16 %v3831, %v3830
        %v4104 = vpack.c.b16 %v3833, %v3832
        %v4105 = vpack.c.b16 %v3835, %v3834
        %v4106 = vpack.c.b16 %v3837, %v3836
        %v4107 = vpack.c.b16 %v3839, %v3838
        %v4108 = vpack.c.b16 %v3841, %v3840
        %v4109 = vpack.c.b16 %v3843, %v3842
        %v4110 = vpack.c.b16 %v3845, %v3844
        %v4111 = vpack.c.b16 %v3847, %v3846
        %v4112 = vpack.c.b16 %v3849, %v3848
        %v4113 = vpack.c.b16 %v3851, %v3850
        %v4114 = vpack.c.b16 %v3853, %v3852
        %v4115 = vpack.c.b16 %v3855, %v3854
        %v4116 = vpack.c.b16 %v3857, %v3856
        %v4117 = vpack.c.b16 %v3859, %v3858
        %v4118 = vpack.c.b16 %v3861, %v3860
        %v4119 = vpack.c.b16 %v3863, %v3862
        %v4120 = vpack.c.b16 %v3865, %v3864
        %v4121 = vpack.c.b16 %v3867, %v3866
        %v4122 = vpack.c.b16 %v3869, %v3868
        %v4123 = vpack.c.b16 %v3871, %v3870
        %v4124 = vpack.c.b16 %v3873, %v3872
        %v4125 = vpack.c.b16 %v3875, %v3874
        %v4126 = vpack.c.b16 %v3877, %v3876
        %v4127 = vpack.c.b16 %v3879, %v3878
        %v4128 = vpack.c.b16 %v3881, %v3880
        %v4129 = vpack.c.b16 %v3883, %v3882
        %v4130 = vpack.c.b16 %v3885, %v3884
        %v4131 = vpack.c.b16 %v3887, %v3886
        %v4132 = vpack.c.b16 %v3889, %v3888
        %v4133 = vpack.c.b16 %v3891, %v3890
        %v4134 = vpack.c.b16 %v3893, %v3892
        %v4135 = vpack.c.b16 %v3895, %v3894
        %v4136 = vpack.c.b16 %v3897, %v3896
        %v4137 = vpack.c.b16 %v3899, %v3898
        %v4138 = vpack.c.b16 %v3901, %v3900
        %v4139 = vpack.c.b16 %v3903, %v3902
        %v4140 = vpack.c.b16 %v3905, %v3904
        %v4141 = vpack.c.b16 %v3907, %v3906
        %v4142 = vpack.c.b16 %v3909, %v3908
        %v4143 = vpack.c.b16 %v3911, %v3910
        %v4144 = vpack.c.b16 %v3913, %v3912
        %v4145 = vpack.c.b16 %v3915, %v3914
        %v4146 = vpack.c.b16 %v3917, %v3916
        %v4147 = vpack.c.b16 %v3919, %v3918
        %v4148 = vpack.c.b16 %v3921, %v3920
        %v4149 = vpack.c.b16 %v3923, %v3922
        %v4150 = vpack.c.b16 %v3925, %v3924
        %v4151 = vpack.c.b16 %v3927, %v3926
        %v4152 = vpack.c.b16 %v3929, %v3928
        %v4153 = vpack.c.b16 %v3931, %v3930
        %v4154 = vpack.c.b16 %v3933, %v3932
        %v4155 = vpack.c.b16 %v3935, %v3934
        %v4156 = vpack.c.b16 %v3937, %v3936
        %v4157 = vpack.c.b16 %v3939, %v3938
        %v4158 = vpack.c.b16 %v3941, %v3940
        %v4159 = vpack.c.b16 %v3943, %v3942
        %4376 = vmatprep.subr.bf16.mxu0 0
        %4377 = vmatpush1.bf16.msra.mxu0 %v3944
        %4378 = vmatprep.subr.bf16.mxu0 0
        %4379 = vmatpush1.bf16.msra.mxu0 %v3945
        %4380 = vmatprep.subr.bf16.mxu0 0
        %4381 = vmatpush1.bf16.msra.mxu0 %v3946
        %4382 = vmatprep.subr.bf16.mxu0 0
        %4383 = vmatpush1.bf16.msra.mxu0 %v3947
        %4384 = vmatprep.subr.bf16.mxu0 0
        %4385 = vmatpush1.bf16.msra.mxu0 %v3948
        %4386 = vmatprep.subr.bf16.mxu0 0
        %4387 = vmatpush1.bf16.msra.mxu0 %v3949
        %4388 = vmatprep.subr.bf16.mxu0 0
        %4389 = vmatpush1.bf16.msra.mxu0 %v3950
        %4390 = vmatprep.subr.bf16.mxu0 0
        %4391 = vmatpush1.bf16.msra.mxu0 %v3951
        %4392 = vmatprep.subr.bf16.mxu0 0
        %4393 = vmatpush1.bf16.msra.mxu0 %v3952
        %4394 = vmatprep.subr.bf16.mxu0 0
        %4395 = vmatpush1.bf16.msra.mxu0 %v3953
        %4396 = vmatprep.subr.bf16.mxu0 0
        %4397 = vmatpush1.bf16.msra.mxu0 %v3954
        %4398 = vmatprep.subr.bf16.mxu0 0
        %4399 = vmatpush1.bf16.msra.mxu0 %v3955
        %4400 = vmatprep.subr.bf16.mxu0 0
        %4401 = vmatpush1.bf16.msra.mxu0 %v3956
        %4402 = vmatprep.subr.bf16.mxu0 0
        %4403 = vmatpush1.bf16.msra.mxu0 %v3957
        %4404 = vmatprep.subr.bf16.mxu0 0
        %4405 = vmatpush1.bf16.msra.mxu0 %v3958
        %4406 = vmatprep.subr.bf16.mxu0 0
        %4407 = vmatpush1.bf16.msra.mxu0 %v3959
        %4408 = vmatprep.mubr.bf16.mxu0 %v2865
        %4409 = vmatmul.mubr.bf16.gmra.mrb[0].mxu0 %v2864
        %v4410 = vpop.f32.mrb[0].mxu0
        %v4411 = vadd.f32 %v2534, %v4410
        %v4412 = vpop.f32.mrb[0].mxu0
        %v4413 = vpop.f32.mrb[0].mxu0
        %v4414 = vadd.f32 %v2534, %v4413
        %v4415 = vpop.f32.mrb[0].mxu0
        %4416 = vmatprep.mubr.bf16.mxu0 %v2892
        %4417 = vmatmul.mubr.bf16.gmra.mrb[0].mxu0 %v2891
        %v4418 = vpop.f32.mrb[0].mxu0
        %v4419 = vadd.f32 %v2534, %v4418
        %v4420 = vpop.f32.mrb[0].mxu0
        %v4421 = vpop.f32.mrb[0].mxu0
        %v4422 = vadd.f32 %v2534, %v4421
        %v4423 = vpop.f32.mrb[0].mxu0
        %4424 = vmatprep.mubr.bf16.mxu0 %v2919
        %4425 = vmatmul.mubr.bf16.gmra.mrb[0].mxu0 %v2918
        %v4426 = vpop.f32.mrb[0].mxu0
        %v4427 = vadd.f32 %v2534, %v4426
        %v4428 = vpop.f32.mrb[0].mxu0
        %v4429 = vpop.f32.mrb[0].mxu0
        %v4430 = vadd.f32 %v2534, %v4429
        %v4431 = vpop.f32.mrb[0].mxu0
        %4432 = vmatprep.mubr.bf16.mxu0 %v2946
        %4433 = vmatmul.mubr.bf16.gmra.mrb[0].mxu0 %v2945
        %v4434 = vpop.f32.mrb[0].mxu0
        %v4435 = vadd.f32 %v2534, %v4434
        %v4436 = vpop.f32.mrb[0].mxu0
        %v4437 = vpop.f32.mrb[0].mxu0
        %v4438 = vadd.f32 %v2534, %v4437
        %v4439 = vpop.f32.mrb[0].mxu0
        %4440 = vdwg.mxu0
        %4441 = vmatprep.subr.bf16.mxu0 0
        %4442 = vmatpush1.bf16.msra.mxu0 %v3960
        %4443 = vmatprep.subr.bf16.mxu0 0
        %4444 = vmatpush1.bf16.msra.mxu0 %v3961
        %4445 = vmatprep.subr.bf16.mxu0 0
        %4446 = vmatpush1.bf16.msra.mxu0 %v3962
        %4447 = vmatprep.subr.bf16.mxu0 0
        %4448 = vmatpush1.bf16.msra.mxu0 %v3963
        %4449 = vmatprep.subr.bf16.mxu0 0
        %4450 = vmatpush1.bf16.msra.mxu0 %v3964
        %4451 = vmatprep.subr.bf16.mxu0 0
        %4452 = vmatpush1.bf16.msra.mxu0 %v3965
        %4453 = vmatprep.subr.bf16.mxu0 0
        %4454 = vmatpush1.bf16.msra.mxu0 %v3966
        %4455 = vmatprep.subr.bf16.mxu0 0
        %4456 = vmatpush1.bf16.msra.mxu0 %v3967
        %4457 = vmatprep.subr.bf16.mxu0 0
        %4458 = vmatpush1.bf16.msra.mxu0 %v3968
        %4459 = vmatprep.subr.bf16.mxu0 0
        %4460 = vmatpush1.bf16.msra.mxu0 %v3969
        %4461 = vmatprep.subr.bf16.mxu0 0
        %4462 = vmatpush1.bf16.msra.mxu0 %v3970
        %4463 = vmatprep.subr.bf16.mxu0 0
        %4464 = vmatpush1.bf16.msra.mxu0 %v3971
        %4465 = vmatprep.subr.bf16.mxu0 0
        %4466 = vmatpush1.bf16.msra.mxu0 %v3972
        %4467 = vmatprep.subr.bf16.mxu0 0
        %4468 = vmatpush1.bf16.msra.mxu0 %v3973
        %4469 = vmatprep.subr.bf16.mxu0 0
        %4470 = vmatpush1.bf16.msra.mxu0 %v3974
        %4471 = vmatprep.subr.bf16.mxu0 0
        %4472 = vmatpush1.bf16.msra.mxu0 %v3975
        %4473 = vmatprep.mubr.bf16.mxu0 %v2867
        %4474 = vmatmul.mubr.bf16.gmra.mrb[0].mxu0 %v2866
        %v4475 = vpop.f32.mrb[0].mxu0
        %v4476 = vadd.f32 %v4411, %v4475
        %v4477 = vpop.f32.mrb[0].mxu0
        %v4478 = vpop.f32.mrb[0].mxu0
        %v4479 = vadd.f32 %v4414, %v4478
        %v4480 = vpop.f32.mrb[0].mxu0
        %4481 = vmatprep.mubr.bf16.mxu0 %v2894
        %4482 = vmatmul.mubr.bf16.gmra.mrb[0].mxu0 %v2893
        %v4483 = vpop.f32.mrb[0].mxu0
        %v4484 = vadd.f32 %v4419, %v4483
        %v4485 = vpop.f32.mrb[0].mxu0
        %v4486 = vpop.f32.mrb[0].mxu0
        %v4487 = vadd.f32 %v4422, %v4486
        %v4488 = vpop.f32.mrb[0].mxu0
        %4489 = vmatprep.mubr.bf16.mxu0 %v2921
        %4490 = vmatmul.mubr.bf16.gmra.mrb[0].mxu0 %v2920
        %v4491 = vpop.f32.mrb[0].mxu0
        %v4492 = vadd.f32 %v4427, %v4491
        %v4493 = vpop.f32.mrb[0].mxu0
        %v4494 = vpop.f32.mrb[0].mxu0
        %v4495 = vadd.f32 %v4430, %v4494
        %v4496 = vpop.f32.mrb[0].mxu0
        %4497 = vmatprep.mubr.bf16.mxu0 %v2948
        %4498 = vmatmul.mubr.bf16.gmra.mrb[0].mxu0 %v2947
        %v4499 = vpop.f32.mrb[0].mxu0
        %v4500 = vadd.f32 %v4435, %v4499
        %v4501 = vpop.f32.mrb[0].mxu0
        %v4502 = vpop.f32.mrb[0].mxu0
        %v4503 = vadd.f32 %v4438, %v4502
        %v4504 = vpop.f32.mrb[0].mxu0
        %4505 = vdwg.mxu0
        %4506 = vmatprep.subr.bf16.mxu0 0
        %4507 = vmatpush1.bf16.msra.mxu0 %v3976
        %4508 = vmatprep.subr.bf16.mxu0 0
        %4509 = vmatpush1.bf16.msra.mxu0 %v3977
        %4510 = vmatprep.subr.bf16.mxu0 0
        %4511 = vmatpush1.bf16.msra.mxu0 %v3978
        %4512 = vmatprep.subr.bf16.mxu0 0
        %4513 = vmatpush1.bf16.msra.mxu0 %v3979
        %4514 = vmatprep.subr.bf16.mxu0 0
        %4515 = vmatpush1.bf16.msra.mxu0 %v3980
        %4516 = vmatprep.subr.bf16.mxu0 0
        %4517 = vmatpush1.bf16.msra.mxu0 %v3981
        %4518 = vmatprep.subr.bf16.mxu0 0
        %4519 = vmatpush1.bf16.msra.mxu0 %v3982
        %4520 = vmatprep.subr.bf16.mxu0 0
        %4521 = vmatpush1.bf16.msra.mxu0 %v3983
        %4522 = vmatprep.subr.bf16.mxu0 0
        %4523 = vmatpush1.bf16.msra.mxu0 %v3984
        %4524 = vmatprep.subr.bf16.mxu0 0
        %4525 = vmatpush1.bf16.msra.mxu0 %v3985
        %4526 = vmatprep.subr.bf16.mxu0 0
        %4527 = vmatpush1.bf16.msra.mxu0 %v3986
        %4528 = vmatprep.subr.bf16.mxu0 0
        %4529 = vmatpush1.bf16.msra.mxu0 %v3987
        %4530 = vmatprep.subr.bf16.mxu0 0
        %4531 = vmatpush1.bf16.msra.mxu0 %v3988
        %4532 = vmatprep.subr.bf16.mxu0 0
        %4533 = vmatpush1.bf16.msra.mxu0 %v3989
        %4534 = vmatprep.subr.bf16.mxu0 0
        %4535 = vmatpush1.bf16.msra.mxu0 %v3990
        %4536 = vmatprep.subr.bf16.mxu0 0
        %4537 = vmatpush1.bf16.msra.mxu0 %v3991
        %4538 = vmatprep.mubr.bf16.mxu0 %v2869
        %4539 = vmatmul.mubr.bf16.gmra.mrb[0].mxu0 %v2868
        %v4540 = vpop.f32.mrb[0].mxu0
        %v4541 = vadd.f32 %v4476, %v4540
        %v4542 = vpop.f32.mrb[0].mxu0
        %v4543 = vpop.f32.mrb[0].mxu0
        %v4544 = vadd.f32 %v4479, %v4543
        %v4545 = vpop.f32.mrb[0].mxu0
        %4546 = vmatprep.mubr.bf16.mxu0 %v2896
        %4547 = vmatmul.mubr.bf16.gmra.mrb[0].mxu0 %v2895
        %v4548 = vpop.f32.mrb[0].mxu0
        %v4549 = vadd.f32 %v4484, %v4548
        %v4550 = vpop.f32.mrb[0].mxu0
        %v4551 = vpop.f32.mrb[0].mxu0
        %v4552 = vadd.f32 %v4487, %v4551
        %v4553 = vpop.f32.mrb[0].mxu0
        %4554 = vmatprep.mubr.bf16.mxu0 %v2923
        %4555 = vmatmul.mubr.bf16.gmra.mrb[0].mxu0 %v2922
        %v4556 = vpop.f32.mrb[0].mxu0
        %v4557 = vadd.f32 %v4492, %v4556
        %v4558 = vpop.f32.mrb[0].mxu0
        %v4559 = vpop.f32.mrb[0].mxu0
        %v4560 = vadd.f32 %v4495, %v4559
        %v4561 = vpop.f32.mrb[0].mxu0
        %4562 = vmatprep.mubr.bf16.mxu0 %v2950
        %4563 = vmatmul.mubr.bf16.gmra.mrb[0].mxu0 %v2949
        %v4564 = vpop.f32.mrb[0].mxu0
        %v4565 = vadd.f32 %v4500, %v4564
        %v4566 = vpop.f32.mrb[0].mxu0
        %v4567 = vpop.f32.mrb[0].mxu0
        %v4568 = vadd.f32 %v4503, %v4567
        %v4569 = vpop.f32.mrb[0].mxu0
        %4570 = vdwg.mxu0
        %4571 = vmatprep.subr.bf16.mxu0 0
        %4572 = vmatpush1.bf16.msra.mxu0 %v3992
        %4573 = vmatprep.subr.bf16.mxu0 0
        %4574 = vmatpush1.bf16.msra.mxu0 %v3993
        %4575 = vmatprep.subr.bf16.mxu0 0
        %4576 = vmatpush1.bf16.msra.mxu0 %v3994
        %4577 = vmatprep.subr.bf16.mxu0 0
        %4578 = vmatpush1.bf16.msra.mxu0 %v3995
        %4579 = vmatprep.subr.bf16.mxu0 0
        %4580 = vmatpush1.bf16.msra.mxu0 %v3996
        %4581 = vmatprep.subr.bf16.mxu0 0
        %4582 = vmatpush1.bf16.msra.mxu0 %v3997
        %4583 = vmatprep.subr.bf16.mxu0 0
        %4584 = vmatpush1.bf16.msra.mxu0 %v3998
        %4585 = vmatprep.subr.bf16.mxu0 0
        %4586 = vmatpush1.bf16.msra.mxu0 %v3999
        %4587 = vmatprep.subr.bf16.mxu0 0
        %4588 = vmatpush1.bf16.msra.mxu0 %v4000
        %4589 = vmatprep.subr.bf16.mxu0 0
        %4590 = vmatpush1.bf16.msra.mxu0 %v4001
        %4591 = vmatprep.subr.bf16.mxu0 0
        %4592 = vmatpush1.bf16.msra.mxu0 %v4002
        %4593 = vmatprep.subr.bf16.mxu0 0
        %4594 = vmatpush1.bf16.msra.mxu0 %v4003
        %4595 = vmatprep.subr.bf16.mxu0 0
        %4596 = vmatpush1.bf16.msra.mxu0 %v4004
        %4597 = vmatprep.subr.bf16.mxu0 0
        %4598 = vmatpush1.bf16.msra.mxu0 %v4005
        %4599 = vmatprep.subr.bf16.mxu0 0
        %4600 = vmatpush1.bf16.msra.mxu0 %v4006
        %4601 = vmatprep.subr.bf16.mxu0 0
        %4602 = vmatpush1.bf16.msra.mxu0 %v4007
        %4603 = vmatprep.mubr.bf16.mxu0 %v2871
        %4604 = vmatmul.mubr.bf16.gmra.mrb[0].mxu0 %v2870
        %v4605 = vpop.f32.mrb[0].mxu0
        %v4606 = vadd.f32 %v4541, %v4605
        %v4607 = vpop.f32.mrb[0].mxu0
        %v4608 = vpop.f32.mrb[0].mxu0
        %v4609 = vadd.f32 %v4544, %v4608
        %v4610 = vpop.f32.mrb[0].mxu0
        %4611 = vmatprep.mubr.bf16.mxu0 %v2898
        %4612 = vmatmul.mubr.bf16.gmra.mrb[0].mxu0 %v2897
        %v4613 = vpop.f32.mrb[0].mxu0
        %v4614 = vadd.f32 %v4549, %v4613
        %v4615 = vpop.f32.mrb[0].mxu0
        %v4616 = vpop.f32.mrb[0].mxu0
        %v4617 = vadd.f32 %v4552, %v4616
        %v4618 = vpop.f32.mrb[0].mxu0
        %4619 = vmatprep.mubr.bf16.mxu0 %v2925
        %4620 = vmatmul.mubr.bf16.gmra.mrb[0].mxu0 %v2924
        %v4621 = vpop.f32.mrb[0].mxu0
        %v4622 = vadd.f32 %v4557, %v4621
        %v4623 = vpop.f32.mrb[0].mxu0
        %v4624 = vpop.f32.mrb[0].mxu0
        %v4625 = vadd.f32 %v4560, %v4624
        %v4626 = vpop.f32.mrb[0].mxu0
        %4627 = vmatprep.mubr.bf16.mxu0 %v2952
        %4628 = vmatmul.mubr.bf16.gmra.mrb[0].mxu0 %v2951
        %v4629 = vpop.f32.mrb[0].mxu0
        %v4630 = vadd.f32 %v4565, %v4629
        %v4631 = vpop.f32.mrb[0].mxu0
        %v4632 = vpop.f32.mrb[0].mxu0
        %v4633 = vadd.f32 %v4568, %v4632
        %v4634 = vpop.f32.mrb[0].mxu0
        %4635 = vdwg.mxu0
        %4636 = vmatprep.subr.bf16.mxu0 0
        %4637 = vmatpush1.bf16.msra.mxu0 %v4008
        %4638 = vmatprep.subr.bf16.mxu0 0
        %4639 = vmatpush1.bf16.msra.mxu0 %v4009
        %4640 = vmatprep.subr.bf16.mxu0 0
        %4641 = vmatpush1.bf16.msra.mxu0 %v4010
        %4642 = vmatprep.subr.bf16.mxu0 0
        %4643 = vmatpush1.bf16.msra.mxu0 %v4011
        %4644 = vmatprep.subr.bf16.mxu0 0
        %4645 = vmatpush1.bf16.msra.mxu0 %v4012
        %4646 = vmatprep.subr.bf16.mxu0 0
        %4647 = vmatpush1.bf16.msra.mxu0 %v4013
        %4648 = vmatprep.subr.bf16.mxu0 0
        %4649 = vmatpush1.bf16.msra.mxu0 %v4014
        %4650 = vmatprep.subr.bf16.mxu0 0
        %4651 = vmatpush1.bf16.msra.mxu0 %v4015
        %4652 = vmatprep.subr.bf16.mxu0 0
        %4653 = vmatpush1.bf16.msra.mxu0 %v4016
        %4654 = vmatprep.subr.bf16.mxu0 0
        %4655 = vmatpush1.bf16.msra.mxu0 %v4017
        %4656 = vmatprep.subr.bf16.mxu0 0
        %4657 = vmatpush1.bf16.msra.mxu0 %v4018
        %4658 = vmatprep.subr.bf16.mxu0 0
        %4659 = vmatpush1.bf16.msra.mxu0 %v4019
        %4660 = vmatprep.subr.bf16.mxu0 0
        %4661 = vmatpush1.bf16.msra.mxu0 %v4020
        %4662 = vmatprep.subr.bf16.mxu0 0
        %4663 = vmatpush1.bf16.msra.mxu0 %v4021
        %4664 = vmatprep.subr.bf16.mxu0 0
        %4665 = vmatpush1.bf16.msra.mxu0 %v4022
        %4666 = vmatprep.subr.bf16.mxu0 0
        %4667 = vmatpush1.bf16.msra.mxu0 %v4023
        %4668 = vmatprep.mubr.bf16.mxu0 %v2873
        %4669 = vmatmul.mubr.bf16.gmra.mrb[0].mxu0 %v2872
        %v4670 = vpop.f32.mrb[0].mxu0
        %v4671 = vadd.f32 %v4606, %v4670
        %v4672 = vpop.f32.mrb[0].mxu0
        %v4673 = vpop.f32.mrb[0].mxu0
        %v4674 = vadd.f32 %v4609, %v4673
        %v4675 = vpop.f32.mrb[0].mxu0
        %4676 = vmatprep.mubr.bf16.mxu0 %v2900
        %4677 = vmatmul.mubr.bf16.gmra.mrb[0].mxu0 %v2899
        %v4678 = vpop.f32.mrb[0].mxu0
        %v4679 = vadd.f32 %v4614, %v4678
        %v4680 = vpop.f32.mrb[0].mxu0
        %v4681 = vpop.f32.mrb[0].mxu0
        %v4682 = vadd.f32 %v4617, %v4681
        %v4683 = vpop.f32.mrb[0].mxu0
        %4684 = vmatprep.mubr.bf16.mxu0 %v2927
        %4685 = vmatmul.mubr.bf16.gmra.mrb[0].mxu0 %v2926
        %v4686 = vpop.f32.mrb[0].mxu0
        %v4687 = vadd.f32 %v4622, %v4686
        %v4688 = vpop.f32.mrb[0].mxu0
        %v4689 = vpop.f32.mrb[0].mxu0
        %v4690 = vadd.f32 %v4625, %v4689
        %v4691 = vpop.f32.mrb[0].mxu0
        %4692 = vmatprep.mubr.bf16.mxu0 %v2954
        %4693 = vmatmul.mubr.bf16.gmra.mrb[0].mxu0 %v2953
        %v4694 = vpop.f32.mrb[0].mxu0
        %v4695 = vadd.f32 %v4630, %v4694
        %v4696 = vpop.f32.mrb[0].mxu0
        %v4697 = vpop.f32.mrb[0].mxu0
        %v4698 = vadd.f32 %v4633, %v4697
        %v4699 = vpop.f32.mrb[0].mxu0
        %4700 = vdwg.mxu0
        %4701 = vmatprep.subr.bf16.mxu0 0
        %4702 = vmatpush1.bf16.msra.mxu0 %v4024
        %4703 = vmatprep.subr.bf16.mxu0 0
        %4704 = vmatpush1.bf16.msra.mxu0 %v4025
        %4705 = vmatprep.subr.bf16.mxu0 0
        %4706 = vmatpush1.bf16.msra.mxu0 %v4026
        %4707 = vmatprep.subr.bf16.mxu0 0
        %4708 = vmatpush1.bf16.msra.mxu0 %v4027
        %4709 = vmatprep.subr.bf16.mxu0 0
        %4710 = vmatpush1.bf16.msra.mxu0 %v4028
        %4711 = vmatprep.subr.bf16.mxu0 0
        %4712 = vmatpush1.bf16.msra.mxu0 %v4029
        %4713 = vmatprep.subr.bf16.mxu0 0
        %4714 = vmatpush1.bf16.msra.mxu0 %v4030
        %4715 = vmatprep.subr.bf16.mxu0 0
        %4716 = vmatpush1.bf16.msra.mxu0 %v4031
        %4717 = vmatprep.subr.bf16.mxu0 0
        %4718 = vmatpush1.bf16.msra.mxu0 %v4032
        %4719 = vmatprep.subr.bf16.mxu0 0
        %4720 = vmatpush1.bf16.msra.mxu0 %v4033
        %4721 = vmatprep.subr.bf16.mxu0 0
        %4722 = vmatpush1.bf16.msra.mxu0 %v4034
        %4723 = vmatprep.subr.bf16.mxu0 0
        %4724 = vmatpush1.bf16.msra.mxu0 %v4035
        %4725 = vmatprep.subr.bf16.mxu0 0
        %4726 = vmatpush1.bf16.msra.mxu0 %v4036
        %4727 = vmatprep.subr.bf16.mxu0 0
        %4728 = vmatpush1.bf16.msra.mxu0 %v4037
        %4729 = vmatprep.subr.bf16.mxu0 0
        %4730 = vmatpush1.bf16.msra.mxu0 %v4038
        %4731 = vmatprep.subr.bf16.mxu0 0
        %4732 = vmatpush1.bf16.msra.mxu0 %v4039
        %4733 = vmatprep.mubr.bf16.mxu0 %v2875
        %4734 = vmatmul.mubr.bf16.gmra.mrb[0].mxu0 %v2874
        %v4735 = vpop.f32.mrb[0].mxu0
        %v4736 = vadd.f32 %v4671, %v4735
        %v4737 = vpop.f32.mrb[0].mxu0
        %v4738 = vpop.f32.mrb[0].mxu0
        %v4739 = vadd.f32 %v4674, %v4738
        %v4740 = vpop.f32.mrb[0].mxu0
        %4741 = vmatprep.mubr.bf16.mxu0 %v2902
        %4742 = vmatmul.mubr.bf16.gmra.mrb[0].mxu0 %v2901
        %v4743 = vpop.f32.mrb[0].mxu0
        %v4744 = vadd.f32 %v4679, %v4743
        %v4745 = vpop.f32.mrb[0].mxu0
        %v4746 = vpop.f32.mrb[0].mxu0
        %v4747 = vadd.f32 %v4682, %v4746
        %v4748 = vpop.f32.mrb[0].mxu0
        %4749 = vmatprep.mubr.bf16.mxu0 %v2929
        %4750 = vmatmul.mubr.bf16.gmra.mrb[0].mxu0 %v2928
        %v4751 = vpop.f32.mrb[0].mxu0
        %v4752 = vadd.f32 %v4687, %v4751
        %v4753 = vpop.f32.mrb[0].mxu0
        %v4754 = vpop.f32.mrb[0].mxu0
        %v4755 = vadd.f32 %v4690, %v4754
        %v4756 = vpop.f32.mrb[0].mxu0
        %4757 = vmatprep.mubr.bf16.mxu0 %v2956
        %4758 = vmatmul.mubr.bf16.gmra.mrb[0].mxu0 %v2955
        %v4759 = vpop.f32.mrb[0].mxu0
        %v4760 = vadd.f32 %v4695, %v4759
        %v4761 = vpop.f32.mrb[0].mxu0
        %v4762 = vpop.f32.mrb[0].mxu0
        %v4763 = vadd.f32 %v4698, %v4762
        %v4764 = vpop.f32.mrb[0].mxu0
        %4765 = vdwg.mxu0
        %4766 = vmatprep.subr.bf16.mxu0 0
        %4767 = vmatpush1.bf16.msra.mxu0 %v4040
        %4768 = vmatprep.subr.bf16.mxu0 0
        %4769 = vmatpush1.bf16.msra.mxu0 %v4041
        %4770 = vmatprep.subr.bf16.mxu0 0
        %4771 = vmatpush1.bf16.msra.mxu0 %v4042
        %4772 = vmatprep.subr.bf16.mxu0 0
        %4773 = vmatpush1.bf16.msra.mxu0 %v4043
        %4774 = vmatprep.subr.bf16.mxu0 0
        %4775 = vmatpush1.bf16.msra.mxu0 %v4044
        %4776 = vmatprep.subr.bf16.mxu0 0
        %4777 = vmatpush1.bf16.msra.mxu0 %v4045
        %4778 = vmatprep.subr.bf16.mxu0 0
        %4779 = vmatpush1.bf16.msra.mxu0 %v4046
        %4780 = vmatprep.subr.bf16.mxu0 0
        %4781 = vmatpush1.bf16.msra.mxu0 %v4047
        %4782 = vmatprep.subr.bf16.mxu0 0
        %4783 = vmatpush1.bf16.msra.mxu0 %v4048
        %4784 = vmatprep.subr.bf16.mxu0 0
        %4785 = vmatpush1.bf16.msra.mxu0 %v4049
        %4786 = vmatprep.subr.bf16.mxu0 0
        %4787 = vmatpush1.bf16.msra.mxu0 %v4050
        %4788 = vmatprep.subr.bf16.mxu0 0
        %4789 = vmatpush1.bf16.msra.mxu0 %v4051
        %4790 = vmatprep.subr.bf16.mxu0 0
        %4791 = vmatpush1.bf16.msra.mxu0 %v4052
        %4792 = vmatprep.subr.bf16.mxu0 0
        %4793 = vmatpush1.bf16.msra.mxu0 %v4053
        %4794 = vmatprep.subr.bf16.mxu0 0
        %4795 = vmatpush1.bf16.msra.mxu0 %v4054
        %4796 = vmatprep.subr.bf16.mxu0 0
        %4797 = vmatpush1.bf16.msra.mxu0 %v4055
        %4798 = vmatprep.mubr.bf16.mxu0 %v2877
        %4799 = vmatmul.mubr.bf16.gmra.mrb[0].mxu0 %v2876
        %v4800 = vpop.f32.mrb[0].mxu0
        %v4801 = vadd.f32 %v4736, %v4800
        %v4802 = vpop.f32.mrb[0].mxu0
        %v4803 = vpop.f32.mrb[0].mxu0
        %v4804 = vadd.f32 %v4739, %v4803
        %v4805 = vpop.f32.mrb[0].mxu0
        %4806 = vmatprep.mubr.bf16.mxu0 %v2904
        %4807 = vmatmul.mubr.bf16.gmra.mrb[0].mxu0 %v2903
        %v4808 = vpop.f32.mrb[0].mxu0
        %v4809 = vadd.f32 %v4744, %v4808
        %v4810 = vpop.f32.mrb[0].mxu0
        %v4811 = vpop.f32.mrb[0].mxu0
        %v4812 = vadd.f32 %v4747, %v4811
        %v4813 = vpop.f32.mrb[0].mxu0
        %4814 = vmatprep.mubr.bf16.mxu0 %v2931
        %4815 = vmatmul.mubr.bf16.gmra.mrb[0].mxu0 %v2930
        %v4816 = vpop.f32.mrb[0].mxu0
        %v4817 = vadd.f32 %v4752, %v4816
        %v4818 = vpop.f32.mrb[0].mxu0
        %v4819 = vpop.f32.mrb[0].mxu0
        %v4820 = vadd.f32 %v4755, %v4819
        %v4821 = vpop.f32.mrb[0].mxu0
        %4822 = vmatprep.mubr.bf16.mxu0 %v2958
        %4823 = vmatmul.mubr.bf16.gmra.mrb[0].mxu0 %v2957
        %v4824 = vpop.f32.mrb[0].mxu0
        %v4825 = vadd.f32 %v4760, %v4824
        %v4826 = vpop.f32.mrb[0].mxu0
        %v4827 = vpop.f32.mrb[0].mxu0
        %v4828 = vadd.f32 %v4763, %v4827
        %v4829 = vpop.f32.mrb[0].mxu0
        %4830 = vdwg.mxu0
        %4831 = vmatprep.subr.bf16.mxu0 0
        %4832 = vmatpush1.bf16.msra.mxu0 %v4056
        %4833 = vmatprep.subr.bf16.mxu0 0
        %4834 = vmatpush1.bf16.msra.mxu0 %v4057
        %4835 = vmatprep.subr.bf16.mxu0 0
        %4836 = vmatpush1.bf16.msra.mxu0 %v4058
        %4837 = vmatprep.subr.bf16.mxu0 0
        %4838 = vmatpush1.bf16.msra.mxu0 %v4059
        %4839 = vmatprep.subr.bf16.mxu0 0
        %4840 = vmatpush1.bf16.msra.mxu0 %v4060
        %4841 = vmatprep.subr.bf16.mxu0 0
        %4842 = vmatpush1.bf16.msra.mxu0 %v4061
        %4843 = vmatprep.subr.bf16.mxu0 0
        %4844 = vmatpush1.bf16.msra.mxu0 %v4062
        %4845 = vmatprep.subr.bf16.mxu0 0
        %4846 = vmatpush1.bf16.msra.mxu0 %v4063
        %4847 = vmatprep.subr.bf16.mxu0 0
        %4848 = vmatpush1.bf16.msra.mxu0 %v4064
        %4849 = vmatprep.subr.bf16.mxu0 0
        %4850 = vmatpush1.bf16.msra.mxu0 %v4065
        %4851 = vmatprep.subr.bf16.mxu0 0
        %4852 = vmatpush1.bf16.msra.mxu0 %v4066
        %4853 = vmatprep.subr.bf16.mxu0 0
        %4854 = vmatpush1.bf16.msra.mxu0 %v4067
        %4855 = vmatprep.subr.bf16.mxu0 0
        %4856 = vmatpush1.bf16.msra.mxu0 %v4068
        %4857 = vmatprep.subr.bf16.mxu0 0
        %4858 = vmatpush1.bf16.msra.mxu0 %v4069
        %4859 = vmatprep.subr.bf16.mxu0 0
        %4860 = vmatpush1.bf16.msra.mxu0 %v4070
        %4861 = vmatprep.subr.bf16.mxu0 0
        %4862 = vmatpush1.bf16.msra.mxu0 %v4071
        %4863 = vmatprep.mubr.bf16.mxu0 %v2879
        %4864 = vmatmul.mubr.bf16.gmra.mrb[0].mxu0 %v2878
        %v4865 = vpop.f32.mrb[0].mxu0
        %v4866 = vadd.f32 %v4801, %v4865
        %v4867 = vpop.f32.mrb[0].mxu0
        %v4868 = vpop.f32.mrb[0].mxu0
        %v4869 = vadd.f32 %v4804, %v4868
        %v4870 = vpop.f32.mrb[0].mxu0
        %4871 = vmatprep.mubr.bf16.mxu0 %v2906
        %4872 = vmatmul.mubr.bf16.gmra.mrb[0].mxu0 %v2905
        %v4873 = vpop.f32.mrb[0].mxu0
        %v4874 = vadd.f32 %v4809, %v4873
        %v4875 = vpop.f32.mrb[0].mxu0
        %v4876 = vpop.f32.mrb[0].mxu0
        %v4877 = vadd.f32 %v4812, %v4876
        %v4878 = vpop.f32.mrb[0].mxu0
        %4879 = vmatprep.mubr.bf16.mxu0 %v2933
        %4880 = vmatmul.mubr.bf16.gmra.mrb[0].mxu0 %v2932
        %v4881 = vpop.f32.mrb[0].mxu0
        %v4882 = vadd.f32 %v4817, %v4881
        %v4883 = vpop.f32.mrb[0].mxu0
        %v4884 = vpop.f32.mrb[0].mxu0
        %v4885 = vadd.f32 %v4820, %v4884
        %v4886 = vpop.f32.mrb[0].mxu0
        %4887 = vmatprep.mubr.bf16.mxu0 %v2960
        %4888 = vmatmul.mubr.bf16.gmra.mrb[0].mxu0 %v2959
        %v4889 = vpop.f32.mrb[0].mxu0
        %v4890 = vadd.f32 %v4825, %v4889
        %v4891 = vpop.f32.mrb[0].mxu0
        %v4892 = vpop.f32.mrb[0].mxu0
        %v4893 = vadd.f32 %v4828, %v4892
        %v4894 = vpop.f32.mrb[0].mxu0
        %4895 = vdwg.mxu0
        %4896 = vmatprep.subr.bf16.mxu0 0
        %4897 = vmatpush1.bf16.msra.mxu0 %v4072
        %4898 = vmatprep.subr.bf16.mxu0 0
        %4899 = vmatpush1.bf16.msra.mxu0 %v4073
        %4900 = vmatprep.subr.bf16.mxu0 0
        %4901 = vmatpush1.bf16.msra.mxu0 %v4074
        %4902 = vmatprep.subr.bf16.mxu0 0
        %4903 = vmatpush1.bf16.msra.mxu0 %v4075
        %4904 = vmatprep.subr.bf16.mxu0 0
        %4905 = vmatpush1.bf16.msra.mxu0 %v4076
        %4906 = vmatprep.subr.bf16.mxu0 0
        %4907 = vmatpush1.bf16.msra.mxu0 %v4077
        %4908 = vmatprep.subr.bf16.mxu0 0
        %4909 = vmatpush1.bf16.msra.mxu0 %v4078
        %4910 = vmatprep.subr.bf16.mxu0 0
        %4911 = vmatpush1.bf16.msra.mxu0 %v4079
        %4912 = vmatprep.subr.bf16.mxu0 0
        %4913 = vmatpush1.bf16.msra.mxu0 %v4080
        %4914 = vmatprep.subr.bf16.mxu0 0
        %4915 = vmatpush1.bf16.msra.mxu0 %v4081
        %4916 = vmatprep.subr.bf16.mxu0 0
        %4917 = vmatpush1.bf16.msra.mxu0 %v4082
        %4918 = vmatprep.subr.bf16.mxu0 0
        %4919 = vmatpush1.bf16.msra.mxu0 %v4083
        %4920 = vmatprep.subr.bf16.mxu0 0
        %4921 = vmatpush1.bf16.msra.mxu0 %v4084
        %4922 = vmatprep.subr.bf16.mxu0 0
        %4923 = vmatpush1.bf16.msra.mxu0 %v4085
        %4924 = vmatprep.subr.bf16.mxu0 0
        %4925 = vmatpush1.bf16.msra.mxu0 %v4086
        %4926 = vmatprep.subr.bf16.mxu0 0
        %4927 = vmatpush1.bf16.msra.mxu0 %v4087
        %4928 = vmatprep.mubr.bf16.mxu0 %v2881
        %4929 = vmatmul.mubr.bf16.gmra.mrb[0].mxu0 %v2880
        %v4930 = vpop.f32.mrb[0].mxu0
        %v4931 = vadd.f32 %v4866, %v4930
        %v4932 = vpop.f32.mrb[0].mxu0
        %v4933 = vpop.f32.mrb[0].mxu0
        %v4934 = vadd.f32 %v4869, %v4933
        %v4935 = vpop.f32.mrb[0].mxu0
        %4936 = vmatprep.mubr.bf16.mxu0 %v2908
        %4937 = vmatmul.mubr.bf16.gmra.mrb[0].mxu0 %v2907
        %v4938 = vpop.f32.mrb[0].mxu0
        %v4939 = vadd.f32 %v4874, %v4938
        %v4940 = vpop.f32.mrb[0].mxu0
        %v4941 = vpop.f32.mrb[0].mxu0
        %v4942 = vadd.f32 %v4877, %v4941
        %v4943 = vpop.f32.mrb[0].mxu0
        %4944 = vmatprep.mubr.bf16.mxu0 %v2935
        %4945 = vmatmul.mubr.bf16.gmra.mrb[0].mxu0 %v2934
        %v4946 = vpop.f32.mrb[0].mxu0
        %v4947 = vadd.f32 %v4882, %v4946
        %v4948 = vpop.f32.mrb[0].mxu0
        %v4949 = vpop.f32.mrb[0].mxu0
        %v4950 = vadd.f32 %v4885, %v4949
        %v4951 = vpop.f32.mrb[0].mxu0
        %4952 = vmatprep.mubr.bf16.mxu0 %v2962
        %4953 = vmatmul.mubr.bf16.gmra.mrb[0].mxu0 %v2961
        %v4954 = vpop.f32.mrb[0].mxu0
        %v4955 = vadd.f32 %v4890, %v4954
        %v4956 = vpop.f32.mrb[0].mxu0
        %v4957 = vpop.f32.mrb[0].mxu0
        %v4958 = vadd.f32 %v4893, %v4957
        %v4959 = vpop.f32.mrb[0].mxu0
        %4960 = vdwg.mxu0
        %4961 = vmatprep.subr.bf16.mxu0 0
        %4962 = vmatpush1.bf16.msra.mxu0 %v4088
        %4963 = vmatprep.subr.bf16.mxu0 0
        %4964 = vmatpush1.bf16.msra.mxu0 %v4089
        %4965 = vmatprep.subr.bf16.mxu0 0
        %4966 = vmatpush1.bf16.msra.mxu0 %v4090
        %4967 = vmatprep.subr.bf16.mxu0 0
        %4968 = vmatpush1.bf16.msra.mxu0 %v4091
        %4969 = vmatprep.subr.bf16.mxu0 0
        %4970 = vmatpush1.bf16.msra.mxu0 %v4092
        %4971 = vmatprep.subr.bf16.mxu0 0
        %4972 = vmatpush1.bf16.msra.mxu0 %v4093
        %4973 = vmatprep.subr.bf16.mxu0 0
        %4974 = vmatpush1.bf16.msra.mxu0 %v4094
        %4975 = vmatprep.subr.bf16.mxu0 0
        %4976 = vmatpush1.bf16.msra.mxu0 %v4095
        %4977 = vmatprep.subr.bf16.mxu0 0
        %4978 = vmatpush1.bf16.msra.mxu0 %v4096
        %4979 = vmatprep.subr.bf16.mxu0 0
        %4980 = vmatpush1.bf16.msra.mxu0 %v4097
        %4981 = vmatprep.subr.bf16.mxu0 0
        %4982 = vmatpush1.bf16.msra.mxu0 %v4098
        %4983 = vmatprep.subr.bf16.mxu0 0
        %4984 = vmatpush1.bf16.msra.mxu0 %v4099
        %4985 = vmatprep.subr.bf16.mxu0 0
        %4986 = vmatpush1.bf16.msra.mxu0 %v4100
        %4987 = vmatprep.subr.bf16.mxu0 0
        %4988 = vmatpush1.bf16.msra.mxu0 %v4101
        %4989 = vmatprep.subr.bf16.mxu0 0
        %4990 = vmatpush1.bf16.msra.mxu0 %v4102
        %4991 = vmatprep.subr.bf16.mxu0 0
        %4992 = vmatpush1.bf16.msra.mxu0 %v4103
        %4993 = vmatprep.mubr.bf16.mxu0 %v2883
        %4994 = vmatmul.mubr.bf16.gmra.mrb[0].mxu0 %v2882
        %v4995 = vpop.f32.mrb[0].mxu0
        %v4996 = vadd.f32 %v4931, %v4995
        %v4997 = vpop.f32.mrb[0].mxu0
        %v4998 = vpop.f32.mrb[0].mxu0
        %v4999 = vadd.f32 %v4934, %v4998
        %v5000 = vpop.f32.mrb[0].mxu0
        %5001 = vmatprep.mubr.bf16.mxu0 %v2910
        %5002 = vmatmul.mubr.bf16.gmra.mrb[0].mxu0 %v2909
        %v5003 = vpop.f32.mrb[0].mxu0
        %v5004 = vadd.f32 %v4939, %v5003
        %v5005 = vpop.f32.mrb[0].mxu0
        %v5006 = vpop.f32.mrb[0].mxu0
        %v5007 = vadd.f32 %v4942, %v5006
        %v5008 = vpop.f32.mrb[0].mxu0
        %5009 = vmatprep.mubr.bf16.mxu0 %v2937
        %5010 = vmatmul.mubr.bf16.gmra.mrb[0].mxu0 %v2936
        %v5011 = vpop.f32.mrb[0].mxu0
        %v5012 = vadd.f32 %v4947, %v5011
        %v5013 = vpop.f32.mrb[0].mxu0
        %v5014 = vpop.f32.mrb[0].mxu0
        %v5015 = vadd.f32 %v4950, %v5014
        %v5016 = vpop.f32.mrb[0].mxu0
        %5017 = vmatprep.mubr.bf16.mxu0 %v2964
        %5018 = vmatmul.mubr.bf16.gmra.mrb[0].mxu0 %v2963
        %v5019 = vpop.f32.mrb[0].mxu0
        %v5020 = vadd.f32 %v4955, %v5019
        %v5021 = vpop.f32.mrb[0].mxu0
        %v5022 = vpop.f32.mrb[0].mxu0
        %v5023 = vadd.f32 %v4958, %v5022
        %v5024 = vpop.f32.mrb[0].mxu0
        %5025 = vdwg.mxu0
        %5026 = vmatprep.subr.bf16.mxu0 0
        %5027 = vmatpush1.bf16.msra.mxu0 %v4104
        %5028 = vmatprep.subr.bf16.mxu0 0
        %5029 = vmatpush1.bf16.msra.mxu0 %v4105
        %5030 = vmatprep.subr.bf16.mxu0 0
        %5031 = vmatpush1.bf16.msra.mxu0 %v4106
        %5032 = vmatprep.subr.bf16.mxu0 0
        %5033 = vmatpush1.bf16.msra.mxu0 %v4107
        %5034 = vmatprep.subr.bf16.mxu0 0
        %5035 = vmatpush1.bf16.msra.mxu0 %v4108
        %5036 = vmatprep.subr.bf16.mxu0 0
        %5037 = vmatpush1.bf16.msra.mxu0 %v4109
        %5038 = vmatprep.subr.bf16.mxu0 0
        %5039 = vmatpush1.bf16.msra.mxu0 %v4110
        %5040 = vmatprep.subr.bf16.mxu0 0
        %5041 = vmatpush1.bf16.msra.mxu0 %v4111
        %5042 = vmatprep.subr.bf16.mxu0 0
        %5043 = vmatpush1.bf16.msra.mxu0 %v4112
        %5044 = vmatprep.subr.bf16.mxu0 0
        %5045 = vmatpush1.bf16.msra.mxu0 %v4113
        %5046 = vmatprep.subr.bf16.mxu0 0
        %5047 = vmatpush1.bf16.msra.mxu0 %v4114
        %5048 = vmatprep.subr.bf16.mxu0 0
        %5049 = vmatpush1.bf16.msra.mxu0 %v4115
        %5050 = vmatprep.subr.bf16.mxu0 0
        %5051 = vmatpush1.bf16.msra.mxu0 %v4116
        %5052 = vmatprep.subr.bf16.mxu0 0
        %5053 = vmatpush1.bf16.msra.mxu0 %v4117
        %5054 = vmatprep.subr.bf16.mxu0 0
        %5055 = vmatpush1.bf16.msra.mxu0 %v4118
        %5056 = vmatprep.subr.bf16.mxu0 0
        %5057 = vmatpush1.bf16.msra.mxu0 %v4119
        %5058 = vmatprep.mubr.bf16.mxu0 %v2885
        %5059 = vmatmul.mubr.bf16.gmra.mrb[0].mxu0 %v2884
        %v5060 = vpop.f32.mrb[0].mxu0
        %v5061 = vadd.f32 %v4996, %v5060
        %v5062 = vpop.f32.mrb[0].mxu0
        %v5063 = vpop.f32.mrb[0].mxu0
        %v5064 = vadd.f32 %v4999, %v5063
        %v5065 = vpop.f32.mrb[0].mxu0
        %5066 = vmatprep.mubr.bf16.mxu0 %v2912
        %5067 = vmatmul.mubr.bf16.gmra.mrb[0].mxu0 %v2911
        %v5068 = vpop.f32.mrb[0].mxu0
        %v5069 = vadd.f32 %v5004, %v5068
        %v5070 = vpop.f32.mrb[0].mxu0
        %v5071 = vpop.f32.mrb[0].mxu0
        %v5072 = vadd.f32 %v5007, %v5071
        %v5073 = vpop.f32.mrb[0].mxu0
        %5074 = vmatprep.mubr.bf16.mxu0 %v2939
        %5075 = vmatmul.mubr.bf16.gmra.mrb[0].mxu0 %v2938
        %v5076 = vpop.f32.mrb[0].mxu0
        %v5077 = vadd.f32 %v5012, %v5076
        %v5078 = vpop.f32.mrb[0].mxu0
        %v5079 = vpop.f32.mrb[0].mxu0
        %v5080 = vadd.f32 %v5015, %v5079
        %v5081 = vpop.f32.mrb[0].mxu0
        %5082 = vmatprep.mubr.bf16.mxu0 %v2966
        %5083 = vmatmul.mubr.bf16.gmra.mrb[0].mxu0 %v2965
        %v5084 = vpop.f32.mrb[0].mxu0
        %v5085 = vadd.f32 %v5020, %v5084
        %v5086 = vpop.f32.mrb[0].mxu0
        %v5087 = vpop.f32.mrb[0].mxu0
        %v5088 = vadd.f32 %v5023, %v5087
        %v5089 = vpop.f32.mrb[0].mxu0
        %5090 = vdwg.mxu0
        %5091 = vmatprep.subr.bf16.mxu0 0
        %5092 = vmatpush1.bf16.msra.mxu0 %v4120
        %5093 = vmatprep.subr.bf16.mxu0 0
        %5094 = vmatpush1.bf16.msra.mxu0 %v4121
        %5095 = vmatprep.subr.bf16.mxu0 0
        %5096 = vmatpush1.bf16.msra.mxu0 %v4122
        %5097 = vmatprep.subr.bf16.mxu0 0
        %5098 = vmatpush1.bf16.msra.mxu0 %v4123
        %5099 = vmatprep.subr.bf16.mxu0 0
        %5100 = vmatpush1.bf16.msra.mxu0 %v4124
        %5101 = vmatprep.subr.bf16.mxu0 0
        %5102 = vmatpush1.bf16.msra.mxu0 %v4125
        %5103 = vmatprep.subr.bf16.mxu0 0
        %5104 = vmatpush1.bf16.msra.mxu0 %v4126
        %5105 = vmatprep.subr.bf16.mxu0 0
        %5106 = vmatpush1.bf16.msra.mxu0 %v4127
        %5107 = vmatprep.subr.bf16.mxu0 0
        %5108 = vmatpush1.bf16.msra.mxu0 %v4128
        %5109 = vmatprep.subr.bf16.mxu0 0
        %5110 = vmatpush1.bf16.msra.mxu0 %v4129
        %5111 = vmatprep.subr.bf16.mxu0 0
        %5112 = vmatpush1.bf16.msra.mxu0 %v4130
        %5113 = vmatprep.subr.bf16.mxu0 0
        %5114 = vmatpush1.bf16.msra.mxu0 %v4131
        %5115 = vmatprep.subr.bf16.mxu0 0
        %5116 = vmatpush1.bf16.msra.mxu0 %v4132
        %5117 = vmatprep.subr.bf16.mxu0 0
        %5118 = vmatpush1.bf16.msra.mxu0 %v4133
        %5119 = vmatprep.subr.bf16.mxu0 0
        %5120 = vmatpush1.bf16.msra.mxu0 %v4134
        %5121 = vmatprep.subr.bf16.mxu0 0
        %5122 = vmatpush1.bf16.msra.mxu0 %v4135
        %5123 = vmatprep.mubr.bf16.mxu0 %v2887
        %5124 = vmatmul.mubr.bf16.gmra.mrb[0].mxu0 %v2886
        %v5125 = vpop.f32.mrb[0].mxu0
        %v5126 = vadd.f32 %v5061, %v5125
        %v5127 = vpop.f32.mrb[0].mxu0
        %v5128 = vpop.f32.mrb[0].mxu0
        %v5129 = vadd.f32 %v5064, %v5128
        %v5130 = vpop.f32.mrb[0].mxu0
        %5131 = vmatprep.mubr.bf16.mxu0 %v2914
        %5132 = vmatmul.mubr.bf16.gmra.mrb[0].mxu0 %v2913
        %v5133 = vpop.f32.mrb[0].mxu0
        %v5134 = vadd.f32 %v5069, %v5133
        %v5135 = vpop.f32.mrb[0].mxu0
        %v5136 = vpop.f32.mrb[0].mxu0
        %v5137 = vadd.f32 %v5072, %v5136
        %v5138 = vpop.f32.mrb[0].mxu0
        %5139 = vmatprep.mubr.bf16.mxu0 %v2941
        %5140 = vmatmul.mubr.bf16.gmra.mrb[0].mxu0 %v2940
        %v5141 = vpop.f32.mrb[0].mxu0
        %v5142 = vadd.f32 %v5077, %v5141
        %v5143 = vpop.f32.mrb[0].mxu0
        %v5144 = vpop.f32.mrb[0].mxu0
        %v5145 = vadd.f32 %v5080, %v5144
        %v5146 = vpop.f32.mrb[0].mxu0
        %5147 = vmatprep.mubr.bf16.mxu0 %v2968
        %5148 = vmatmul.mubr.bf16.gmra.mrb[0].mxu0 %v2967
        %v5149 = vpop.f32.mrb[0].mxu0
        %v5150 = vadd.f32 %v5085, %v5149
        %v5151 = vpop.f32.mrb[0].mxu0
        %v5152 = vpop.f32.mrb[0].mxu0
        %v5153 = vadd.f32 %v5088, %v5152
        %v5154 = vpop.f32.mrb[0].mxu0
        %5155 = vdwg.mxu0
        %5156 = vmatprep.subr.bf16.mxu0 0
        %5157 = vmatpush1.bf16.msra.mxu0 %v4136
        %5158 = vmatprep.subr.bf16.mxu0 0
        %5159 = vmatpush1.bf16.msra.mxu0 %v4137
        %5160 = vmatprep.subr.bf16.mxu0 0
        %5161 = vmatpush1.bf16.msra.mxu0 %v4138
        %5162 = vmatprep.subr.bf16.mxu0 0
        %5163 = vmatpush1.bf16.msra.mxu0 %v4139
        %5164 = vmatprep.subr.bf16.mxu0 0
        %5165 = vmatpush1.bf16.msra.mxu0 %v4140
        %5166 = vmatprep.subr.bf16.mxu0 0
        %5167 = vmatpush1.bf16.msra.mxu0 %v4141
        %5168 = vmatprep.subr.bf16.mxu0 0
        %5169 = vmatpush1.bf16.msra.mxu0 %v4142
        %5170 = vmatprep.subr.bf16.mxu0 0
        %5171 = vmatpush1.bf16.msra.mxu0 %v4143
        %5172 = vmatprep.subr.bf16.mxu0 0
        %5173 = vmatpush1.bf16.msra.mxu0 %v4144
        %5174 = vmatprep.subr.bf16.mxu0 0
        %5175 = vmatpush1.bf16.msra.mxu0 %v4145
        %5176 = vmatprep.subr.bf16.mxu0 0
        %5177 = vmatpush1.bf16.msra.mxu0 %v4146
        %5178 = vmatprep.subr.bf16.mxu0 0
        %5179 = vmatpush1.bf16.msra.mxu0 %v4147
        %5180 = vmatprep.subr.bf16.mxu0 0
        %5181 = vmatpush1.bf16.msra.mxu0 %v4148
        %5182 = vmatprep.subr.bf16.mxu0 0
        %5183 = vmatpush1.bf16.msra.mxu0 %v4149
        %5184 = vmatprep.subr.bf16.mxu0 0
        %5185 = vmatpush1.bf16.msra.mxu0 %v4150
        %5186 = vmatprep.subr.bf16.mxu0 0
        %5187 = vmatpush1.bf16.msra.mxu0 %v4151
        %5188 = vmatprep.mubr.bf16.mxu0 %v2889
        %5189 = vmatmul.mubr.bf16.gmra.mrb[0].mxu0 %v2888
        %v5190 = vpop.f32.mrb[0].mxu0
        %v5191 = vadd.f32 %v5126, %v5190
        %v5192 = vpop.f32.mrb[0].mxu0
        %v5193 = vpop.f32.mrb[0].mxu0
        %v5194 = vadd.f32 %v5129, %v5193
        %v5195 = vpop.f32.mrb[0].mxu0
        %5196 = vmatprep.mubr.bf16.mxu0 %v2916
        %5197 = vmatmul.mubr.bf16.gmra.mrb[0].mxu0 %v2915
        %v5198 = vpop.f32.mrb[0].mxu0
        %v5199 = vadd.f32 %v5134, %v5198
        %v5200 = vpop.f32.mrb[0].mxu0
        %v5201 = vpop.f32.mrb[0].mxu0
        %v5202 = vadd.f32 %v5137, %v5201
        %v5203 = vpop.f32.mrb[0].mxu0
        %5204 = vmatprep.mubr.bf16.mxu0 %v2943
        %5205 = vmatmul.mubr.bf16.gmra.mrb[0].mxu0 %v2942
        %v5206 = vpop.f32.mrb[0].mxu0
        %v5207 = vadd.f32 %v5142, %v5206
        %v5208 = vpop.f32.mrb[0].mxu0
        %v5209 = vpop.f32.mrb[0].mxu0
        %v5210 = vadd.f32 %v5145, %v5209
        %v5211 = vpop.f32.mrb[0].mxu0
        %5212 = vmatprep.mubr.bf16.mxu0 %v2970
        %5213 = vmatmul.mubr.bf16.gmra.mrb[0].mxu0 %v2969
        %v5214 = vpop.f32.mrb[0].mxu0
        %v5215 = vadd.f32 %v5150, %v5214
        %v5216 = vpop.f32.mrb[0].mxu0
        %v5217 = vpop.f32.mrb[0].mxu0
        %v5218 = vadd.f32 %v5153, %v5217
        %v5219 = vpop.f32.mrb[0].mxu0
        %5220 = vdwg.mxu0
        %5221 = vmatprep.subr.bf16.mxu0 0
        %5222 = vmatpush1.bf16.msra.mxu0 %v4152
        %5223 = vmatprep.subr.bf16.mxu0 0
        %5224 = vmatpush1.bf16.msra.mxu0 %v4153
        %5225 = vmatprep.subr.bf16.mxu0 0
        %5226 = vmatpush1.bf16.msra.mxu0 %v4154
        %5227 = vmatprep.subr.bf16.mxu0 0
        %5228 = vmatpush1.bf16.msra.mxu0 %v4155
        %5229 = vmatprep.subr.bf16.mxu0 0
        %5230 = vmatpush1.bf16.msra.mxu0 %v4156
        %5231 = vmatprep.subr.bf16.mxu0 0
        %5232 = vmatpush1.bf16.msra.mxu0 %v4157
        %5233 = vmatprep.subr.bf16.mxu0 0
        %5234 = vmatpush1.bf16.msra.mxu0 %v4158
        %5235 = vmatprep.subr.bf16.mxu0 0
        %5236 = vmatpush1.bf16.msra.mxu0 %v4159
        %5237 = vmatprep.subr.bf16.mxu0 0
        %5238 = vmatpush1.bf16.msra.mxu0 0
        %5239 = vmatprep.subr.bf16.mxu0 0
        %5240 = vmatpush1.bf16.msra.mxu0 0
        %5241 = vmatprep.subr.bf16.mxu0 0
        %5242 = vmatpush1.bf16.msra.mxu0 0
        %5243 = vmatprep.subr.bf16.mxu0 0
        %5244 = vmatpush1.bf16.msra.mxu0 0
        %5245 = vmatprep.subr.bf16.mxu0 0
        %5246 = vmatpush1.bf16.msra.mxu0 0
        %5247 = vmatprep.subr.bf16.mxu0 0
        %5248 = vmatpush1.bf16.msra.mxu0 0
        %5249 = vmatprep.subr.bf16.mxu0 0
        %5250 = vmatpush1.bf16.msra.mxu0 0
        %5251 = vmatprep.subr.bf16.mxu0 0
        %5252 = vmatpush1.bf16.msra.mxu0 0
        %5253 = vmatprep.mubr.bf16.mxu0 0
        %5254 = vmatmul.mubr.bf16.gmra.mrb[0].mxu0 %v2890
        %v5255 = vpop.f32.mrb[0].mxu0
        %v5256 = vadd.f32 %v5191, %v5255
        %v5257 = vpop.f32.mrb[0].mxu0
        %v5258 = vpop.f32.mrb[0].mxu0
        %v5259 = vadd.f32 %v5194, %v5258
        %v5260 = vpop.f32.mrb[0].mxu0
        %5261 = vmatprep.mubr.bf16.mxu0 0
        %5262 = vmatmul.mubr.bf16.gmra.mrb[0].mxu0 %v2917
        %v5263 = vpop.f32.mrb[0].mxu0
        %v5264 = vadd.f32 %v5199, %v5263
        %v5265 = vpop.f32.mrb[0].mxu0
        %v5266 = vpop.f32.mrb[0].mxu0
        %v5267 = vadd.f32 %v5202, %v5266
        %v5268 = vpop.f32.mrb[0].mxu0
        %5269 = vmatprep.mubr.bf16.mxu0 0
        %5270 = vmatmul.mubr.bf16.gmra.mrb[0].mxu0 %v2944
        %v5271 = vpop.f32.mrb[0].mxu0
        %v5272 = vadd.f32 %v5207, %v5271
        %v5273 = vpop.f32.mrb[0].mxu0
        %v5274 = vpop.f32.mrb[0].mxu0
        %v5275 = vadd.f32 %v5210, %v5274
        %v5276 = vpop.f32.mrb[0].mxu0
        %5277 = vmatprep.mubr.bf16.mxu0 0
        %5278 = vmatmul.mubr.bf16.gmra.mrb[0].mxu0 %v2971
        %v5279 = vpop.f32.mrb[0].mxu0
        %v5280 = vadd.f32 %v5215, %v5279
        %v5281 = vpop.f32.mrb[0].mxu0
        %v5282 = vpop.f32.mrb[0].mxu0
        %v5283 = vadd.f32 %v5218, %v5282
        %v5284 = vpop.f32.mrb[0].mxu0
        %5285 = vdwg.mxu0
        %vm5286 = vcmp.ge.f32.partialorder %v5256, 0.0
        %vm5287 = vcmp.ge.f32.partialorder %v5259, 0.0
        %vm5288 = vcmp.ge.f32.partialorder %v5264, 0.0
        %vm5289 = vcmp.ge.f32.partialorder %v5267, 0.0
        %vm5290 = vcmp.ge.f32.partialorder %v5272, 0.0
        %vm5291 = vcmp.ge.f32.partialorder %v5275, 0.0
        %vm5292 = vcmp.ge.f32.partialorder %v5280, 0.0
        %vm5293 = vcmp.ge.f32.partialorder %v5283, 0.0
        %v5294 = vmul.f32 %v5256, 0.2
        %v5295 = vmul.f32 %v5259, 0.2
        %v5296 = vmul.f32 %v5264, 0.2
        %v5297 = vmul.f32 %v5267, 0.2
        %v5298 = vmul.f32 %v5272, 0.2
        %v5299 = vmul.f32 %v5275, 0.2
        %v5300 = vmul.f32 %v5280, 0.2
        %v5301 = vmul.f32 %v5283, 0.2
        %v5302 = vsel %vm5286, %v5256, %v5294
        %v5303 = vsel %vm5287, %v5259, %v5295
        %v5304 = vsel %vm5288, %v5264, %v5296
        %v5305 = vsel %vm5289, %v5267, %v5297
        %v5306 = vsel %vm5290, %v5272, %v5298
        %v5307 = vsel %vm5291, %v5275, %v5299
        %v5308 = vsel %vm5292, %v5280, %v5300
        %v5309 = vsel %vm5293, %v5283, %v5301
        %v5310 = vpack.c.bf16 %v5303, %v5302
        %v5311 = vpack.c.bf16 %v5305, %v5304
        %v5312 = vpack.c.bf16 %v5307, %v5306
        %v5313 = vpack.c.bf16 %v5309, %v5308
        %v5318 = vunpack.c.l.b16 %v5310
        %v5319 = vunpack.c.h.b16 %v5310
        %v5320 = vunpack.c.l.b16 %v5311
        %v5321 = vunpack.c.h.b16 %v5311
        %v5322 = vunpack.c.l.b16 %v5312
        %v5323 = vunpack.c.h.b16 %v5312
        %v5324 = vunpack.c.l.b16 %v5313
        %v5325 = vunpack.c.h.b16 %v5313
        %v5326 = vpack.c.b16 %v5318, %v5318
        %v5327 = vpack.c.b16 %v5319, %v5319
        %v5328 = vpack.c.b16 %v5320, %v5320
        %v5329 = vpack.c.b16 %v5321, %v5321
        %v5330 = vpack.c.b16 %v5322, %v5322
        %v5331 = vpack.c.b16 %v5323, %v5323
        %v5332 = vpack.c.b16 %v5324, %v5324
        %v5333 = vpack.c.b16 %v5325, %v5325
        %5342 = vst [vmem:[%s1972] sm:$0xf] %v5326
        %5343 = vst [vmem:[%s1972 + $0x4] sm:$0xf] %v5327
        %5344 = vst [vmem:[%s1972 + $0x8] sm:$0xf] %v5328
        %5345 = vst [vmem:[%s1972 + $0xc] sm:$0xf] %v5329
        %5346 = vst [vmem:[%s1972 + $0x10] sm:$0xf] %v5330
        %5347 = vst [vmem:[%s1972 + $0x14] sm:$0xf] %v5331
        %5348 = vst [vmem:[%s1972 + $0x18] sm:$0xf] %v5332
        %5349 = vst [vmem:[%s1972 + $0x1c] sm:$0xf] %v5333
        %s5350 = sand.u32 %s114, 1
        %s5351 = sand.u32 %s114, 1
        %s5352 = smul.addr %s5351, 32
        %s5353 = scalar_lea.vmem [#allocation3], %s5352
        // Predicated region
        $region74: #{_lambda_.5} parent=68 // pred_check
          %p5354 = pneg %p124
        $region75: #{_lambda_.5} parent=68 // pred_check_branch
          %5356 = sbr.rel (%p5354) target = $region77
        $region76: #{_lambda_.5} parent=68 // pred_region
          %s5357 = smul.u32 8, %s19
          %s5358 = smul.addr %s5357, 2
          %s5359 = sadd.s32 %s18, %s5358
          %s5360 = smul.addr %s5359, 4
          %s5361 = scalar_lea.vmem %s3, %s5360
          // Predicated region
          $region78: #{_lambda_.5} parent=76 // pred_check
            _
          $region79: #{_lambda_.5} parent=76 // pred_check_branch
            %5363 = sbr.rel (0) target = $region81
          $region80: #{_lambda_.5} parent=76 // pred_region
            // Predicated region
            $region82: #{_lambda_.5} parent=80 // pred_check
              _
            $region83: #{_lambda_.5} parent=80 // pred_check_branch
              %5365 = sbr.rel target = $region85
            $region84: #{_lambda_.5} parent=80 // pred_region
              // Predicated region
              $region97: #{_lambda_.5} parent=84 // pred_check
                _
              $region98: #{_lambda_.5} parent=84 // pred_check_branch
                %5394 = sbr.rel (0) target = $region100
              $region99: #{_lambda_.5} parent=84 // pred_region
                loop: start=0, step=1, limit=1
                $region101: #{_lambda_.5} parent=99 // loop_pre_header
                  _
                $region102: #{_lambda_.5} parent=99 // loop_header
                  %s5396 = sphi 0, %s5400
                  %p5397 = scmp.ge.s32.totalorder %s5396, 1
                  %s5401 = sphi %s5353, %s5353
                  %s5402 = sphi %s5361, %s5361
                $region103: #{_lambda_.5} parent=99 // loop_header_branch
                  %5399 = sbr.rel (%p5397) target = $region107
                $region104: #{_lambda_.5} parent=99 // loop_body
                  _
                $region105: #{_lambda_.5} parent=99 // loop_footer
                  %s5400 = sadd.s32 1, %s5396
                $region106: #{_lambda_.5} parent=99 // loop_footer_branch
                  %5395 = sbr.rel target = $region102
                $region107: #{_lambda_.5} parent=99 // loop_exit
                  _
                loop: start=0, step=1, limit=1
                $region108: #{_lambda_.5} parent=99 // loop_pre_header
                  _
                $region109: #{_lambda_.5} parent=99 // loop_header
                  %s5405 = sphi 0, %s5409
                  %p5406 = scmp.ge.s32.totalorder %s5405, 1
                  %s5410 = sphi %s5353, %s5353
                  %s5411 = sphi %s5361, %s5361
                $region110: #{_lambda_.5} parent=99 // loop_header_branch
                  %5408 = sbr.rel (%p5406) target = $region114
                $region111: #{_lambda_.5} parent=99 // loop_body
                  %v5412 = vld [vmem:[%s5410] sm:$0xf]
                  %5413 = vst [vmem:[%s5411] sm:$0xf] %v5412
                  %v5414 = vld [vmem:[%s5410 + $0x4] sm:$0xf]
                  %5415 = vst [vmem:[%s5411 + $0x8] sm:$0xf] %v5414
                  %v5416 = vld [vmem:[%s5410 + $0x8] sm:$0xf]
                  %5417 = vst [vmem:[%s5411 + $0x10] sm:$0xf] %v5416
                  %v5418 = vld [vmem:[%s5410 + $0xc] sm:$0xf]
                  %5419 = vst [vmem:[%s5411 + $0x18] sm:$0xf] %v5418
                  %v5420 = vld [vmem:[%s5410 + $0x10] sm:$0xf]
                  %5421 = vst [vmem:[%s5411 + $0x20] sm:$0xf] %v5420
                  %v5422 = vld [vmem:[%s5410 + $0x14] sm:$0xf]
                  %5423 = vst [vmem:[%s5411 + $0x28] sm:$0xf] %v5422
                  %v5424 = vld [vmem:[%s5410 + $0x18] sm:$0xf]
                  %5425 = vst [vmem:[%s5411 + $0x30] sm:$0xf] %v5424
                  %v5426 = vld [vmem:[%s5410 + $0x1c] sm:$0xf]
                  %5427 = vst [vmem:[%s5411 + $0x38] sm:$0xf] %v5426
                $region112: #{_lambda_.5} parent=99 // loop_footer
                  %s5409 = sadd.s32 1, %s5405
                $region113: #{_lambda_.5} parent=99 // loop_footer_branch
                  %5404 = sbr.rel target = $region109
                $region114: #{_lambda_.5} parent=99 // loop_exit
                  _
              $region100: #{_lambda_.5} parent=84 // pred_fallthru
                _
            $region85: #{_lambda_.5} parent=80 // pred_fallthru
              _
            // Predicated region
            $region86: #{_lambda_.5} parent=80 // pred_check
              _
            $region87: #{_lambda_.5} parent=80 // pred_check_branch
              %5367 = sbr.rel (0) target = $region89
            $region88: #{_lambda_.5} parent=80 // pred_region
              loop: start=0, step=1, limit=1
              $region90: #{_lambda_.5} parent=88 // loop_pre_header
                _
              $region91: #{_lambda_.5} parent=88 // loop_header
                %s5370 = sphi 0, %s5374
                %p5371 = scmp.ge.s32.totalorder %s5370, 1
                %s5375 = sphi %s5353, %s5353
                %s5376 = sphi %s5361, %s5361
              $region92: #{_lambda_.5} parent=88 // loop_header_branch
                %5373 = sbr.rel (%p5371) target = $region96
              $region93: #{_lambda_.5} parent=88 // loop_body
                %v5377 = vld [vmem:[%s5375] sm:$0xf]
                %5378 = vst [vmem:[%s5376] sm:$0xf] %v5377
                %v5379 = vld [vmem:[%s5375 + $0x4] sm:$0xf]
                %5380 = vst [vmem:[%s5376 + $0x8] sm:$0xf] %v5379
                %v5381 = vld [vmem:[%s5375 + $0x8] sm:$0xf]
                %5382 = vst [vmem:[%s5376 + $0x10] sm:$0xf] %v5381
                %v5383 = vld [vmem:[%s5375 + $0xc] sm:$0xf]
                %5384 = vst [vmem:[%s5376 + $0x18] sm:$0xf] %v5383
                %v5385 = vld [vmem:[%s5375 + $0x10] sm:$0xf]
                %5386 = vst [vmem:[%s5376 + $0x20] sm:$0xf] %v5385
                %v5387 = vld [vmem:[%s5375 + $0x14] sm:$0xf]
                %5388 = vst [vmem:[%s5376 + $0x28] sm:$0xf] %v5387
                %v5389 = vld [vmem:[%s5375 + $0x18] sm:$0xf]
                %5390 = vst [vmem:[%s5376 + $0x30] sm:$0xf] %v5389
                %v5391 = vld [vmem:[%s5375 + $0x1c] sm:$0xf]
                %5392 = vst [vmem:[%s5376 + $0x38] sm:$0xf] %v5391
              $region94: #{_lambda_.5} parent=88 // loop_footer
                %s5374 = sadd.s32 1, %s5370
              $region95: #{_lambda_.5} parent=88 // loop_footer_branch
                %5369 = sbr.rel target = $region91
              $region96: #{_lambda_.5} parent=88 // loop_exit
                _
            $region89: #{_lambda_.5} parent=80 // pred_fallthru
              _
          $region81: #{_lambda_.5} parent=76 // pred_fallthru
            _
          %5428 = vnop
        $region77: #{_lambda_.5} parent=68 // pred_fallthru
          _
      $region69: #{_lambda_.5} parent=5 // pred_fallthru
        _
      %p5429 = scmp.le.s32.totalorder 2, %s9
      // Predicated region
      $region115: #{_lambda_.5} parent=5 // pred_check
        %p5430 = pneg %p5429
      $region116: #{_lambda_.5} parent=5 // pred_check_branch
        %5432 = sbr.rel (%p5430) target = $region118
      $region117: #{_lambda_.5} parent=5 // pred_region
        %s5433 = ssub.s32 %s9, 2
        // Predicated region
        $region119: #{_lambda_.5} parent=117 // pred_check
          %p5434 = pneg %p130
        $region120: #{_lambda_.5} parent=117 // pred_check_branch
          %5436 = sbr.rel (%p5434) target = $region122
        $region121: #{_lambda_.5} parent=117 // pred_region
          %s5437 = sand.u32 %s115, 1
          %s5438 = sand.u32 %s115, 1
          %s5439 = smul.addr %s5438, 32
          %s5440 = scalar_lea.vmem [#allocation3], %s5439
        $region122: #{_lambda_.5} parent=117 // pred_fallthru
          _
      $region118: #{_lambda_.5} parent=5 // pred_fallthru
        _
    $region6: #{_lambda_.5} parent=1 // loop_footer
      %s13 = sadd.s32 1, %s9
    $region7: #{_lambda_.5} parent=1 // loop_footer_branch
      %8 = sbr.rel target = $region3
    $region8: #{_lambda_.5} parent=1 // loop_exit
      _

</llo_original>
